<compile_context>
chip_gen: v7x
topology: tpu7x:2x2x1
jax: 0.10.0
libtpu: 0.0.40
codegen_flags: <defaults>
</compile_context>

<pallas_src>
import functools

import jax
import jax.numpy as jnp
from jax.experimental import pallas as pl
from jax.experimental.pallas import tpu as pltpu


def _round_up(x, m):
    return ((x + m - 1) // m) * m


def _canvas_layout(H, W):
    Hc, Wc = H + 2, W + 2
    P = Hc * Wc                               # zero-ring canvas pixels
    Pd = Wc + 1                               # max |tap offset|
    F = _round_up(Pd, 128)                    # lane-aligned flank width (>= Pd)
    T = min(2048, _round_up(P, 128))          # lane chunk (multiple of 128)
    nchunks = -(-P // T)
    P_round = nchunks * T
    Ptot = F + P_round + F
    return dict(Hc=Hc, Wc=Wc, P=P, Pd=Pd, F=F, T=T,
                nchunks=nchunks, P_round=P_round, Ptot=Ptot)


# ----------------------------- conv kernel (MXU) -----------------------------

def _conv3x3_kernel(x_ref, w_ref, b_ref, m_ref, o_ref, *scratch,
                    F, T, nchunks, P_round, offs, act, scale, shift, stacked):
    """3x3 SAME conv on a bf16 flank-padded flattened canvas.

    x_ref:  (1, Cin, Ptot) bf16  input canvas (zero flanks; interior at [F, F+P))
    w_ref:  stacked (Cout, 9*Cin) or per-tap (9, Cout, Cin), bf16
    b_ref:  (Cout, 1) f32 bias
    m_ref:  (1, P_round) f32 interior mask (1 inside the HxW image, else 0)
    o_ref:  (1, Cout, Ptot) output canvas (bf16 for hidden, f32 for head layers)
    scratch: optional (9*Cin, T) bf16 stacked-RHS buffer (stacked path only)
    """
    cin = x_ref.shape[1]
    cout = o_ref.shape[1]

    wmat = w_ref[...]
    bias = b_ref[...]

    # Zero the output flanks once; they only ever feed masked ring pixels of the
    # next conv but must stay finite/zero.
    o_ref[0, :, 0:F] = jnp.zeros((cout, F), o_ref.dtype)
    o_ref[0, :, F + P_round:F + P_round + F] = jnp.zeros((cout, F), o_ref.dtype)

    def chunk_body(base):
        if stacked:
            stack_ref, = scratch
            # Stack the 9 shifted tap slices into one (9*Cin, T) bf16 RHS and do
            # a single MXU matmul (K = 9*Cin) instead of 9 dots + 8 f32 adds.
            for t in range(9):
                stack_ref[t * cin:(t + 1) * cin, :] = (
                    x_ref[0, :, pl.ds(base + F + offs[t], T)])
            acc = jnp.dot(wmat, stack_ref[...],
                          preferred_element_type=jnp.float32)        # (Cout, T)
        else:
            acc = None
            for t in range(9):
                tap = x_ref[0, :, pl.ds(base + F + offs[t], T)]       # (Cin, T)
                part = jnp.dot(wmat[t], tap,
                               preferred_element_type=jnp.float32)    # (Cout, T)
                acc = part if acc is None else acc + part

        acc = acc + bias
        if act == "lrelu":
            acc = jnp.where(acc >= 0, acc, 0.2 * acc)
        elif act == "tanh":
            acc = jnp.tanh(acc)
        if scale != 1.0 or shift != 0.0:
            acc = acc * scale + shift                                  # fused post-scale

        # Re-zero the border ring (and the rounding overrun) so the canvas stays
        # a valid zero-padded input for the next conv; lane-aligned store.
        acc = acc * m_ref[:, pl.ds(base, T)]
        o_ref[0, :, pl.ds(base + F, T)] = acc.astype(o_ref.dtype)

    if nchunks <= 8:
        for c in range(nchunks):                 # static offsets: best codegen
            chunk_body(c * T)
    else:
        @pl.loop(0, nchunks)
        def _(c):
            chunk_body(pl.multiple_of(c * T, 128))


def _interior_mask(H, W, P_round):
    Hc, Wc = H + 2, W + 2
    m = jnp.zeros((Hc, Wc), jnp.float32).at[1:-1, 1:-1].set(1.0).reshape(-1)
    m = jnp.pad(m, (0, P_round - Hc * Wc))
    return m.reshape(1, P_round)


def conv3x3_canvas(xc, w, b, H, W, act="none", scale=1.0, shift=0.0,
                   out_dtype=jnp.bfloat16):
    """xc: (B, Cin, Ptot) bf16 canvas; w: (Cout, Cin, 3, 3); b: (Cout,)."""
    lay = _canvas_layout(H, W)
    B, Cin, Ptot = xc.shape
    assert Ptot == lay["Ptot"]
    Cout = w.shape[0]
    Wc = lay["Wc"]

    offs = tuple((dy - 1) * Wc + (dx - 1) for dy in range(3) for dx in range(3))
    stacked = (Cin % 8 == 0)       # aligned sublane writes into the stacked RHS

    if stacked:
        # (Cout, Cin, 3, 3) -> (Cout, 3, 3, Cin) -> (Cout, 9*Cin); col = t*Cin+ci
        wmat = jnp.transpose(w, (0, 2, 3, 1)).reshape(Cout, 9 * Cin)
        w_spec = pl.BlockSpec((Cout, 9 * Cin), lambda i: (0, 0))
        scratch = [pltpu.VMEM((9 * Cin, lay["T"]), jnp.bfloat16)]
    else:
        # per-tap (9, Cout, Cin); tap t = dy*3 + dx
        wmat = jnp.transpose(w, (2, 3, 0, 1)).reshape(9, Cout, Cin)
        w_spec = pl.BlockSpec((9, Cout, Cin), lambda i: (0, 0, 0))
        scratch = []
    wmat = wmat.astype(jnp.bfloat16)
    b2 = b.reshape(Cout, 1).astype(jnp.float32)
    mask = _interior_mask(H, W, lay["P_round"])

    kernel = functools.partial(
        _conv3x3_kernel, F=lay["F"], T=lay["T"], nchunks=lay["nchunks"],
        P_round=lay["P_round"], offs=offs, act=act, scale=scale, shift=shift,
        stacked=stacked)

    return pl.pallas_call(
        kernel,
        out_shape=jax.ShapeDtypeStruct((B, Cout, Ptot), out_dtype),
        grid=(B,),
        in_specs=[
            pl.BlockSpec((1, Cin, Ptot), lambda i: (i, 0, 0)),
            w_spec,
            pl.BlockSpec((Cout, 1), lambda i: (0, 0)),
            pl.BlockSpec((1, lay["P_round"]), lambda i: (0, 0)),
        ],
        out_specs=pl.BlockSpec((1, Cout, Ptot), lambda i: (i, 0, 0)),
        scratch_shapes=scratch,
        compiler_params=pltpu.CompilerParams(
            dimension_semantics=("parallel",),
            vmem_limit_bytes=32 * 1024 * 1024,
        ),
    )(xc, wmat, b2, mask)


# ------------------------- canvas <-> image helpers --------------------------

def to_canvas(x, H, W):
    # (B, C, H, W) f32 -> (B, C, Ptot) bf16 flank-padded canvas with zero ring.
    lay = _canvas_layout(H, W)
    B, C = x.shape[0], x.shape[1]
    xp = jnp.pad(x, ((0, 0), (0, 0), (1, 1), (1, 1))).reshape(B, C, lay["P"])
    xp = jnp.pad(xp, ((0, 0), (0, 0),
                      (lay["F"], lay["Ptot"] - lay["F"] - lay["P"])))
    return xp.astype(jnp.bfloat16)


def from_canvas(xc, H, W):
    lay = _canvas_layout(H, W)
    B, C, _ = xc.shape
    img = xc[:, :, lay["F"]:lay["F"] + lay["P"]].reshape(B, C, H + 2, W + 2)
    return img[:, :, 1:-1, 1:-1].astype(jnp.float32)


# --------------------- fused Cb/Cr + YCbCr->RGB kernel -----------------------

def _fuse_color_kernel(fu_ref, vi_ref, o_ref):
    # fu_ref: (1, 1, S, 128) fused Y; vi_ref/o_ref: (1, 3, S, 128).
    y = fu_ref[0, 0]
    r = vi_ref[0, 0]
    g = vi_ref[0, 1]
    b = vi_ref[0, 2]
    vy = 0.299 * r + 0.587 * g + 0.114 * b       # Y of the visible image
    cr = (r - vy) * 0.713                         # Cr - 0.5
    cb = (b - vy) * 0.564                         # Cb - 0.5
    o_ref[0, 0] = jnp.clip(y + 1.403 * cr, 0.0, 1.0)
    o_ref[0, 1] = jnp.clip(y - 0.714 * cr - 0.344 * cb, 0.0, 1.0)
    o_ref[0, 2] = jnp.clip(y + 1.773 * cb, 0.0, 1.0)


def fuse_and_to_rgb(fu_y, vi):
    # Replaces RGB2YCrCb (Cb/Cr part) + YCbCr2RGB with one fused kernel on
    # sublane/lane-dense (HW/128, 128) tiles.
    B, _, H, W = vi.shape
    HW = H * W
    HWp = _round_up(HW, 8 * 128)
    S = HWp // 128

    def prep(x, C):
        x = x.reshape(B, C, HW).astype(jnp.float32)
        x = jnp.pad(x, ((0, 0), (0, 0), (0, HWp - HW)))
        return x.reshape(B, C, S, 128)

    out = pl.pallas_call(
        _fuse_color_kernel,
        out_shape=jax.ShapeDtypeStruct((B, 3, S, 128), jnp.float32),
        grid=(B,),
        in_specs=[
            pl.BlockSpec((1, 1, S, 128), lambda i: (i, 0, 0, 0)),
            pl.BlockSpec((1, 3, S, 128), lambda i: (i, 0, 0, 0)),
        ],
        out_specs=pl.BlockSpec((1, 3, S, 128), lambda i: (i, 0, 0, 0)),
        compiler_params=pltpu.CompilerParams(dimension_semantics=("parallel",)),
    )(prep(fu_y, 1), prep(vi, 3))
    return out.reshape(B, 3, HWp)[:, :, :HW].reshape(B, 3, H, W)


# --------------------- spatial transformer (JAX glue) ------------------------

def _bilinear_grid_sample(img, grid):
    # TODO(synk): F.grid_sample is a data-dependent gather; kept in plain JAX
    # (a Pallas row-strip gather with SMEM indices is the remaining optimization).
    B, C, H, W = img.shape
    x = (grid[..., 0] + 1.0) * 0.5 * (W - 1)
    y = (grid[..., 1] + 1.0) * 0.5 * (H - 1)
    x0 = jnp.floor(x)
    y0 = jnp.floor(y)
    x1, y1 = x0 + 1.0, y0 + 1.0
    wx1, wy1 = x - x0, y - y0
    wx0, wy0 = 1.0 - wx1, 1.0 - wy1
    flat = img.reshape(B, C, H * W)

    def gather(yc, xc):
        valid = (xc >= 0) & (xc <= W - 1) & (yc >= 0) & (yc <= H - 1)
        xi = jnp.clip(xc, 0, W - 1).astype(jnp.int32)
        yi = jnp.clip(yc, 0, H - 1).astype(jnp.int32)
        idx = (yi * W + xi).reshape(B, 1, H * W)
        g = jnp.take_along_axis(flat, jnp.broadcast_to(idx, (B, C, H * W)), axis=2)
        return g * valid.reshape(B, 1, H * W).astype(img.dtype)

    def wgt(a):
        return a.reshape(B, 1, H * W)

    out = (gather(y0, x0) * wgt(wy0 * wx0) + gather(y0, x1) * wgt(wy0 * wx1)
           + gather(y1, x0) * wgt(wy1 * wx0) + gather(y1, x1) * wgt(wy1 * wx1))
    return out.reshape(B, C, H, W)


def spatial_transform(img, disp):
    # disp: (B, 2, H, W) normalized [-1, 1] offsets (channel 0 = x, 1 = y).
    B, C, H, W = img.shape
    xs = jnp.linspace(-1.0, 1.0, W)
    ys = jnp.linspace(-1.0, 1.0, H)
    gx, gy = jnp.meshgrid(xs, ys)
    base = jnp.stack([gx, gy], axis=-1)[None]             # (1, H, W, 2)
    grid = base + jnp.transpose(disp, (0, 2, 3, 1))
    return _bilinear_grid_sample(img, grid)


# ---------------------------- sub-nets & params ------------------------------

def _conv_params(key, cin, cout):
    # gaussian_weights_init: N(0, 0.02) conv weights, zero bias.
    return (0.02 * jax.random.normal(key, (cout, cin, 3, 3), jnp.float32),
            jnp.zeros((cout,), jnp.float32))


def init_params(key):
    ks = jax.random.split(key, 6)
    return {
        "DM": [_conv_params(ks[0], 6, 16),
               _conv_params(ks[1], 16, 16),
               _conv_params(ks[2], 16, 2)],
        "FN": [_conv_params(ks[3], 2, 16),
               _conv_params(ks[4], 16, 16),
               _conv_params(ks[5], 16, 1)],
    }


def _fold_y_into_conv1(w):
    # Fold vi RGB->Y (0.299 R + 0.587 G + 0.114 B) into the FusionNet first conv:
    # (Cout, 2, 3, 3) [ir_Y, vi_Y] -> (Cout, 4, 3, 3) [ir_Y, vi_R, vi_G, vi_B].
    coef = jnp.array([0.299, 0.587, 0.114], jnp.float32).reshape(1, 3, 1, 1)
    return jnp.concatenate([w[:, 0:1], w[:, 1:2] * coef], axis=1)


def dense_matcher(params, ir, vi, H, W):
    # TODO(synk): original DenseMatcher (multi-scale matcher) source not provided;
    # compact 3-conv displacement head.
    (w0, b0), (w1, b1), (w2, b2) = params
    xc = to_canvas(jnp.concatenate([ir, vi], axis=1), H, W)       # (B, 6, Ptot) bf16
    h = conv3x3_canvas(xc, w0, b0, H, W, act="lrelu")
    h = conv3x3_canvas(h, w1, b1, H, W, act="lrelu")
    d = conv3x3_canvas(h, w2, b2, H, W, act="tanh", scale=0.1,
                       out_dtype=jnp.float32)                     # 0.1*tanh fused
    return from_canvas(d, H, W)                                   # (B, 2, H, W)


def fusion_net(params, ir_reg_y, vi_rgb, H, W):
    # TODO(synk): original FusionNet source not provided; compact 3-conv fusion head.
    (w0, b0), (w1, b1), (w2, b2) = params
    w0f = _fold_y_into_conv1(w0)                                  # RGB->Y folded in
    xc = to_canvas(jnp.concatenate([ir_reg_y, vi_rgb], axis=1), H, W)  # (B, 4, Ptot)
    h = conv3x3_canvas(xc, w0f, b0, H, W, act="lrelu")
    h = conv3x3_canvas(h, w1, b1, H, W, act="lrelu")
    fu = conv3x3_canvas(h, w2, b2, H, W, act="tanh",
                        scale=0.5, shift=0.5, out_dtype=jnp.float32)  # 0.5*tanh+0.5
    return from_canvas(fu, H, W)                                  # (B, 1, H, W)


def superfusion_forward(params, ir, vi):
    """SuperFusion.forward: register IR to VIS, fuse Y channels, restore RGB."""
    B, _, H, W = ir.shape
    disp = dense_matcher(params["DM"], ir, vi, H, W)              # ir2vis displacement
    # Only channel 0 of the registered IR is consumed by FN (ir_reg[:, 0:1]),
    # and ST acts per-channel -> sample just that channel.
    ir_reg_y = spatial_transform(ir[:, 0:1], disp)
    fu_y = fusion_net(params["FN"], ir_reg_y, vi, H, W)
    return fuse_and_to_rgb(fu_y, vi)


# ----------------------------------- main ------------------------------------

if __name__ == "__main__":
    key = jax.random.PRNGKey(0)
    k_ir, k_vi, k_p = jax.random.split(key, 3)

    B, H, W = 2, 16, 16                        # small shapes (module nominally 256x256)
    ir = jax.random.uniform(k_ir, (B, 3, H, W), jnp.float32)
    vi = jax.random.uniform(k_vi, (B, 3, H, W), jnp.float32)
    params = init_params(k_p)

    fwd = jax.jit(superfusion_forward)
    fu = fwd(params, ir, vi)
    fu = jax.block_until_ready(fu)
    assert fu.shape == (B, 3, H, W) and fu.dtype == jnp.float32
    print("KERNEL_OK")
</pallas_src>

<mosaic_0001>
module attributes {stable_mosaic.version = 11 : i64} {
  func.func @_conv3x3_kernel(%arg0: i32, %arg1: memref<1x16x640xbf16, #tpu.memory_space<vmem>>, %arg2: memref<16x144xbf16, #tpu.memory_space<vmem>>, %arg3: memref<16x1xf32, #tpu.memory_space<vmem>>, %arg4: memref<1x384xf32, #tpu.memory_space<vmem>>, %arg5: memref<1x16x640xbf16, #tpu.memory_space<vmem>>, %arg6: memref<144x384xbf16, #tpu.memory_space<vmem>>) attributes {dimension_semantics = [#tpu.dimension_semantics<parallel>], iteration_bounds = array<i64: 2>, scalar_prefetch = 0 : i64, scratch_operands = 1 : i64, tpu.core_type = #tpu.core_type<tc>, window_params = [{transform_indices = @transform_0, window_bounds = array<i64: 1, 16, 640>}, {pipeline_mode = #tpu.pipeline_mode<synchronous>, transform_indices = @transform_1, window_bounds = array<i64: 16, 144>}, {pipeline_mode = #tpu.pipeline_mode<synchronous>, transform_indices = @transform_2, window_bounds = array<i64: 16, 1>}, {pipeline_mode = #tpu.pipeline_mode<synchronous>, transform_indices = @transform_3, window_bounds = array<i64: 1, 384>}, {transform_indices = @transform_4, window_bounds = array<i64: 1, 16, 640>}]} {
    %c0 = arith.constant 0 : index
    %c0_0 = arith.constant 0 : index
    %0 = vector.load %arg2[%c0, %c0_0] : memref<16x144xbf16, #tpu.memory_space<vmem>>, vector<16x144xbf16>
    %c0_1 = arith.constant 0 : index
    %c0_2 = arith.constant 0 : index
    %1 = vector.load %arg3[%c0_1, %c0_2] : memref<16x1xf32, #tpu.memory_space<vmem>>, vector<16x1xf32>
    %cst = arith.constant 0.000000e+00 : bf16
    %2 = vector.broadcast %cst : bf16 to vector<16x128xbf16>
    %c0_3 = arith.constant 0 : index
    %c0_4 = arith.constant 0 : index
    %c0_5 = arith.constant 0 : index
    %3 = vector.load %arg5[%c0_3, %c0_4, %c0_5] : memref<1x16x640xbf16, #tpu.memory_space<vmem>>, vector<1x16x128xbf16>
    %4 = vector.shape_cast %3 : vector<1x16x128xbf16> to vector<16x128xbf16>
    %5 = vector.shape_cast %2 : vector<16x128xbf16> to vector<1x16x128xbf16>
    tpu.vector_store %arg5[%c0_3, %c0_4, %c0_5], %5 {strides = array<i32>} : memref<1x16x640xbf16, #tpu.memory_space<vmem>>, vector<1x16x128xbf16>,
    %cst_6 = arith.constant 0.000000e+00 : bf16
    %6 = vector.broadcast %cst_6 : bf16 to vector<16x128xbf16>
    %c0_7 = arith.constant 0 : index
    %c0_8 = arith.constant 0 : index
    %c512 = arith.constant 512 : index
    %7 = vector.load %arg5[%c0_7, %c0_8, %c512] : memref<1x16x640xbf16, #tpu.memory_space<vmem>>, vector<1x16x128xbf16>
    %8 = vector.shape_cast %7 : vector<1x16x128xbf16> to vector<16x128xbf16>
    %9 = vector.shape_cast %6 : vector<16x128xbf16> to vector<1x16x128xbf16>
    tpu.vector_store %arg5[%c0_7, %c0_8, %c512], %9 {strides = array<i32>} : memref<1x16x640xbf16, #tpu.memory_space<vmem>>, vector<1x16x128xbf16>,
    %c0_9 = arith.constant 0 : index
    %c0_10 = arith.constant 0 : index
    %c109 = arith.constant 109 : index
    %10 = vector.load %arg1[%c0_9, %c0_10, %c109] : memref<1x16x640xbf16, #tpu.memory_space<vmem>>, vector<1x16x384xbf16>
    %11 = vector.shape_cast %10 : vector<1x16x384xbf16> to vector<16x384xbf16>
    %c0_11 = arith.constant 0 : index
    %c0_12 = arith.constant 0 : index
    %12 = vector.load %arg6[%c0_11, %c0_12] : memref<144x384xbf16, #tpu.memory_space<vmem>>, vector<16x384xbf16>
    tpu.vector_store %arg6[%c0_11, %c0_12], %11 {strides = array<i32>} : memref<144x384xbf16, #tpu.memory_space<vmem>>, vector<16x384xbf16>,
    %c0_13 = arith.constant 0 : index
    %c0_14 = arith.constant 0 : index
    %c110 = arith.constant 110 : index
    %13 = vector.load %arg1[%c0_13, %c0_14, %c110] : memref<1x16x640xbf16, #tpu.memory_space<vmem>>, vector<1x16x384xbf16>
    %14 = vector.shape_cast %13 : vector<1x16x384xbf16> to vector<16x384xbf16>
    %c16 = arith.constant 16 : index
    %c0_15 = arith.constant 0 : index
    %15 = vector.load %arg6[%c16, %c0_15] : memref<144x384xbf16, #tpu.memory_space<vmem>>, vector<16x384xbf16>
    tpu.vector_store %arg6[%c16, %c0_15], %14 {strides = array<i32>} : memref<144x384xbf16, #tpu.memory_space<vmem>>, vector<16x384xbf16>,
    %c0_16 = arith.constant 0 : index
    %c0_17 = arith.constant 0 : index
    %c111 = arith.constant 111 : index
    %16 = vector.load %arg1[%c0_16, %c0_17, %c111] : memref<1x16x640xbf16, #tpu.memory_space<vmem>>, vector<1x16x384xbf16>
    %17 = vector.shape_cast %16 : vector<1x16x384xbf16> to vector<16x384xbf16>
    %c32 = arith.constant 32 : index
    %c0_18 = arith.constant 0 : index
    %18 = vector.load %arg6[%c32, %c0_18] : memref<144x384xbf16, #tpu.memory_space<vmem>>, vector<16x384xbf16>
    tpu.vector_store %arg6[%c32, %c0_18], %17 {strides = array<i32>} : memref<144x384xbf16, #tpu.memory_space<vmem>>, vector<16x384xbf16>,
    %c0_19 = arith.constant 0 : index
    %c0_20 = arith.constant 0 : index
    %c127 = arith.constant 127 : index
    %19 = vector.load %arg1[%c0_19, %c0_20, %c127] : memref<1x16x640xbf16, #tpu.memory_space<vmem>>, vector<1x16x384xbf16>
    %20 = vector.shape_cast %19 : vector<1x16x384xbf16> to vector<16x384xbf16>
    %c48 = arith.constant 48 : index
    %c0_21 = arith.constant 0 : index
    %21 = vector.load %arg6[%c48, %c0_21] : memref<144x384xbf16, #tpu.memory_space<vmem>>, vector<16x384xbf16>
    tpu.vector_store %arg6[%c48, %c0_21], %20 {strides = array<i32>} : memref<144x384xbf16, #tpu.memory_space<vmem>>, vector<16x384xbf16>,
    %c0_22 = arith.constant 0 : index
    %c0_23 = arith.constant 0 : index
    %c128 = arith.constant 128 : index
    %22 = vector.load %arg1[%c0_22, %c0_23, %c128] : memref<1x16x640xbf16, #tpu.memory_space<vmem>>, vector<1x16x384xbf16>
    %23 = vector.shape_cast %22 : vector<1x16x384xbf16> to vector<16x384xbf16>
    %c64 = arith.constant 64 : index
    %c0_24 = arith.constant 0 : index
    %24 = vector.load %arg6[%c64, %c0_24] : memref<144x384xbf16, #tpu.memory_space<vmem>>, vector<16x384xbf16>
    tpu.vector_store %arg6[%c64, %c0_24], %23 {strides = array<i32>} : memref<144x384xbf16, #tpu.memory_space<vmem>>, vector<16x384xbf16>,
    %c0_25 = arith.constant 0 : index
    %c0_26 = arith.constant 0 : index
    %c129 = arith.constant 129 : index
    %25 = vector.load %arg1[%c0_25, %c0_26, %c129] : memref<1x16x640xbf16, #tpu.memory_space<vmem>>, vector<1x16x384xbf16>
    %26 = vector.shape_cast %25 : vector<1x16x384xbf16> to vector<16x384xbf16>
    %c80 = arith.constant 80 : index
    %c0_27 = arith.constant 0 : index
    %27 = vector.load %arg6[%c80, %c0_27] : memref<144x384xbf16, #tpu.memory_space<vmem>>, vector<16x384xbf16>
    tpu.vector_store %arg6[%c80, %c0_27], %26 {strides = array<i32>} : memref<144x384xbf16, #tpu.memory_space<vmem>>, vector<16x384xbf16>,
    %c0_28 = arith.constant 0 : index
    %c0_29 = arith.constant 0 : index
    %c145 = arith.constant 145 : index
    %28 = vector.load %arg1[%c0_28, %c0_29, %c145] : memref<1x16x640xbf16, #tpu.memory_space<vmem>>, vector<1x16x384xbf16>
    %29 = vector.shape_cast %28 : vector<1x16x384xbf16> to vector<16x384xbf16>
    %c96 = arith.constant 96 : index
    %c0_30 = arith.constant 0 : index
    %30 = vector.load %arg6[%c96, %c0_30] : memref<144x384xbf16, #tpu.memory_space<vmem>>, vector<16x384xbf16>
    tpu.vector_store %arg6[%c96, %c0_30], %29 {strides = array<i32>} : memref<144x384xbf16, #tpu.memory_space<vmem>>, vector<16x384xbf16>,
    %c0_31 = arith.constant 0 : index
    %c0_32 = arith.constant 0 : index
    %c146 = arith.constant 146 : index
    %31 = vector.load %arg1[%c0_31, %c0_32, %c146] : memref<1x16x640xbf16, #tpu.memory_space<vmem>>, vector<1x16x384xbf16>
    %32 = vector.shape_cast %31 : vector<1x16x384xbf16> to vector<16x384xbf16>
    %c112 = arith.constant 112 : index
    %c0_33 = arith.constant 0 : index
    %33 = vector.load %arg6[%c112, %c0_33] : memref<144x384xbf16, #tpu.memory_space<vmem>>, vector<16x384xbf16>
    tpu.vector_store %arg6[%c112, %c0_33], %32 {strides = array<i32>} : memref<144x384xbf16, #tpu.memory_space<vmem>>, vector<16x384xbf16>,
    %c0_34 = arith.constant 0 : index
    %c0_35 = arith.constant 0 : index
    %c147 = arith.constant 147 : index
    %34 = vector.load %arg1[%c0_34, %c0_35, %c147] : memref<1x16x640xbf16, #tpu.memory_space<vmem>>, vector<1x16x384xbf16>
    %35 = vector.shape_cast %34 : vector<1x16x384xbf16> to vector<16x384xbf16>
    %c128_36 = arith.constant 128 : index
    %c0_37 = arith.constant 0 : index
    %36 = vector.load %arg6[%c128_36, %c0_37] : memref<144x384xbf16, #tpu.memory_space<vmem>>, vector<16x384xbf16>
    tpu.vector_store %arg6[%c128_36, %c0_37], %35 {strides = array<i32>} : memref<144x384xbf16, #tpu.memory_space<vmem>>, vector<16x384xbf16>,
    %c0_38 = arith.constant 0 : index
    %c0_39 = arith.constant 0 : index
    %37 = vector.load %arg6[%c0_38, %c0_39] : memref<144x384xbf16, #tpu.memory_space<vmem>>, vector<144x384xbf16>
    %cst_40 = arith.constant dense<0.000000e+00> : vector<16x384xf32>
    %38 = tpu.matmul %0, %37, %cst_40 {dimension_numbers = #tpu.dot_dimension_numbers<[1], [0], [0], [1], [0, 0, 1, 1], [], []>} : vector<16x144xbf16>, vector<144x384xbf16>, vector<16x384xf32> -> vector<16x384xf32>
    %39 = vector.broadcast %1 : vector<16x1xf32> to vector<16x384xf32>
    %40 = arith.addf %38, %39 : vector<16x384xf32>
    %cst_41 = arith.constant 0.000000e+00 : f32
    %41 = vector.broadcast %cst_41 : f32 to vector<16x384xf32>
    %42 = arith.cmpf oge, %40, %41 : vector<16x384xf32>
    %cst_42 = arith.constant 2.000000e-01 : f32
    %43 = vector.broadcast %cst_42 : f32 to vector<16x384xf32>
    %44 = arith.mulf %43, %40 : vector<16x384xf32>
    %45 = arith.select %42, %40, %44 : vector<16x384xi1>, vector<16x384xf32>
    %c0_43 = arith.constant 0 : index
    %c0_44 = arith.constant 0 : index
    %46 = vector.load %arg4[%c0_43, %c0_44] : memref<1x384xf32, #tpu.memory_space<vmem>>, vector<1x384xf32>
    %47 = vector.broadcast %46 : vector<1x384xf32> to vector<16x384xf32>
    %48 = arith.mulf %45, %47 : vector<16x384xf32>
    %49 = arith.truncf %48 : vector<16x384xf32> to vector<16x384xbf16>
    %c0_45 = arith.constant 0 : index
    %c0_46 = arith.constant 0 : index
    %c128_47 = arith.constant 128 : index
    %50 = vector.load %arg5[%c0_45, %c0_46, %c128_47] : memref<1x16x640xbf16, #tpu.memory_space<vmem>>, vector<1x16x384xbf16>
    %51 = vector.shape_cast %50 : vector<1x16x384xbf16> to vector<16x384xbf16>
    %52 = vector.shape_cast %49 : vector<16x384xbf16> to vector<1x16x384xbf16>
    tpu.vector_store %arg5[%c0_45, %c0_46, %c128_47], %52 {strides = array<i32>} : memref<1x16x640xbf16, #tpu.memory_space<vmem>>, vector<1x16x384xbf16>,
    return
  }
  func.func @transform_0(%arg0: i32) -> (i32, i32, i32) {
    %c0_i32 = arith.constant 0 : i32
    %c0_i32_0 = arith.constant 0 : i32
    %c0_i32_1 = arith.constant 0 : i32
    return %arg0, %c0_i32, %c0_i32_0 : i32, i32, i32
  }
  func.func @transform_1(%arg0: i32) -> (i32, i32) {
    %c0_i32 = arith.constant 0 : i32
    %c0_i32_0 = arith.constant 0 : i32
    %c0_i32_1 = arith.constant 0 : i32
    return %c0_i32, %c0_i32_0 : i32, i32
  }
  func.func @transform_2(%arg0: i32) -> (i32, i32) {
    %c0_i32 = arith.constant 0 : i32
    %c0_i32_0 = arith.constant 0 : i32
    %c0_i32_1 = arith.constant 0 : i32
    return %c0_i32, %c0_i32_0 : i32, i32
  }
  func.func @transform_3(%arg0: i32) -> (i32, i32) {
    %c0_i32 = arith.constant 0 : i32
    %c0_i32_0 = arith.constant 0 : i32
    %c0_i32_1 = arith.constant 0 : i32
    return %c0_i32, %c0_i32_0 : i32, i32
  }
  func.func @transform_4(%arg0: i32) -> (i32, i32, i32) {
    %c0_i32 = arith.constant 0 : i32
    %c0_i32_0 = arith.constant 0 : i32
    %c0_i32_1 = arith.constant 0 : i32
    return %arg0, %c0_i32, %c0_i32_0 : i32, i32, i32
  }
}

module attributes {stable_mosaic.version = 11 : i64} {
  func.func @_conv3x3_kernel(%arg0: i32, %arg1: memref<1x6x640xbf16, #tpu.memory_space<vmem>>, %arg2: memref<9x16x6xbf16, #tpu.memory_space<vmem>>, %arg3: memref<16x1xf32, #tpu.memory_space<vmem>>, %arg4: memref<1x384xf32, #tpu.memory_space<vmem>>, %arg5: memref<1x16x640xbf16, #tpu.memory_space<vmem>>) attributes {dimension_semantics = [#tpu.dimension_semantics<parallel>], iteration_bounds = array<i64: 2>, scalar_prefetch = 0 : i64, scratch_operands = 0 : i64, tpu.core_type = #tpu.core_type<tc>, window_params = [{transform_indices = @transform_0, window_bounds = array<i64: 1, 6, 640>}, {pipeline_mode = #tpu.pipeline_mode<synchronous>, transform_indices = @transform_1, window_bounds = array<i64: 9, 16, 6>}, {pipeline_mode = #tpu.pipeline_mode<synchronous>, transform_indices = @transform_2, window_bounds = array<i64: 16, 1>}, {pipeline_mode = #tpu.pipeline_mode<synchronous>, transform_indices = @transform_3, window_bounds = array<i64: 1, 384>}, {transform_indices = @transform_4, window_bounds = array<i64: 1, 16, 640>}]} {
    %c0 = arith.constant 0 : index
    %c0_0 = arith.constant 0 : index
    %c0_1 = arith.constant 0 : index
    %0 = vector.load %arg2[%c0, %c0_0, %c0_1] : memref<9x16x6xbf16, #tpu.memory_space<vmem>>, vector<9x16x6xbf16>
    %c0_2 = arith.constant 0 : index
    %c0_3 = arith.constant 0 : index
    %1 = vector.load %arg3[%c0_2, %c0_3] : memref<16x1xf32, #tpu.memory_space<vmem>>, vector<16x1xf32>
    %cst = arith.constant 0.000000e+00 : bf16
    %2 = vector.broadcast %cst : bf16 to vector<16x128xbf16>
    %c0_4 = arith.constant 0 : index
    %c0_5 = arith.constant 0 : index
    %c0_6 = arith.constant 0 : index
    %3 = vector.load %arg5[%c0_4, %c0_5, %c0_6] : memref<1x16x640xbf16, #tpu.memory_space<vmem>>, vector<1x16x128xbf16>
    %4 = vector.shape_cast %3 : vector<1x16x128xbf16> to vector<16x128xbf16>
    %5 = vector.shape_cast %2 : vector<16x128xbf16> to vector<1x16x128xbf16>
    tpu.vector_store %arg5[%c0_4, %c0_5, %c0_6], %5 {strides = array<i32>} : memref<1x16x640xbf16, #tpu.memory_space<vmem>>, vector<1x16x128xbf16>,
    %cst_7 = arith.constant 0.000000e+00 : bf16
    %6 = vector.broadcast %cst_7 : bf16 to vector<16x128xbf16>
    %c0_8 = arith.constant 0 : index
    %c0_9 = arith.constant 0 : index
    %c512 = arith.constant 512 : index
    %7 = vector.load %arg5[%c0_8, %c0_9, %c512] : memref<1x16x640xbf16, #tpu.memory_space<vmem>>, vector<1x16x128xbf16>
    %8 = vector.shape_cast %7 : vector<1x16x128xbf16> to vector<16x128xbf16>
    %9 = vector.shape_cast %6 : vector<16x128xbf16> to vector<1x16x128xbf16>
    tpu.vector_store %arg5[%c0_8, %c0_9, %c512], %9 {strides = array<i32>} : memref<1x16x640xbf16, #tpu.memory_space<vmem>>, vector<1x16x128xbf16>,
    %c0_10 = arith.constant 0 : index
    %c0_11 = arith.constant 0 : index
    %c109 = arith.constant 109 : index
    %10 = vector.load %arg1[%c0_10, %c0_11, %c109] : memref<1x6x640xbf16, #tpu.memory_space<vmem>>, vector<1x6x384xbf16>
    %11 = vector.shape_cast %10 : vector<1x6x384xbf16> to vector<6x384xbf16>
    %12 = vector.extract_strided_slice %0 {offsets = [0, 0, 0], sizes = [1, 16, 6], strides = [1, 1, 1]} : vector<9x16x6xbf16> to vector<1x16x6xbf16>
    %13 = vector.shape_cast %12 : vector<1x16x6xbf16> to vector<16x6xbf16>
    %cst_12 = arith.constant dense<0.000000e+00> : vector<16x384xf32>
    %14 = tpu.matmul %13, %11, %cst_12 {dimension_numbers = #tpu.dot_dimension_numbers<[1], [0], [0], [1], [0, 0, 1, 1], [], []>} : vector<16x6xbf16>, vector<6x384xbf16>, vector<16x384xf32> -> vector<16x384xf32>
    %c0_13 = arith.constant 0 : index
    %c0_14 = arith.constant 0 : index
    %c110 = arith.constant 110 : index
    %15 = vector.load %arg1[%c0_13, %c0_14, %c110] : memref<1x6x640xbf16, #tpu.memory_space<vmem>>, vector<1x6x384xbf16>
    %16 = vector.shape_cast %15 : vector<1x6x384xbf16> to vector<6x384xbf16>
    %17 = vector.extract_strided_slice %0 {offsets = [1, 0, 0], sizes = [1, 16, 6], strides = [1, 1, 1]} : vector<9x16x6xbf16> to vector<1x16x6xbf16>
    %18 = vector.shape_cast %17 : vector<1x16x6xbf16> to vector<16x6xbf16>
    %cst_15 = arith.constant dense<0.000000e+00> : vector<16x384xf32>
    %19 = tpu.matmul %18, %16, %cst_15 {dimension_numbers = #tpu.dot_dimension_numbers<[1], [0], [0], [1], [0, 0, 1, 1], [], []>} : vector<16x6xbf16>, vector<6x384xbf16>, vector<16x384xf32> -> vector<16x384xf32>
    %20 = arith.addf %14, %19 : vector<16x384xf32>
    %c0_16 = arith.constant 0 : index
    %c0_17 = arith.constant 0 : index
    %c111 = arith.constant 111 : index
    %21 = vector.load %arg1[%c0_16, %c0_17, %c111] : memref<1x6x640xbf16, #tpu.memory_space<vmem>>, vector<1x6x384xbf16>
    %22 = vector.shape_cast %21 : vector<1x6x384xbf16> to vector<6x384xbf16>
    %23 = vector.extract_strided_slice %0 {offsets = [2, 0, 0], sizes = [1, 16, 6], strides = [1, 1, 1]} : vector<9x16x6xbf16> to vector<1x16x6xbf16>
    %24 = vector.shape_cast %23 : vector<1x16x6xbf16> to vector<16x6xbf16>
    %cst_18 = arith.constant dense<0.000000e+00> : vector<16x384xf32>
    %25 = tpu.matmul %24, %22, %cst_18 {dimension_numbers = #tpu.dot_dimension_numbers<[1], [0], [0], [1], [0, 0, 1, 1], [], []>} : vector<16x6xbf16>, vector<6x384xbf16>, vector<16x384xf32> -> vector<16x384xf32>
    %26 = arith.addf %20, %25 : vector<16x384xf32>
    %c0_19 = arith.constant 0 : index
    %c0_20 = arith.constant 0 : index
    %c127 = arith.constant 127 : index
    %27 = vector.load %arg1[%c0_19, %c0_20, %c127] : memref<1x6x640xbf16, #tpu.memory_space<vmem>>, vector<1x6x384xbf16>
    %28 = vector.shape_cast %27 : vector<1x6x384xbf16> to vector<6x384xbf16>
    %29 = vector.extract_strided_slice %0 {offsets = [3, 0, 0], sizes = [1, 16, 6], strides = [1, 1, 1]} : vector<9x16x6xbf16> to vector<1x16x6xbf16>
    %30 = vector.shape_cast %29 : vector<1x16x6xbf16> to vector<16x6xbf16>
    %cst_21 = arith.constant dense<0.000000e+00> : vector<16x384xf32>
    %31 = tpu.matmul %30, %28, %cst_21 {dimension_numbers = #tpu.dot_dimension_numbers<[1], [0], [0], [1], [0, 0, 1, 1], [], []>} : vector<16x6xbf16>, vector<6x384xbf16>, vector<16x384xf32> -> vector<16x384xf32>
    %32 = arith.addf %26, %31 : vector<16x384xf32>
    %c0_22 = arith.constant 0 : index
    %c0_23 = arith.constant 0 : index
    %c128 = arith.constant 128 : index
    %33 = vector.load %arg1[%c0_22, %c0_23, %c128] : memref<1x6x640xbf16, #tpu.memory_space<vmem>>, vector<1x6x384xbf16>
    %34 = vector.shape_cast %33 : vector<1x6x384xbf16> to vector<6x384xbf16>
    %35 = vector.extract_strided_slice %0 {offsets = [4, 0, 0], sizes = [1, 16, 6], strides = [1, 1, 1]} : vector<9x16x6xbf16> to vector<1x16x6xbf16>
    %36 = vector.shape_cast %35 : vector<1x16x6xbf16> to vector<16x6xbf16>
    %cst_24 = arith.constant dense<0.000000e+00> : vector<16x384xf32>
    %37 = tpu.matmul %36, %34, %cst_24 {dimension_numbers = #tpu.dot_dimension_numbers<[1], [0], [0], [1], [0, 0, 1, 1], [], []>} : vector<16x6xbf16>, vector<6x384xbf16>, vector<16x384xf32> -> vector<16x384xf32>
    %38 = arith.addf %32, %37 : vector<16x384xf32>
    %c0_25 = arith.constant 0 : index
    %c0_26 = arith.constant 0 : index
    %c129 = arith.constant 129 : index
    %39 = vector.load %arg1[%c0_25, %c0_26, %c129] : memref<1x6x640xbf16, #tpu.memory_space<vmem>>, vector<1x6x384xbf16>
    %40 = vector.shape_cast %39 : vector<1x6x384xbf16> to vector<6x384xbf16>
    %41 = vector.extract_strided_slice %0 {offsets = [5, 0, 0], sizes = [1, 16, 6], strides = [1, 1, 1]} : vector<9x16x6xbf16> to vector<1x16x6xbf16>
    %42 = vector.shape_cast %41 : vector<1x16x6xbf16> to vector<16x6xbf16>
    %cst_27 = arith.constant dense<0.000000e+00> : vector<16x384xf32>
    %43 = tpu.matmul %42, %40, %cst_27 {dimension_numbers = #tpu.dot_dimension_numbers<[1], [0], [0], [1], [0, 0, 1, 1], [], []>} : vector<16x6xbf16>, vector<6x384xbf16>, vector<16x384xf32> -> vector<16x384xf32>
    %44 = arith.addf %38, %43 : vector<16x384xf32>
    %c0_28 = arith.constant 0 : index
    %c0_29 = arith.constant 0 : index
    %c145 = arith.constant 145 : index
    %45 = vector.load %arg1[%c0_28, %c0_29, %c145] : memref<1x6x640xbf16, #tpu.memory_space<vmem>>, vector<1x6x384xbf16>
    %46 = vector.shape_cast %45 : vector<1x6x384xbf16> to vector<6x384xbf16>
    %47 = vector.extract_strided_slice %0 {offsets = [6, 0, 0], sizes = [1, 16, 6], strides = [1, 1, 1]} : vector<9x16x6xbf16> to vector<1x16x6xbf16>
    %48 = vector.shape_cast %47 : vector<1x16x6xbf16> to vector<16x6xbf16>
    %cst_30 = arith.constant dense<0.000000e+00> : vector<16x384xf32>
    %49 = tpu.matmul %48, %46, %cst_30 {dimension_numbers = #tpu.dot_dimension_numbers<[1], [0], [0], [1], [0, 0, 1, 1], [], []>} : vector<16x6xbf16>, vector<6x384xbf16>, vector<16x384xf32> -> vector<16x384xf32>
    %50 = arith.addf %44, %49 : vector<16x384xf32>
    %c0_31 = arith.constant 0 : index
    %c0_32 = arith.constant 0 : index
    %c146 = arith.constant 146 : index
    %51 = vector.load %arg1[%c0_31, %c0_32, %c146] : memref<1x6x640xbf16, #tpu.memory_space<vmem>>, vector<1x6x384xbf16>
    %52 = vector.shape_cast %51 : vector<1x6x384xbf16> to vector<6x384xbf16>
    %53 = vector.extract_strided_slice %0 {offsets = [7, 0, 0], sizes = [1, 16, 6], strides = [1, 1, 1]} : vector<9x16x6xbf16> to vector<1x16x6xbf16>
    %54 = vector.shape_cast %53 : vector<1x16x6xbf16> to vector<16x6xbf16>
    %cst_33 = arith.constant dense<0.000000e+00> : vector<16x384xf32>
    %55 = tpu.matmul %54, %52, %cst_33 {dimension_numbers = #tpu.dot_dimension_numbers<[1], [0], [0], [1], [0, 0, 1, 1], [], []>} : vector<16x6xbf16>, vector<6x384xbf16>, vector<16x384xf32> -> vector<16x384xf32>
    %56 = arith.addf %50, %55 : vector<16x384xf32>
    %c0_34 = arith.constant 0 : index
    %c0_35 = arith.constant 0 : index
    %c147 = arith.constant 147 : index
    %57 = vector.load %arg1[%c0_34, %c0_35, %c147] : memref<1x6x640xbf16, #tpu.memory_space<vmem>>, vector<1x6x384xbf16>
    %58 = vector.shape_cast %57 : vector<1x6x384xbf16> to vector<6x384xbf16>
    %59 = vector.extract_strided_slice %0 {offsets = [8, 0, 0], sizes = [1, 16, 6], strides = [1, 1, 1]} : vector<9x16x6xbf16> to vector<1x16x6xbf16>
    %60 = vector.shape_cast %59 : vector<1x16x6xbf16> to vector<16x6xbf16>
    %cst_36 = arith.constant dense<0.000000e+00> : vector<16x384xf32>
    %61 = tpu.matmul %60, %58, %cst_36 {dimension_numbers = #tpu.dot_dimension_numbers<[1], [0], [0], [1], [0, 0, 1, 1], [], []>} : vector<16x6xbf16>, vector<6x384xbf16>, vector<16x384xf32> -> vector<16x384xf32>
    %62 = arith.addf %56, %61 : vector<16x384xf32>
    %63 = vector.broadcast %1 : vector<16x1xf32> to vector<16x384xf32>
    %64 = arith.addf %62, %63 : vector<16x384xf32>
    %cst_37 = arith.constant 0.000000e+00 : f32
    %65 = vector.broadcast %cst_37 : f32 to vector<16x384xf32>
    %66 = arith.cmpf oge, %64, %65 : vector<16x384xf32>
    %cst_38 = arith.constant 2.000000e-01 : f32
    %67 = vector.broadcast %cst_38 : f32 to vector<16x384xf32>
    %68 = arith.mulf %67, %64 : vector<16x384xf32>
    %69 = arith.select %66, %64, %68 : vector<16x384xi1>, vector<16x384xf32>
    %c0_39 = arith.constant 0 : index
    %c0_40 = arith.constant 0 : index
    %70 = vector.load %arg4[%c0_39, %c0_40] : memref<1x384xf32, #tpu.memory_space<vmem>>, vector<1x384xf32>
    %71 = vector.broadcast %70 : vector<1x384xf32> to vector<16x384xf32>
    %72 = arith.mulf %69, %71 : vector<16x384xf32>
    %73 = arith.truncf %72 : vector<16x384xf32> to vector<16x384xbf16>
    %c0_41 = arith.constant 0 : index
    %c0_42 = arith.constant 0 : index
    %c128_43 = arith.constant 128 : index
    %74 = vector.load %arg5[%c0_41, %c0_42, %c128_43] : memref<1x16x640xbf16, #tpu.memory_space<vmem>>, vector<1x16x384xbf16>
    %75 = vector.shape_cast %74 : vector<1x16x384xbf16> to vector<16x384xbf16>
    %76 = vector.shape_cast %73 : vector<16x384xbf16> to vector<1x16x384xbf16>
    tpu.vector_store %arg5[%c0_41, %c0_42, %c128_43], %76 {strides = array<i32>} : memref<1x16x640xbf16, #tpu.memory_space<vmem>>, vector<1x16x384xbf16>,
    return
  }
  func.func @transform_0(%arg0: i32) -> (i32, i32, i32) {
    %c0_i32 = arith.constant 0 : i32
    %c0_i32_0 = arith.constant 0 : i32
    %c0_i32_1 = arith.constant 0 : i32
    return %arg0, %c0_i32, %c0_i32_0 : i32, i32, i32
  }
  func.func @transform_1(%arg0: i32) -> (i32, i32, i32) {
    %c0_i32 = arith.constant 0 : i32
    %c0_i32_0 = arith.constant 0 : i32
    %c0_i32_1 = arith.constant 0 : i32
    %c0_i32_2 = arith.constant 0 : i32
    return %c0_i32, %c0_i32_0, %c0_i32_1 : i32, i32, i32
  }
  func.func @transform_2(%arg0: i32) -> (i32, i32) {
    %c0_i32 = arith.constant 0 : i32
    %c0_i32_0 = arith.constant 0 : i32
    %c0_i32_1 = arith.constant 0 : i32
    return %c0_i32, %c0_i32_0 : i32, i32
  }
  func.func @transform_3(%arg0: i32) -> (i32, i32) {
    %c0_i32 = arith.constant 0 : i32
    %c0_i32_0 = arith.constant 0 : i32
    %c0_i32_1 = arith.constant 0 : i32
    return %c0_i32, %c0_i32_0 : i32, i32
  }
  func.func @transform_4(%arg0: i32) -> (i32, i32, i32) {
    %c0_i32 = arith.constant 0 : i32
    %c0_i32_0 = arith.constant 0 : i32
    %c0_i32_1 = arith.constant 0 : i32
    return %arg0, %c0_i32, %c0_i32_0 : i32, i32, i32
  }
}

module attributes {stable_mosaic.version = 11 : i64} {
  func.func @_conv3x3_kernel(%arg0: i32, %arg1: memref<1x16x640xbf16, #tpu.memory_space<vmem>>, %arg2: memref<2x144xbf16, #tpu.memory_space<vmem>>, %arg3: memref<2x1xf32, #tpu.memory_space<vmem>>, %arg4: memref<1x384xf32, #tpu.memory_space<vmem>>, %arg5: memref<1x2x640xf32, #tpu.memory_space<vmem>>, %arg6: memref<144x384xbf16, #tpu.memory_space<vmem>>) attributes {dimension_semantics = [#tpu.dimension_semantics<parallel>], iteration_bounds = array<i64: 2>, scalar_prefetch = 0 : i64, scratch_operands = 1 : i64, tpu.core_type = #tpu.core_type<tc>, window_params = [{transform_indices = @transform_0, window_bounds = array<i64: 1, 16, 640>}, {pipeline_mode = #tpu.pipeline_mode<synchronous>, transform_indices = @transform_1, window_bounds = array<i64: 2, 144>}, {pipeline_mode = #tpu.pipeline_mode<synchronous>, transform_indices = @transform_2, window_bounds = array<i64: 2, 1>}, {pipeline_mode = #tpu.pipeline_mode<synchronous>, transform_indices = @transform_3, window_bounds = array<i64: 1, 384>}, {transform_indices = @transform_4, window_bounds = array<i64: 1, 2, 640>}]} {
    %c0 = arith.constant 0 : index
    %c0_0 = arith.constant 0 : index
    %0 = vector.load %arg2[%c0, %c0_0] : memref<2x144xbf16, #tpu.memory_space<vmem>>, vector<2x144xbf16>
    %c0_1 = arith.constant 0 : index
    %c0_2 = arith.constant 0 : index
    %1 = vector.load %arg3[%c0_1, %c0_2] : memref<2x1xf32, #tpu.memory_space<vmem>>, vector<2x1xf32>
    %cst = arith.constant 0.000000e+00 : f32
    %2 = vector.broadcast %cst : f32 to vector<2x128xf32>
    %c0_3 = arith.constant 0 : index
    %c0_4 = arith.constant 0 : index
    %c0_5 = arith.constant 0 : index
    %3 = vector.load %arg5[%c0_3, %c0_4, %c0_5] : memref<1x2x640xf32, #tpu.memory_space<vmem>>, vector<1x2x128xf32>
    %4 = vector.shape_cast %3 : vector<1x2x128xf32> to vector<2x128xf32>
    %5 = vector.shape_cast %2 : vector<2x128xf32> to vector<1x2x128xf32>
    tpu.vector_store %arg5[%c0_3, %c0_4, %c0_5], %5 {strides = array<i32>} : memref<1x2x640xf32, #tpu.memory_space<vmem>>, vector<1x2x128xf32>,
    %cst_6 = arith.constant 0.000000e+00 : f32
    %6 = vector.broadcast %cst_6 : f32 to vector<2x128xf32>
    %c0_7 = arith.constant 0 : index
    %c0_8 = arith.constant 0 : index
    %c512 = arith.constant 512 : index
    %7 = vector.load %arg5[%c0_7, %c0_8, %c512] : memref<1x2x640xf32, #tpu.memory_space<vmem>>, vector<1x2x128xf32>
    %8 = vector.shape_cast %7 : vector<1x2x128xf32> to vector<2x128xf32>
    %9 = vector.shape_cast %6 : vector<2x128xf32> to vector<1x2x128xf32>
    tpu.vector_store %arg5[%c0_7, %c0_8, %c512], %9 {strides = array<i32>} : memref<1x2x640xf32, #tpu.memory_space<vmem>>, vector<1x2x128xf32>,
    %c0_9 = arith.constant 0 : index
    %c0_10 = arith.constant 0 : index
    %c109 = arith.constant 109 : index
    %10 = vector.load %arg1[%c0_9, %c0_10, %c109] : memref<1x16x640xbf16, #tpu.memory_space<vmem>>, vector<1x16x384xbf16>
    %11 = vector.shape_cast %10 : vector<1x16x384xbf16> to vector<16x384xbf16>
    %c0_11 = arith.constant 0 : index
    %c0_12 = arith.constant 0 : index
    %12 = vector.load %arg6[%c0_11, %c0_12] : memref<144x384xbf16, #tpu.memory_space<vmem>>, vector<16x384xbf16>
    tpu.vector_store %arg6[%c0_11, %c0_12], %11 {strides = array<i32>} : memref<144x384xbf16, #tpu.memory_space<vmem>>, vector<16x384xbf16>,
    %c0_13 = arith.constant 0 : index
    %c0_14 = arith.constant 0 : index
    %c110 = arith.constant 110 : index
    %13 = vector.load %arg1[%c0_13, %c0_14, %c110] : memref<1x16x640xbf16, #tpu.memory_space<vmem>>, vector<1x16x384xbf16>
    %14 = vector.shape_cast %13 : vector<1x16x384xbf16> to vector<16x384xbf16>
    %c16 = arith.constant 16 : index
    %c0_15 = arith.constant 0 : index
    %15 = vector.load %arg6[%c16, %c0_15] : memref<144x384xbf16, #tpu.memory_space<vmem>>, vector<16x384xbf16>
    tpu.vector_store %arg6[%c16, %c0_15], %14 {strides = array<i32>} : memref<144x384xbf16, #tpu.memory_space<vmem>>, vector<16x384xbf16>,
    %c0_16 = arith.constant 0 : index
    %c0_17 = arith.constant 0 : index
    %c111 = arith.constant 111 : index
    %16 = vector.load %arg1[%c0_16, %c0_17, %c111] : memref<1x16x640xbf16, #tpu.memory_space<vmem>>, vector<1x16x384xbf16>
    %17 = vector.shape_cast %16 : vector<1x16x384xbf16> to vector<16x384xbf16>
    %c32 = arith.constant 32 : index
    %c0_18 = arith.constant 0 : index
    %18 = vector.load %arg6[%c32, %c0_18] : memref<144x384xbf16, #tpu.memory_space<vmem>>, vector<16x384xbf16>
    tpu.vector_store %arg6[%c32, %c0_18], %17 {strides = array<i32>} : memref<144x384xbf16, #tpu.memory_space<vmem>>, vector<16x384xbf16>,
    %c0_19 = arith.constant 0 : index
    %c0_20 = arith.constant 0 : index
    %c127 = arith.constant 127 : index
    %19 = vector.load %arg1[%c0_19, %c0_20, %c127] : memref<1x16x640xbf16, #tpu.memory_space<vmem>>, vector<1x16x384xbf16>
    %20 = vector.shape_cast %19 : vector<1x16x384xbf16> to vector<16x384xbf16>
    %c48 = arith.constant 48 : index
    %c0_21 = arith.constant 0 : index
    %21 = vector.load %arg6[%c48, %c0_21] : memref<144x384xbf16, #tpu.memory_space<vmem>>, vector<16x384xbf16>
    tpu.vector_store %arg6[%c48, %c0_21], %20 {strides = array<i32>} : memref<144x384xbf16, #tpu.memory_space<vmem>>, vector<16x384xbf16>,
    %c0_22 = arith.constant 0 : index
    %c0_23 = arith.constant 0 : index
    %c128 = arith.constant 128 : index
    %22 = vector.load %arg1[%c0_22, %c0_23, %c128] : memref<1x16x640xbf16, #tpu.memory_space<vmem>>, vector<1x16x384xbf16>
    %23 = vector.shape_cast %22 : vector<1x16x384xbf16> to vector<16x384xbf16>
    %c64 = arith.constant 64 : index
    %c0_24 = arith.constant 0 : index
    %24 = vector.load %arg6[%c64, %c0_24] : memref<144x384xbf16, #tpu.memory_space<vmem>>, vector<16x384xbf16>
    tpu.vector_store %arg6[%c64, %c0_24], %23 {strides = array<i32>} : memref<144x384xbf16, #tpu.memory_space<vmem>>, vector<16x384xbf16>,
    %c0_25 = arith.constant 0 : index
    %c0_26 = arith.constant 0 : index
    %c129 = arith.constant 129 : index
    %25 = vector.load %arg1[%c0_25, %c0_26, %c129] : memref<1x16x640xbf16, #tpu.memory_space<vmem>>, vector<1x16x384xbf16>
    %26 = vector.shape_cast %25 : vector<1x16x384xbf16> to vector<16x384xbf16>
    %c80 = arith.constant 80 : index
    %c0_27 = arith.constant 0 : index
    %27 = vector.load %arg6[%c80, %c0_27] : memref<144x384xbf16, #tpu.memory_space<vmem>>, vector<16x384xbf16>
    tpu.vector_store %arg6[%c80, %c0_27], %26 {strides = array<i32>} : memref<144x384xbf16, #tpu.memory_space<vmem>>, vector<16x384xbf16>,
    %c0_28 = arith.constant 0 : index
    %c0_29 = arith.constant 0 : index
    %c145 = arith.constant 145 : index
    %28 = vector.load %arg1[%c0_28, %c0_29, %c145] : memref<1x16x640xbf16, #tpu.memory_space<vmem>>, vector<1x16x384xbf16>
    %29 = vector.shape_cast %28 : vector<1x16x384xbf16> to vector<16x384xbf16>
    %c96 = arith.constant 96 : index
    %c0_30 = arith.constant 0 : index
    %30 = vector.load %arg6[%c96, %c0_30] : memref<144x384xbf16, #tpu.memory_space<vmem>>, vector<16x384xbf16>
    tpu.vector_store %arg6[%c96, %c0_30], %29 {strides = array<i32>} : memref<144x384xbf16, #tpu.memory_space<vmem>>, vector<16x384xbf16>,
    %c0_31 = arith.constant 0 : index
    %c0_32 = arith.constant 0 : index
    %c146 = arith.constant 146 : index
    %31 = vector.load %arg1[%c0_31, %c0_32, %c146] : memref<1x16x640xbf16, #tpu.memory_space<vmem>>, vector<1x16x384xbf16>
    %32 = vector.shape_cast %31 : vector<1x16x384xbf16> to vector<16x384xbf16>
    %c112 = arith.constant 112 : index
    %c0_33 = arith.constant 0 : index
    %33 = vector.load %arg6[%c112, %c0_33] : memref<144x384xbf16, #tpu.memory_space<vmem>>, vector<16x384xbf16>
    tpu.vector_store %arg6[%c112, %c0_33], %32 {strides = array<i32>} : memref<144x384xbf16, #tpu.memory_space<vmem>>, vector<16x384xbf16>,
    %c0_34 = arith.constant 0 : index
    %c0_35 = arith.constant 0 : index
    %c147 = arith.constant 147 : index
    %34 = vector.load %arg1[%c0_34, %c0_35, %c147] : memref<1x16x640xbf16, #tpu.memory_space<vmem>>, vector<1x16x384xbf16>
    %35 = vector.shape_cast %34 : vector<1x16x384xbf16> to vector<16x384xbf16>
    %c128_36 = arith.constant 128 : index
    %c0_37 = arith.constant 0 : index
    %36 = vector.load %arg6[%c128_36, %c0_37] : memref<144x384xbf16, #tpu.memory_space<vmem>>, vector<16x384xbf16>
    tpu.vector_store %arg6[%c128_36, %c0_37], %35 {strides = array<i32>} : memref<144x384xbf16, #tpu.memory_space<vmem>>, vector<16x384xbf16>,
    %c0_38 = arith.constant 0 : index
    %c0_39 = arith.constant 0 : index
    %37 = vector.load %arg6[%c0_38, %c0_39] : memref<144x384xbf16, #tpu.memory_space<vmem>>, vector<144x384xbf16>
    %cst_40 = arith.constant dense<0.000000e+00> : vector<2x384xf32>
    %38 = tpu.matmul %0, %37, %cst_40 {dimension_numbers = #tpu.dot_dimension_numbers<[1], [0], [0], [1], [0, 0, 1, 1], [], []>} : vector<2x144xbf16>, vector<144x384xbf16>, vector<2x384xf32> -> vector<2x384xf32>
    %39 = vector.broadcast %1 : vector<2x1xf32> to vector<2x384xf32>
    %40 = arith.addf %38, %39 : vector<2x384xf32>
    %41 = math.tanh %40 : vector<2x384xf32>
    %cst_41 = arith.constant 1.000000e-01 : f32
    %42 = vector.broadcast %cst_41 : f32 to vector<2x384xf32>
    %43 = arith.mulf %41, %42 : vector<2x384xf32>
    %cst_42 = arith.constant 0.000000e+00 : f32
    %44 = vector.broadcast %cst_42 : f32 to vector<2x384xf32>
    %45 = arith.addf %43, %44 : vector<2x384xf32>
    %c0_43 = arith.constant 0 : index
    %c0_44 = arith.constant 0 : index
    %46 = vector.load %arg4[%c0_43, %c0_44] : memref<1x384xf32, #tpu.memory_space<vmem>>, vector<1x384xf32>
    %47 = vector.broadcast %46 : vector<1x384xf32> to vector<2x384xf32>
    %48 = arith.mulf %45, %47 : vector<2x384xf32>
    %c0_45 = arith.constant 0 : index
    %c0_46 = arith.constant 0 : index
    %c128_47 = arith.constant 128 : index
    %49 = vector.load %arg5[%c0_45, %c0_46, %c128_47] : memref<1x2x640xf32, #tpu.memory_space<vmem>>, vector<1x2x384xf32>
    %50 = vector.shape_cast %49 : vector<1x2x384xf32> to vector<2x384xf32>
    %51 = vector.shape_cast %48 : vector<2x384xf32> to vector<1x2x384xf32>
    tpu.vector_store %arg5[%c0_45, %c0_46, %c128_47], %51 {strides = array<i32>} : memref<1x2x640xf32, #tpu.memory_space<vmem>>, vector<1x2x384xf32>,
    return
  }
  func.func @transform_0(%arg0: i32) -> (i32, i32, i32) {
    %c0_i32 = arith.constant 0 : i32
    %c0_i32_0 = arith.constant 0 : i32
    %c0_i32_1 = arith.constant 0 : i32
    return %arg0, %c0_i32, %c0_i32_0 : i32, i32, i32
  }
  func.func @transform_1(%arg0: i32) -> (i32, i32) {
    %c0_i32 = arith.constant 0 : i32
    %c0_i32_0 = arith.constant 0 : i32
    %c0_i32_1 = arith.constant 0 : i32
    return %c0_i32, %c0_i32_0 : i32, i32
  }
  func.func @transform_2(%arg0: i32) -> (i32, i32) {
    %c0_i32 = arith.constant 0 : i32
    %c0_i32_0 = arith.constant 0 : i32
    %c0_i32_1 = arith.constant 0 : i32
    return %c0_i32, %c0_i32_0 : i32, i32
  }
  func.func @transform_3(%arg0: i32) -> (i32, i32) {
    %c0_i32 = arith.constant 0 : i32
    %c0_i32_0 = arith.constant 0 : i32
    %c0_i32_1 = arith.constant 0 : i32
    return %c0_i32, %c0_i32_0 : i32, i32
  }
  func.func @transform_4(%arg0: i32) -> (i32, i32, i32) {
    %c0_i32 = arith.constant 0 : i32
    %c0_i32_0 = arith.constant 0 : i32
    %c0_i32_1 = arith.constant 0 : i32
    return %arg0, %c0_i32, %c0_i32_0 : i32, i32, i32
  }
}

module attributes {stable_mosaic.version = 11 : i64} {
  func.func @_conv3x3_kernel(%arg0: i32, %arg1: memref<1x4x640xbf16, #tpu.memory_space<vmem>>, %arg2: memref<9x16x4xbf16, #tpu.memory_space<vmem>>, %arg3: memref<16x1xf32, #tpu.memory_space<vmem>>, %arg4: memref<1x384xf32, #tpu.memory_space<vmem>>, %arg5: memref<1x16x640xbf16, #tpu.memory_space<vmem>>) attributes {dimension_semantics = [#tpu.dimension_semantics<parallel>], iteration_bounds = array<i64: 2>, scalar_prefetch = 0 : i64, scratch_operands = 0 : i64, tpu.core_type = #tpu.core_type<tc>, window_params = [{transform_indices = @transform_0, window_bounds = array<i64: 1, 4, 640>}, {pipeline_mode = #tpu.pipeline_mode<synchronous>, transform_indices = @transform_1, window_bounds = array<i64: 9, 16, 4>}, {pipeline_mode = #tpu.pipeline_mode<synchronous>, transform_indices = @transform_2, window_bounds = array<i64: 16, 1>}, {pipeline_mode = #tpu.pipeline_mode<synchronous>, transform_indices = @transform_3, window_bounds = array<i64: 1, 384>}, {transform_indices = @transform_4, window_bounds = array<i64: 1, 16, 640>}]} {
    %c0 = arith.constant 0 : index
    %c0_0 = arith.constant 0 : index
    %c0_1 = arith.constant 0 : index
    %0 = vector.load %arg2[%c0, %c0_0, %c0_1] : memref<9x16x4xbf16, #tpu.memory_space<vmem>>, vector<9x16x4xbf16>
    %c0_2 = arith.constant 0 : index
    %c0_3 = arith.constant 0 : index
    %1 = vector.load %arg3[%c0_2, %c0_3] : memref<16x1xf32, #tpu.memory_space<vmem>>, vector<16x1xf32>
    %cst = arith.constant 0.000000e+00 : bf16
    %2 = vector.broadcast %cst : bf16 to vector<16x128xbf16>
    %c0_4 = arith.constant 0 : index
    %c0_5 = arith.constant 0 : index
    %c0_6 = arith.constant 0 : index
    %3 = vector.load %arg5[%c0_4, %c0_5, %c0_6] : memref<1x16x640xbf16, #tpu.memory_space<vmem>>, vector<1x16x128xbf16>
    %4 = vector.shape_cast %3 : vector<1x16x128xbf16> to vector<16x128xbf16>
    %5 = vector.shape_cast %2 : vector<16x128xbf16> to vector<1x16x128xbf16>
    tpu.vector_store %arg5[%c0_4, %c0_5, %c0_6], %5 {strides = array<i32>} : memref<1x16x640xbf16, #tpu.memory_space<vmem>>, vector<1x16x128xbf16>,
    %cst_7 = arith.constant 0.000000e+00 : bf16
    %6 = vector.broadcast %cst_7 : bf16 to vector<16x128xbf16>
    %c0_8 = arith.constant 0 : index
    %c0_9 = arith.constant 0 : index
    %c512 = arith.constant 512 : index
    %7 = vector.load %arg5[%c0_8, %c0_9, %c512] : memref<1x16x640xbf16, #tpu.memory_space<vmem>>, vector<1x16x128xbf16>
    %8 = vector.shape_cast %7 : vector<1x16x128xbf16> to vector<16x128xbf16>
    %9 = vector.shape_cast %6 : vector<16x128xbf16> to vector<1x16x128xbf16>
    tpu.vector_store %arg5[%c0_8, %c0_9, %c512], %9 {strides = array<i32>} : memref<1x16x640xbf16, #tpu.memory_space<vmem>>, vector<1x16x128xbf16>,
    %c0_10 = arith.constant 0 : index
    %c0_11 = arith.constant 0 : index
    %c109 = arith.constant 109 : index
    %10 = vector.load %arg1[%c0_10, %c0_11, %c109] : memref<1x4x640xbf16, #tpu.memory_space<vmem>>, vector<1x4x384xbf16>
    %11 = vector.shape_cast %10 : vector<1x4x384xbf16> to vector<4x384xbf16>
    %12 = vector.extract_strided_slice %0 {offsets = [0, 0, 0], sizes = [1, 16, 4], strides = [1, 1, 1]} : vector<9x16x4xbf16> to vector<1x16x4xbf16>
    %13 = vector.shape_cast %12 : vector<1x16x4xbf16> to vector<16x4xbf16>
    %cst_12 = arith.constant dense<0.000000e+00> : vector<16x384xf32>
    %14 = tpu.matmul %13, %11, %cst_12 {dimension_numbers = #tpu.dot_dimension_numbers<[1], [0], [0], [1], [0, 0, 1, 1], [], []>} : vector<16x4xbf16>, vector<4x384xbf16>, vector<16x384xf32> -> vector<16x384xf32>
    %c0_13 = arith.constant 0 : index
    %c0_14 = arith.constant 0 : index
    %c110 = arith.constant 110 : index
    %15 = vector.load %arg1[%c0_13, %c0_14, %c110] : memref<1x4x640xbf16, #tpu.memory_space<vmem>>, vector<1x4x384xbf16>
    %16 = vector.shape_cast %15 : vector<1x4x384xbf16> to vector<4x384xbf16>
    %17 = vector.extract_strided_slice %0 {offsets = [1, 0, 0], sizes = [1, 16, 4], strides = [1, 1, 1]} : vector<9x16x4xbf16> to vector<1x16x4xbf16>
    %18 = vector.shape_cast %17 : vector<1x16x4xbf16> to vector<16x4xbf16>
    %cst_15 = arith.constant dense<0.000000e+00> : vector<16x384xf32>
    %19 = tpu.matmul %18, %16, %cst_15 {dimension_numbers = #tpu.dot_dimension_numbers<[1], [0], [0], [1], [0, 0, 1, 1], [], []>} : vector<16x4xbf16>, vector<4x384xbf16>, vector<16x384xf32> -> vector<16x384xf32>
    %20 = arith.addf %14, %19 : vector<16x384xf32>
    %c0_16 = arith.constant 0 : index
    %c0_17 = arith.constant 0 : index
    %c111 = arith.constant 111 : index
    %21 = vector.load %arg1[%c0_16, %c0_17, %c111] : memref<1x4x640xbf16, #tpu.memory_space<vmem>>, vector<1x4x384xbf16>
    %22 = vector.shape_cast %21 : vector<1x4x384xbf16> to vector<4x384xbf16>
    %23 = vector.extract_strided_slice %0 {offsets = [2, 0, 0], sizes = [1, 16, 4], strides = [1, 1, 1]} : vector<9x16x4xbf16> to vector<1x16x4xbf16>
    %24 = vector.shape_cast %23 : vector<1x16x4xbf16> to vector<16x4xbf16>
    %cst_18 = arith.constant dense<0.000000e+00> : vector<16x384xf32>
    %25 = tpu.matmul %24, %22, %cst_18 {dimension_numbers = #tpu.dot_dimension_numbers<[1], [0], [0], [1], [0, 0, 1, 1], [], []>} : vector<16x4xbf16>, vector<4x384xbf16>, vector<16x384xf32> -> vector<16x384xf32>
    %26 = arith.addf %20, %25 : vector<16x384xf32>
    %c0_19 = arith.constant 0 : index
    %c0_20 = arith.constant 0 : index
    %c127 = arith.constant 127 : index
    %27 = vector.load %arg1[%c0_19, %c0_20, %c127] : memref<1x4x640xbf16, #tpu.memory_space<vmem>>, vector<1x4x384xbf16>
    %28 = vector.shape_cast %27 : vector<1x4x384xbf16> to vector<4x384xbf16>
    %29 = vector.extract_strided_slice %0 {offsets = [3, 0, 0], sizes = [1, 16, 4], strides = [1, 1, 1]} : vector<9x16x4xbf16> to vector<1x16x4xbf16>
    %30 = vector.shape_cast %29 : vector<1x16x4xbf16> to vector<16x4xbf16>
    %cst_21 = arith.constant dense<0.000000e+00> : vector<16x384xf32>
    %31 = tpu.matmul %30, %28, %cst_21 {dimension_numbers = #tpu.dot_dimension_numbers<[1], [0], [0], [1], [0, 0, 1, 1], [], []>} : vector<16x4xbf16>, vector<4x384xbf16>, vector<16x384xf32> -> vector<16x384xf32>
    %32 = arith.addf %26, %31 : vector<16x384xf32>
    %c0_22 = arith.constant 0 : index
    %c0_23 = arith.constant 0 : index
    %c128 = arith.constant 128 : index
    %33 = vector.load %arg1[%c0_22, %c0_23, %c128] : memref<1x4x640xbf16, #tpu.memory_space<vmem>>, vector<1x4x384xbf16>
    %34 = vector.shape_cast %33 : vector<1x4x384xbf16> to vector<4x384xbf16>
    %35 = vector.extract_strided_slice %0 {offsets = [4, 0, 0], sizes = [1, 16, 4], strides = [1, 1, 1]} : vector<9x16x4xbf16> to vector<1x16x4xbf16>
    %36 = vector.shape_cast %35 : vector<1x16x4xbf16> to vector<16x4xbf16>
    %cst_24 = arith.constant dense<0.000000e+00> : vector<16x384xf32>
    %37 = tpu.matmul %36, %34, %cst_24 {dimension_numbers = #tpu.dot_dimension_numbers<[1], [0], [0], [1], [0, 0, 1, 1], [], []>} : vector<16x4xbf16>, vector<4x384xbf16>, vector<16x384xf32> -> vector<16x384xf32>
    %38 = arith.addf %32, %37 : vector<16x384xf32>
    %c0_25 = arith.constant 0 : index
    %c0_26 = arith.constant 0 : index
    %c129 = arith.constant 129 : index
    %39 = vector.load %arg1[%c0_25, %c0_26, %c129] : memref<1x4x640xbf16, #tpu.memory_space<vmem>>, vector<1x4x384xbf16>
    %40 = vector.shape_cast %39 : vector<1x4x384xbf16> to vector<4x384xbf16>
    %41 = vector.extract_strided_slice %0 {offsets = [5, 0, 0], sizes = [1, 16, 4], strides = [1, 1, 1]} : vector<9x16x4xbf16> to vector<1x16x4xbf16>
    %42 = vector.shape_cast %41 : vector<1x16x4xbf16> to vector<16x4xbf16>
    %cst_27 = arith.constant dense<0.000000e+00> : vector<16x384xf32>
    %43 = tpu.matmul %42, %40, %cst_27 {dimension_numbers = #tpu.dot_dimension_numbers<[1], [0], [0], [1], [0, 0, 1, 1], [], []>} : vector<16x4xbf16>, vector<4x384xbf16>, vector<16x384xf32> -> vector<16x384xf32>
    %44 = arith.addf %38, %43 : vector<16x384xf32>
    %c0_28 = arith.constant 0 : index
    %c0_29 = arith.constant 0 : index
    %c145 = arith.constant 145 : index
    %45 = vector.load %arg1[%c0_28, %c0_29, %c145] : memref<1x4x640xbf16, #tpu.memory_space<vmem>>, vector<1x4x384xbf16>
    %46 = vector.shape_cast %45 : vector<1x4x384xbf16> to vector<4x384xbf16>
    %47 = vector.extract_strided_slice %0 {offsets = [6, 0, 0], sizes = [1, 16, 4], strides = [1, 1, 1]} : vector<9x16x4xbf16> to vector<1x16x4xbf16>
    %48 = vector.shape_cast %47 : vector<1x16x4xbf16> to vector<16x4xbf16>
    %cst_30 = arith.constant dense<0.000000e+00> : vector<16x384xf32>
    %49 = tpu.matmul %48, %46, %cst_30 {dimension_numbers = #tpu.dot_dimension_numbers<[1], [0], [0], [1], [0, 0, 1, 1], [], []>} : vector<16x4xbf16>, vector<4x384xbf16>, vector<16x384xf32> -> vector<16x384xf32>
    %50 = arith.addf %44, %49 : vector<16x384xf32>
    %c0_31 = arith.constant 0 : index
    %c0_32 = arith.constant 0 : index
    %c146 = arith.constant 146 : index
    %51 = vector.load %arg1[%c0_31, %c0_32, %c146] : memref<1x4x640xbf16, #tpu.memory_space<vmem>>, vector<1x4x384xbf16>
    %52 = vector.shape_cast %51 : vector<1x4x384xbf16> to vector<4x384xbf16>
    %53 = vector.extract_strided_slice %0 {offsets = [7, 0, 0], sizes = [1, 16, 4], strides = [1, 1, 1]} : vector<9x16x4xbf16> to vector<1x16x4xbf16>
    %54 = vector.shape_cast %53 : vector<1x16x4xbf16> to vector<16x4xbf16>
    %cst_33 = arith.constant dense<0.000000e+00> : vector<16x384xf32>
    %55 = tpu.matmul %54, %52, %cst_33 {dimension_numbers = #tpu.dot_dimension_numbers<[1], [0], [0], [1], [0, 0, 1, 1], [], []>} : vector<16x4xbf16>, vector<4x384xbf16>, vector<16x384xf32> -> vector<16x384xf32>
    %56 = arith.addf %50, %55 : vector<16x384xf32>
    %c0_34 = arith.constant 0 : index
    %c0_35 = arith.constant 0 : index
    %c147 = arith.constant 147 : index
    %57 = vector.load %arg1[%c0_34, %c0_35, %c147] : memref<1x4x640xbf16, #tpu.memory_space<vmem>>, vector<1x4x384xbf16>
    %58 = vector.shape_cast %57 : vector<1x4x384xbf16> to vector<4x384xbf16>
    %59 = vector.extract_strided_slice %0 {offsets = [8, 0, 0], sizes = [1, 16, 4], strides = [1, 1, 1]} : vector<9x16x4xbf16> to vector<1x16x4xbf16>
    %60 = vector.shape_cast %59 : vector<1x16x4xbf16> to vector<16x4xbf16>
    %cst_36 = arith.constant dense<0.000000e+00> : vector<16x384xf32>
    %61 = tpu.matmul %60, %58, %cst_36 {dimension_numbers = #tpu.dot_dimension_numbers<[1], [0], [0], [1], [0, 0, 1, 1], [], []>} : vector<16x4xbf16>, vector<4x384xbf16>, vector<16x384xf32> -> vector<16x384xf32>
    %62 = arith.addf %56, %61 : vector<16x384xf32>
    %63 = vector.broadcast %1 : vector<16x1xf32> to vector<16x384xf32>
    %64 = arith.addf %62, %63 : vector<16x384xf32>
    %cst_37 = arith.constant 0.000000e+00 : f32
    %65 = vector.broadcast %cst_37 : f32 to vector<16x384xf32>
    %66 = arith.cmpf oge, %64, %65 : vector<16x384xf32>
    %cst_38 = arith.constant 2.000000e-01 : f32
    %67 = vector.broadcast %cst_38 : f32 to vector<16x384xf32>
    %68 = arith.mulf %67, %64 : vector<16x384xf32>
    %69 = arith.select %66, %64, %68 : vector<16x384xi1>, vector<16x384xf32>
    %c0_39 = arith.constant 0 : index
    %c0_40 = arith.constant 0 : index
    %70 = vector.load %arg4[%c0_39, %c0_40] : memref<1x384xf32, #tpu.memory_space<vmem>>, vector<1x384xf32>
    %71 = vector.broadcast %70 : vector<1x384xf32> to vector<16x384xf32>
    %72 = arith.mulf %69, %71 : vector<16x384xf32>
    %73 = arith.truncf %72 : vector<16x384xf32> to vector<16x384xbf16>
    %c0_41 = arith.constant 0 : index
    %c0_42 = arith.constant 0 : index
    %c128_43 = arith.constant 128 : index
    %74 = vector.load %arg5[%c0_41, %c0_42, %c128_43] : memref<1x16x640xbf16, #tpu.memory_space<vmem>>, vector<1x16x384xbf16>
    %75 = vector.shape_cast %74 : vector<1x16x384xbf16> to vector<16x384xbf16>
    %76 = vector.shape_cast %73 : vector<16x384xbf16> to vector<1x16x384xbf16>
    tpu.vector_store %arg5[%c0_41, %c0_42, %c128_43], %76 {strides = array<i32>} : memref<1x16x640xbf16, #tpu.memory_space<vmem>>, vector<1x16x384xbf16>,
    return
  }
  func.func @transform_0(%arg0: i32) -> (i32, i32, i32) {
    %c0_i32 = arith.constant 0 : i32
    %c0_i32_0 = arith.constant 0 : i32
    %c0_i32_1 = arith.constant 0 : i32
    return %arg0, %c0_i32, %c0_i32_0 : i32, i32, i32
  }
  func.func @transform_1(%arg0: i32) -> (i32, i32, i32) {
    %c0_i32 = arith.constant 0 : i32
    %c0_i32_0 = arith.constant 0 : i32
    %c0_i32_1 = arith.constant 0 : i32
    %c0_i32_2 = arith.constant 0 : i32
    return %c0_i32, %c0_i32_0, %c0_i32_1 : i32, i32, i32
  }
  func.func @transform_2(%arg0: i32) -> (i32, i32) {
    %c0_i32 = arith.constant 0 : i32
    %c0_i32_0 = arith.constant 0 : i32
    %c0_i32_1 = arith.constant 0 : i32
    return %c0_i32, %c0_i32_0 : i32, i32
  }
  func.func @transform_3(%arg0: i32) -> (i32, i32) {
    %c0_i32 = arith.constant 0 : i32
    %c0_i32_0 = arith.constant 0 : i32
    %c0_i32_1 = arith.constant 0 : i32
    return %c0_i32, %c0_i32_0 : i32, i32
  }
  func.func @transform_4(%arg0: i32) -> (i32, i32, i32) {
    %c0_i32 = arith.constant 0 : i32
    %c0_i32_0 = arith.constant 0 : i32
    %c0_i32_1 = arith.constant 0 : i32
    return %arg0, %c0_i32, %c0_i32_0 : i32, i32, i32
  }
}

module attributes {stable_mosaic.version = 11 : i64} {
  func.func @_conv3x3_kernel(%arg0: i32, %arg1: memref<1x16x640xbf16, #tpu.memory_space<vmem>>, %arg2: memref<1x144xbf16, #tpu.memory_space<vmem>>, %arg3: memref<1x1xf32, #tpu.memory_space<vmem>>, %arg4: memref<1x384xf32, #tpu.memory_space<vmem>>, %arg5: memref<1x1x640xf32, #tpu.memory_space<vmem>>, %arg6: memref<144x384xbf16, #tpu.memory_space<vmem>>) attributes {dimension_semantics = [#tpu.dimension_semantics<parallel>], iteration_bounds = array<i64: 2>, scalar_prefetch = 0 : i64, scratch_operands = 1 : i64, tpu.core_type = #tpu.core_type<tc>, window_params = [{transform_indices = @transform_0, window_bounds = array<i64: 1, 16, 640>}, {pipeline_mode = #tpu.pipeline_mode<synchronous>, transform_indices = @transform_1, window_bounds = array<i64: 1, 144>}, {pipeline_mode = #tpu.pipeline_mode<synchronous>, transform_indices = @transform_2, window_bounds = array<i64: 1, 1>}, {pipeline_mode = #tpu.pipeline_mode<synchronous>, transform_indices = @transform_3, window_bounds = array<i64: 1, 384>}, {transform_indices = @transform_4, window_bounds = array<i64: 1, 1, 640>}]} {
    %c0 = arith.constant 0 : index
    %c0_0 = arith.constant 0 : index
    %0 = vector.load %arg2[%c0, %c0_0] : memref<1x144xbf16, #tpu.memory_space<vmem>>, vector<1x144xbf16>
    %c0_1 = arith.constant 0 : index
    %c0_2 = arith.constant 0 : index
    %1 = vector.load %arg3[%c0_1, %c0_2] : memref<1x1xf32, #tpu.memory_space<vmem>>, vector<1x1xf32>
    %cst = arith.constant 0.000000e+00 : f32
    %2 = vector.broadcast %cst : f32 to vector<1x128xf32>
    %c0_3 = arith.constant 0 : index
    %c0_4 = arith.constant 0 : index
    %c0_5 = arith.constant 0 : index
    %3 = vector.load %arg5[%c0_3, %c0_4, %c0_5] : memref<1x1x640xf32, #tpu.memory_space<vmem>>, vector<1x1x128xf32>
    %4 = vector.shape_cast %3 : vector<1x1x128xf32> to vector<1x128xf32>
    %5 = vector.shape_cast %2 : vector<1x128xf32> to vector<1x1x128xf32>
    tpu.vector_store %arg5[%c0_3, %c0_4, %c0_5], %5 {strides = array<i32>} : memref<1x1x640xf32, #tpu.memory_space<vmem>>, vector<1x1x128xf32>,
    %cst_6 = arith.constant 0.000000e+00 : f32
    %6 = vector.broadcast %cst_6 : f32 to vector<1x128xf32>
    %c0_7 = arith.constant 0 : index
    %c0_8 = arith.constant 0 : index
    %c512 = arith.constant 512 : index
    %7 = vector.load %arg5[%c0_7, %c0_8, %c512] : memref<1x1x640xf32, #tpu.memory_space<vmem>>, vector<1x1x128xf32>
    %8 = vector.shape_cast %7 : vector<1x1x128xf32> to vector<1x128xf32>
    %9 = vector.shape_cast %6 : vector<1x128xf32> to vector<1x1x128xf32>
    tpu.vector_store %arg5[%c0_7, %c0_8, %c512], %9 {strides = array<i32>} : memref<1x1x640xf32, #tpu.memory_space<vmem>>, vector<1x1x128xf32>,
    %c0_9 = arith.constant 0 : index
    %c0_10 = arith.constant 0 : index
    %c109 = arith.constant 109 : index
    %10 = vector.load %arg1[%c0_9, %c0_10, %c109] : memref<1x16x640xbf16, #tpu.memory_space<vmem>>, vector<1x16x384xbf16>
    %11 = vector.shape_cast %10 : vector<1x16x384xbf16> to vector<16x384xbf16>
    %c0_11 = arith.constant 0 : index
    %c0_12 = arith.constant 0 : index
    %12 = vector.load %arg6[%c0_11, %c0_12] : memref<144x384xbf16, #tpu.memory_space<vmem>>, vector<16x384xbf16>
    tpu.vector_store %arg6[%c0_11, %c0_12], %11 {strides = array<i32>} : memref<144x384xbf16, #tpu.memory_space<vmem>>, vector<16x384xbf16>,
    %c0_13 = arith.constant 0 : index
    %c0_14 = arith.constant 0 : index
    %c110 = arith.constant 110 : index
    %13 = vector.load %arg1[%c0_13, %c0_14, %c110] : memref<1x16x640xbf16, #tpu.memory_space<vmem>>, vector<1x16x384xbf16>
    %14 = vector.shape_cast %13 : vector<1x16x384xbf16> to vector<16x384xbf16>
    %c16 = arith.constant 16 : index
    %c0_15 = arith.constant 0 : index
    %15 = vector.load %arg6[%c16, %c0_15] : memref<144x384xbf16, #tpu.memory_space<vmem>>, vector<16x384xbf16>
    tpu.vector_store %arg6[%c16, %c0_15], %14 {strides = array<i32>} : memref<144x384xbf16, #tpu.memory_space<vmem>>, vector<16x384xbf16>,
    %c0_16 = arith.constant 0 : index
    %c0_17 = arith.constant 0 : index
    %c111 = arith.constant 111 : index
    %16 = vector.load %arg1[%c0_16, %c0_17, %c111] : memref<1x16x640xbf16, #tpu.memory_space<vmem>>, vector<1x16x384xbf16>
    %17 = vector.shape_cast %16 : vector<1x16x384xbf16> to vector<16x384xbf16>
    %c32 = arith.constant 32 : index
    %c0_18 = arith.constant 0 : index
    %18 = vector.load %arg6[%c32, %c0_18] : memref<144x384xbf16, #tpu.memory_space<vmem>>, vector<16x384xbf16>
    tpu.vector_store %arg6[%c32, %c0_18], %17 {strides = array<i32>} : memref<144x384xbf16, #tpu.memory_space<vmem>>, vector<16x384xbf16>,
    %c0_19 = arith.constant 0 : index
    %c0_20 = arith.constant 0 : index
    %c127 = arith.constant 127 : index
    %19 = vector.load %arg1[%c0_19, %c0_20, %c127] : memref<1x16x640xbf16, #tpu.memory_space<vmem>>, vector<1x16x384xbf16>
    %20 = vector.shape_cast %19 : vector<1x16x384xbf16> to vector<16x384xbf16>
    %c48 = arith.constant 48 : index
    %c0_21 = arith.constant 0 : index
    %21 = vector.load %arg6[%c48, %c0_21] : memref<144x384xbf16, #tpu.memory_space<vmem>>, vector<16x384xbf16>
    tpu.vector_store %arg6[%c48, %c0_21], %20 {strides = array<i32>} : memref<144x384xbf16, #tpu.memory_space<vmem>>, vector<16x384xbf16>,
    %c0_22 = arith.constant 0 : index
    %c0_23 = arith.constant 0 : index
    %c128 = arith.constant 128 : index
    %22 = vector.load %arg1[%c0_22, %c0_23, %c128] : memref<1x16x640xbf16, #tpu.memory_space<vmem>>, vector<1x16x384xbf16>
    %23 = vector.shape_cast %22 : vector<1x16x384xbf16> to vector<16x384xbf16>
    %c64 = arith.constant 64 : index
    %c0_24 = arith.constant 0 : index
    %24 = vector.load %arg6[%c64, %c0_24] : memref<144x384xbf16, #tpu.memory_space<vmem>>, vector<16x384xbf16>
    tpu.vector_store %arg6[%c64, %c0_24], %23 {strides = array<i32>} : memref<144x384xbf16, #tpu.memory_space<vmem>>, vector<16x384xbf16>,
    %c0_25 = arith.constant 0 : index
    %c0_26 = arith.constant 0 : index
    %c129 = arith.constant 129 : index
    %25 = vector.load %arg1[%c0_25, %c0_26, %c129] : memref<1x16x640xbf16, #tpu.memory_space<vmem>>, vector<1x16x384xbf16>
    %26 = vector.shape_cast %25 : vector<1x16x384xbf16> to vector<16x384xbf16>
    %c80 = arith.constant 80 : index
    %c0_27 = arith.constant 0 : index
    %27 = vector.load %arg6[%c80, %c0_27] : memref<144x384xbf16, #tpu.memory_space<vmem>>, vector<16x384xbf16>
    tpu.vector_store %arg6[%c80, %c0_27], %26 {strides = array<i32>} : memref<144x384xbf16, #tpu.memory_space<vmem>>, vector<16x384xbf16>,
    %c0_28 = arith.constant 0 : index
    %c0_29 = arith.constant 0 : index
    %c145 = arith.constant 145 : index
    %28 = vector.load %arg1[%c0_28, %c0_29, %c145] : memref<1x16x640xbf16, #tpu.memory_space<vmem>>, vector<1x16x384xbf16>
    %29 = vector.shape_cast %28 : vector<1x16x384xbf16> to vector<16x384xbf16>
    %c96 = arith.constant 96 : index
    %c0_30 = arith.constant 0 : index
    %30 = vector.load %arg6[%c96, %c0_30] : memref<144x384xbf16, #tpu.memory_space<vmem>>, vector<16x384xbf16>
    tpu.vector_store %arg6[%c96, %c0_30], %29 {strides = array<i32>} : memref<144x384xbf16, #tpu.memory_space<vmem>>, vector<16x384xbf16>,
    %c0_31 = arith.constant 0 : index
    %c0_32 = arith.constant 0 : index
    %c146 = arith.constant 146 : index
    %31 = vector.load %arg1[%c0_31, %c0_32, %c146] : memref<1x16x640xbf16, #tpu.memory_space<vmem>>, vector<1x16x384xbf16>
    %32 = vector.shape_cast %31 : vector<1x16x384xbf16> to vector<16x384xbf16>
    %c112 = arith.constant 112 : index
    %c0_33 = arith.constant 0 : index
    %33 = vector.load %arg6[%c112, %c0_33] : memref<144x384xbf16, #tpu.memory_space<vmem>>, vector<16x384xbf16>
    tpu.vector_store %arg6[%c112, %c0_33], %32 {strides = array<i32>} : memref<144x384xbf16, #tpu.memory_space<vmem>>, vector<16x384xbf16>,
    %c0_34 = arith.constant 0 : index
    %c0_35 = arith.constant 0 : index
    %c147 = arith.constant 147 : index
    %34 = vector.load %arg1[%c0_34, %c0_35, %c147] : memref<1x16x640xbf16, #tpu.memory_space<vmem>>, vector<1x16x384xbf16>
    %35 = vector.shape_cast %34 : vector<1x16x384xbf16> to vector<16x384xbf16>
    %c128_36 = arith.constant 128 : index
    %c0_37 = arith.constant 0 : index
    %36 = vector.load %arg6[%c128_36, %c0_37] : memref<144x384xbf16, #tpu.memory_space<vmem>>, vector<16x384xbf16>
    tpu.vector_store %arg6[%c128_36, %c0_37], %35 {strides = array<i32>} : memref<144x384xbf16, #tpu.memory_space<vmem>>, vector<16x384xbf16>,
    %c0_38 = arith.constant 0 : index
    %c0_39 = arith.constant 0 : index
    %37 = vector.load %arg6[%c0_38, %c0_39] : memref<144x384xbf16, #tpu.memory_space<vmem>>, vector<144x384xbf16>
    %cst_40 = arith.constant dense<0.000000e+00> : vector<1x384xf32>
    %38 = tpu.matmul %0, %37, %cst_40 {dimension_numbers = #tpu.dot_dimension_numbers<[1], [0], [0], [1], [0, 0, 1, 1], [], []>} : vector<1x144xbf16>, vector<144x384xbf16>, vector<1x384xf32> -> vector<1x384xf32>
    %39 = vector.broadcast %1 : vector<1x1xf32> to vector<1x384xf32>
    %40 = arith.addf %38, %39 : vector<1x384xf32>
    %41 = math.tanh %40 : vector<1x384xf32>
    %cst_41 = arith.constant 5.000000e-01 : f32
    %42 = vector.broadcast %cst_41 : f32 to vector<1x384xf32>
    %43 = arith.mulf %41, %42 : vector<1x384xf32>
    %cst_42 = arith.constant 5.000000e-01 : f32
    %44 = vector.broadcast %cst_42 : f32 to vector<1x384xf32>
    %45 = arith.addf %43, %44 : vector<1x384xf32>
    %c0_43 = arith.constant 0 : index
    %c0_44 = arith.constant 0 : index
    %46 = vector.load %arg4[%c0_43, %c0_44] : memref<1x384xf32, #tpu.memory_space<vmem>>, vector<1x384xf32>
    %47 = arith.mulf %45, %46 : vector<1x384xf32>
    %c0_45 = arith.constant 0 : index
    %c0_46 = arith.constant 0 : index
    %c128_47 = arith.constant 128 : index
    %48 = vector.load %arg5[%c0_45, %c0_46, %c128_47] : memref<1x1x640xf32, #tpu.memory_space<vmem>>, vector<1x1x384xf32>
    %49 = vector.shape_cast %48 : vector<1x1x384xf32> to vector<1x384xf32>
    %50 = vector.shape_cast %47 : vector<1x384xf32> to vector<1x1x384xf32>
    tpu.vector_store %arg5[%c0_45, %c0_46, %c128_47], %50 {strides = array<i32>} : memref<1x1x640xf32, #tpu.memory_space<vmem>>, vector<1x1x384xf32>,
    return
  }
  func.func @transform_0(%arg0: i32) -> (i32, i32, i32) {
    %c0_i32 = arith.constant 0 : i32
    %c0_i32_0 = arith.constant 0 : i32
    %c0_i32_1 = arith.constant 0 : i32
    return %arg0, %c0_i32, %c0_i32_0 : i32, i32, i32
  }
  func.func @transform_1(%arg0: i32) -> (i32, i32) {
    %c0_i32 = arith.constant 0 : i32
    %c0_i32_0 = arith.constant 0 : i32
    %c0_i32_1 = arith.constant 0 : i32
    return %c0_i32, %c0_i32_0 : i32, i32
  }
  func.func @transform_2(%arg0: i32) -> (i32, i32) {
    %c0_i32 = arith.constant 0 : i32
    %c0_i32_0 = arith.constant 0 : i32
    %c0_i32_1 = arith.constant 0 : i32
    return %c0_i32, %c0_i32_0 : i32, i32
  }
  func.func @transform_3(%arg0: i32) -> (i32, i32) {
    %c0_i32 = arith.constant 0 : i32
    %c0_i32_0 = arith.constant 0 : i32
    %c0_i32_1 = arith.constant 0 : i32
    return %c0_i32, %c0_i32_0 : i32, i32
  }
  func.func @transform_4(%arg0: i32) -> (i32, i32, i32) {
    %c0_i32 = arith.constant 0 : i32
    %c0_i32_0 = arith.constant 0 : i32
    %c0_i32_1 = arith.constant 0 : i32
    return %arg0, %c0_i32, %c0_i32_0 : i32, i32, i32
  }
}

module attributes {stable_mosaic.version = 11 : i64} {
  func.func @_fuse_color_kernel(%arg0: i32, %arg1: memref<1x1x8x128xf32, #tpu.memory_space<vmem>>, %arg2: memref<1x3x8x128xf32, #tpu.memory_space<vmem>>, %arg3: memref<1x3x8x128xf32, #tpu.memory_space<vmem>>) attributes {dimension_semantics = [#tpu.dimension_semantics<parallel>], iteration_bounds = array<i64: 2>, scalar_prefetch = 0 : i64, scratch_operands = 0 : i64, tpu.core_type = #tpu.core_type<tc>, window_params = [{transform_indices = @transform_0, window_bounds = array<i64: 1, 1, 8, 128>}, {transform_indices = @transform_1, window_bounds = array<i64: 1, 3, 8, 128>}, {transform_indices = @transform_2, window_bounds = array<i64: 1, 3, 8, 128>}]} {
    %c0 = arith.constant 0 : index
    %c0_0 = arith.constant 0 : index
    %c0_1 = arith.constant 0 : index
    %c0_2 = arith.constant 0 : index
    %0 = vector.load %arg1[%c0, %c0_0, %c0_1, %c0_2] : memref<1x1x8x128xf32, #tpu.memory_space<vmem>>, vector<1x1x8x128xf32>
    %1 = vector.shape_cast %0 : vector<1x1x8x128xf32> to vector<8x128xf32>
    %c0_3 = arith.constant 0 : index
    %c0_4 = arith.constant 0 : index
    %c0_5 = arith.constant 0 : index
    %c0_6 = arith.constant 0 : index
    %2 = vector.load %arg2[%c0_3, %c0_4, %c0_5, %c0_6] : memref<1x3x8x128xf32, #tpu.memory_space<vmem>>, vector<1x1x8x128xf32>
    %3 = vector.shape_cast %2 : vector<1x1x8x128xf32> to vector<8x128xf32>
    %c0_7 = arith.constant 0 : index
    %c1 = arith.constant 1 : index
    %c0_8 = arith.constant 0 : index
    %c0_9 = arith.constant 0 : index
    %4 = vector.load %arg2[%c0_7, %c1, %c0_8, %c0_9] : memref<1x3x8x128xf32, #tpu.memory_space<vmem>>, vector<1x1x8x128xf32>
    %5 = vector.shape_cast %4 : vector<1x1x8x128xf32> to vector<8x128xf32>
    %c0_10 = arith.constant 0 : index
    %c2 = arith.constant 2 : index
    %c0_11 = arith.constant 0 : index
    %c0_12 = arith.constant 0 : index
    %6 = vector.load %arg2[%c0_10, %c2, %c0_11, %c0_12] : memref<1x3x8x128xf32, #tpu.memory_space<vmem>>, vector<1x1x8x128xf32>
    %7 = vector.shape_cast %6 : vector<1x1x8x128xf32> to vector<8x128xf32>
    %cst = arith.constant 2.990000e-01 : f32
    %8 = vector.broadcast %cst : f32 to vector<8x128xf32>
    %9 = arith.mulf %8, %3 : vector<8x128xf32>
    %cst_13 = arith.constant 5.870000e-01 : f32
    %10 = vector.broadcast %cst_13 : f32 to vector<8x128xf32>
    %11 = arith.mulf %10, %5 : vector<8x128xf32>
    %12 = arith.addf %9, %11 : vector<8x128xf32>
    %cst_14 = arith.constant 1.140000e-01 : f32
    %13 = vector.broadcast %cst_14 : f32 to vector<8x128xf32>
    %14 = arith.mulf %13, %7 : vector<8x128xf32>
    %15 = arith.addf %12, %14 : vector<8x128xf32>
    %16 = arith.subf %3, %15 : vector<8x128xf32>
    %cst_15 = arith.constant 0.712999999 : f32
    %17 = vector.broadcast %cst_15 : f32 to vector<8x128xf32>
    %18 = arith.mulf %16, %17 : vector<8x128xf32>
    %19 = arith.subf %7, %15 : vector<8x128xf32>
    %cst_16 = arith.constant 5.640000e-01 : f32
    %20 = vector.broadcast %cst_16 : f32 to vector<8x128xf32>
    %21 = arith.mulf %19, %20 : vector<8x128xf32>
    %cst_17 = arith.constant 1.403000e+00 : f32
    %22 = vector.broadcast %cst_17 : f32 to vector<8x128xf32>
    %23 = arith.mulf %22, %18 : vector<8x128xf32>
    %24 = arith.addf %1, %23 : vector<8x128xf32>
    %cst_18 = arith.constant 0.000000e+00 : f32
    %cst_19 = arith.constant 1.000000e+00 : f32
    %25 = vector.broadcast %cst_18 : f32 to vector<8x128xf32>
    %26 = arith.maximumf %25, %24 : vector<8x128xf32>
    %27 = vector.broadcast %cst_19 : f32 to vector<8x128xf32>
    %28 = arith.minimumf %27, %26 : vector<8x128xf32>
    %c0_20 = arith.constant 0 : index
    %c0_21 = arith.constant 0 : index
    %c0_22 = arith.constant 0 : index
    %c0_23 = arith.constant 0 : index
    %29 = vector.load %arg3[%c0_20, %c0_21, %c0_22, %c0_23] : memref<1x3x8x128xf32, #tpu.memory_space<vmem>>, vector<1x1x8x128xf32>
    %30 = vector.shape_cast %29 : vector<1x1x8x128xf32> to vector<8x128xf32>
    %31 = vector.shape_cast %28 : vector<8x128xf32> to vector<1x1x8x128xf32>
    tpu.vector_store %arg3[%c0_20, %c0_21, %c0_22, %c0_23], %31 {strides = array<i32>} : memref<1x3x8x128xf32, #tpu.memory_space<vmem>>, vector<1x1x8x128xf32>,
    %cst_24 = arith.constant 7.140000e-01 : f32
    %32 = vector.broadcast %cst_24 : f32 to vector<8x128xf32>
    %33 = arith.mulf %32, %18 : vector<8x128xf32>
    %34 = arith.subf %1, %33 : vector<8x128xf32>
    %cst_25 = arith.constant 3.440000e-01 : f32
    %35 = vector.broadcast %cst_25 : f32 to vector<8x128xf32>
    %36 = arith.mulf %35, %21 : vector<8x128xf32>
    %37 = arith.subf %34, %36 : vector<8x128xf32>
    %cst_26 = arith.constant 0.000000e+00 : f32
    %cst_27 = arith.constant 1.000000e+00 : f32
    %38 = vector.broadcast %cst_26 : f32 to vector<8x128xf32>
    %39 = arith.maximumf %38, %37 : vector<8x128xf32>
    %40 = vector.broadcast %cst_27 : f32 to vector<8x128xf32>
    %41 = arith.minimumf %40, %39 : vector<8x128xf32>
    %c0_28 = arith.constant 0 : index
    %c1_29 = arith.constant 1 : index
    %c0_30 = arith.constant 0 : index
    %c0_31 = arith.constant 0 : index
    %42 = vector.load %arg3[%c0_28, %c1_29, %c0_30, %c0_31] : memref<1x3x8x128xf32, #tpu.memory_space<vmem>>, vector<1x1x8x128xf32>
    %43 = vector.shape_cast %42 : vector<1x1x8x128xf32> to vector<8x128xf32>
    %44 = vector.shape_cast %41 : vector<8x128xf32> to vector<1x1x8x128xf32>
    tpu.vector_store %arg3[%c0_28, %c1_29, %c0_30, %c0_31], %44 {strides = array<i32>} : memref<1x3x8x128xf32, #tpu.memory_space<vmem>>, vector<1x1x8x128xf32>,
    %cst_32 = arith.constant 1.773000e+00 : f32
    %45 = vector.broadcast %cst_32 : f32 to vector<8x128xf32>
    %46 = arith.mulf %45, %21 : vector<8x128xf32>
    %47 = arith.addf %1, %46 : vector<8x128xf32>
    %cst_33 = arith.constant 0.000000e+00 : f32
    %cst_34 = arith.constant 1.000000e+00 : f32
    %48 = vector.broadcast %cst_33 : f32 to vector<8x128xf32>
    %49 = arith.maximumf %48, %47 : vector<8x128xf32>
    %50 = vector.broadcast %cst_34 : f32 to vector<8x128xf32>
    %51 = arith.minimumf %50, %49 : vector<8x128xf32>
    %c0_35 = arith.constant 0 : index
    %c2_36 = arith.constant 2 : index
    %c0_37 = arith.constant 0 : index
    %c0_38 = arith.constant 0 : index
    %52 = vector.load %arg3[%c0_35, %c2_36, %c0_37, %c0_38] : memref<1x3x8x128xf32, #tpu.memory_space<vmem>>, vector<1x1x8x128xf32>
    %53 = vector.shape_cast %52 : vector<1x1x8x128xf32> to vector<8x128xf32>
    %54 = vector.shape_cast %51 : vector<8x128xf32> to vector<1x1x8x128xf32>
    tpu.vector_store %arg3[%c0_35, %c2_36, %c0_37, %c0_38], %54 {strides = array<i32>} : memref<1x3x8x128xf32, #tpu.memory_space<vmem>>, vector<1x1x8x128xf32>,
    return
  }
  func.func @transform_0(%arg0: i32) -> (i32, i32, i32, i32) {
    %c0_i32 = arith.constant 0 : i32
    %c0_i32_0 = arith.constant 0 : i32
    %c0_i32_1 = arith.constant 0 : i32
    %c0_i32_2 = arith.constant 0 : i32
    return %arg0, %c0_i32, %c0_i32_0, %c0_i32_1 : i32, i32, i32, i32
  }
  func.func @transform_1(%arg0: i32) -> (i32, i32, i32, i32) {
    %c0_i32 = arith.constant 0 : i32
    %c0_i32_0 = arith.constant 0 : i32
    %c0_i32_1 = arith.constant 0 : i32
    %c0_i32_2 = arith.constant 0 : i32
    return %arg0, %c0_i32, %c0_i32_0, %c0_i32_1 : i32, i32, i32, i32
  }
  func.func @transform_2(%arg0: i32) -> (i32, i32, i32, i32) {
    %c0_i32 = arith.constant 0 : i32
    %c0_i32_0 = arith.constant 0 : i32
    %c0_i32_1 = arith.constant 0 : i32
    %c0_i32_2 = arith.constant 0 : i32
    return %arg0, %c0_i32, %c0_i32_0, %c0_i32_1 : i32, i32, i32, i32
  }
}

</mosaic_0001>

<llo_original>
// kernel: superfusion_forward.8
$region0: #{superfusion_forward.8}
  #allocation0 [shape = 'u32[]', space=smem, size = 0x4, offset = 0x4, fixed_abs, tag = 'smem constant byte address 0x4 - core index']
  #allocation1 [shape = 'u32[144,128]{1,0:T(1,128)}', space=vmem, size = 0x12000, scoped, tag = 'internal scratch']
  #allocation2 [shape = 'bf16[144,384]{1,0:T(16,128)(2,1)}', space=vmem, size = 0x1b000, scoped, tag = 'scratch operand']
  %s0 = inlined_call_operand.vmem [shape: bf16[2,16,640], index: 0, kind: input, shape index: {}]
  %s1 = inlined_call_operand.vmem [shape: bf16[16,144], index: 1, kind: input, shape index: {}]
  %s2 = inlined_call_operand.vmem [shape: f32[16,1], index: 2, kind: input, shape index: {}]
  %s3 = inlined_call_operand.vmem [shape: f32[1,384], index: 3, kind: input, shape index: {}]
  %s4 = inlined_call_operand.vmem [shape: bf16[2,16,640], index: 4, kind: output, shape index: {}]
  %s5 = sld [smem:[#allocation0]]
  $region49: #{superfusion_forward.8} parent=0
    _
  %s7 = ssub.s32 1, %s5
  %s8 = scalar_select 0, %s7, %s5
  loop: start=0, step=1, limit=4
  $region2: #{superfusion_forward.8} parent=0 // loop_pre_header
    _
  $region3: #{superfusion_forward.8} parent=0 // loop_header
    %s10 = sphi 0, %s14
    %p11 = scmp.ge.s32.totalorder %s10, 4
    %s20 = sphi 0, %s22
    %s23 = sphi 0, %s20
    %s24 = sphi 0, %s23
    %s40 = sphi 0, %s24
    %s44 = sphi 0, %s44
    %s46 = sphi 0, %s44
    %s47 = sphi 0, %s46
    %s61 = sphi 0, %s47
    %s65 = sphi 0, %s65
    %s67 = sphi 0, %s65
    %s68 = sphi 0, %s67
    %s82 = sphi 0, %s68
    %s86 = sphi 0, %s86
    %s88 = sphi 0, %s86
    %s89 = sphi 0, %s88
    %s103 = sphi 0, %s89
    %s109 = sphi 0, %s111
    %s112 = sphi 0, %s109
    %s113 = sphi 0, %s112
    %s129 = sphi 0, %s113
  $region4: #{superfusion_forward.8} parent=0 // loop_header_branch
    %13 = sbr.rel (%p11) target = $region8
  $region5: #{superfusion_forward.8} parent=0 // loop_body
    %s15 = ssub.s32 %s10, 1
    %s16 = ssub.s32 %s10, 2
    %s17 = sadd.s32 %s10, 1
    %s18 = ssub.s32 %s10, %s17
    %p19 = scmp.eq.s32.totalorder %s18, 0
    %s21 = sadd.s32 %s20, 1
    %s22 = scalar_select %p19, %s20, %s21
    %p25 = pneg %p19
    %p26 = scmp.eq.s32.totalorder %s10, 1
    %p27 = por %p25, %p26
    %p28 = scmp.ne.s32.totalorder %s20, %s23
    %p29 = scmp.eq.s32.totalorder %s10, 0
    %p30 = por %p28, %p29
    %p31 = scmp.ne.s32.totalorder %s20, %s23
    %p32 = scmp.eq.s32.totalorder %s15, 1
    %p33 = por %p31, %p32
    %p34 = scmp.ne.s32.totalorder %s23, %s24
    %p35 = scmp.eq.s32.totalorder %s15, 0
    %p36 = por %p34, %p35
    %p37 = scmp.ne.s32.totalorder %s23, %s24
    %p38 = scmp.eq.s32.totalorder %s16, 1
    %p39 = por %p37, %p38
    %p41 = scmp.ne.s32.totalorder %s24, %s40
    %p42 = scmp.eq.s32.totalorder %s16, 0
    %p43 = por %p41, %p42
    %s45 = sadd.s32 %s44, 1
    %p48 = scmp.eq.s32.totalorder %s10, 1
    %p49 = scmp.ne.s32.totalorder %s44, %s46
    %p50 = scmp.eq.s32.totalorder %s10, 0
    %p51 = por %p49, %p50
    %p52 = scmp.ne.s32.totalorder %s44, %s46
    %p53 = scmp.eq.s32.totalorder %s15, 1
    %p54 = por %p52, %p53
    %p55 = scmp.ne.s32.totalorder %s46, %s47
    %p56 = scmp.eq.s32.totalorder %s15, 0
    %p57 = por %p55, %p56
    %p58 = scmp.ne.s32.totalorder %s46, %s47
    %p59 = scmp.eq.s32.totalorder %s16, 1
    %p60 = por %p58, %p59
    %p62 = scmp.ne.s32.totalorder %s47, %s61
    %p63 = scmp.eq.s32.totalorder %s16, 0
    %p64 = por %p62, %p63
    %s66 = sadd.s32 %s65, 1
    %p69 = scmp.eq.s32.totalorder %s10, 1
    %p70 = scmp.ne.s32.totalorder %s65, %s67
    %p71 = scmp.eq.s32.totalorder %s10, 0
    %p72 = por %p70, %p71
    %p73 = scmp.ne.s32.totalorder %s65, %s67
    %p74 = scmp.eq.s32.totalorder %s15, 1
    %p75 = por %p73, %p74
    %p76 = scmp.ne.s32.totalorder %s67, %s68
    %p77 = scmp.eq.s32.totalorder %s15, 0
    %p78 = por %p76, %p77
    %p79 = scmp.ne.s32.totalorder %s67, %s68
    %p80 = scmp.eq.s32.totalorder %s16, 1
    %p81 = por %p79, %p80
    %p83 = scmp.ne.s32.totalorder %s68, %s82
    %p84 = scmp.eq.s32.totalorder %s16, 0
    %p85 = por %p83, %p84
    %s87 = sadd.s32 %s86, 1
    %p90 = scmp.eq.s32.totalorder %s10, 1
    %p91 = scmp.ne.s32.totalorder %s86, %s88
    %p92 = scmp.eq.s32.totalorder %s10, 0
    %p93 = por %p91, %p92
    %p94 = scmp.ne.s32.totalorder %s86, %s88
    %p95 = scmp.eq.s32.totalorder %s15, 1
    %p96 = por %p94, %p95
    %p97 = scmp.ne.s32.totalorder %s88, %s89
    %p98 = scmp.eq.s32.totalorder %s15, 0
    %p99 = por %p97, %p98
    %p100 = scmp.ne.s32.totalorder %s88, %s89
    %p101 = scmp.eq.s32.totalorder %s16, 1
    %p102 = por %p100, %p101
    %p104 = scmp.ne.s32.totalorder %s89, %s103
    %p105 = scmp.eq.s32.totalorder %s16, 0
    %p106 = por %p104, %p105
    %s107 = ssub.s32 %s10, %s17
    %p108 = scmp.eq.s32.totalorder %s107, 0
    %s110 = sadd.s32 %s109, 1
    %s111 = scalar_select %p108, %s109, %s110
    %p114 = pneg %p108
    %p115 = scmp.eq.s32.totalorder %s10, 1
    %p116 = por %p114, %p115
    %p117 = scmp.ne.s32.totalorder %s109, %s112
    %p118 = scmp.eq.s32.totalorder %s10, 0
    %p119 = por %p117, %p118
    %p120 = scmp.ne.s32.totalorder %s109, %s112
    %p121 = scmp.eq.s32.totalorder %s15, 1
    %p122 = por %p120, %p121
    %p123 = scmp.ne.s32.totalorder %s112, %s113
    %p124 = scmp.eq.s32.totalorder %s15, 0
    %p125 = por %p123, %p124
    %p126 = scmp.ne.s32.totalorder %s112, %s113
    %p127 = scmp.eq.s32.totalorder %s16, 1
    %p128 = por %p126, %p127
    %p130 = scmp.ne.s32.totalorder %s113, %s129
    %p131 = scmp.eq.s32.totalorder %s16, 0
    %p132 = por %p130, %p131
    %p133 = scmp.le.s32.totalorder 1, %s10
    %p134 = scmp.lt.s32.totalorder %s10, 3
    %p135 = pnand %p133, %p134
    %p136 = pneg %p135
    // Predicated region
    $region9: #{superfusion_forward.8} parent=5 // pred_check
      _
    $region10: #{superfusion_forward.8} parent=5 // pred_check_branch
      %138 = sbr.rel (%p135) target = $region12
    $region11: #{superfusion_forward.8} parent=5 // pred_region
      %s139 = ssub.s32 %s10, 1
      // Predicated region
      $region13: #{superfusion_forward.8} parent=11 // pred_check
        %p140 = pneg %p57
      $region14: #{superfusion_forward.8} parent=11 // pred_check_branch
        %142 = sbr.rel (%p140) target = $region16
      $region15: #{superfusion_forward.8} parent=11 // pred_region
        _
      $region16: #{superfusion_forward.8} parent=11 // pred_fallthru
        _
      // Predicated region
      $region17: #{superfusion_forward.8} parent=11 // pred_check
        %p143 = pneg %p78
      $region18: #{superfusion_forward.8} parent=11 // pred_check_branch
        %145 = sbr.rel (%p143) target = $region20
      $region19: #{superfusion_forward.8} parent=11 // pred_region
        _
      $region20: #{superfusion_forward.8} parent=11 // pred_fallthru
        _
      // Predicated region
      $region21: #{superfusion_forward.8} parent=11 // pred_check
        %p146 = pneg %p99
      $region22: #{superfusion_forward.8} parent=11 // pred_check_branch
        %148 = sbr.rel (%p146) target = $region24
      $region23: #{superfusion_forward.8} parent=11 // pred_region
        _
      $region24: #{superfusion_forward.8} parent=11 // pred_fallthru
        _
    $region12: #{superfusion_forward.8} parent=5 // pred_fallthru
      _
    %p149 = scmp.lt.s32.totalorder %s10, 2
    // Predicated region
    $region25: #{superfusion_forward.8} parent=5 // pred_check
      %p150 = pneg %p149
    $region26: #{superfusion_forward.8} parent=5 // pred_check_branch
      %152 = sbr.rel (%p150) target = $region28
    $region27: #{superfusion_forward.8} parent=5 // pred_region
      // Predicated region
      $region29: #{superfusion_forward.8} parent=27 // pred_check
        %p153 = pneg %p30
      $region30: #{superfusion_forward.8} parent=27 // pred_check_branch
        %155 = sbr.rel (%p153) target = $region32
      $region31: #{superfusion_forward.8} parent=27 // pred_region
        %p156 = scmp.lt.s32.totalorder %s10, 1
        %s157 = scalar_select %p156, %s10, 1
        %s158 = smul.addr %s157, 10
        %s159 = smul.addr %s158, 4
        %s160 = scalar_lea.vmem %s0, %s159
      $region32: #{superfusion_forward.8} parent=27 // pred_fallthru
        _
    $region28: #{superfusion_forward.8} parent=5 // pred_fallthru
      _
    %p161 = scmp.le.s32.totalorder 1, %s10
    %p162 = scmp.lt.s32.totalorder %s10, 3
    %p163 = pnand %p161, %p162
    %p164 = pneg %p163
    // Predicated region
    $region33: #{superfusion_forward.8} parent=5 // pred_check
      _
    $region34: #{superfusion_forward.8} parent=5 // pred_check_branch
      %166 = sbr.rel (%p163) target = $region36
    $region35: #{superfusion_forward.8} parent=5 // pred_region
      %s167 = ssub.s32 %s10, 1
      %p168 = scmp.lt.s32.totalorder %s15, 1
      %s169 = scalar_select %p168, %s15, 1
      %s170 = smul.addr %s169, 10
      %s171 = smul.addr %s170, 4
      %s172 = scalar_lea.vmem %s0, %s171
      %p173 = pneg %p36
      %p174 = pneg %p33
      %p175 = pneg %p57
      %p176 = pneg %p54
      %p177 = pneg %p78
      %p178 = pneg %p75
      %p179 = pneg %p99
      %p180 = pneg %p96
      %p181 = pneg %p125
      %p182 = pneg %p122
      %p183 = scmp.lt.s32.totalorder %s15, 1
      %s184 = scalar_select %p183, %s15, 1
      %s185 = smul.addr %s184, 10
      %s186 = smul.addr %s185, 4
      %s187 = scalar_lea.vmem %s4, %s186
      %p188 = scmp.lt.s32.totalorder %s15, 1
      %s189 = scalar_select %p188, %s15, 1
      %s190 = smul.addr %s189, 10
      %s191 = smul.addr %s190, 4
      %s192 = scalar_lea.vmem %s0, %s191
      %p193 = scmp.lt.s32.totalorder %s15, 1
      %s194 = scalar_select %p193, %s15, 1
      %s195 = smul.addr %s194, 10
      %s196 = smul.addr %s195, 4
      %s197 = scalar_lea.vmem %s4, %s196
      %v199 = vld [vmem:[%s1] sm:$0xff]
      %v200 = vld [vmem:[%s1 + $0x8] sm:$0xff]
      %v201 = vld [vmem:[%s2] sm:$0xff]
      %v202 = vld [vmem:[%s2 + $0x8] sm:$0xff]
      %203 = vst [vmem:[%s197] sm:$0xf] 0
      %204 = vst [vmem:[%s197 + $0x14] sm:$0xf] 0
      %205 = vst [vmem:[%s197 + $0x10] sm:$0xf] 0
      %206 = vst [vmem:[%s197 + $0x24] sm:$0xf] 0
      %v207 = vld [vmem:[%s192] sm:$0xff]
      %v208 = vld [vmem:[%s192 + $0x8] sm:$0xff]
      %v209 = vld [vmem:[%s192 + $0x14] sm:$0xff]
      %v210 = vld [vmem:[%s192 + $0x1c] sm:$0xff]
      %v215 = vunpack.c.l.b16 %v207
      %v216 = vunpack.c.h.b16 %v207
      %v217 = vunpack.c.l.b16 %v208
      %v218 = vunpack.c.h.b16 %v208
      %v219 = vunpack.c.l.b16 %v209
      %v220 = vunpack.c.h.b16 %v209
      %v221 = vunpack.c.l.b16 %v210
      %v222 = vunpack.c.h.b16 %v210
      %v223 = vpack.c.b16 %v219, %v215
      %v224 = vpack.c.b16 %v220, %v216
      %v225 = vpack.c.b16 %v221, %v217
      %v226 = vpack.c.b16 %v222, %v218
      %227 = vrot.lane.b32.xlu0 %v223, 19
      %v228 = vpop.permute.xlu0 %227
      %229 = vrot.lane.b32.xlu0 %v224, 19
      %v230 = vpop.permute.xlu0 %229
      %231 = vrot.lane.b32.xlu0 %v225, 19
      %v232 = vpop.permute.xlu0 %231
      %233 = vrot.lane.b32.xlu0 %v226, 19
      %v234 = vpop.permute.xlu0 %233
      %vm235 = vcmask 154624
      %v236 = vsel %vm235, %v228, %v230
      %v237 = vsel %vm235, %v230, %v232
      %v238 = vsel %vm235, %v232, %v234
      %242 = vst [vmem:[#allocation2] sm:$0xff] %v236
      %243 = vst [vmem:[#allocation2 + $0x8] sm:$0xff] %v237
      %244 = vst [vmem:[#allocation2 + $0x10] sm:$0xff] %v238
      %v245 = vld [vmem:[%s192] sm:$0xff]
      %v246 = vld [vmem:[%s192 + $0x8] sm:$0xff]
      %v247 = vld [vmem:[%s192 + $0x14] sm:$0xff]
      %v248 = vld [vmem:[%s192 + $0x1c] sm:$0xff]
      %v253 = vunpack.c.l.b16 %v245
      %v254 = vunpack.c.h.b16 %v245
      %v255 = vunpack.c.l.b16 %v246
      %v256 = vunpack.c.h.b16 %v246
      %v257 = vunpack.c.l.b16 %v247
      %v258 = vunpack.c.h.b16 %v247
      %v259 = vunpack.c.l.b16 %v248
      %v260 = vunpack.c.h.b16 %v248
      %v261 = vpack.c.b16 %v257, %v253
      %v262 = vpack.c.b16 %v258, %v254
      %v263 = vpack.c.b16 %v259, %v255
      %v264 = vpack.c.b16 %v260, %v256
      %265 = vrot.lane.b32.xlu0 %v261, 18
      %v266 = vpop.permute.xlu0 %265
      %267 = vrot.lane.b32.xlu0 %v262, 18
      %v268 = vpop.permute.xlu0 %267
      %269 = vrot.lane.b32.xlu0 %v263, 18
      %v270 = vpop.permute.xlu0 %269
      %271 = vrot.lane.b32.xlu0 %v264, 18
      %v272 = vpop.permute.xlu0 %271
      %vm273 = vcmask 146432
      %v274 = vsel %vm273, %v266, %v268
      %v275 = vsel %vm273, %v268, %v270
      %v276 = vsel %vm273, %v270, %v272
      %280 = vst [vmem:[#allocation2 + $0x18] sm:$0xff] %v274
      %281 = vst [vmem:[#allocation2 + $0x20] sm:$0xff] %v275
      %282 = vst [vmem:[#allocation2 + $0x28] sm:$0xff] %v276
      %v283 = vld [vmem:[%s192] sm:$0xff]
      %v284 = vld [vmem:[%s192 + $0x8] sm:$0xff]
      %v285 = vld [vmem:[%s192 + $0x14] sm:$0xff]
      %v286 = vld [vmem:[%s192 + $0x1c] sm:$0xff]
      %v291 = vunpack.c.l.b16 %v283
      %v292 = vunpack.c.h.b16 %v283
      %v293 = vunpack.c.l.b16 %v284
      %v294 = vunpack.c.h.b16 %v284
      %v295 = vunpack.c.l.b16 %v285
      %v296 = vunpack.c.h.b16 %v285
      %v297 = vunpack.c.l.b16 %v286
      %v298 = vunpack.c.h.b16 %v286
      %v299 = vpack.c.b16 %v295, %v291
      %v300 = vpack.c.b16 %v296, %v292
      %v301 = vpack.c.b16 %v297, %v293
      %v302 = vpack.c.b16 %v298, %v294
      %303 = vrot.lane.b32.xlu0 %v299, 17
      %v304 = vpop.permute.xlu0 %303
      %305 = vrot.lane.b32.xlu0 %v300, 17
      %v306 = vpop.permute.xlu0 %305
      %307 = vrot.lane.b32.xlu0 %v301, 17
      %v308 = vpop.permute.xlu0 %307
      %309 = vrot.lane.b32.xlu0 %v302, 17
      %v310 = vpop.permute.xlu0 %309
      %vm311 = vcmask 138240
      %v312 = vsel %vm311, %v304, %v306
      %v313 = vsel %vm311, %v306, %v308
      %v314 = vsel %vm311, %v308, %v310
      %318 = vst [vmem:[#allocation2 + $0x30] sm:$0xff] %v312
      %319 = vst [vmem:[#allocation2 + $0x38] sm:$0xff] %v313
      %320 = vst [vmem:[#allocation2 + $0x40] sm:$0xff] %v314
      %v321 = vld [vmem:[%s192] sm:$0xff]
      %v322 = vld [vmem:[%s192 + $0x8] sm:$0xff]
      %v323 = vld [vmem:[%s192 + $0x14] sm:$0xff]
      %v324 = vld [vmem:[%s192 + $0x1c] sm:$0xff]
      %v329 = vunpack.c.l.b16 %v321
      %v330 = vunpack.c.h.b16 %v321
      %v331 = vunpack.c.l.b16 %v322
      %v332 = vunpack.c.h.b16 %v322
      %v333 = vunpack.c.l.b16 %v323
      %v334 = vunpack.c.h.b16 %v323
      %v335 = vunpack.c.l.b16 %v324
      %v336 = vunpack.c.h.b16 %v324
      %v337 = vpack.c.b16 %v333, %v329
      %v338 = vpack.c.b16 %v334, %v330
      %v339 = vpack.c.b16 %v335, %v331
      %v340 = vpack.c.b16 %v336, %v332
      %341 = vrot.lane.b32.xlu0 %v337, 1
      %v342 = vpop.permute.xlu0 %341
      %343 = vrot.lane.b32.xlu0 %v338, 1
      %v344 = vpop.permute.xlu0 %343
      %345 = vrot.lane.b32.xlu0 %v339, 1
      %v346 = vpop.permute.xlu0 %345
      %347 = vrot.lane.b32.xlu0 %v340, 1
      %v348 = vpop.permute.xlu0 %347
      %vm349 = vcmask 7168
      %v350 = vsel %vm349, %v342, %v344
      %v351 = vsel %vm349, %v344, %v346
      %v352 = vsel %vm349, %v346, %v348
      %356 = vst [vmem:[#allocation2 + $0x48] sm:$0xff] %v350
      %357 = vst [vmem:[#allocation2 + $0x50] sm:$0xff] %v351
      %358 = vst [vmem:[#allocation2 + $0x58] sm:$0xff] %v352
      %v359 = vld [vmem:[%s192 + $0x4] sm:$0xff]
      %v360 = vld [vmem:[%s192 + $0xc] sm:$0xf]
      %v361 = vld [vmem:[%s192 + $0x18] sm:$0xff]
      %v362 = vld [vmem:[%s192 + $0x20] sm:$0xf]
      %v367 = vunpack.c.l.b16 %v359
      %v368 = vunpack.c.h.b16 %v359
      %v369 = vunpack.c.l.b16 %v360
      %v370 = vunpack.c.l.b16 %v361
      %v371 = vunpack.c.h.b16 %v361
      %v372 = vunpack.c.l.b16 %v362
      %v373 = vpack.c.b16 %v370, %v367
      %v374 = vpack.c.b16 %v371, %v368
      %v375 = vpack.c.b16 %v372, %v369
      %379 = vst [vmem:[#allocation2 + $0x60] sm:$0xff] %v373
      %380 = vst [vmem:[#allocation2 + $0x68] sm:$0xff] %v374
      %381 = vst [vmem:[#allocation2 + $0x70] sm:$0xff] %v375
      %v382 = vld [vmem:[%s192 + $0x4] sm:$0xff]
      %v383 = vld [vmem:[%s192 + $0xc] sm:$0xff]
      %v384 = vld [vmem:[%s192 + $0x18] sm:$0xff]
      %v385 = vld [vmem:[%s192 + $0x20] sm:$0xff]
      %v390 = vunpack.c.l.b16 %v382
      %v391 = vunpack.c.h.b16 %v382
      %v392 = vunpack.c.l.b16 %v383
      %v393 = vunpack.c.h.b16 %v383
      %v394 = vunpack.c.l.b16 %v384
      %v395 = vunpack.c.h.b16 %v384
      %v396 = vunpack.c.l.b16 %v385
      %v397 = vunpack.c.h.b16 %v385
      %v398 = vpack.c.b16 %v394, %v390
      %v399 = vpack.c.b16 %v395, %v391
      %v400 = vpack.c.b16 %v396, %v392
      %v401 = vpack.c.b16 %v397, %v393
      %402 = vrot.lane.b32.xlu0 %v398, 127
      %v403 = vpop.permute.xlu0 %402
      %404 = vrot.lane.b32.xlu0 %v399, 127
      %v405 = vpop.permute.xlu0 %404
      %406 = vrot.lane.b32.xlu0 %v400, 127
      %v407 = vpop.permute.xlu0 %406
      %408 = vrot.lane.b32.xlu0 %v401, 127
      %v409 = vpop.permute.xlu0 %408
      %vm410 = vcmask 1039360
      %v411 = vsel %vm410, %v403, %v405
      %v412 = vsel %vm410, %v405, %v407
      %v413 = vsel %vm410, %v407, %v409
      %417 = vst [vmem:[#allocation2 + $0x78] sm:$0xff] %v411
      %418 = vst [vmem:[#allocation2 + $0x80] sm:$0xff] %v412
      %419 = vst [vmem:[#allocation2 + $0x88] sm:$0xff] %v413
      %v420 = vld [vmem:[%s192 + $0x4] sm:$0xff]
      %v421 = vld [vmem:[%s192 + $0xc] sm:$0xff]
      %v422 = vld [vmem:[%s192 + $0x18] sm:$0xff]
      %v423 = vld [vmem:[%s192 + $0x20] sm:$0xff]
      %v428 = vunpack.c.l.b16 %v420
      %v429 = vunpack.c.h.b16 %v420
      %v430 = vunpack.c.l.b16 %v421
      %v431 = vunpack.c.h.b16 %v421
      %v432 = vunpack.c.l.b16 %v422
      %v433 = vunpack.c.h.b16 %v422
      %v434 = vunpack.c.l.b16 %v423
      %v435 = vunpack.c.h.b16 %v423
      %v436 = vpack.c.b16 %v432, %v428
      %v437 = vpack.c.b16 %v433, %v429
      %v438 = vpack.c.b16 %v434, %v430
      %v439 = vpack.c.b16 %v435, %v431
      %440 = vrot.lane.b32.xlu0 %v436, 111
      %v441 = vpop.permute.xlu0 %440
      %442 = vrot.lane.b32.xlu0 %v437, 111
      %v443 = vpop.permute.xlu0 %442
      %444 = vrot.lane.b32.xlu0 %v438, 111
      %v445 = vpop.permute.xlu0 %444
      %446 = vrot.lane.b32.xlu0 %v439, 111
      %v447 = vpop.permute.xlu0 %446
      %vm448 = vcmask 908288
      %v449 = vsel %vm448, %v441, %v443
      %v450 = vsel %vm448, %v443, %v445
      %v451 = vsel %vm448, %v445, %v447
      %455 = vst [vmem:[#allocation2 + $0x90] sm:$0xff] %v449
      %456 = vst [vmem:[#allocation2 + $0x98] sm:$0xff] %v450
      %457 = vst [vmem:[#allocation2 + $0xa0] sm:$0xff] %v451
      %v458 = vld [vmem:[%s192 + $0x4] sm:$0xff]
      %v459 = vld [vmem:[%s192 + $0xc] sm:$0xff]
      %v460 = vld [vmem:[%s192 + $0x18] sm:$0xff]
      %v461 = vld [vmem:[%s192 + $0x20] sm:$0xff]
      %v466 = vunpack.c.l.b16 %v458
      %v467 = vunpack.c.h.b16 %v458
      %v468 = vunpack.c.l.b16 %v459
      %v469 = vunpack.c.h.b16 %v459
      %v470 = vunpack.c.l.b16 %v460
      %v471 = vunpack.c.h.b16 %v460
      %v472 = vunpack.c.l.b16 %v461
      %v473 = vunpack.c.h.b16 %v461
      %v474 = vpack.c.b16 %v470, %v466
      %v475 = vpack.c.b16 %v471, %v467
      %v476 = vpack.c.b16 %v472, %v468
      %v477 = vpack.c.b16 %v473, %v469
      %478 = vrot.lane.b32.xlu0 %v474, 110
      %v479 = vpop.permute.xlu0 %478
      %480 = vrot.lane.b32.xlu0 %v475, 110
      %v481 = vpop.permute.xlu0 %480
      %482 = vrot.lane.b32.xlu0 %v476, 110
      %v483 = vpop.permute.xlu0 %482
      %484 = vrot.lane.b32.xlu0 %v477, 110
      %v485 = vpop.permute.xlu0 %484
      %vm486 = vcmask 900096
      %v487 = vsel %vm486, %v479, %v481
      %v488 = vsel %vm486, %v481, %v483
      %v489 = vsel %vm486, %v483, %v485
      %493 = vst [vmem:[#allocation2 + $0xa8] sm:$0xff] %v487
      %494 = vst [vmem:[#allocation2 + $0xb0] sm:$0xff] %v488
      %495 = vst [vmem:[#allocation2 + $0xb8] sm:$0xff] %v489
      %v496 = vld [vmem:[%s192 + $0x4] sm:$0xff]
      %v497 = vld [vmem:[%s192 + $0xc] sm:$0xff]
      %v498 = vld [vmem:[%s192 + $0x18] sm:$0xff]
      %v499 = vld [vmem:[%s192 + $0x20] sm:$0xff]
      %v504 = vunpack.c.l.b16 %v496
      %v505 = vunpack.c.h.b16 %v496
      %v506 = vunpack.c.l.b16 %v497
      %v507 = vunpack.c.h.b16 %v497
      %v508 = vunpack.c.l.b16 %v498
      %v509 = vunpack.c.h.b16 %v498
      %v510 = vunpack.c.l.b16 %v499
      %v511 = vunpack.c.h.b16 %v499
      %v512 = vpack.c.b16 %v508, %v504
      %v513 = vpack.c.b16 %v509, %v505
      %v514 = vpack.c.b16 %v510, %v506
      %v515 = vpack.c.b16 %v511, %v507
      %516 = vrot.lane.b32.xlu0 %v512, 109
      %v517 = vpop.permute.xlu0 %516
      %518 = vrot.lane.b32.xlu0 %v513, 109
      %v519 = vpop.permute.xlu0 %518
      %520 = vrot.lane.b32.xlu0 %v514, 109
      %v521 = vpop.permute.xlu0 %520
      %522 = vrot.lane.b32.xlu0 %v515, 109
      %v523 = vpop.permute.xlu0 %522
      %vm524 = vcmask 891904
      %v525 = vsel %vm524, %v517, %v519
      %v526 = vsel %vm524, %v519, %v521
      %v527 = vsel %vm524, %v521, %v523
      %531 = vst [vmem:[#allocation2 + $0xc0] sm:$0xff] %v525
      %532 = vst [vmem:[#allocation2 + $0xc8] sm:$0xff] %v526
      %533 = vst [vmem:[#allocation2 + $0xd0] sm:$0xff] %v527
      %v534 = vld [vmem:[#allocation2] sm:$0xff]
      %v535 = vld [vmem:[#allocation2 + $0x8] sm:$0xff]
      %v536 = vld [vmem:[#allocation2 + $0x10] sm:$0xff]
      %v537 = vld [vmem:[#allocation2 + $0x18] sm:$0xff]
      %v538 = vld [vmem:[#allocation2 + $0x20] sm:$0xff]
      %v539 = vld [vmem:[#allocation2 + $0x28] sm:$0xff]
      %v540 = vld [vmem:[#allocation2 + $0x30] sm:$0xff]
      %v541 = vld [vmem:[#allocation2 + $0x38] sm:$0xff]
      %v542 = vld [vmem:[#allocation2 + $0x40] sm:$0xff]
      %v543 = vld [vmem:[#allocation2 + $0x48] sm:$0xff]
      %v544 = vld [vmem:[#allocation2 + $0x50] sm:$0xff]
      %v545 = vld [vmem:[#allocation2 + $0x58] sm:$0xff]
      %v546 = vld [vmem:[#allocation2 + $0x60] sm:$0xff]
      %v547 = vld [vmem:[#allocation2 + $0x68] sm:$0xff]
      %v548 = vld [vmem:[#allocation2 + $0x70] sm:$0xff]
      %v549 = vld [vmem:[#allocation2 + $0x78] sm:$0xff]
      %v550 = vld [vmem:[#allocation2 + $0x80] sm:$0xff]
      %v551 = vld [vmem:[#allocation2 + $0x88] sm:$0xff]
      %v552 = vld [vmem:[#allocation2 + $0x90] sm:$0xff]
      %v553 = vld [vmem:[#allocation2 + $0x98] sm:$0xff]
      %v554 = vld [vmem:[#allocation2 + $0xa0] sm:$0xff]
      %v555 = vld [vmem:[#allocation2 + $0xa8] sm:$0xff]
      %v556 = vld [vmem:[#allocation2 + $0xb0] sm:$0xff]
      %v557 = vld [vmem:[#allocation2 + $0xb8] sm:$0xff]
      %v558 = vld [vmem:[#allocation2 + $0xc0] sm:$0xff]
      %v559 = vld [vmem:[#allocation2 + $0xc8] sm:$0xff]
      %v560 = vld [vmem:[#allocation2 + $0xd0] sm:$0xff]
      %562 = vset.pattern.permute.xlu0 0
      %563 = vperm.xlu0 %562, %v201
      %v564 = vpop.permute.xlu0 %563
      %567 = vset.pattern.permute.xlu0 0
      %568 = vperm.xlu0 %567, %v202
      %v569 = vpop.permute.xlu0 %568
      %v573 = vunpack.c.l.b16 %v199
      %v574 = vunpack.c.h.b16 %v199
      %v575 = vunpack.c.l.b16 %v200
      %v576 = vunpack.c.h.b16 %v200
      %v577 = vpack.c.b16 %v575, %v573
      %v578 = vpack.c.b16 %v576, %v574
      %vm580 = vcmask 130048
      %v582 = vsel %vm580, %v578, 0
      %584 = vmatprep.subr.bf16.mxu0 %v535
      %585 = vmatpush1.bf16.msra.mxu0 %v534
      %586 = vmatprep.subr.bf16.mxu0 %v538
      %587 = vmatpush1.bf16.msra.mxu0 %v537
      %588 = vmatprep.subr.bf16.mxu0 %v541
      %589 = vmatpush1.bf16.msra.mxu0 %v540
      %590 = vmatprep.subr.bf16.mxu0 %v544
      %591 = vmatpush1.bf16.msra.mxu0 %v543
      %592 = vmatprep.subr.bf16.mxu0 %v547
      %593 = vmatpush1.bf16.msra.mxu0 %v546
      %594 = vmatprep.subr.bf16.mxu0 %v550
      %595 = vmatpush1.bf16.msra.mxu0 %v549
      %596 = vmatprep.subr.bf16.mxu0 %v553
      %597 = vmatpush1.bf16.msra.mxu0 %v552
      %598 = vmatprep.subr.bf16.mxu0 %v556
      %599 = vmatpush1.bf16.msra.mxu0 %v555
      %600 = vmatprep.subr.bf16.mxu0 %v559
      %601 = vmatpush1.bf16.msra.mxu0 %v558
      %602 = vmatprep.subr.bf16.mxu0 0
      %603 = vmatpush1.bf16.msra.mxu0 0
      %604 = vmatprep.subr.bf16.mxu0 0
      %605 = vmatpush1.bf16.msra.mxu0 0
      %606 = vmatprep.subr.bf16.mxu0 0
      %607 = vmatpush1.bf16.msra.mxu0 0
      %608 = vmatprep.subr.bf16.mxu0 0
      %609 = vmatpush1.bf16.msra.mxu0 0
      %610 = vmatprep.subr.bf16.mxu0 0
      %611 = vmatpush1.bf16.msra.mxu0 0
      %612 = vmatprep.subr.bf16.mxu0 0
      %613 = vmatpush1.bf16.msra.mxu0 0
      %614 = vmatprep.subr.bf16.mxu0 0
      %615 = vmatpush1.bf16.msra.mxu0 0
      %616 = vmatprep.mubr.bf16.mxu0 %v582
      %617 = vmatmul.mubr.bf16.gmra.mrb[0].mxu0 %v577
      %v618 = vpop.f32.mrb[0].mxu0
      %v619 = vadd.f32 %v564, %v618
      %v620 = vpop.f32.mrb[0].mxu0
      %v621 = vadd.f32 %v564, %v620
      %v622 = vpop.f32.mrb[0].mxu0
      %v623 = vadd.f32 %v569, %v622
      %v624 = vpop.f32.mrb[0].mxu0
      %v625 = vadd.f32 %v569, %v624
      %626 = vdwg.mxu0
      %627 = vmatprep.subr.bf16.mxu0 0
      %628 = vmatpush1.bf16.msra.mxu0 %v536
      %629 = vmatprep.subr.bf16.mxu0 0
      %630 = vmatpush1.bf16.msra.mxu0 %v539
      %631 = vmatprep.subr.bf16.mxu0 0
      %632 = vmatpush1.bf16.msra.mxu0 %v542
      %633 = vmatprep.subr.bf16.mxu0 0
      %634 = vmatpush1.bf16.msra.mxu0 %v545
      %635 = vmatprep.subr.bf16.mxu0 0
      %636 = vmatpush1.bf16.msra.mxu0 %v548
      %637 = vmatprep.subr.bf16.mxu0 0
      %638 = vmatpush1.bf16.msra.mxu0 %v551
      %639 = vmatprep.subr.bf16.mxu0 0
      %640 = vmatpush1.bf16.msra.mxu0 %v554
      %641 = vmatprep.subr.bf16.mxu0 0
      %642 = vmatpush1.bf16.msra.mxu0 %v557
      %643 = vmatprep.subr.bf16.mxu0 0
      %644 = vmatpush1.bf16.msra.mxu0 %v560
      %645 = vmatprep.subr.bf16.mxu0 0
      %646 = vmatpush1.bf16.msra.mxu0 0
      %647 = vmatprep.subr.bf16.mxu0 0
      %648 = vmatpush1.bf16.msra.mxu0 0
      %649 = vmatprep.subr.bf16.mxu0 0
      %650 = vmatpush1.bf16.msra.mxu0 0
      %651 = vmatprep.subr.bf16.mxu0 0
      %652 = vmatpush1.bf16.msra.mxu0 0
      %653 = vmatprep.subr.bf16.mxu0 0
      %654 = vmatpush1.bf16.msra.mxu0 0
      %655 = vmatprep.subr.bf16.mxu0 0
      %656 = vmatpush1.bf16.msra.mxu0 0
      %657 = vmatprep.subr.bf16.mxu0 0
      %658 = vmatpush1.bf16.msra.mxu0 0
      %659 = vmatprep.mubr.bf16.mxu0 %v582
      %660 = vmatmul.mubr.bf16.gmra.mrb[0].mxu0 %v577
      %v661 = vpop.f32.mrb[0].mxu0
      %v662 = vadd.f32 %v564, %v661
      %v663 = vpop.f32.mrb[0].mxu0
      %v664 = vpop.f32.mrb[0].mxu0
      %v665 = vadd.f32 %v569, %v664
      %v666 = vpop.f32.mrb[0].mxu0
      %667 = vdwg.mxu0
      %vm668 = vcmp.ge.f32.partialorder %v619, 0.0
      %vm669 = vcmp.ge.f32.partialorder %v621, 0.0
      %vm670 = vcmp.ge.f32.partialorder %v662, 0.0
      %vm671 = vcmp.ge.f32.partialorder %v623, 0.0
      %vm672 = vcmp.ge.f32.partialorder %v625, 0.0
      %vm673 = vcmp.ge.f32.partialorder %v665, 0.0
      %v674 = vmul.f32 %v619, 0.2
      %v675 = vmul.f32 %v621, 0.2
      %v676 = vmul.f32 %v662, 0.2
      %v677 = vmul.f32 %v623, 0.2
      %v678 = vmul.f32 %v625, 0.2
      %v679 = vmul.f32 %v665, 0.2
      %v680 = vsel %vm668, %v619, %v674
      %v681 = vsel %vm669, %v621, %v675
      %v682 = vsel %vm670, %v662, %v676
      %v683 = vsel %vm671, %v623, %v677
      %v684 = vsel %vm672, %v625, %v678
      %v685 = vsel %vm673, %v665, %v679
      %v686 = vld [vmem:[%s3] sm:$0x7]
      %v688 = vlaneseq
      %v689 = vshrl.u32 %v688, 7
      %v690 = vsub.s32 0, %v689
      %v691 = vrot.slane %v686, %v690
      %v692 = vlaneseq
      %v693 = vshrl.u32 %v692, 7
      %v694 = vsub.s32 1, %v693
      %v695 = vrot.slane %v686, %v694
      %v696 = vlaneseq
      %v697 = vshrl.u32 %v696, 7
      %v698 = vsub.s32 2, %v697
      %v699 = vrot.slane %v686, %v698
      %v703 = vmul.f32 %v680, %v691
      %v704 = vmul.f32 %v681, %v695
      %v705 = vmul.f32 %v682, %v699
      %v706 = vmul.f32 %v683, %v691
      %v707 = vmul.f32 %v684, %v695
      %v708 = vmul.f32 %v685, %v699
      %v709 = vpack.c.bf16 %v706, %v703
      %v710 = vpack.c.bf16 %v707, %v704
      %v711 = vpack.c.bf16 %v708, %v705
      %v715 = vunpack.c.l.b16 %v709
      %v716 = vunpack.c.l.b16 %v710
      %v717 = vunpack.c.l.b16 %v711
      %v718 = vunpack.c.h.b16 %v709
      %v719 = vunpack.c.h.b16 %v710
      %v720 = vunpack.c.h.b16 %v711
      %v721 = vpack.c.b16 %v716, %v715
      %v722 = vpack.c.b16 %v717, %v717
      %v723 = vpack.c.b16 %v719, %v718
      %v724 = vpack.c.b16 %v720, %v720
      %729 = vst [vmem:[%s197 + $0x4] sm:$0xff] %v721
      %730 = vst [vmem:[%s197 + $0xc] sm:$0xf] %v722
      %731 = vst [vmem:[%s197 + $0x18] sm:$0xff] %v723
      %732 = vst [vmem:[%s197 + $0x20] sm:$0xf] %v724
      %p733 = scmp.lt.s32.totalorder %s15, 1
      %s734 = scalar_select %p733, %s15, 1
      %s735 = smul.addr %s734, 10
      %s736 = smul.addr %s735, 4
      %s737 = scalar_lea.vmem %s4, %s736
      // Predicated region
      $region37: #{superfusion_forward.8} parent=35 // pred_check
        %p738 = pneg %p122
      $region38: #{superfusion_forward.8} parent=35 // pred_check_branch
        %740 = sbr.rel (%p738) target = $region40
      $region39: #{superfusion_forward.8} parent=35 // pred_region
        _
      $region40: #{superfusion_forward.8} parent=35 // pred_fallthru
        _
    $region36: #{superfusion_forward.8} parent=5 // pred_fallthru
      _
    %p741 = scmp.le.s32.totalorder 2, %s10
    // Predicated region
    $region41: #{superfusion_forward.8} parent=5 // pred_check
      %p742 = pneg %p741
    $region42: #{superfusion_forward.8} parent=5 // pred_check_branch
      %744 = sbr.rel (%p742) target = $region44
    $region43: #{superfusion_forward.8} parent=5 // pred_region
      %s745 = ssub.s32 %s10, 2
      // Predicated region
      $region45: #{superfusion_forward.8} parent=43 // pred_check
        %p746 = pneg %p128
      $region46: #{superfusion_forward.8} parent=43 // pred_check_branch
        %748 = sbr.rel (%p746) target = $region48
      $region47: #{superfusion_forward.8} parent=43 // pred_region
        %p749 = scmp.lt.s32.totalorder %s16, 1
        %s750 = scalar_select %p749, %s16, 1
        %s751 = smul.addr %s750, 10
        %s752 = smul.addr %s751, 4
        %s753 = scalar_lea.vmem %s4, %s752
      $region48: #{superfusion_forward.8} parent=43 // pred_fallthru
        _
    $region44: #{superfusion_forward.8} parent=5 // pred_fallthru
      _
  $region6: #{superfusion_forward.8} parent=0 // loop_footer
    %s14 = sadd.s32 1, %s10
  $region7: #{superfusion_forward.8} parent=0 // loop_footer_branch
    %9 = sbr.rel target = $region3
  $region8: #{superfusion_forward.8} parent=0 // loop_exit
    _

// kernel: superfusion_forward.7
$region0: #{superfusion_forward.7}
  #allocation0 [shape = 'u32[]', space=smem, size = 0x4, offset = 0x4, fixed_abs, tag = 'smem constant byte address 0x4 - core index']
  #allocation1 [shape = 'u32[144,128]{1,0:T(1,128)}', space=vmem, size = 0x12000, scoped, tag = 'internal scratch']
  %s0 = inlined_call_operand.vmem [shape: bf16[2,6,640], index: 0, kind: input, shape index: {}]
  %s1 = inlined_call_operand.vmem [shape: bf16[9,16,6], index: 1, kind: input, shape index: {}]
  %s2 = inlined_call_operand.vmem [shape: f32[16,1], index: 2, kind: input, shape index: {}]
  %s3 = inlined_call_operand.vmem [shape: f32[1,384], index: 3, kind: input, shape index: {}]
  %s4 = inlined_call_operand.vmem [shape: bf16[2,16,640], index: 4, kind: output, shape index: {}]
  %s5 = sld [smem:[#allocation0]]
  $region49: #{superfusion_forward.7} parent=0
    _
  %s7 = ssub.s32 1, %s5
  %s8 = scalar_select 0, %s7, %s5
  loop: start=0, step=1, limit=4
  $region2: #{superfusion_forward.7} parent=0 // loop_pre_header
    _
  $region3: #{superfusion_forward.7} parent=0 // loop_header
    %s10 = sphi 0, %s14
    %p11 = scmp.ge.s32.totalorder %s10, 4
    %s20 = sphi 0, %s22
    %s23 = sphi 0, %s20
    %s24 = sphi 0, %s23
    %s40 = sphi 0, %s24
    %s44 = sphi 0, %s44
    %s46 = sphi 0, %s44
    %s47 = sphi 0, %s46
    %s61 = sphi 0, %s47
    %s65 = sphi 0, %s65
    %s67 = sphi 0, %s65
    %s68 = sphi 0, %s67
    %s82 = sphi 0, %s68
    %s86 = sphi 0, %s86
    %s88 = sphi 0, %s86
    %s89 = sphi 0, %s88
    %s103 = sphi 0, %s89
    %s109 = sphi 0, %s111
    %s112 = sphi 0, %s109
    %s113 = sphi 0, %s112
    %s129 = sphi 0, %s113
  $region4: #{superfusion_forward.7} parent=0 // loop_header_branch
    %13 = sbr.rel (%p11) target = $region8
  $region5: #{superfusion_forward.7} parent=0 // loop_body
    %s15 = ssub.s32 %s10, 1
    %s16 = ssub.s32 %s10, 2
    %s17 = sadd.s32 %s10, 1
    %s18 = ssub.s32 %s10, %s17
    %p19 = scmp.eq.s32.totalorder %s18, 0
    %s21 = sadd.s32 %s20, 1
    %s22 = scalar_select %p19, %s20, %s21
    %p25 = pneg %p19
    %p26 = scmp.eq.s32.totalorder %s10, 1
    %p27 = por %p25, %p26
    %p28 = scmp.ne.s32.totalorder %s20, %s23
    %p29 = scmp.eq.s32.totalorder %s10, 0
    %p30 = por %p28, %p29
    %p31 = scmp.ne.s32.totalorder %s20, %s23
    %p32 = scmp.eq.s32.totalorder %s15, 1
    %p33 = por %p31, %p32
    %p34 = scmp.ne.s32.totalorder %s23, %s24
    %p35 = scmp.eq.s32.totalorder %s15, 0
    %p36 = por %p34, %p35
    %p37 = scmp.ne.s32.totalorder %s23, %s24
    %p38 = scmp.eq.s32.totalorder %s16, 1
    %p39 = por %p37, %p38
    %p41 = scmp.ne.s32.totalorder %s24, %s40
    %p42 = scmp.eq.s32.totalorder %s16, 0
    %p43 = por %p41, %p42
    %s45 = sadd.s32 %s44, 1
    %p48 = scmp.eq.s32.totalorder %s10, 1
    %p49 = scmp.ne.s32.totalorder %s44, %s46
    %p50 = scmp.eq.s32.totalorder %s10, 0
    %p51 = por %p49, %p50
    %p52 = scmp.ne.s32.totalorder %s44, %s46
    %p53 = scmp.eq.s32.totalorder %s15, 1
    %p54 = por %p52, %p53
    %p55 = scmp.ne.s32.totalorder %s46, %s47
    %p56 = scmp.eq.s32.totalorder %s15, 0
    %p57 = por %p55, %p56
    %p58 = scmp.ne.s32.totalorder %s46, %s47
    %p59 = scmp.eq.s32.totalorder %s16, 1
    %p60 = por %p58, %p59
    %p62 = scmp.ne.s32.totalorder %s47, %s61
    %p63 = scmp.eq.s32.totalorder %s16, 0
    %p64 = por %p62, %p63
    %s66 = sadd.s32 %s65, 1
    %p69 = scmp.eq.s32.totalorder %s10, 1
    %p70 = scmp.ne.s32.totalorder %s65, %s67
    %p71 = scmp.eq.s32.totalorder %s10, 0
    %p72 = por %p70, %p71
    %p73 = scmp.ne.s32.totalorder %s65, %s67
    %p74 = scmp.eq.s32.totalorder %s15, 1
    %p75 = por %p73, %p74
    %p76 = scmp.ne.s32.totalorder %s67, %s68
    %p77 = scmp.eq.s32.totalorder %s15, 0
    %p78 = por %p76, %p77
    %p79 = scmp.ne.s32.totalorder %s67, %s68
    %p80 = scmp.eq.s32.totalorder %s16, 1
    %p81 = por %p79, %p80
    %p83 = scmp.ne.s32.totalorder %s68, %s82
    %p84 = scmp.eq.s32.totalorder %s16, 0
    %p85 = por %p83, %p84
    %s87 = sadd.s32 %s86, 1
    %p90 = scmp.eq.s32.totalorder %s10, 1
    %p91 = scmp.ne.s32.totalorder %s86, %s88
    %p92 = scmp.eq.s32.totalorder %s10, 0
    %p93 = por %p91, %p92
    %p94 = scmp.ne.s32.totalorder %s86, %s88
    %p95 = scmp.eq.s32.totalorder %s15, 1
    %p96 = por %p94, %p95
    %p97 = scmp.ne.s32.totalorder %s88, %s89
    %p98 = scmp.eq.s32.totalorder %s15, 0
    %p99 = por %p97, %p98
    %p100 = scmp.ne.s32.totalorder %s88, %s89
    %p101 = scmp.eq.s32.totalorder %s16, 1
    %p102 = por %p100, %p101
    %p104 = scmp.ne.s32.totalorder %s89, %s103
    %p105 = scmp.eq.s32.totalorder %s16, 0
    %p106 = por %p104, %p105
    %s107 = ssub.s32 %s10, %s17
    %p108 = scmp.eq.s32.totalorder %s107, 0
    %s110 = sadd.s32 %s109, 1
    %s111 = scalar_select %p108, %s109, %s110
    %p114 = pneg %p108
    %p115 = scmp.eq.s32.totalorder %s10, 1
    %p116 = por %p114, %p115
    %p117 = scmp.ne.s32.totalorder %s109, %s112
    %p118 = scmp.eq.s32.totalorder %s10, 0
    %p119 = por %p117, %p118
    %p120 = scmp.ne.s32.totalorder %s109, %s112
    %p121 = scmp.eq.s32.totalorder %s15, 1
    %p122 = por %p120, %p121
    %p123 = scmp.ne.s32.totalorder %s112, %s113
    %p124 = scmp.eq.s32.totalorder %s15, 0
    %p125 = por %p123, %p124
    %p126 = scmp.ne.s32.totalorder %s112, %s113
    %p127 = scmp.eq.s32.totalorder %s16, 1
    %p128 = por %p126, %p127
    %p130 = scmp.ne.s32.totalorder %s113, %s129
    %p131 = scmp.eq.s32.totalorder %s16, 0
    %p132 = por %p130, %p131
    %p133 = scmp.le.s32.totalorder 1, %s10
    %p134 = scmp.lt.s32.totalorder %s10, 3
    %p135 = pnand %p133, %p134
    %p136 = pneg %p135
    // Predicated region
    $region9: #{superfusion_forward.7} parent=5 // pred_check
      _
    $region10: #{superfusion_forward.7} parent=5 // pred_check_branch
      %138 = sbr.rel (%p135) target = $region12
    $region11: #{superfusion_forward.7} parent=5 // pred_region
      %s139 = ssub.s32 %s10, 1
      // Predicated region
      $region13: #{superfusion_forward.7} parent=11 // pred_check
        %p140 = pneg %p57
      $region14: #{superfusion_forward.7} parent=11 // pred_check_branch
        %142 = sbr.rel (%p140) target = $region16
      $region15: #{superfusion_forward.7} parent=11 // pred_region
        _
      $region16: #{superfusion_forward.7} parent=11 // pred_fallthru
        _
      // Predicated region
      $region17: #{superfusion_forward.7} parent=11 // pred_check
        %p143 = pneg %p78
      $region18: #{superfusion_forward.7} parent=11 // pred_check_branch
        %145 = sbr.rel (%p143) target = $region20
      $region19: #{superfusion_forward.7} parent=11 // pred_region
        _
      $region20: #{superfusion_forward.7} parent=11 // pred_fallthru
        _
      // Predicated region
      $region21: #{superfusion_forward.7} parent=11 // pred_check
        %p146 = pneg %p99
      $region22: #{superfusion_forward.7} parent=11 // pred_check_branch
        %148 = sbr.rel (%p146) target = $region24
      $region23: #{superfusion_forward.7} parent=11 // pred_region
        _
      $region24: #{superfusion_forward.7} parent=11 // pred_fallthru
        _
    $region12: #{superfusion_forward.7} parent=5 // pred_fallthru
      _
    %p149 = scmp.lt.s32.totalorder %s10, 2
    // Predicated region
    $region25: #{superfusion_forward.7} parent=5 // pred_check
      %p150 = pneg %p149
    $region26: #{superfusion_forward.7} parent=5 // pred_check_branch
      %152 = sbr.rel (%p150) target = $region28
    $region27: #{superfusion_forward.7} parent=5 // pred_region
      // Predicated region
      $region29: #{superfusion_forward.7} parent=27 // pred_check
        %p153 = pneg %p30
      $region30: #{superfusion_forward.7} parent=27 // pred_check_branch
        %155 = sbr.rel (%p153) target = $region32
      $region31: #{superfusion_forward.7} parent=27 // pred_region
        %p156 = scmp.lt.s32.totalorder %s10, 1
        %s157 = scalar_select %p156, %s10, 1
        %s158 = smul.addr %s157, 5
        %s159 = smul.addr %s158, 4
        %s160 = scalar_lea.vmem %s0, %s159
      $region32: #{superfusion_forward.7} parent=27 // pred_fallthru
        _
    $region28: #{superfusion_forward.7} parent=5 // pred_fallthru
      _
    %p161 = scmp.le.s32.totalorder 1, %s10
    %p162 = scmp.lt.s32.totalorder %s10, 3
    %p163 = pnand %p161, %p162
    %p164 = pneg %p163
    // Predicated region
    $region33: #{superfusion_forward.7} parent=5 // pred_check
      _
    $region34: #{superfusion_forward.7} parent=5 // pred_check_branch
      %166 = sbr.rel (%p163) target = $region36
    $region35: #{superfusion_forward.7} parent=5 // pred_region
      %s167 = ssub.s32 %s10, 1
      %p168 = scmp.lt.s32.totalorder %s15, 1
      %s169 = scalar_select %p168, %s15, 1
      %s170 = smul.addr %s169, 5
      %s171 = smul.addr %s170, 4
      %s172 = scalar_lea.vmem %s0, %s171
      %p173 = pneg %p36
      %p174 = pneg %p33
      %p175 = pneg %p57
      %p176 = pneg %p54
      %p177 = pneg %p78
      %p178 = pneg %p75
      %p179 = pneg %p99
      %p180 = pneg %p96
      %p181 = pneg %p125
      %p182 = pneg %p122
      %p183 = scmp.lt.s32.totalorder %s15, 1
      %s184 = scalar_select %p183, %s15, 1
      %s185 = smul.addr %s184, 10
      %s186 = smul.addr %s185, 4
      %s187 = scalar_lea.vmem %s4, %s186
      %p188 = scmp.lt.s32.totalorder %s15, 1
      %s189 = scalar_select %p188, %s15, 1
      %s190 = smul.addr %s189, 5
      %s191 = smul.addr %s190, 4
      %s192 = scalar_lea.vmem %s0, %s191
      %p193 = scmp.lt.s32.totalorder %s15, 1
      %s194 = scalar_select %p193, %s15, 1
      %s195 = smul.addr %s194, 10
      %s196 = smul.addr %s195, 4
      %s197 = scalar_lea.vmem %s4, %s196
      %v199 = vld [vmem:[%s1] sm:$0xf]
      %v200 = vld [vmem:[%s1 + $0x4] sm:$0xf]
      %v201 = vld [vmem:[%s1 + $0x8] sm:$0xf]
      %v202 = vld [vmem:[%s1 + $0xc] sm:$0xf]
      %v203 = vld [vmem:[%s1 + $0x10] sm:$0xf]
      %v204 = vld [vmem:[%s1 + $0x14] sm:$0xf]
      %v205 = vld [vmem:[%s1 + $0x18] sm:$0xf]
      %v206 = vld [vmem:[%s1 + $0x1c] sm:$0xf]
      %v207 = vld [vmem:[%s1 + $0x20] sm:$0xf]
      %v208 = vld [vmem:[%s1 + $0x24] sm:$0xf]
      %v209 = vld [vmem:[%s1 + $0x28] sm:$0xf]
      %v210 = vld [vmem:[%s1 + $0x2c] sm:$0xf]
      %v211 = vld [vmem:[%s1 + $0x30] sm:$0xf]
      %v212 = vld [vmem:[%s1 + $0x34] sm:$0xf]
      %v213 = vld [vmem:[%s1 + $0x38] sm:$0xf]
      %v214 = vld [vmem:[%s1 + $0x3c] sm:$0xf]
      %v215 = vld [vmem:[%s1 + $0x40] sm:$0xf]
      %v216 = vld [vmem:[%s1 + $0x44] sm:$0xf]
      %v217 = vld [vmem:[%s2] sm:$0xff]
      %v218 = vld [vmem:[%s2 + $0x8] sm:$0xff]
      %219 = vst [vmem:[%s197] sm:$0xf] 0
      %220 = vst [vmem:[%s197 + $0x14] sm:$0xf] 0
      %221 = vst [vmem:[%s197 + $0x10] sm:$0xf] 0
      %222 = vst [vmem:[%s197 + $0x24] sm:$0xf] 0
      %v223 = vld [vmem:[%s192] sm:$0x77]
      %v224 = vld [vmem:[%s192 + $0x8] sm:$0x77]
      %v227 = vunpack.c.l.b16 %v201
      %v228 = vunpack.c.l.b16 %v202
      %v229 = vpack.c.b16 %v228, %v227
      %v232 = vunpack.c.l.b16 %v223
      %v233 = vunpack.c.h.b16 %v223
      %v234 = vunpack.c.l.b16 %v224
      %v235 = vunpack.c.h.b16 %v224
      %v236 = vpack.c.b16 %v232, %v232
      %v237 = vpack.c.b16 %v233, %v233
      %v238 = vpack.c.b16 %v234, %v234
      %v239 = vpack.c.b16 %v235, %v235
      %240 = vrot.lane.b32.xlu0 %v236, 18
      %v241 = vpop.permute.xlu0 %240
      %242 = vrot.lane.b32.xlu0 %v237, 18
      %v243 = vpop.permute.xlu0 %242
      %244 = vrot.lane.b32.xlu0 %v238, 18
      %v245 = vpop.permute.xlu0 %244
      %246 = vrot.lane.b32.xlu0 %v239, 18
      %v247 = vpop.permute.xlu0 %246
      %vm248 = vcmask 146432
      %v249 = vsel %vm248, %v241, %v243
      %v250 = vsel %vm248, %v243, %v245
      %v251 = vsel %vm248, %v245, %v247
      %vm252 = vcmask 48128
      %v254 = vsel %vm252, %v229, 0
      %vm256 = vcmask 1042432
      %v258 = vsel %vm256, %v249, 0
      %v261 = vsel %vm256, %v250, 0
      %v264 = vsel %vm256, %v251, 0
      %266 = vmatprep.subr.bf16.mxu0 %v261
      %267 = vmatpush1.bf16.msra.mxu0 %v258
      %268 = vmatprep.subr.bf16.mxu0 0
      %269 = vmatpush1.bf16.msra.mxu0 0
      %270 = vmatprep.subr.bf16.mxu0 0
      %271 = vmatpush1.bf16.msra.mxu0 0
      %272 = vmatprep.subr.bf16.mxu0 0
      %273 = vmatpush1.bf16.msra.mxu0 0
      %274 = vmatprep.subr.bf16.mxu0 0
      %275 = vmatpush1.bf16.msra.mxu0 0
      %276 = vmatprep.subr.bf16.mxu0 0
      %277 = vmatpush1.bf16.msra.mxu0 0
      %278 = vmatprep.subr.bf16.mxu0 0
      %279 = vmatpush1.bf16.msra.mxu0 0
      %280 = vmatprep.subr.bf16.mxu0 0
      %281 = vmatpush1.bf16.msra.mxu0 0
      %282 = vmatprep.subr.bf16.mxu0 0
      %283 = vmatpush1.bf16.msra.mxu0 0
      %284 = vmatprep.subr.bf16.mxu0 0
      %285 = vmatpush1.bf16.msra.mxu0 0
      %286 = vmatprep.subr.bf16.mxu0 0
      %287 = vmatpush1.bf16.msra.mxu0 0
      %288 = vmatprep.subr.bf16.mxu0 0
      %289 = vmatpush1.bf16.msra.mxu0 0
      %290 = vmatprep.subr.bf16.mxu0 0
      %291 = vmatpush1.bf16.msra.mxu0 0
      %292 = vmatprep.subr.bf16.mxu0 0
      %293 = vmatpush1.bf16.msra.mxu0 0
      %294 = vmatprep.subr.bf16.mxu0 0
      %295 = vmatpush1.bf16.msra.mxu0 0
      %296 = vmatprep.subr.bf16.mxu0 0
      %297 = vmatpush1.bf16.msra.mxu0 0
      %298 = vmatprep.mubr.bf16.mxu0 0
      %299 = vmatmul.mubr.bf16.gmra.mrb[0].mxu0 %v254
      %v300 = vpop.f32.mrb[0].mxu0
      %v301 = vadd.f32 0.0, %v300
      %v302 = vpop.f32.mrb[0].mxu0
      %v303 = vadd.f32 0.0, %v302
      %v304 = vpop.f32.mrb[0].mxu0
      %v305 = vadd.f32 0.0, %v304
      %v306 = vpop.f32.mrb[0].mxu0
      %v307 = vadd.f32 0.0, %v306
      %308 = vdwg.mxu0
      %309 = vmatprep.subr.bf16.mxu0 0
      %310 = vmatpush1.bf16.msra.mxu0 %v264
      %311 = vmatprep.subr.bf16.mxu0 0
      %312 = vmatpush1.bf16.msra.mxu0 0
      %313 = vmatprep.subr.bf16.mxu0 0
      %314 = vmatpush1.bf16.msra.mxu0 0
      %315 = vmatprep.subr.bf16.mxu0 0
      %316 = vmatpush1.bf16.msra.mxu0 0
      %317 = vmatprep.subr.bf16.mxu0 0
      %318 = vmatpush1.bf16.msra.mxu0 0
      %319 = vmatprep.subr.bf16.mxu0 0
      %320 = vmatpush1.bf16.msra.mxu0 0
      %321 = vmatprep.subr.bf16.mxu0 0
      %322 = vmatpush1.bf16.msra.mxu0 0
      %323 = vmatprep.subr.bf16.mxu0 0
      %324 = vmatpush1.bf16.msra.mxu0 0
      %325 = vmatprep.subr.bf16.mxu0 0
      %326 = vmatpush1.bf16.msra.mxu0 0
      %327 = vmatprep.subr.bf16.mxu0 0
      %328 = vmatpush1.bf16.msra.mxu0 0
      %329 = vmatprep.subr.bf16.mxu0 0
      %330 = vmatpush1.bf16.msra.mxu0 0
      %331 = vmatprep.subr.bf16.mxu0 0
      %332 = vmatpush1.bf16.msra.mxu0 0
      %333 = vmatprep.subr.bf16.mxu0 0
      %334 = vmatpush1.bf16.msra.mxu0 0
      %335 = vmatprep.subr.bf16.mxu0 0
      %336 = vmatpush1.bf16.msra.mxu0 0
      %337 = vmatprep.subr.bf16.mxu0 0
      %338 = vmatpush1.bf16.msra.mxu0 0
      %339 = vmatprep.subr.bf16.mxu0 0
      %340 = vmatpush1.bf16.msra.mxu0 0
      %341 = vmatprep.mubr.bf16.mxu0 0
      %342 = vmatmul.mubr.bf16.gmra.mrb[0].mxu0 %v254
      %v343 = vpop.f32.mrb[0].mxu0
      %v344 = vadd.f32 0.0, %v343
      %v345 = vpop.f32.mrb[0].mxu0
      %v346 = vpop.f32.mrb[0].mxu0
      %v347 = vadd.f32 0.0, %v346
      %v348 = vpop.f32.mrb[0].mxu0
      %349 = vdwg.mxu0
      %v352 = vunpack.c.l.b16 %v199
      %v353 = vunpack.c.l.b16 %v200
      %v354 = vpack.c.b16 %v353, %v352
      %355 = vrot.lane.b32.xlu0 %v236, 19
      %v356 = vpop.permute.xlu0 %355
      %357 = vrot.lane.b32.xlu0 %v237, 19
      %v358 = vpop.permute.xlu0 %357
      %359 = vrot.lane.b32.xlu0 %v238, 19
      %v360 = vpop.permute.xlu0 %359
      %361 = vrot.lane.b32.xlu0 %v239, 19
      %v362 = vpop.permute.xlu0 %361
      %vm363 = vcmask 154624
      %v364 = vsel %vm363, %v356, %v358
      %v365 = vsel %vm363, %v358, %v360
      %v366 = vsel %vm363, %v360, %v362
      %v368 = vsel %vm252, %v354, 0
      %v371 = vsel %vm256, %v364, 0
      %v374 = vsel %vm256, %v365, 0
      %v377 = vsel %vm256, %v366, 0
      %379 = vmatprep.subr.bf16.mxu0 %v374
      %380 = vmatpush1.bf16.msra.mxu0 %v371
      %381 = vmatprep.subr.bf16.mxu0 0
      %382 = vmatpush1.bf16.msra.mxu0 0
      %383 = vmatprep.subr.bf16.mxu0 0
      %384 = vmatpush1.bf16.msra.mxu0 0
      %385 = vmatprep.subr.bf16.mxu0 0
      %386 = vmatpush1.bf16.msra.mxu0 0
      %387 = vmatprep.subr.bf16.mxu0 0
      %388 = vmatpush1.bf16.msra.mxu0 0
      %389 = vmatprep.subr.bf16.mxu0 0
      %390 = vmatpush1.bf16.msra.mxu0 0
      %391 = vmatprep.subr.bf16.mxu0 0
      %392 = vmatpush1.bf16.msra.mxu0 0
      %393 = vmatprep.subr.bf16.mxu0 0
      %394 = vmatpush1.bf16.msra.mxu0 0
      %395 = vmatprep.subr.bf16.mxu0 0
      %396 = vmatpush1.bf16.msra.mxu0 0
      %397 = vmatprep.subr.bf16.mxu0 0
      %398 = vmatpush1.bf16.msra.mxu0 0
      %399 = vmatprep.subr.bf16.mxu0 0
      %400 = vmatpush1.bf16.msra.mxu0 0
      %401 = vmatprep.subr.bf16.mxu0 0
      %402 = vmatpush1.bf16.msra.mxu0 0
      %403 = vmatprep.subr.bf16.mxu0 0
      %404 = vmatpush1.bf16.msra.mxu0 0
      %405 = vmatprep.subr.bf16.mxu0 0
      %406 = vmatpush1.bf16.msra.mxu0 0
      %407 = vmatprep.subr.bf16.mxu0 0
      %408 = vmatpush1.bf16.msra.mxu0 0
      %409 = vmatprep.subr.bf16.mxu0 0
      %410 = vmatpush1.bf16.msra.mxu0 0
      %411 = vmatprep.mubr.bf16.mxu0 0
      %412 = vmatmul.mubr.bf16.gmra.mrb[0].mxu0 %v368
      %v413 = vpop.f32.mrb[0].mxu0
      %v414 = vadd.f32 %v301, %v413
      %v415 = vpop.f32.mrb[0].mxu0
      %v416 = vadd.f32 %v303, %v415
      %v417 = vpop.f32.mrb[0].mxu0
      %v418 = vadd.f32 %v305, %v417
      %v419 = vpop.f32.mrb[0].mxu0
      %v420 = vadd.f32 %v307, %v419
      %421 = vdwg.mxu0
      %422 = vmatprep.subr.bf16.mxu0 0
      %423 = vmatpush1.bf16.msra.mxu0 %v377
      %424 = vmatprep.subr.bf16.mxu0 0
      %425 = vmatpush1.bf16.msra.mxu0 0
      %426 = vmatprep.subr.bf16.mxu0 0
      %427 = vmatpush1.bf16.msra.mxu0 0
      %428 = vmatprep.subr.bf16.mxu0 0
      %429 = vmatpush1.bf16.msra.mxu0 0
      %430 = vmatprep.subr.bf16.mxu0 0
      %431 = vmatpush1.bf16.msra.mxu0 0
      %432 = vmatprep.subr.bf16.mxu0 0
      %433 = vmatpush1.bf16.msra.mxu0 0
      %434 = vmatprep.subr.bf16.mxu0 0
      %435 = vmatpush1.bf16.msra.mxu0 0
      %436 = vmatprep.subr.bf16.mxu0 0
      %437 = vmatpush1.bf16.msra.mxu0 0
      %438 = vmatprep.subr.bf16.mxu0 0
      %439 = vmatpush1.bf16.msra.mxu0 0
      %440 = vmatprep.subr.bf16.mxu0 0
      %441 = vmatpush1.bf16.msra.mxu0 0
      %442 = vmatprep.subr.bf16.mxu0 0
      %443 = vmatpush1.bf16.msra.mxu0 0
      %444 = vmatprep.subr.bf16.mxu0 0
      %445 = vmatpush1.bf16.msra.mxu0 0
      %446 = vmatprep.subr.bf16.mxu0 0
      %447 = vmatpush1.bf16.msra.mxu0 0
      %448 = vmatprep.subr.bf16.mxu0 0
      %449 = vmatpush1.bf16.msra.mxu0 0
      %450 = vmatprep.subr.bf16.mxu0 0
      %451 = vmatpush1.bf16.msra.mxu0 0
      %452 = vmatprep.subr.bf16.mxu0 0
      %453 = vmatpush1.bf16.msra.mxu0 0
      %454 = vmatprep.mubr.bf16.mxu0 0
      %455 = vmatmul.mubr.bf16.gmra.mrb[0].mxu0 %v368
      %v456 = vpop.f32.mrb[0].mxu0
      %v457 = vadd.f32 %v344, %v456
      %v458 = vpop.f32.mrb[0].mxu0
      %v459 = vpop.f32.mrb[0].mxu0
      %v460 = vadd.f32 %v347, %v459
      %v461 = vpop.f32.mrb[0].mxu0
      %462 = vdwg.mxu0
      %v465 = vunpack.c.l.b16 %v203
      %v466 = vunpack.c.l.b16 %v204
      %v467 = vpack.c.b16 %v466, %v465
      %468 = vrot.lane.b32.xlu0 %v236, 17
      %v469 = vpop.permute.xlu0 %468
      %470 = vrot.lane.b32.xlu0 %v237, 17
      %v471 = vpop.permute.xlu0 %470
      %472 = vrot.lane.b32.xlu0 %v238, 17
      %v473 = vpop.permute.xlu0 %472
      %474 = vrot.lane.b32.xlu0 %v239, 17
      %v475 = vpop.permute.xlu0 %474
      %vm476 = vcmask 138240
      %v477 = vsel %vm476, %v469, %v471
      %v478 = vsel %vm476, %v471, %v473
      %v479 = vsel %vm476, %v473, %v475
      %v481 = vsel %vm252, %v467, 0
      %v484 = vsel %vm256, %v477, 0
      %v487 = vsel %vm256, %v478, 0
      %v490 = vsel %vm256, %v479, 0
      %492 = vmatprep.subr.bf16.mxu0 %v487
      %493 = vmatpush1.bf16.msra.mxu0 %v484
      %494 = vmatprep.subr.bf16.mxu0 0
      %495 = vmatpush1.bf16.msra.mxu0 0
      %496 = vmatprep.subr.bf16.mxu0 0
      %497 = vmatpush1.bf16.msra.mxu0 0
      %498 = vmatprep.subr.bf16.mxu0 0
      %499 = vmatpush1.bf16.msra.mxu0 0
      %500 = vmatprep.subr.bf16.mxu0 0
      %501 = vmatpush1.bf16.msra.mxu0 0
      %502 = vmatprep.subr.bf16.mxu0 0
      %503 = vmatpush1.bf16.msra.mxu0 0
      %504 = vmatprep.subr.bf16.mxu0 0
      %505 = vmatpush1.bf16.msra.mxu0 0
      %506 = vmatprep.subr.bf16.mxu0 0
      %507 = vmatpush1.bf16.msra.mxu0 0
      %508 = vmatprep.subr.bf16.mxu0 0
      %509 = vmatpush1.bf16.msra.mxu0 0
      %510 = vmatprep.subr.bf16.mxu0 0
      %511 = vmatpush1.bf16.msra.mxu0 0
      %512 = vmatprep.subr.bf16.mxu0 0
      %513 = vmatpush1.bf16.msra.mxu0 0
      %514 = vmatprep.subr.bf16.mxu0 0
      %515 = vmatpush1.bf16.msra.mxu0 0
      %516 = vmatprep.subr.bf16.mxu0 0
      %517 = vmatpush1.bf16.msra.mxu0 0
      %518 = vmatprep.subr.bf16.mxu0 0
      %519 = vmatpush1.bf16.msra.mxu0 0
      %520 = vmatprep.subr.bf16.mxu0 0
      %521 = vmatpush1.bf16.msra.mxu0 0
      %522 = vmatprep.subr.bf16.mxu0 0
      %523 = vmatpush1.bf16.msra.mxu0 0
      %524 = vmatprep.mubr.bf16.mxu0 0
      %525 = vmatmul.mubr.bf16.gmra.mrb[0].mxu0 %v481
      %v526 = vpop.f32.mrb[0].mxu0
      %v527 = vadd.f32 0.0, %v526
      %v528 = vpop.f32.mrb[0].mxu0
      %v529 = vadd.f32 0.0, %v528
      %v530 = vpop.f32.mrb[0].mxu0
      %v531 = vadd.f32 0.0, %v530
      %v532 = vpop.f32.mrb[0].mxu0
      %v533 = vadd.f32 0.0, %v532
      %534 = vdwg.mxu0
      %535 = vmatprep.subr.bf16.mxu0 0
      %536 = vmatpush1.bf16.msra.mxu0 %v490
      %537 = vmatprep.subr.bf16.mxu0 0
      %538 = vmatpush1.bf16.msra.mxu0 0
      %539 = vmatprep.subr.bf16.mxu0 0
      %540 = vmatpush1.bf16.msra.mxu0 0
      %541 = vmatprep.subr.bf16.mxu0 0
      %542 = vmatpush1.bf16.msra.mxu0 0
      %543 = vmatprep.subr.bf16.mxu0 0
      %544 = vmatpush1.bf16.msra.mxu0 0
      %545 = vmatprep.subr.bf16.mxu0 0
      %546 = vmatpush1.bf16.msra.mxu0 0
      %547 = vmatprep.subr.bf16.mxu0 0
      %548 = vmatpush1.bf16.msra.mxu0 0
      %549 = vmatprep.subr.bf16.mxu0 0
      %550 = vmatpush1.bf16.msra.mxu0 0
      %551 = vmatprep.subr.bf16.mxu0 0
      %552 = vmatpush1.bf16.msra.mxu0 0
      %553 = vmatprep.subr.bf16.mxu0 0
      %554 = vmatpush1.bf16.msra.mxu0 0
      %555 = vmatprep.subr.bf16.mxu0 0
      %556 = vmatpush1.bf16.msra.mxu0 0
      %557 = vmatprep.subr.bf16.mxu0 0
      %558 = vmatpush1.bf16.msra.mxu0 0
      %559 = vmatprep.subr.bf16.mxu0 0
      %560 = vmatpush1.bf16.msra.mxu0 0
      %561 = vmatprep.subr.bf16.mxu0 0
      %562 = vmatpush1.bf16.msra.mxu0 0
      %563 = vmatprep.subr.bf16.mxu0 0
      %564 = vmatpush1.bf16.msra.mxu0 0
      %565 = vmatprep.subr.bf16.mxu0 0
      %566 = vmatpush1.bf16.msra.mxu0 0
      %567 = vmatprep.mubr.bf16.mxu0 0
      %568 = vmatmul.mubr.bf16.gmra.mrb[0].mxu0 %v481
      %v569 = vpop.f32.mrb[0].mxu0
      %v570 = vadd.f32 0.0, %v569
      %v571 = vpop.f32.mrb[0].mxu0
      %v572 = vpop.f32.mrb[0].mxu0
      %v573 = vadd.f32 0.0, %v572
      %v574 = vpop.f32.mrb[0].mxu0
      %575 = vdwg.mxu0
      %v576 = vadd.f32 %v414, %v527
      %v577 = vadd.f32 %v416, %v529
      %v578 = vadd.f32 %v457, %v570
      %v579 = vadd.f32 %v418, %v531
      %v580 = vadd.f32 %v420, %v533
      %v581 = vadd.f32 %v460, %v573
      %v584 = vunpack.c.l.b16 %v205
      %v585 = vunpack.c.l.b16 %v206
      %v586 = vpack.c.b16 %v585, %v584
      %587 = vrot.lane.b32.xlu0 %v236, 1
      %v588 = vpop.permute.xlu0 %587
      %589 = vrot.lane.b32.xlu0 %v237, 1
      %v590 = vpop.permute.xlu0 %589
      %591 = vrot.lane.b32.xlu0 %v238, 1
      %v592 = vpop.permute.xlu0 %591
      %593 = vrot.lane.b32.xlu0 %v239, 1
      %v594 = vpop.permute.xlu0 %593
      %vm595 = vcmask 7168
      %v596 = vsel %vm595, %v588, %v590
      %v597 = vsel %vm595, %v590, %v592
      %v598 = vsel %vm595, %v592, %v594
      %v600 = vsel %vm252, %v586, 0
      %v603 = vsel %vm256, %v596, 0
      %v606 = vsel %vm256, %v597, 0
      %v609 = vsel %vm256, %v598, 0
      %611 = vmatprep.subr.bf16.mxu0 %v606
      %612 = vmatpush1.bf16.msra.mxu0 %v603
      %613 = vmatprep.subr.bf16.mxu0 0
      %614 = vmatpush1.bf16.msra.mxu0 0
      %615 = vmatprep.subr.bf16.mxu0 0
      %616 = vmatpush1.bf16.msra.mxu0 0
      %617 = vmatprep.subr.bf16.mxu0 0
      %618 = vmatpush1.bf16.msra.mxu0 0
      %619 = vmatprep.subr.bf16.mxu0 0
      %620 = vmatpush1.bf16.msra.mxu0 0
      %621 = vmatprep.subr.bf16.mxu0 0
      %622 = vmatpush1.bf16.msra.mxu0 0
      %623 = vmatprep.subr.bf16.mxu0 0
      %624 = vmatpush1.bf16.msra.mxu0 0
      %625 = vmatprep.subr.bf16.mxu0 0
      %626 = vmatpush1.bf16.msra.mxu0 0
      %627 = vmatprep.subr.bf16.mxu0 0
      %628 = vmatpush1.bf16.msra.mxu0 0
      %629 = vmatprep.subr.bf16.mxu0 0
      %630 = vmatpush1.bf16.msra.mxu0 0
      %631 = vmatprep.subr.bf16.mxu0 0
      %632 = vmatpush1.bf16.msra.mxu0 0
      %633 = vmatprep.subr.bf16.mxu0 0
      %634 = vmatpush1.bf16.msra.mxu0 0
      %635 = vmatprep.subr.bf16.mxu0 0
      %636 = vmatpush1.bf16.msra.mxu0 0
      %637 = vmatprep.subr.bf16.mxu0 0
      %638 = vmatpush1.bf16.msra.mxu0 0
      %639 = vmatprep.subr.bf16.mxu0 0
      %640 = vmatpush1.bf16.msra.mxu0 0
      %641 = vmatprep.subr.bf16.mxu0 0
      %642 = vmatpush1.bf16.msra.mxu0 0
      %643 = vmatprep.mubr.bf16.mxu0 0
      %644 = vmatmul.mubr.bf16.gmra.mrb[0].mxu0 %v600
      %v645 = vpop.f32.mrb[0].mxu0
      %v646 = vadd.f32 0.0, %v645
      %v647 = vpop.f32.mrb[0].mxu0
      %v648 = vadd.f32 0.0, %v647
      %v649 = vpop.f32.mrb[0].mxu0
      %v650 = vadd.f32 0.0, %v649
      %v651 = vpop.f32.mrb[0].mxu0
      %v652 = vadd.f32 0.0, %v651
      %653 = vdwg.mxu0
      %654 = vmatprep.subr.bf16.mxu0 0
      %655 = vmatpush1.bf16.msra.mxu0 %v609
      %656 = vmatprep.subr.bf16.mxu0 0
      %657 = vmatpush1.bf16.msra.mxu0 0
      %658 = vmatprep.subr.bf16.mxu0 0
      %659 = vmatpush1.bf16.msra.mxu0 0
      %660 = vmatprep.subr.bf16.mxu0 0
      %661 = vmatpush1.bf16.msra.mxu0 0
      %662 = vmatprep.subr.bf16.mxu0 0
      %663 = vmatpush1.bf16.msra.mxu0 0
      %664 = vmatprep.subr.bf16.mxu0 0
      %665 = vmatpush1.bf16.msra.mxu0 0
      %666 = vmatprep.subr.bf16.mxu0 0
      %667 = vmatpush1.bf16.msra.mxu0 0
      %668 = vmatprep.subr.bf16.mxu0 0
      %669 = vmatpush1.bf16.msra.mxu0 0
      %670 = vmatprep.subr.bf16.mxu0 0
      %671 = vmatpush1.bf16.msra.mxu0 0
      %672 = vmatprep.subr.bf16.mxu0 0
      %673 = vmatpush1.bf16.msra.mxu0 0
      %674 = vmatprep.subr.bf16.mxu0 0
      %675 = vmatpush1.bf16.msra.mxu0 0
      %676 = vmatprep.subr.bf16.mxu0 0
      %677 = vmatpush1.bf16.msra.mxu0 0
      %678 = vmatprep.subr.bf16.mxu0 0
      %679 = vmatpush1.bf16.msra.mxu0 0
      %680 = vmatprep.subr.bf16.mxu0 0
      %681 = vmatpush1.bf16.msra.mxu0 0
      %682 = vmatprep.subr.bf16.mxu0 0
      %683 = vmatpush1.bf16.msra.mxu0 0
      %684 = vmatprep.subr.bf16.mxu0 0
      %685 = vmatpush1.bf16.msra.mxu0 0
      %686 = vmatprep.mubr.bf16.mxu0 0
      %687 = vmatmul.mubr.bf16.gmra.mrb[0].mxu0 %v600
      %v688 = vpop.f32.mrb[0].mxu0
      %v689 = vadd.f32 0.0, %v688
      %v690 = vpop.f32.mrb[0].mxu0
      %v691 = vpop.f32.mrb[0].mxu0
      %v692 = vadd.f32 0.0, %v691
      %v693 = vpop.f32.mrb[0].mxu0
      %694 = vdwg.mxu0
      %v695 = vadd.f32 %v576, %v646
      %v696 = vadd.f32 %v577, %v648
      %v697 = vadd.f32 %v578, %v689
      %v698 = vadd.f32 %v579, %v650
      %v699 = vadd.f32 %v580, %v652
      %v700 = vadd.f32 %v581, %v692
      %v701 = vld [vmem:[%s192 + $0x4] sm:$0x77]
      %v702 = vld [vmem:[%s192 + $0xc] sm:$0x7]
      %v705 = vunpack.c.l.b16 %v207
      %v706 = vunpack.c.l.b16 %v208
      %v707 = vpack.c.b16 %v706, %v705
      %v710 = vunpack.c.l.b16 %v701
      %v711 = vunpack.c.h.b16 %v701
      %v712 = vunpack.c.l.b16 %v702
      %v713 = vpack.c.b16 %v710, %v710
      %v714 = vpack.c.b16 %v711, %v711
      %v715 = vpack.c.b16 %v712, %v712
      %v717 = vsel %vm252, %v707, 0
      %v720 = vsel %vm256, %v713, 0
      %v723 = vsel %vm256, %v714, 0
      %v726 = vsel %vm256, %v715, 0
      %728 = vmatprep.subr.bf16.mxu0 %v723
      %729 = vmatpush1.bf16.msra.mxu0 %v720
      %730 = vmatprep.subr.bf16.mxu0 0
      %731 = vmatpush1.bf16.msra.mxu0 0
      %732 = vmatprep.subr.bf16.mxu0 0
      %733 = vmatpush1.bf16.msra.mxu0 0
      %734 = vmatprep.subr.bf16.mxu0 0
      %735 = vmatpush1.bf16.msra.mxu0 0
      %736 = vmatprep.subr.bf16.mxu0 0
      %737 = vmatpush1.bf16.msra.mxu0 0
      %738 = vmatprep.subr.bf16.mxu0 0
      %739 = vmatpush1.bf16.msra.mxu0 0
      %740 = vmatprep.subr.bf16.mxu0 0
      %741 = vmatpush1.bf16.msra.mxu0 0
      %742 = vmatprep.subr.bf16.mxu0 0
      %743 = vmatpush1.bf16.msra.mxu0 0
      %744 = vmatprep.subr.bf16.mxu0 0
      %745 = vmatpush1.bf16.msra.mxu0 0
      %746 = vmatprep.subr.bf16.mxu0 0
      %747 = vmatpush1.bf16.msra.mxu0 0
      %748 = vmatprep.subr.bf16.mxu0 0
      %749 = vmatpush1.bf16.msra.mxu0 0
      %750 = vmatprep.subr.bf16.mxu0 0
      %751 = vmatpush1.bf16.msra.mxu0 0
      %752 = vmatprep.subr.bf16.mxu0 0
      %753 = vmatpush1.bf16.msra.mxu0 0
      %754 = vmatprep.subr.bf16.mxu0 0
      %755 = vmatpush1.bf16.msra.mxu0 0
      %756 = vmatprep.subr.bf16.mxu0 0
      %757 = vmatpush1.bf16.msra.mxu0 0
      %758 = vmatprep.subr.bf16.mxu0 0
      %759 = vmatpush1.bf16.msra.mxu0 0
      %760 = vmatprep.mubr.bf16.mxu0 0
      %761 = vmatmul.mubr.bf16.gmra.mrb[0].mxu0 %v717
      %v762 = vpop.f32.mrb[0].mxu0
      %v763 = vadd.f32 0.0, %v762
      %v764 = vpop.f32.mrb[0].mxu0
      %v765 = vadd.f32 0.0, %v764
      %v766 = vpop.f32.mrb[0].mxu0
      %v767 = vadd.f32 0.0, %v766
      %v768 = vpop.f32.mrb[0].mxu0
      %v769 = vadd.f32 0.0, %v768
      %770 = vdwg.mxu0
      %771 = vmatprep.subr.bf16.mxu0 0
      %772 = vmatpush1.bf16.msra.mxu0 %v726
      %773 = vmatprep.subr.bf16.mxu0 0
      %774 = vmatpush1.bf16.msra.mxu0 0
      %775 = vmatprep.subr.bf16.mxu0 0
      %776 = vmatpush1.bf16.msra.mxu0 0
      %777 = vmatprep.subr.bf16.mxu0 0
      %778 = vmatpush1.bf16.msra.mxu0 0
      %779 = vmatprep.subr.bf16.mxu0 0
      %780 = vmatpush1.bf16.msra.mxu0 0
      %781 = vmatprep.subr.bf16.mxu0 0
      %782 = vmatpush1.bf16.msra.mxu0 0
      %783 = vmatprep.subr.bf16.mxu0 0
      %784 = vmatpush1.bf16.msra.mxu0 0
      %785 = vmatprep.subr.bf16.mxu0 0
      %786 = vmatpush1.bf16.msra.mxu0 0
      %787 = vmatprep.subr.bf16.mxu0 0
      %788 = vmatpush1.bf16.msra.mxu0 0
      %789 = vmatprep.subr.bf16.mxu0 0
      %790 = vmatpush1.bf16.msra.mxu0 0
      %791 = vmatprep.subr.bf16.mxu0 0
      %792 = vmatpush1.bf16.msra.mxu0 0
      %793 = vmatprep.subr.bf16.mxu0 0
      %794 = vmatpush1.bf16.msra.mxu0 0
      %795 = vmatprep.subr.bf16.mxu0 0
      %796 = vmatpush1.bf16.msra.mxu0 0
      %797 = vmatprep.subr.bf16.mxu0 0
      %798 = vmatpush1.bf16.msra.mxu0 0
      %799 = vmatprep.subr.bf16.mxu0 0
      %800 = vmatpush1.bf16.msra.mxu0 0
      %801 = vmatprep.subr.bf16.mxu0 0
      %802 = vmatpush1.bf16.msra.mxu0 0
      %803 = vmatprep.mubr.bf16.mxu0 0
      %804 = vmatmul.mubr.bf16.gmra.mrb[0].mxu0 %v717
      %v805 = vpop.f32.mrb[0].mxu0
      %v806 = vadd.f32 0.0, %v805
      %v807 = vpop.f32.mrb[0].mxu0
      %v808 = vpop.f32.mrb[0].mxu0
      %v809 = vadd.f32 0.0, %v808
      %v810 = vpop.f32.mrb[0].mxu0
      %811 = vdwg.mxu0
      %v812 = vadd.f32 %v695, %v763
      %v813 = vadd.f32 %v696, %v765
      %v814 = vadd.f32 %v697, %v806
      %v815 = vadd.f32 %v698, %v767
      %v816 = vadd.f32 %v699, %v769
      %v817 = vadd.f32 %v700, %v809
      %v818 = vld [vmem:[%s192 + $0x4] sm:$0x77]
      %v819 = vld [vmem:[%s192 + $0xc] sm:$0x77]
      %v822 = vunpack.c.l.b16 %v209
      %v823 = vunpack.c.l.b16 %v210
      %v824 = vpack.c.b16 %v823, %v822
      %v827 = vunpack.c.l.b16 %v818
      %v828 = vunpack.c.h.b16 %v818
      %v829 = vunpack.c.l.b16 %v819
      %v830 = vunpack.c.h.b16 %v819
      %v831 = vpack.c.b16 %v827, %v827
      %v832 = vpack.c.b16 %v828, %v828
      %v833 = vpack.c.b16 %v829, %v829
      %v834 = vpack.c.b16 %v830, %v830
      %835 = vrot.lane.b32.xlu0 %v831, 127
      %v836 = vpop.permute.xlu0 %835
      %837 = vrot.lane.b32.xlu0 %v832, 127
      %v838 = vpop.permute.xlu0 %837
      %839 = vrot.lane.b32.xlu0 %v833, 127
      %v840 = vpop.permute.xlu0 %839
      %841 = vrot.lane.b32.xlu0 %v834, 127
      %v842 = vpop.permute.xlu0 %841
      %vm843 = vcmask 1039360
      %v844 = vsel %vm843, %v836, %v838
      %v845 = vsel %vm843, %v838, %v840
      %v846 = vsel %vm843, %v840, %v842
      %v848 = vsel %vm252, %v824, 0
      %v851 = vsel %vm256, %v844, 0
      %v854 = vsel %vm256, %v845, 0
      %v857 = vsel %vm256, %v846, 0
      %859 = vmatprep.subr.bf16.mxu0 %v854
      %860 = vmatpush1.bf16.msra.mxu0 %v851
      %861 = vmatprep.subr.bf16.mxu0 0
      %862 = vmatpush1.bf16.msra.mxu0 0
      %863 = vmatprep.subr.bf16.mxu0 0
      %864 = vmatpush1.bf16.msra.mxu0 0
      %865 = vmatprep.subr.bf16.mxu0 0
      %866 = vmatpush1.bf16.msra.mxu0 0
      %867 = vmatprep.subr.bf16.mxu0 0
      %868 = vmatpush1.bf16.msra.mxu0 0
      %869 = vmatprep.subr.bf16.mxu0 0
      %870 = vmatpush1.bf16.msra.mxu0 0
      %871 = vmatprep.subr.bf16.mxu0 0
      %872 = vmatpush1.bf16.msra.mxu0 0
      %873 = vmatprep.subr.bf16.mxu0 0
      %874 = vmatpush1.bf16.msra.mxu0 0
      %875 = vmatprep.subr.bf16.mxu0 0
      %876 = vmatpush1.bf16.msra.mxu0 0
      %877 = vmatprep.subr.bf16.mxu0 0
      %878 = vmatpush1.bf16.msra.mxu0 0
      %879 = vmatprep.subr.bf16.mxu0 0
      %880 = vmatpush1.bf16.msra.mxu0 0
      %881 = vmatprep.subr.bf16.mxu0 0
      %882 = vmatpush1.bf16.msra.mxu0 0
      %883 = vmatprep.subr.bf16.mxu0 0
      %884 = vmatpush1.bf16.msra.mxu0 0
      %885 = vmatprep.subr.bf16.mxu0 0
      %886 = vmatpush1.bf16.msra.mxu0 0
      %887 = vmatprep.subr.bf16.mxu0 0
      %888 = vmatpush1.bf16.msra.mxu0 0
      %889 = vmatprep.subr.bf16.mxu0 0
      %890 = vmatpush1.bf16.msra.mxu0 0
      %891 = vmatprep.mubr.bf16.mxu0 0
      %892 = vmatmul.mubr.bf16.gmra.mrb[0].mxu0 %v848
      %v893 = vpop.f32.mrb[0].mxu0
      %v894 = vadd.f32 0.0, %v893
      %v895 = vpop.f32.mrb[0].mxu0
      %v896 = vadd.f32 0.0, %v895
      %v897 = vpop.f32.mrb[0].mxu0
      %v898 = vadd.f32 0.0, %v897
      %v899 = vpop.f32.mrb[0].mxu0
      %v900 = vadd.f32 0.0, %v899
      %901 = vdwg.mxu0
      %902 = vmatprep.subr.bf16.mxu0 0
      %903 = vmatpush1.bf16.msra.mxu0 %v857
      %904 = vmatprep.subr.bf16.mxu0 0
      %905 = vmatpush1.bf16.msra.mxu0 0
      %906 = vmatprep.subr.bf16.mxu0 0
      %907 = vmatpush1.bf16.msra.mxu0 0
      %908 = vmatprep.subr.bf16.mxu0 0
      %909 = vmatpush1.bf16.msra.mxu0 0
      %910 = vmatprep.subr.bf16.mxu0 0
      %911 = vmatpush1.bf16.msra.mxu0 0
      %912 = vmatprep.subr.bf16.mxu0 0
      %913 = vmatpush1.bf16.msra.mxu0 0
      %914 = vmatprep.subr.bf16.mxu0 0
      %915 = vmatpush1.bf16.msra.mxu0 0
      %916 = vmatprep.subr.bf16.mxu0 0
      %917 = vmatpush1.bf16.msra.mxu0 0
      %918 = vmatprep.subr.bf16.mxu0 0
      %919 = vmatpush1.bf16.msra.mxu0 0
      %920 = vmatprep.subr.bf16.mxu0 0
      %921 = vmatpush1.bf16.msra.mxu0 0
      %922 = vmatprep.subr.bf16.mxu0 0
      %923 = vmatpush1.bf16.msra.mxu0 0
      %924 = vmatprep.subr.bf16.mxu0 0
      %925 = vmatpush1.bf16.msra.mxu0 0
      %926 = vmatprep.subr.bf16.mxu0 0
      %927 = vmatpush1.bf16.msra.mxu0 0
      %928 = vmatprep.subr.bf16.mxu0 0
      %929 = vmatpush1.bf16.msra.mxu0 0
      %930 = vmatprep.subr.bf16.mxu0 0
      %931 = vmatpush1.bf16.msra.mxu0 0
      %932 = vmatprep.subr.bf16.mxu0 0
      %933 = vmatpush1.bf16.msra.mxu0 0
      %934 = vmatprep.mubr.bf16.mxu0 0
      %935 = vmatmul.mubr.bf16.gmra.mrb[0].mxu0 %v848
      %v936 = vpop.f32.mrb[0].mxu0
      %v937 = vadd.f32 0.0, %v936
      %v938 = vpop.f32.mrb[0].mxu0
      %v939 = vpop.f32.mrb[0].mxu0
      %v940 = vadd.f32 0.0, %v939
      %v941 = vpop.f32.mrb[0].mxu0
      %942 = vdwg.mxu0
      %v943 = vadd.f32 %v812, %v894
      %v944 = vadd.f32 %v813, %v896
      %v945 = vadd.f32 %v814, %v937
      %v946 = vadd.f32 %v815, %v898
      %v947 = vadd.f32 %v816, %v900
      %v948 = vadd.f32 %v817, %v940
      %v951 = vunpack.c.l.b16 %v211
      %v952 = vunpack.c.l.b16 %v212
      %v953 = vpack.c.b16 %v952, %v951
      %954 = vrot.lane.b32.xlu0 %v831, 111
      %v955 = vpop.permute.xlu0 %954
      %956 = vrot.lane.b32.xlu0 %v832, 111
      %v957 = vpop.permute.xlu0 %956
      %958 = vrot.lane.b32.xlu0 %v833, 111
      %v959 = vpop.permute.xlu0 %958
      %960 = vrot.lane.b32.xlu0 %v834, 111
      %v961 = vpop.permute.xlu0 %960
      %vm962 = vcmask 908288
      %v963 = vsel %vm962, %v955, %v957
      %v964 = vsel %vm962, %v957, %v959
      %v965 = vsel %vm962, %v959, %v961
      %v967 = vsel %vm252, %v953, 0
      %v970 = vsel %vm256, %v963, 0
      %v973 = vsel %vm256, %v964, 0
      %v976 = vsel %vm256, %v965, 0
      %978 = vmatprep.subr.bf16.mxu0 %v973
      %979 = vmatpush1.bf16.msra.mxu0 %v970
      %980 = vmatprep.subr.bf16.mxu0 0
      %981 = vmatpush1.bf16.msra.mxu0 0
      %982 = vmatprep.subr.bf16.mxu0 0
      %983 = vmatpush1.bf16.msra.mxu0 0
      %984 = vmatprep.subr.bf16.mxu0 0
      %985 = vmatpush1.bf16.msra.mxu0 0
      %986 = vmatprep.subr.bf16.mxu0 0
      %987 = vmatpush1.bf16.msra.mxu0 0
      %988 = vmatprep.subr.bf16.mxu0 0
      %989 = vmatpush1.bf16.msra.mxu0 0
      %990 = vmatprep.subr.bf16.mxu0 0
      %991 = vmatpush1.bf16.msra.mxu0 0
      %992 = vmatprep.subr.bf16.mxu0 0
      %993 = vmatpush1.bf16.msra.mxu0 0
      %994 = vmatprep.subr.bf16.mxu0 0
      %995 = vmatpush1.bf16.msra.mxu0 0
      %996 = vmatprep.subr.bf16.mxu0 0
      %997 = vmatpush1.bf16.msra.mxu0 0
      %998 = vmatprep.subr.bf16.mxu0 0
      %999 = vmatpush1.bf16.msra.mxu0 0
      %1000 = vmatprep.subr.bf16.mxu0 0
      %1001 = vmatpush1.bf16.msra.mxu0 0
      %1002 = vmatprep.subr.bf16.mxu0 0
      %1003 = vmatpush1.bf16.msra.mxu0 0
      %1004 = vmatprep.subr.bf16.mxu0 0
      %1005 = vmatpush1.bf16.msra.mxu0 0
      %1006 = vmatprep.subr.bf16.mxu0 0
      %1007 = vmatpush1.bf16.msra.mxu0 0
      %1008 = vmatprep.subr.bf16.mxu0 0
      %1009 = vmatpush1.bf16.msra.mxu0 0
      %1010 = vmatprep.mubr.bf16.mxu0 0
      %1011 = vmatmul.mubr.bf16.gmra.mrb[0].mxu0 %v967
      %v1012 = vpop.f32.mrb[0].mxu0
      %v1013 = vadd.f32 0.0, %v1012
      %v1014 = vpop.f32.mrb[0].mxu0
      %v1015 = vadd.f32 0.0, %v1014
      %v1016 = vpop.f32.mrb[0].mxu0
      %v1017 = vadd.f32 0.0, %v1016
      %v1018 = vpop.f32.mrb[0].mxu0
      %v1019 = vadd.f32 0.0, %v1018
      %1020 = vdwg.mxu0
      %1021 = vmatprep.subr.bf16.mxu0 0
      %1022 = vmatpush1.bf16.msra.mxu0 %v976
      %1023 = vmatprep.subr.bf16.mxu0 0
      %1024 = vmatpush1.bf16.msra.mxu0 0
      %1025 = vmatprep.subr.bf16.mxu0 0
      %1026 = vmatpush1.bf16.msra.mxu0 0
      %1027 = vmatprep.subr.bf16.mxu0 0
      %1028 = vmatpush1.bf16.msra.mxu0 0
      %1029 = vmatprep.subr.bf16.mxu0 0
      %1030 = vmatpush1.bf16.msra.mxu0 0
      %1031 = vmatprep.subr.bf16.mxu0 0
      %1032 = vmatpush1.bf16.msra.mxu0 0
      %1033 = vmatprep.subr.bf16.mxu0 0
      %1034 = vmatpush1.bf16.msra.mxu0 0
      %1035 = vmatprep.subr.bf16.mxu0 0
      %1036 = vmatpush1.bf16.msra.mxu0 0
      %1037 = vmatprep.subr.bf16.mxu0 0
      %1038 = vmatpush1.bf16.msra.mxu0 0
      %1039 = vmatprep.subr.bf16.mxu0 0
      %1040 = vmatpush1.bf16.msra.mxu0 0
      %1041 = vmatprep.subr.bf16.mxu0 0
      %1042 = vmatpush1.bf16.msra.mxu0 0
      %1043 = vmatprep.subr.bf16.mxu0 0
      %1044 = vmatpush1.bf16.msra.mxu0 0
      %1045 = vmatprep.subr.bf16.mxu0 0
      %1046 = vmatpush1.bf16.msra.mxu0 0
      %1047 = vmatprep.subr.bf16.mxu0 0
      %1048 = vmatpush1.bf16.msra.mxu0 0
      %1049 = vmatprep.subr.bf16.mxu0 0
      %1050 = vmatpush1.bf16.msra.mxu0 0
      %1051 = vmatprep.subr.bf16.mxu0 0
      %1052 = vmatpush1.bf16.msra.mxu0 0
      %1053 = vmatprep.mubr.bf16.mxu0 0
      %1054 = vmatmul.mubr.bf16.gmra.mrb[0].mxu0 %v967
      %v1055 = vpop.f32.mrb[0].mxu0
      %v1056 = vadd.f32 0.0, %v1055
      %v1057 = vpop.f32.mrb[0].mxu0
      %v1058 = vpop.f32.mrb[0].mxu0
      %v1059 = vadd.f32 0.0, %v1058
      %v1060 = vpop.f32.mrb[0].mxu0
      %1061 = vdwg.mxu0
      %v1062 = vadd.f32 %v943, %v1013
      %v1063 = vadd.f32 %v944, %v1015
      %v1064 = vadd.f32 %v945, %v1056
      %v1065 = vadd.f32 %v946, %v1017
      %v1066 = vadd.f32 %v947, %v1019
      %v1067 = vadd.f32 %v948, %v1059
      %v1070 = vunpack.c.l.b16 %v213
      %v1071 = vunpack.c.l.b16 %v214
      %v1072 = vpack.c.b16 %v1071, %v1070
      %1073 = vrot.lane.b32.xlu0 %v831, 110
      %v1074 = vpop.permute.xlu0 %1073
      %1075 = vrot.lane.b32.xlu0 %v832, 110
      %v1076 = vpop.permute.xlu0 %1075
      %1077 = vrot.lane.b32.xlu0 %v833, 110
      %v1078 = vpop.permute.xlu0 %1077
      %1079 = vrot.lane.b32.xlu0 %v834, 110
      %v1080 = vpop.permute.xlu0 %1079
      %vm1081 = vcmask 900096
      %v1082 = vsel %vm1081, %v1074, %v1076
      %v1083 = vsel %vm1081, %v1076, %v1078
      %v1084 = vsel %vm1081, %v1078, %v1080
      %v1086 = vsel %vm252, %v1072, 0
      %v1089 = vsel %vm256, %v1082, 0
      %v1092 = vsel %vm256, %v1083, 0
      %v1095 = vsel %vm256, %v1084, 0
      %1097 = vmatprep.subr.bf16.mxu0 %v1092
      %1098 = vmatpush1.bf16.msra.mxu0 %v1089
      %1099 = vmatprep.subr.bf16.mxu0 0
      %1100 = vmatpush1.bf16.msra.mxu0 0
      %1101 = vmatprep.subr.bf16.mxu0 0
      %1102 = vmatpush1.bf16.msra.mxu0 0
      %1103 = vmatprep.subr.bf16.mxu0 0
      %1104 = vmatpush1.bf16.msra.mxu0 0
      %1105 = vmatprep.subr.bf16.mxu0 0
      %1106 = vmatpush1.bf16.msra.mxu0 0
      %1107 = vmatprep.subr.bf16.mxu0 0
      %1108 = vmatpush1.bf16.msra.mxu0 0
      %1109 = vmatprep.subr.bf16.mxu0 0
      %1110 = vmatpush1.bf16.msra.mxu0 0
      %1111 = vmatprep.subr.bf16.mxu0 0
      %1112 = vmatpush1.bf16.msra.mxu0 0
      %1113 = vmatprep.subr.bf16.mxu0 0
      %1114 = vmatpush1.bf16.msra.mxu0 0
      %1115 = vmatprep.subr.bf16.mxu0 0
      %1116 = vmatpush1.bf16.msra.mxu0 0
      %1117 = vmatprep.subr.bf16.mxu0 0
      %1118 = vmatpush1.bf16.msra.mxu0 0
      %1119 = vmatprep.subr.bf16.mxu0 0
      %1120 = vmatpush1.bf16.msra.mxu0 0
      %1121 = vmatprep.subr.bf16.mxu0 0
      %1122 = vmatpush1.bf16.msra.mxu0 0
      %1123 = vmatprep.subr.bf16.mxu0 0
      %1124 = vmatpush1.bf16.msra.mxu0 0
      %1125 = vmatprep.subr.bf16.mxu0 0
      %1126 = vmatpush1.bf16.msra.mxu0 0
      %1127 = vmatprep.subr.bf16.mxu0 0
      %1128 = vmatpush1.bf16.msra.mxu0 0
      %1129 = vmatprep.mubr.bf16.mxu0 0
      %1130 = vmatmul.mubr.bf16.gmra.mrb[0].mxu0 %v1086
      %v1131 = vpop.f32.mrb[0].mxu0
      %v1132 = vadd.f32 0.0, %v1131
      %v1133 = vpop.f32.mrb[0].mxu0
      %v1134 = vadd.f32 0.0, %v1133
      %v1135 = vpop.f32.mrb[0].mxu0
      %v1136 = vadd.f32 0.0, %v1135
      %v1137 = vpop.f32.mrb[0].mxu0
      %v1138 = vadd.f32 0.0, %v1137
      %1139 = vdwg.mxu0
      %1140 = vmatprep.subr.bf16.mxu0 0
      %1141 = vmatpush1.bf16.msra.mxu0 %v1095
      %1142 = vmatprep.subr.bf16.mxu0 0
      %1143 = vmatpush1.bf16.msra.mxu0 0
      %1144 = vmatprep.subr.bf16.mxu0 0
      %1145 = vmatpush1.bf16.msra.mxu0 0
      %1146 = vmatprep.subr.bf16.mxu0 0
      %1147 = vmatpush1.bf16.msra.mxu0 0
      %1148 = vmatprep.subr.bf16.mxu0 0
      %1149 = vmatpush1.bf16.msra.mxu0 0
      %1150 = vmatprep.subr.bf16.mxu0 0
      %1151 = vmatpush1.bf16.msra.mxu0 0
      %1152 = vmatprep.subr.bf16.mxu0 0
      %1153 = vmatpush1.bf16.msra.mxu0 0
      %1154 = vmatprep.subr.bf16.mxu0 0
      %1155 = vmatpush1.bf16.msra.mxu0 0
      %1156 = vmatprep.subr.bf16.mxu0 0
      %1157 = vmatpush1.bf16.msra.mxu0 0
      %1158 = vmatprep.subr.bf16.mxu0 0
      %1159 = vmatpush1.bf16.msra.mxu0 0
      %1160 = vmatprep.subr.bf16.mxu0 0
      %1161 = vmatpush1.bf16.msra.mxu0 0
      %1162 = vmatprep.subr.bf16.mxu0 0
      %1163 = vmatpush1.bf16.msra.mxu0 0
      %1164 = vmatprep.subr.bf16.mxu0 0
      %1165 = vmatpush1.bf16.msra.mxu0 0
      %1166 = vmatprep.subr.bf16.mxu0 0
      %1167 = vmatpush1.bf16.msra.mxu0 0
      %1168 = vmatprep.subr.bf16.mxu0 0
      %1169 = vmatpush1.bf16.msra.mxu0 0
      %1170 = vmatprep.subr.bf16.mxu0 0
      %1171 = vmatpush1.bf16.msra.mxu0 0
      %1172 = vmatprep.mubr.bf16.mxu0 0
      %1173 = vmatmul.mubr.bf16.gmra.mrb[0].mxu0 %v1086
      %v1174 = vpop.f32.mrb[0].mxu0
      %v1175 = vadd.f32 0.0, %v1174
      %v1176 = vpop.f32.mrb[0].mxu0
      %v1177 = vpop.f32.mrb[0].mxu0
      %v1178 = vadd.f32 0.0, %v1177
      %v1179 = vpop.f32.mrb[0].mxu0
      %1180 = vdwg.mxu0
      %v1181 = vadd.f32 %v1062, %v1132
      %v1182 = vadd.f32 %v1063, %v1134
      %v1183 = vadd.f32 %v1064, %v1175
      %v1184 = vadd.f32 %v1065, %v1136
      %v1185 = vadd.f32 %v1066, %v1138
      %v1186 = vadd.f32 %v1067, %v1178
      %v1189 = vunpack.c.l.b16 %v215
      %v1190 = vunpack.c.l.b16 %v216
      %v1191 = vpack.c.b16 %v1190, %v1189
      %1192 = vrot.lane.b32.xlu0 %v831, 109
      %v1193 = vpop.permute.xlu0 %1192
      %1194 = vrot.lane.b32.xlu0 %v832, 109
      %v1195 = vpop.permute.xlu0 %1194
      %1196 = vrot.lane.b32.xlu0 %v833, 109
      %v1197 = vpop.permute.xlu0 %1196
      %1198 = vrot.lane.b32.xlu0 %v834, 109
      %v1199 = vpop.permute.xlu0 %1198
      %vm1200 = vcmask 891904
      %v1201 = vsel %vm1200, %v1193, %v1195
      %v1202 = vsel %vm1200, %v1195, %v1197
      %v1203 = vsel %vm1200, %v1197, %v1199
      %v1205 = vsel %vm252, %v1191, 0
      %v1208 = vsel %vm256, %v1201, 0
      %v1211 = vsel %vm256, %v1202, 0
      %v1214 = vsel %vm256, %v1203, 0
      %1216 = vmatprep.subr.bf16.mxu0 %v1211
      %1217 = vmatpush1.bf16.msra.mxu0 %v1208
      %1218 = vmatprep.subr.bf16.mxu0 0
      %1219 = vmatpush1.bf16.msra.mxu0 0
      %1220 = vmatprep.subr.bf16.mxu0 0
      %1221 = vmatpush1.bf16.msra.mxu0 0
      %1222 = vmatprep.subr.bf16.mxu0 0
      %1223 = vmatpush1.bf16.msra.mxu0 0
      %1224 = vmatprep.subr.bf16.mxu0 0
      %1225 = vmatpush1.bf16.msra.mxu0 0
      %1226 = vmatprep.subr.bf16.mxu0 0
      %1227 = vmatpush1.bf16.msra.mxu0 0
      %1228 = vmatprep.subr.bf16.mxu0 0
      %1229 = vmatpush1.bf16.msra.mxu0 0
      %1230 = vmatprep.subr.bf16.mxu0 0
      %1231 = vmatpush1.bf16.msra.mxu0 0
      %1232 = vmatprep.subr.bf16.mxu0 0
      %1233 = vmatpush1.bf16.msra.mxu0 0
      %1234 = vmatprep.subr.bf16.mxu0 0
      %1235 = vmatpush1.bf16.msra.mxu0 0
      %1236 = vmatprep.subr.bf16.mxu0 0
      %1237 = vmatpush1.bf16.msra.mxu0 0
      %1238 = vmatprep.subr.bf16.mxu0 0
      %1239 = vmatpush1.bf16.msra.mxu0 0
      %1240 = vmatprep.subr.bf16.mxu0 0
      %1241 = vmatpush1.bf16.msra.mxu0 0
      %1242 = vmatprep.subr.bf16.mxu0 0
      %1243 = vmatpush1.bf16.msra.mxu0 0
      %1244 = vmatprep.subr.bf16.mxu0 0
      %1245 = vmatpush1.bf16.msra.mxu0 0
      %1246 = vmatprep.subr.bf16.mxu0 0
      %1247 = vmatpush1.bf16.msra.mxu0 0
      %1248 = vmatprep.mubr.bf16.mxu0 0
      %1249 = vmatmul.mubr.bf16.gmra.mrb[0].mxu0 %v1205
      %v1250 = vpop.f32.mrb[0].mxu0
      %v1251 = vadd.f32 0.0, %v1250
      %v1252 = vpop.f32.mrb[0].mxu0
      %v1253 = vadd.f32 0.0, %v1252
      %v1254 = vpop.f32.mrb[0].mxu0
      %v1255 = vadd.f32 0.0, %v1254
      %v1256 = vpop.f32.mrb[0].mxu0
      %v1257 = vadd.f32 0.0, %v1256
      %1258 = vdwg.mxu0
      %1259 = vmatprep.subr.bf16.mxu0 0
      %1260 = vmatpush1.bf16.msra.mxu0 %v1214
      %1261 = vmatprep.subr.bf16.mxu0 0
      %1262 = vmatpush1.bf16.msra.mxu0 0
      %1263 = vmatprep.subr.bf16.mxu0 0
      %1264 = vmatpush1.bf16.msra.mxu0 0
      %1265 = vmatprep.subr.bf16.mxu0 0
      %1266 = vmatpush1.bf16.msra.mxu0 0
      %1267 = vmatprep.subr.bf16.mxu0 0
      %1268 = vmatpush1.bf16.msra.mxu0 0
      %1269 = vmatprep.subr.bf16.mxu0 0
      %1270 = vmatpush1.bf16.msra.mxu0 0
      %1271 = vmatprep.subr.bf16.mxu0 0
      %1272 = vmatpush1.bf16.msra.mxu0 0
      %1273 = vmatprep.subr.bf16.mxu0 0
      %1274 = vmatpush1.bf16.msra.mxu0 0
      %1275 = vmatprep.subr.bf16.mxu0 0
      %1276 = vmatpush1.bf16.msra.mxu0 0
      %1277 = vmatprep.subr.bf16.mxu0 0
      %1278 = vmatpush1.bf16.msra.mxu0 0
      %1279 = vmatprep.subr.bf16.mxu0 0
      %1280 = vmatpush1.bf16.msra.mxu0 0
      %1281 = vmatprep.subr.bf16.mxu0 0
      %1282 = vmatpush1.bf16.msra.mxu0 0
      %1283 = vmatprep.subr.bf16.mxu0 0
      %1284 = vmatpush1.bf16.msra.mxu0 0
      %1285 = vmatprep.subr.bf16.mxu0 0
      %1286 = vmatpush1.bf16.msra.mxu0 0
      %1287 = vmatprep.subr.bf16.mxu0 0
      %1288 = vmatpush1.bf16.msra.mxu0 0
      %1289 = vmatprep.subr.bf16.mxu0 0
      %1290 = vmatpush1.bf16.msra.mxu0 0
      %1291 = vmatprep.mubr.bf16.mxu0 0
      %1292 = vmatmul.mubr.bf16.gmra.mrb[0].mxu0 %v1205
      %v1293 = vpop.f32.mrb[0].mxu0
      %v1294 = vadd.f32 0.0, %v1293
      %v1295 = vpop.f32.mrb[0].mxu0
      %v1296 = vpop.f32.mrb[0].mxu0
      %v1297 = vadd.f32 0.0, %v1296
      %v1298 = vpop.f32.mrb[0].mxu0
      %1299 = vdwg.mxu0
      %v1300 = vadd.f32 %v1181, %v1251
      %v1301 = vadd.f32 %v1182, %v1253
      %v1302 = vadd.f32 %v1183, %v1294
      %v1303 = vadd.f32 %v1184, %v1255
      %v1304 = vadd.f32 %v1185, %v1257
      %v1305 = vadd.f32 %v1186, %v1297
      %1307 = vset.pattern.permute.xlu0 0
      %1308 = vperm.xlu0 %1307, %v217
      %v1309 = vpop.permute.xlu0 %1308
      %1312 = vset.pattern.permute.xlu0 0
      %1313 = vperm.xlu0 %1312, %v218
      %v1314 = vpop.permute.xlu0 %1313
      %v1316 = vadd.f32 %v1300, %v1309
      %v1317 = vadd.f32 %v1301, %v1309
      %v1318 = vadd.f32 %v1302, %v1309
      %v1319 = vadd.f32 %v1303, %v1314
      %v1320 = vadd.f32 %v1304, %v1314
      %v1321 = vadd.f32 %v1305, %v1314
      %vm1322 = vcmp.ge.f32.partialorder %v1316, 0.0
      %vm1323 = vcmp.ge.f32.partialorder %v1317, 0.0
      %vm1324 = vcmp.ge.f32.partialorder %v1318, 0.0
      %vm1325 = vcmp.ge.f32.partialorder %v1319, 0.0
      %vm1326 = vcmp.ge.f32.partialorder %v1320, 0.0
      %vm1327 = vcmp.ge.f32.partialorder %v1321, 0.0
      %v1328 = vmul.f32 %v1316, 0.2
      %v1329 = vmul.f32 %v1317, 0.2
      %v1330 = vmul.f32 %v1318, 0.2
      %v1331 = vmul.f32 %v1319, 0.2
      %v1332 = vmul.f32 %v1320, 0.2
      %v1333 = vmul.f32 %v1321, 0.2
      %v1334 = vsel %vm1322, %v1316, %v1328
      %v1335 = vsel %vm1323, %v1317, %v1329
      %v1336 = vsel %vm1324, %v1318, %v1330
      %v1337 = vsel %vm1325, %v1319, %v1331
      %v1338 = vsel %vm1326, %v1320, %v1332
      %v1339 = vsel %vm1327, %v1321, %v1333
      %v1340 = vld [vmem:[%s3] sm:$0x7]
      %v1342 = vlaneseq
      %v1343 = vshrl.u32 %v1342, 7
      %v1344 = vsub.s32 0, %v1343
      %v1345 = vrot.slane %v1340, %v1344
      %v1346 = vlaneseq
      %v1347 = vshrl.u32 %v1346, 7
      %v1348 = vsub.s32 1, %v1347
      %v1349 = vrot.slane %v1340, %v1348
      %v1350 = vlaneseq
      %v1351 = vshrl.u32 %v1350, 7
      %v1352 = vsub.s32 2, %v1351
      %v1353 = vrot.slane %v1340, %v1352
      %v1357 = vmul.f32 %v1334, %v1345
      %v1358 = vmul.f32 %v1335, %v1349
      %v1359 = vmul.f32 %v1336, %v1353
      %v1360 = vmul.f32 %v1337, %v1345
      %v1361 = vmul.f32 %v1338, %v1349
      %v1362 = vmul.f32 %v1339, %v1353
      %v1363 = vpack.c.bf16 %v1360, %v1357
      %v1364 = vpack.c.bf16 %v1361, %v1358
      %v1365 = vpack.c.bf16 %v1362, %v1359
      %v1369 = vunpack.c.l.b16 %v1363
      %v1370 = vunpack.c.l.b16 %v1364
      %v1371 = vunpack.c.l.b16 %v1365
      %v1372 = vunpack.c.h.b16 %v1363
      %v1373 = vunpack.c.h.b16 %v1364
      %v1374 = vunpack.c.h.b16 %v1365
      %v1375 = vpack.c.b16 %v1370, %v1369
      %v1376 = vpack.c.b16 %v1371, %v1371
      %v1377 = vpack.c.b16 %v1373, %v1372
      %v1378 = vpack.c.b16 %v1374, %v1374
      %1383 = vst [vmem:[%s197 + $0x4] sm:$0xff] %v1375
      %1384 = vst [vmem:[%s197 + $0xc] sm:$0xf] %v1376
      %1385 = vst [vmem:[%s197 + $0x18] sm:$0xff] %v1377
      %1386 = vst [vmem:[%s197 + $0x20] sm:$0xf] %v1378
      %p1387 = scmp.lt.s32.totalorder %s15, 1
      %s1388 = scalar_select %p1387, %s15, 1
      %s1389 = smul.addr %s1388, 10
      %s1390 = smul.addr %s1389, 4
      %s1391 = scalar_lea.vmem %s4, %s1390
      // Predicated region
      $region37: #{superfusion_forward.7} parent=35 // pred_check
        %p1392 = pneg %p122
      $region38: #{superfusion_forward.7} parent=35 // pred_check_branch
        %1394 = sbr.rel (%p1392) target = $region40
      $region39: #{superfusion_forward.7} parent=35 // pred_region
        _
      $region40: #{superfusion_forward.7} parent=35 // pred_fallthru
        _
    $region36: #{superfusion_forward.7} parent=5 // pred_fallthru
      _
    %p1395 = scmp.le.s32.totalorder 2, %s10
    // Predicated region
    $region41: #{superfusion_forward.7} parent=5 // pred_check
      %p1396 = pneg %p1395
    $region42: #{superfusion_forward.7} parent=5 // pred_check_branch
      %1398 = sbr.rel (%p1396) target = $region44
    $region43: #{superfusion_forward.7} parent=5 // pred_region
      %s1399 = ssub.s32 %s10, 2
      // Predicated region
      $region45: #{superfusion_forward.7} parent=43 // pred_check
        %p1400 = pneg %p128
      $region46: #{superfusion_forward.7} parent=43 // pred_check_branch
        %1402 = sbr.rel (%p1400) target = $region48
      $region47: #{superfusion_forward.7} parent=43 // pred_region
        %p1403 = scmp.lt.s32.totalorder %s16, 1
        %s1404 = scalar_select %p1403, %s16, 1
        %s1405 = smul.addr %s1404, 10
        %s1406 = smul.addr %s1405, 4
        %s1407 = scalar_lea.vmem %s4, %s1406
      $region48: #{superfusion_forward.7} parent=43 // pred_fallthru
        _
    $region44: #{superfusion_forward.7} parent=5 // pred_fallthru
      _
  $region6: #{superfusion_forward.7} parent=0 // loop_footer
    %s14 = sadd.s32 1, %s10
  $region7: #{superfusion_forward.7} parent=0 // loop_footer_branch
    %9 = sbr.rel target = $region3
  $region8: #{superfusion_forward.7} parent=0 // loop_exit
    _

// kernel: superfusion_forward.9
$region0: #{superfusion_forward.9}
  #allocation0 [shape = 'u32[]', space=smem, size = 0x4, offset = 0x4, fixed_abs, tag = 'smem constant byte address 0x4 - core index']
  #allocation1 [shape = 'u32[144,128]{1,0:T(1,128)}', space=vmem, size = 0x12000, scoped, tag = 'internal scratch']
  #allocation2 [shape = 'bf16[144,384]{1,0:T(16,128)(2,1)}', space=vmem, size = 0x1b000, scoped, tag = 'scratch operand']
  %s0 = inlined_call_operand.vmem [shape: bf16[2,16,640], index: 0, kind: input, shape index: {}]
  %s1 = inlined_call_operand.vmem [shape: bf16[2,144], index: 1, kind: input, shape index: {}]
  %s2 = inlined_call_operand.vmem [shape: f32[2,1], index: 2, kind: input, shape index: {}]
  %s3 = inlined_call_operand.vmem [shape: f32[1,384], index: 3, kind: input, shape index: {}]
  %s4 = inlined_call_operand.vmem [shape: f32[2,2,640], index: 4, kind: output, shape index: {}]
  %s5 = sld [smem:[#allocation0]]
  $region49: #{superfusion_forward.9} parent=0
    _
  %s7 = ssub.s32 1, %s5
  %s8 = scalar_select 0, %s7, %s5
  loop: start=0, step=1, limit=4
  $region2: #{superfusion_forward.9} parent=0 // loop_pre_header
    _
  $region3: #{superfusion_forward.9} parent=0 // loop_header
    %s10 = sphi 0, %s14
    %p11 = scmp.ge.s32.totalorder %s10, 4
    %s20 = sphi 0, %s22
    %s23 = sphi 0, %s20
    %s24 = sphi 0, %s23
    %s40 = sphi 0, %s24
    %s44 = sphi 0, %s44
    %s46 = sphi 0, %s44
    %s47 = sphi 0, %s46
    %s61 = sphi 0, %s47
    %s65 = sphi 0, %s65
    %s67 = sphi 0, %s65
    %s68 = sphi 0, %s67
    %s82 = sphi 0, %s68
    %s86 = sphi 0, %s86
    %s88 = sphi 0, %s86
    %s89 = sphi 0, %s88
    %s103 = sphi 0, %s89
    %s109 = sphi 0, %s111
    %s112 = sphi 0, %s109
    %s113 = sphi 0, %s112
    %s129 = sphi 0, %s113
  $region4: #{superfusion_forward.9} parent=0 // loop_header_branch
    %13 = sbr.rel (%p11) target = $region8
  $region5: #{superfusion_forward.9} parent=0 // loop_body
    %s15 = ssub.s32 %s10, 1
    %s16 = ssub.s32 %s10, 2
    %s17 = sadd.s32 %s10, 1
    %s18 = ssub.s32 %s10, %s17
    %p19 = scmp.eq.s32.totalorder %s18, 0
    %s21 = sadd.s32 %s20, 1
    %s22 = scalar_select %p19, %s20, %s21
    %p25 = pneg %p19
    %p26 = scmp.eq.s32.totalorder %s10, 1
    %p27 = por %p25, %p26
    %p28 = scmp.ne.s32.totalorder %s20, %s23
    %p29 = scmp.eq.s32.totalorder %s10, 0
    %p30 = por %p28, %p29
    %p31 = scmp.ne.s32.totalorder %s20, %s23
    %p32 = scmp.eq.s32.totalorder %s15, 1
    %p33 = por %p31, %p32
    %p34 = scmp.ne.s32.totalorder %s23, %s24
    %p35 = scmp.eq.s32.totalorder %s15, 0
    %p36 = por %p34, %p35
    %p37 = scmp.ne.s32.totalorder %s23, %s24
    %p38 = scmp.eq.s32.totalorder %s16, 1
    %p39 = por %p37, %p38
    %p41 = scmp.ne.s32.totalorder %s24, %s40
    %p42 = scmp.eq.s32.totalorder %s16, 0
    %p43 = por %p41, %p42
    %s45 = sadd.s32 %s44, 1
    %p48 = scmp.eq.s32.totalorder %s10, 1
    %p49 = scmp.ne.s32.totalorder %s44, %s46
    %p50 = scmp.eq.s32.totalorder %s10, 0
    %p51 = por %p49, %p50
    %p52 = scmp.ne.s32.totalorder %s44, %s46
    %p53 = scmp.eq.s32.totalorder %s15, 1
    %p54 = por %p52, %p53
    %p55 = scmp.ne.s32.totalorder %s46, %s47
    %p56 = scmp.eq.s32.totalorder %s15, 0
    %p57 = por %p55, %p56
    %p58 = scmp.ne.s32.totalorder %s46, %s47
    %p59 = scmp.eq.s32.totalorder %s16, 1
    %p60 = por %p58, %p59
    %p62 = scmp.ne.s32.totalorder %s47, %s61
    %p63 = scmp.eq.s32.totalorder %s16, 0
    %p64 = por %p62, %p63
    %s66 = sadd.s32 %s65, 1
    %p69 = scmp.eq.s32.totalorder %s10, 1
    %p70 = scmp.ne.s32.totalorder %s65, %s67
    %p71 = scmp.eq.s32.totalorder %s10, 0
    %p72 = por %p70, %p71
    %p73 = scmp.ne.s32.totalorder %s65, %s67
    %p74 = scmp.eq.s32.totalorder %s15, 1
    %p75 = por %p73, %p74
    %p76 = scmp.ne.s32.totalorder %s67, %s68
    %p77 = scmp.eq.s32.totalorder %s15, 0
    %p78 = por %p76, %p77
    %p79 = scmp.ne.s32.totalorder %s67, %s68
    %p80 = scmp.eq.s32.totalorder %s16, 1
    %p81 = por %p79, %p80
    %p83 = scmp.ne.s32.totalorder %s68, %s82
    %p84 = scmp.eq.s32.totalorder %s16, 0
    %p85 = por %p83, %p84
    %s87 = sadd.s32 %s86, 1
    %p90 = scmp.eq.s32.totalorder %s10, 1
    %p91 = scmp.ne.s32.totalorder %s86, %s88
    %p92 = scmp.eq.s32.totalorder %s10, 0
    %p93 = por %p91, %p92
    %p94 = scmp.ne.s32.totalorder %s86, %s88
    %p95 = scmp.eq.s32.totalorder %s15, 1
    %p96 = por %p94, %p95
    %p97 = scmp.ne.s32.totalorder %s88, %s89
    %p98 = scmp.eq.s32.totalorder %s15, 0
    %p99 = por %p97, %p98
    %p100 = scmp.ne.s32.totalorder %s88, %s89
    %p101 = scmp.eq.s32.totalorder %s16, 1
    %p102 = por %p100, %p101
    %p104 = scmp.ne.s32.totalorder %s89, %s103
    %p105 = scmp.eq.s32.totalorder %s16, 0
    %p106 = por %p104, %p105
    %s107 = ssub.s32 %s10, %s17
    %p108 = scmp.eq.s32.totalorder %s107, 0
    %s110 = sadd.s32 %s109, 1
    %s111 = scalar_select %p108, %s109, %s110
    %p114 = pneg %p108
    %p115 = scmp.eq.s32.totalorder %s10, 1
    %p116 = por %p114, %p115
    %p117 = scmp.ne.s32.totalorder %s109, %s112
    %p118 = scmp.eq.s32.totalorder %s10, 0
    %p119 = por %p117, %p118
    %p120 = scmp.ne.s32.totalorder %s109, %s112
    %p121 = scmp.eq.s32.totalorder %s15, 1
    %p122 = por %p120, %p121
    %p123 = scmp.ne.s32.totalorder %s112, %s113
    %p124 = scmp.eq.s32.totalorder %s15, 0
    %p125 = por %p123, %p124
    %p126 = scmp.ne.s32.totalorder %s112, %s113
    %p127 = scmp.eq.s32.totalorder %s16, 1
    %p128 = por %p126, %p127
    %p130 = scmp.ne.s32.totalorder %s113, %s129
    %p131 = scmp.eq.s32.totalorder %s16, 0
    %p132 = por %p130, %p131
    %p133 = scmp.le.s32.totalorder 1, %s10
    %p134 = scmp.lt.s32.totalorder %s10, 3
    %p135 = pnand %p133, %p134
    %p136 = pneg %p135
    // Predicated region
    $region9: #{superfusion_forward.9} parent=5 // pred_check
      _
    $region10: #{superfusion_forward.9} parent=5 // pred_check_branch
      %138 = sbr.rel (%p135) target = $region12
    $region11: #{superfusion_forward.9} parent=5 // pred_region
      %s139 = ssub.s32 %s10, 1
      // Predicated region
      $region13: #{superfusion_forward.9} parent=11 // pred_check
        %p140 = pneg %p57
      $region14: #{superfusion_forward.9} parent=11 // pred_check_branch
        %142 = sbr.rel (%p140) target = $region16
      $region15: #{superfusion_forward.9} parent=11 // pred_region
        _
      $region16: #{superfusion_forward.9} parent=11 // pred_fallthru
        _
      // Predicated region
      $region17: #{superfusion_forward.9} parent=11 // pred_check
        %p143 = pneg %p78
      $region18: #{superfusion_forward.9} parent=11 // pred_check_branch
        %145 = sbr.rel (%p143) target = $region20
      $region19: #{superfusion_forward.9} parent=11 // pred_region
        _
      $region20: #{superfusion_forward.9} parent=11 // pred_fallthru
        _
      // Predicated region
      $region21: #{superfusion_forward.9} parent=11 // pred_check
        %p146 = pneg %p99
      $region22: #{superfusion_forward.9} parent=11 // pred_check_branch
        %148 = sbr.rel (%p146) target = $region24
      $region23: #{superfusion_forward.9} parent=11 // pred_region
        _
      $region24: #{superfusion_forward.9} parent=11 // pred_fallthru
        _
    $region12: #{superfusion_forward.9} parent=5 // pred_fallthru
      _
    %p149 = scmp.lt.s32.totalorder %s10, 2
    // Predicated region
    $region25: #{superfusion_forward.9} parent=5 // pred_check
      %p150 = pneg %p149
    $region26: #{superfusion_forward.9} parent=5 // pred_check_branch
      %152 = sbr.rel (%p150) target = $region28
    $region27: #{superfusion_forward.9} parent=5 // pred_region
      // Predicated region
      $region29: #{superfusion_forward.9} parent=27 // pred_check
        %p153 = pneg %p30
      $region30: #{superfusion_forward.9} parent=27 // pred_check_branch
        %155 = sbr.rel (%p153) target = $region32
      $region31: #{superfusion_forward.9} parent=27 // pred_region
        %p156 = scmp.lt.s32.totalorder %s10, 1
        %s157 = scalar_select %p156, %s10, 1
        %s158 = smul.addr %s157, 10
        %s159 = smul.addr %s158, 4
        %s160 = scalar_lea.vmem %s0, %s159
      $region32: #{superfusion_forward.9} parent=27 // pred_fallthru
        _
    $region28: #{superfusion_forward.9} parent=5 // pred_fallthru
      _
    %p161 = scmp.le.s32.totalorder 1, %s10
    %p162 = scmp.lt.s32.totalorder %s10, 3
    %p163 = pnand %p161, %p162
    %p164 = pneg %p163
    // Predicated region
    $region33: #{superfusion_forward.9} parent=5 // pred_check
      _
    $region34: #{superfusion_forward.9} parent=5 // pred_check_branch
      %166 = sbr.rel (%p163) target = $region36
    $region35: #{superfusion_forward.9} parent=5 // pred_region
      %s167 = ssub.s32 %s10, 1
      %p168 = scmp.lt.s32.totalorder %s15, 1
      %s169 = scalar_select %p168, %s15, 1
      %s170 = smul.addr %s169, 10
      %s171 = smul.addr %s170, 4
      %s172 = scalar_lea.vmem %s0, %s171
      %p173 = pneg %p36
      %p174 = pneg %p33
      %p175 = pneg %p57
      %p176 = pneg %p54
      %p177 = pneg %p78
      %p178 = pneg %p75
      %p179 = pneg %p99
      %p180 = pneg %p96
      %p181 = pneg %p125
      %p182 = pneg %p122
      %p183 = scmp.lt.s32.totalorder %s15, 1
      %s184 = scalar_select %p183, %s15, 1
      %s185 = smul.addr %s184, 5
      %s186 = smul.addr %s185, 2
      %s187 = scalar_lea.vmem %s4, %s186
      %p188 = scmp.lt.s32.totalorder %s15, 1
      %s189 = scalar_select %p188, %s15, 1
      %s190 = smul.addr %s189, 10
      %s191 = smul.addr %s190, 4
      %s192 = scalar_lea.vmem %s0, %s191
      %p193 = scmp.lt.s32.totalorder %s15, 1
      %s194 = scalar_select %p193, %s15, 1
      %s195 = smul.addr %s194, 5
      %s196 = smul.addr %s195, 2
      %s197 = scalar_lea.vmem %s4, %s196
      %v199 = vld [vmem:[%s1] sm:$0x3]
      %v200 = vld [vmem:[%s2] sm:$0x3]
      %201 = vst [vmem:[%s197] sm:$0x3] 0.0
      %202 = vst [vmem:[%s197 + $0x8] sm:$0x3] 0.0
      %v203 = vld [vmem:[%s192] sm:$0xff]
      %v204 = vld [vmem:[%s192 + $0x8] sm:$0xff]
      %v205 = vld [vmem:[%s192 + $0x14] sm:$0xff]
      %v206 = vld [vmem:[%s192 + $0x1c] sm:$0xff]
      %v211 = vunpack.c.l.b16 %v203
      %v212 = vunpack.c.h.b16 %v203
      %v213 = vunpack.c.l.b16 %v204
      %v214 = vunpack.c.h.b16 %v204
      %v215 = vunpack.c.l.b16 %v205
      %v216 = vunpack.c.h.b16 %v205
      %v217 = vunpack.c.l.b16 %v206
      %v218 = vunpack.c.h.b16 %v206
      %v219 = vpack.c.b16 %v215, %v211
      %v220 = vpack.c.b16 %v216, %v212
      %v221 = vpack.c.b16 %v217, %v213
      %v222 = vpack.c.b16 %v218, %v214
      %223 = vrot.lane.b32.xlu0 %v219, 19
      %v224 = vpop.permute.xlu0 %223
      %225 = vrot.lane.b32.xlu0 %v220, 19
      %v226 = vpop.permute.xlu0 %225
      %227 = vrot.lane.b32.xlu0 %v221, 19
      %v228 = vpop.permute.xlu0 %227
      %229 = vrot.lane.b32.xlu0 %v222, 19
      %v230 = vpop.permute.xlu0 %229
      %vm231 = vcmask 154624
      %v232 = vsel %vm231, %v224, %v226
      %v233 = vsel %vm231, %v226, %v228
      %v234 = vsel %vm231, %v228, %v230
      %238 = vst [vmem:[#allocation2] sm:$0xff] %v232
      %239 = vst [vmem:[#allocation2 + $0x8] sm:$0xff] %v233
      %240 = vst [vmem:[#allocation2 + $0x10] sm:$0xff] %v234
      %v241 = vld [vmem:[%s192] sm:$0xff]
      %v242 = vld [vmem:[%s192 + $0x8] sm:$0xff]
      %v243 = vld [vmem:[%s192 + $0x14] sm:$0xff]
      %v244 = vld [vmem:[%s192 + $0x1c] sm:$0xff]
      %v249 = vunpack.c.l.b16 %v241
      %v250 = vunpack.c.h.b16 %v241
      %v251 = vunpack.c.l.b16 %v242
      %v252 = vunpack.c.h.b16 %v242
      %v253 = vunpack.c.l.b16 %v243
      %v254 = vunpack.c.h.b16 %v243
      %v255 = vunpack.c.l.b16 %v244
      %v256 = vunpack.c.h.b16 %v244
      %v257 = vpack.c.b16 %v253, %v249
      %v258 = vpack.c.b16 %v254, %v250
      %v259 = vpack.c.b16 %v255, %v251
      %v260 = vpack.c.b16 %v256, %v252
      %261 = vrot.lane.b32.xlu0 %v257, 18
      %v262 = vpop.permute.xlu0 %261
      %263 = vrot.lane.b32.xlu0 %v258, 18
      %v264 = vpop.permute.xlu0 %263
      %265 = vrot.lane.b32.xlu0 %v259, 18
      %v266 = vpop.permute.xlu0 %265
      %267 = vrot.lane.b32.xlu0 %v260, 18
      %v268 = vpop.permute.xlu0 %267
      %vm269 = vcmask 146432
      %v270 = vsel %vm269, %v262, %v264
      %v271 = vsel %vm269, %v264, %v266
      %v272 = vsel %vm269, %v266, %v268
      %276 = vst [vmem:[#allocation2 + $0x18] sm:$0xff] %v270
      %277 = vst [vmem:[#allocation2 + $0x20] sm:$0xff] %v271
      %278 = vst [vmem:[#allocation2 + $0x28] sm:$0xff] %v272
      %v279 = vld [vmem:[%s192] sm:$0xff]
      %v280 = vld [vmem:[%s192 + $0x8] sm:$0xff]
      %v281 = vld [vmem:[%s192 + $0x14] sm:$0xff]
      %v282 = vld [vmem:[%s192 + $0x1c] sm:$0xff]
      %v287 = vunpack.c.l.b16 %v279
      %v288 = vunpack.c.h.b16 %v279
      %v289 = vunpack.c.l.b16 %v280
      %v290 = vunpack.c.h.b16 %v280
      %v291 = vunpack.c.l.b16 %v281
      %v292 = vunpack.c.h.b16 %v281
      %v293 = vunpack.c.l.b16 %v282
      %v294 = vunpack.c.h.b16 %v282
      %v295 = vpack.c.b16 %v291, %v287
      %v296 = vpack.c.b16 %v292, %v288
      %v297 = vpack.c.b16 %v293, %v289
      %v298 = vpack.c.b16 %v294, %v290
      %299 = vrot.lane.b32.xlu0 %v295, 17
      %v300 = vpop.permute.xlu0 %299
      %301 = vrot.lane.b32.xlu0 %v296, 17
      %v302 = vpop.permute.xlu0 %301
      %303 = vrot.lane.b32.xlu0 %v297, 17
      %v304 = vpop.permute.xlu0 %303
      %305 = vrot.lane.b32.xlu0 %v298, 17
      %v306 = vpop.permute.xlu0 %305
      %vm307 = vcmask 138240
      %v308 = vsel %vm307, %v300, %v302
      %v309 = vsel %vm307, %v302, %v304
      %v310 = vsel %vm307, %v304, %v306
      %314 = vst [vmem:[#allocation2 + $0x30] sm:$0xff] %v308
      %315 = vst [vmem:[#allocation2 + $0x38] sm:$0xff] %v309
      %316 = vst [vmem:[#allocation2 + $0x40] sm:$0xff] %v310
      %v317 = vld [vmem:[%s192] sm:$0xff]
      %v318 = vld [vmem:[%s192 + $0x8] sm:$0xff]
      %v319 = vld [vmem:[%s192 + $0x14] sm:$0xff]
      %v320 = vld [vmem:[%s192 + $0x1c] sm:$0xff]
      %v325 = vunpack.c.l.b16 %v317
      %v326 = vunpack.c.h.b16 %v317
      %v327 = vunpack.c.l.b16 %v318
      %v328 = vunpack.c.h.b16 %v318
      %v329 = vunpack.c.l.b16 %v319
      %v330 = vunpack.c.h.b16 %v319
      %v331 = vunpack.c.l.b16 %v320
      %v332 = vunpack.c.h.b16 %v320
      %v333 = vpack.c.b16 %v329, %v325
      %v334 = vpack.c.b16 %v330, %v326
      %v335 = vpack.c.b16 %v331, %v327
      %v336 = vpack.c.b16 %v332, %v328
      %337 = vrot.lane.b32.xlu0 %v333, 1
      %v338 = vpop.permute.xlu0 %337
      %339 = vrot.lane.b32.xlu0 %v334, 1
      %v340 = vpop.permute.xlu0 %339
      %341 = vrot.lane.b32.xlu0 %v335, 1
      %v342 = vpop.permute.xlu0 %341
      %343 = vrot.lane.b32.xlu0 %v336, 1
      %v344 = vpop.permute.xlu0 %343
      %vm345 = vcmask 7168
      %v346 = vsel %vm345, %v338, %v340
      %v347 = vsel %vm345, %v340, %v342
      %v348 = vsel %vm345, %v342, %v344
      %352 = vst [vmem:[#allocation2 + $0x48] sm:$0xff] %v346
      %353 = vst [vmem:[#allocation2 + $0x50] sm:$0xff] %v347
      %354 = vst [vmem:[#allocation2 + $0x58] sm:$0xff] %v348
      %v355 = vld [vmem:[%s192 + $0x4] sm:$0xff]
      %v356 = vld [vmem:[%s192 + $0xc] sm:$0xf]
      %v357 = vld [vmem:[%s192 + $0x18] sm:$0xff]
      %v358 = vld [vmem:[%s192 + $0x20] sm:$0xf]
      %v363 = vunpack.c.l.b16 %v355
      %v364 = vunpack.c.h.b16 %v355
      %v365 = vunpack.c.l.b16 %v356
      %v366 = vunpack.c.l.b16 %v357
      %v367 = vunpack.c.h.b16 %v357
      %v368 = vunpack.c.l.b16 %v358
      %v369 = vpack.c.b16 %v366, %v363
      %v370 = vpack.c.b16 %v367, %v364
      %v371 = vpack.c.b16 %v368, %v365
      %375 = vst [vmem:[#allocation2 + $0x60] sm:$0xff] %v369
      %376 = vst [vmem:[#allocation2 + $0x68] sm:$0xff] %v370
      %377 = vst [vmem:[#allocation2 + $0x70] sm:$0xff] %v371
      %v378 = vld [vmem:[%s192 + $0x4] sm:$0xff]
      %v379 = vld [vmem:[%s192 + $0xc] sm:$0xff]
      %v380 = vld [vmem:[%s192 + $0x18] sm:$0xff]
      %v381 = vld [vmem:[%s192 + $0x20] sm:$0xff]
      %v386 = vunpack.c.l.b16 %v378
      %v387 = vunpack.c.h.b16 %v378
      %v388 = vunpack.c.l.b16 %v379
      %v389 = vunpack.c.h.b16 %v379
      %v390 = vunpack.c.l.b16 %v380
      %v391 = vunpack.c.h.b16 %v380
      %v392 = vunpack.c.l.b16 %v381
      %v393 = vunpack.c.h.b16 %v381
      %v394 = vpack.c.b16 %v390, %v386
      %v395 = vpack.c.b16 %v391, %v387
      %v396 = vpack.c.b16 %v392, %v388
      %v397 = vpack.c.b16 %v393, %v389
      %398 = vrot.lane.b32.xlu0 %v394, 127
      %v399 = vpop.permute.xlu0 %398
      %400 = vrot.lane.b32.xlu0 %v395, 127
      %v401 = vpop.permute.xlu0 %400
      %402 = vrot.lane.b32.xlu0 %v396, 127
      %v403 = vpop.permute.xlu0 %402
      %404 = vrot.lane.b32.xlu0 %v397, 127
      %v405 = vpop.permute.xlu0 %404
      %vm406 = vcmask 1039360
      %v407 = vsel %vm406, %v399, %v401
      %v408 = vsel %vm406, %v401, %v403
      %v409 = vsel %vm406, %v403, %v405
      %413 = vst [vmem:[#allocation2 + $0x78] sm:$0xff] %v407
      %414 = vst [vmem:[#allocation2 + $0x80] sm:$0xff] %v408
      %415 = vst [vmem:[#allocation2 + $0x88] sm:$0xff] %v409
      %v416 = vld [vmem:[%s192 + $0x4] sm:$0xff]
      %v417 = vld [vmem:[%s192 + $0xc] sm:$0xff]
      %v418 = vld [vmem:[%s192 + $0x18] sm:$0xff]
      %v419 = vld [vmem:[%s192 + $0x20] sm:$0xff]
      %v424 = vunpack.c.l.b16 %v416
      %v425 = vunpack.c.h.b16 %v416
      %v426 = vunpack.c.l.b16 %v417
      %v427 = vunpack.c.h.b16 %v417
      %v428 = vunpack.c.l.b16 %v418
      %v429 = vunpack.c.h.b16 %v418
      %v430 = vunpack.c.l.b16 %v419
      %v431 = vunpack.c.h.b16 %v419
      %v432 = vpack.c.b16 %v428, %v424
      %v433 = vpack.c.b16 %v429, %v425
      %v434 = vpack.c.b16 %v430, %v426
      %v435 = vpack.c.b16 %v431, %v427
      %436 = vrot.lane.b32.xlu0 %v432, 111
      %v437 = vpop.permute.xlu0 %436
      %438 = vrot.lane.b32.xlu0 %v433, 111
      %v439 = vpop.permute.xlu0 %438
      %440 = vrot.lane.b32.xlu0 %v434, 111
      %v441 = vpop.permute.xlu0 %440
      %442 = vrot.lane.b32.xlu0 %v435, 111
      %v443 = vpop.permute.xlu0 %442
      %vm444 = vcmask 908288
      %v445 = vsel %vm444, %v437, %v439
      %v446 = vsel %vm444, %v439, %v441
      %v447 = vsel %vm444, %v441, %v443
      %451 = vst [vmem:[#allocation2 + $0x90] sm:$0xff] %v445
      %452 = vst [vmem:[#allocation2 + $0x98] sm:$0xff] %v446
      %453 = vst [vmem:[#allocation2 + $0xa0] sm:$0xff] %v447
      %v454 = vld [vmem:[%s192 + $0x4] sm:$0xff]
      %v455 = vld [vmem:[%s192 + $0xc] sm:$0xff]
      %v456 = vld [vmem:[%s192 + $0x18] sm:$0xff]
      %v457 = vld [vmem:[%s192 + $0x20] sm:$0xff]
      %v462 = vunpack.c.l.b16 %v454
      %v463 = vunpack.c.h.b16 %v454
      %v464 = vunpack.c.l.b16 %v455
      %v465 = vunpack.c.h.b16 %v455
      %v466 = vunpack.c.l.b16 %v456
      %v467 = vunpack.c.h.b16 %v456
      %v468 = vunpack.c.l.b16 %v457
      %v469 = vunpack.c.h.b16 %v457
      %v470 = vpack.c.b16 %v466, %v462
      %v471 = vpack.c.b16 %v467, %v463
      %v472 = vpack.c.b16 %v468, %v464
      %v473 = vpack.c.b16 %v469, %v465
      %474 = vrot.lane.b32.xlu0 %v470, 110
      %v475 = vpop.permute.xlu0 %474
      %476 = vrot.lane.b32.xlu0 %v471, 110
      %v477 = vpop.permute.xlu0 %476
      %478 = vrot.lane.b32.xlu0 %v472, 110
      %v479 = vpop.permute.xlu0 %478
      %480 = vrot.lane.b32.xlu0 %v473, 110
      %v481 = vpop.permute.xlu0 %480
      %vm482 = vcmask 900096
      %v483 = vsel %vm482, %v475, %v477
      %v484 = vsel %vm482, %v477, %v479
      %v485 = vsel %vm482, %v479, %v481
      %489 = vst [vmem:[#allocation2 + $0xa8] sm:$0xff] %v483
      %490 = vst [vmem:[#allocation2 + $0xb0] sm:$0xff] %v484
      %491 = vst [vmem:[#allocation2 + $0xb8] sm:$0xff] %v485
      %v492 = vld [vmem:[%s192 + $0x4] sm:$0xff]
      %v493 = vld [vmem:[%s192 + $0xc] sm:$0xff]
      %v494 = vld [vmem:[%s192 + $0x18] sm:$0xff]
      %v495 = vld [vmem:[%s192 + $0x20] sm:$0xff]
      %v500 = vunpack.c.l.b16 %v492
      %v501 = vunpack.c.h.b16 %v492
      %v502 = vunpack.c.l.b16 %v493
      %v503 = vunpack.c.h.b16 %v493
      %v504 = vunpack.c.l.b16 %v494
      %v505 = vunpack.c.h.b16 %v494
      %v506 = vunpack.c.l.b16 %v495
      %v507 = vunpack.c.h.b16 %v495
      %v508 = vpack.c.b16 %v504, %v500
      %v509 = vpack.c.b16 %v505, %v501
      %v510 = vpack.c.b16 %v506, %v502
      %v511 = vpack.c.b16 %v507, %v503
      %512 = vrot.lane.b32.xlu0 %v508, 109
      %v513 = vpop.permute.xlu0 %512
      %514 = vrot.lane.b32.xlu0 %v509, 109
      %v515 = vpop.permute.xlu0 %514
      %516 = vrot.lane.b32.xlu0 %v510, 109
      %v517 = vpop.permute.xlu0 %516
      %518 = vrot.lane.b32.xlu0 %v511, 109
      %v519 = vpop.permute.xlu0 %518
      %vm520 = vcmask 891904
      %v521 = vsel %vm520, %v513, %v515
      %v522 = vsel %vm520, %v515, %v517
      %v523 = vsel %vm520, %v517, %v519
      %527 = vst [vmem:[#allocation2 + $0xc0] sm:$0xff] %v521
      %528 = vst [vmem:[#allocation2 + $0xc8] sm:$0xff] %v522
      %529 = vst [vmem:[#allocation2 + $0xd0] sm:$0xff] %v523
      %v530 = vld [vmem:[#allocation2] sm:$0xff]
      %v531 = vld [vmem:[#allocation2 + $0x8] sm:$0xff]
      %v532 = vld [vmem:[#allocation2 + $0x10] sm:$0xff]
      %v533 = vld [vmem:[#allocation2 + $0x18] sm:$0xff]
      %v534 = vld [vmem:[#allocation2 + $0x20] sm:$0xff]
      %v535 = vld [vmem:[#allocation2 + $0x28] sm:$0xff]
      %v536 = vld [vmem:[#allocation2 + $0x30] sm:$0xff]
      %v537 = vld [vmem:[#allocation2 + $0x38] sm:$0xff]
      %v538 = vld [vmem:[#allocation2 + $0x40] sm:$0xff]
      %v539 = vld [vmem:[#allocation2 + $0x48] sm:$0xff]
      %v540 = vld [vmem:[#allocation2 + $0x50] sm:$0xff]
      %v541 = vld [vmem:[#allocation2 + $0x58] sm:$0xff]
      %v542 = vld [vmem:[#allocation2 + $0x60] sm:$0xff]
      %v543 = vld [vmem:[#allocation2 + $0x68] sm:$0xff]
      %v544 = vld [vmem:[#allocation2 + $0x70] sm:$0xff]
      %v545 = vld [vmem:[#allocation2 + $0x78] sm:$0xff]
      %v546 = vld [vmem:[#allocation2 + $0x80] sm:$0xff]
      %v547 = vld [vmem:[#allocation2 + $0x88] sm:$0xff]
      %v548 = vld [vmem:[#allocation2 + $0x90] sm:$0xff]
      %v549 = vld [vmem:[#allocation2 + $0x98] sm:$0xff]
      %v550 = vld [vmem:[#allocation2 + $0xa0] sm:$0xff]
      %v551 = vld [vmem:[#allocation2 + $0xa8] sm:$0xff]
      %v552 = vld [vmem:[#allocation2 + $0xb0] sm:$0xff]
      %v553 = vld [vmem:[#allocation2 + $0xb8] sm:$0xff]
      %v554 = vld [vmem:[#allocation2 + $0xc0] sm:$0xff]
      %v555 = vld [vmem:[#allocation2 + $0xc8] sm:$0xff]
      %v556 = vld [vmem:[#allocation2 + $0xd0] sm:$0xff]
      %558 = vset.pattern.permute.xlu0 0
      %559 = vperm.xlu0 %558, %v200
      %v560 = vpop.permute.xlu0 %559
      %v564 = vunpack.c.l.s4 1966171168
      %v565 = vunpack.c.0.s8 %v564
      %v566 = vlaneseq
      %v567 = vshrl.u32 %v566, 7
      %v568 = vsub.s32 %v565, %v567
      %v569 = vrot.slane %v199, %v568
      %v570 = vcombine.high %v569, %v569
      %v572 = vunpack.c.l.s4 1966171168
      %v573 = vunpack.c.0.s8 %v572
      %v574 = vlaneseq
      %v575 = vshrl.u32 %v574, 7
      %v576 = vsub.s32 %v573, %v575
      %v577 = vrot.slane %v569, %v576
      %v579 = vunpack.c.l.s4 1966171168
      %v580 = vunpack.c.0.s8 %v579
      %v581 = vlaneseq
      %v582 = vshrl.u32 %v581, 7
      %v583 = vsub.s32 %v580, %v582
      %v584 = vrot.slane %v570, %v583
      %vm586 = vcmask 130048
      %v588 = vsel %vm586, %v584, 0
      %590 = vmatprep.subr.bf16.mxu0 %v531
      %591 = vmatpush1.bf16.msra.mxu0 %v530
      %592 = vmatprep.subr.bf16.mxu0 %v534
      %593 = vmatpush1.bf16.msra.mxu0 %v533
      %594 = vmatprep.subr.bf16.mxu0 %v537
      %595 = vmatpush1.bf16.msra.mxu0 %v536
      %596 = vmatprep.subr.bf16.mxu0 %v540
      %597 = vmatpush1.bf16.msra.mxu0 %v539
      %598 = vmatprep.subr.bf16.mxu0 %v543
      %599 = vmatpush1.bf16.msra.mxu0 %v542
      %600 = vmatprep.subr.bf16.mxu0 %v546
      %601 = vmatpush1.bf16.msra.mxu0 %v545
      %602 = vmatprep.subr.bf16.mxu0 %v549
      %603 = vmatpush1.bf16.msra.mxu0 %v548
      %604 = vmatprep.subr.bf16.mxu0 %v552
      %605 = vmatpush1.bf16.msra.mxu0 %v551
      %606 = vmatprep.subr.bf16.mxu0 %v555
      %607 = vmatpush1.bf16.msra.mxu0 %v554
      %608 = vmatprep.subr.bf16.mxu0 0
      %609 = vmatpush1.bf16.msra.mxu0 0
      %610 = vmatprep.subr.bf16.mxu0 0
      %611 = vmatpush1.bf16.msra.mxu0 0
      %612 = vmatprep.subr.bf16.mxu0 0
      %613 = vmatpush1.bf16.msra.mxu0 0
      %614 = vmatprep.subr.bf16.mxu0 0
      %615 = vmatpush1.bf16.msra.mxu0 0
      %616 = vmatprep.subr.bf16.mxu0 0
      %617 = vmatpush1.bf16.msra.mxu0 0
      %618 = vmatprep.subr.bf16.mxu0 0
      %619 = vmatpush1.bf16.msra.mxu0 0
      %620 = vmatprep.subr.bf16.mxu0 0
      %621 = vmatpush1.bf16.msra.mxu0 0
      %622 = vmatprep.mubr.bf16.mxu0 %v588
      %623 = vmatmul.mubr.bf16.gmra.mrb[0].mxu0 %v577
      %v624 = vpop.f32.mrb[0].mxu0
      %v625 = vadd.f32 %v560, %v624
      %v626 = vpop.f32.mrb[0].mxu0
      %v627 = vadd.f32 %v560, %v626
      %v628 = vpop.f32.mrb[0].mxu0
      %v629 = vpop.f32.mrb[0].mxu0
      %630 = vdwg.mxu0
      %631 = vmatprep.subr.bf16.mxu0 0
      %632 = vmatpush1.bf16.msra.mxu0 %v532
      %633 = vmatprep.subr.bf16.mxu0 0
      %634 = vmatpush1.bf16.msra.mxu0 %v535
      %635 = vmatprep.subr.bf16.mxu0 0
      %636 = vmatpush1.bf16.msra.mxu0 %v538
      %637 = vmatprep.subr.bf16.mxu0 0
      %638 = vmatpush1.bf16.msra.mxu0 %v541
      %639 = vmatprep.subr.bf16.mxu0 0
      %640 = vmatpush1.bf16.msra.mxu0 %v544
      %641 = vmatprep.subr.bf16.mxu0 0
      %642 = vmatpush1.bf16.msra.mxu0 %v547
      %643 = vmatprep.subr.bf16.mxu0 0
      %644 = vmatpush1.bf16.msra.mxu0 %v550
      %645 = vmatprep.subr.bf16.mxu0 0
      %646 = vmatpush1.bf16.msra.mxu0 %v553
      %647 = vmatprep.subr.bf16.mxu0 0
      %648 = vmatpush1.bf16.msra.mxu0 %v556
      %649 = vmatprep.subr.bf16.mxu0 0
      %650 = vmatpush1.bf16.msra.mxu0 0
      %651 = vmatprep.subr.bf16.mxu0 0
      %652 = vmatpush1.bf16.msra.mxu0 0
      %653 = vmatprep.subr.bf16.mxu0 0
      %654 = vmatpush1.bf16.msra.mxu0 0
      %655 = vmatprep.subr.bf16.mxu0 0
      %656 = vmatpush1.bf16.msra.mxu0 0
      %657 = vmatprep.subr.bf16.mxu0 0
      %658 = vmatpush1.bf16.msra.mxu0 0
      %659 = vmatprep.subr.bf16.mxu0 0
      %660 = vmatpush1.bf16.msra.mxu0 0
      %661 = vmatprep.subr.bf16.mxu0 0
      %662 = vmatpush1.bf16.msra.mxu0 0
      %663 = vmatprep.mubr.bf16.mxu0 %v588
      %664 = vmatmul.mubr.bf16.gmra.mrb[0].mxu0 %v577
      %v665 = vpop.f32.mrb[0].mxu0
      %v666 = vadd.f32 %v560, %v665
      %v667 = vpop.f32.mrb[0].mxu0
      %v668 = vpop.f32.mrb[0].mxu0
      %v669 = vpop.f32.mrb[0].mxu0
      %670 = vdwg.mxu0
      %v671 = vtanh.pop %v625
      %v672 = vtanh.pop %v627
      %v673 = vtanh.pop %v666
      %v674 = vmul.f32 %v671, 0.1
      %v675 = vmul.f32 %v672, 0.1
      %v676 = vmul.f32 %v673, 0.1
      %v677 = vadd.f32 %v674, 0.0
      %v678 = vadd.f32 %v675, 0.0
      %v679 = vadd.f32 %v676, 0.0
      %v680 = vld [vmem:[%s3] sm:$0x7]
      %v682 = vlaneseq
      %v683 = vshrl.u32 %v682, 7
      %v684 = vsub.s32 0, %v683
      %v685 = vrot.slane %v680, %v684
      %v686 = vlaneseq
      %v687 = vshrl.u32 %v686, 7
      %v688 = vsub.s32 1, %v687
      %v689 = vrot.slane %v680, %v688
      %v690 = vlaneseq
      %v691 = vshrl.u32 %v690, 7
      %v692 = vsub.s32 2, %v691
      %v693 = vrot.slane %v680, %v692
      %v697 = vmul.f32 %v677, %v685
      %v698 = vmul.f32 %v678, %v689
      %v699 = vmul.f32 %v679, %v693
      %v703 = vcombine.low %v697, %v698
      %v705 = vunpack.c.l.s4 1983009808
      %v706 = vunpack.c.0.s8 %v705
      %v707 = vlaneseq
      %v708 = vshrl.u32 %v707, 7
      %v709 = vsub.s32 %v706, %v708
      %v710 = vrot.slane %v703, %v709
      %v712 = vunpack.c.l.s4 1983009808
      %v713 = vunpack.c.0.s8 %v712
      %v714 = vlaneseq
      %v715 = vshrl.u32 %v714, 7
      %v716 = vsub.s32 %v713, %v715
      %v717 = vrot.slane %v699, %v716
      %v718 = vcombine.low %v710, %v717
      %720 = vst [vmem:[%s197 + $0x2] sm:$0x3f] %v718
      %p721 = scmp.lt.s32.totalorder %s15, 1
      %s722 = scalar_select %p721, %s15, 1
      %s723 = smul.addr %s722, 5
      %s724 = smul.addr %s723, 2
      %s725 = scalar_lea.vmem %s4, %s724
      // Predicated region
      $region37: #{superfusion_forward.9} parent=35 // pred_check
        %p726 = pneg %p122
      $region38: #{superfusion_forward.9} parent=35 // pred_check_branch
        %728 = sbr.rel (%p726) target = $region40
      $region39: #{superfusion_forward.9} parent=35 // pred_region
        _
      $region40: #{superfusion_forward.9} parent=35 // pred_fallthru
        _
    $region36: #{superfusion_forward.9} parent=5 // pred_fallthru
      _
    %p729 = scmp.le.s32.totalorder 2, %s10
    // Predicated region
    $region41: #{superfusion_forward.9} parent=5 // pred_check
      %p730 = pneg %p729
    $region42: #{superfusion_forward.9} parent=5 // pred_check_branch
      %732 = sbr.rel (%p730) target = $region44
    $region43: #{superfusion_forward.9} parent=5 // pred_region
      %s733 = ssub.s32 %s10, 2
      // Predicated region
      $region45: #{superfusion_forward.9} parent=43 // pred_check
        %p734 = pneg %p128
      $region46: #{superfusion_forward.9} parent=43 // pred_check_branch
        %736 = sbr.rel (%p734) target = $region48
      $region47: #{superfusion_forward.9} parent=43 // pred_region
        %p737 = scmp.lt.s32.totalorder %s16, 1
        %s738 = scalar_select %p737, %s16, 1
        %s739 = smul.addr %s738, 5
        %s740 = smul.addr %s739, 2
        %s741 = scalar_lea.vmem %s4, %s740
      $region48: #{superfusion_forward.9} parent=43 // pred_fallthru
        _
    $region44: #{superfusion_forward.9} parent=5 // pred_fallthru
      _
  $region6: #{superfusion_forward.9} parent=0 // loop_footer
    %s14 = sadd.s32 1, %s10
  $region7: #{superfusion_forward.9} parent=0 // loop_footer_branch
    %9 = sbr.rel target = $region3
  $region8: #{superfusion_forward.9} parent=0 // loop_exit
    _

// kernel: superfusion_forward.12
$region0: #{superfusion_forward.12}
  #allocation0 [shape = 'u32[]', space=smem, size = 0x4, offset = 0x4, fixed_abs, tag = 'smem constant byte address 0x4 - core index']
  #allocation1 [shape = 'u32[144,128]{1,0:T(1,128)}', space=vmem, size = 0x12000, scoped, tag = 'internal scratch']
  #allocation2 [shape = 'bf16[144,384]{1,0:T(16,128)(2,1)}', space=vmem, size = 0x1b000, scoped, tag = 'scratch operand']
  #allocation3 [shape = 'f32[1,1]{1,0:T(1,128)S(1)}', space=vmem, size = 0x200, scoped, tag = 'scoped memory for superfusion_forward.12']
  %s0 = inlined_call_operand.vmem [shape: bf16[2,16,640], index: 0, kind: input, shape index: {}]
  %s1 = inlined_call_operand.vmem [shape: bf16[1,144], index: 1, kind: input, shape index: {}]
  %s2 = inlined_call_operand.<no memory space> [shape: f32[1,1], index: 2, kind: input, shape index: {}]
  %s3 = inlined_call_operand.vmem [shape: f32[1,384], index: 3, kind: input, shape index: {}]
  %s4 = inlined_call_operand.vmem [shape: f32[2,1,640], index: 4, kind: output, shape index: {}]
  %s5 = sld [smem:[#allocation0]]
  $region49: #{superfusion_forward.12} parent=0
    _
  %s7 = ssub.s32 1, %s5
  %s8 = scalar_select 0, %s7, %s5
  %v9 = vstv %s2
  %10 = vst [vmem:[#allocation3] sm:$0x1] %v9
  loop: start=0, step=1, limit=4
  $region2: #{superfusion_forward.12} parent=0 // loop_pre_header
    _
  $region3: #{superfusion_forward.12} parent=0 // loop_header
    %s12 = sphi 0, %s16
    %p13 = scmp.ge.s32.totalorder %s12, 4
    %s22 = sphi 0, %s24
    %s25 = sphi 0, %s22
    %s26 = sphi 0, %s25
    %s42 = sphi 0, %s26
    %s46 = sphi 0, %s46
    %s48 = sphi 0, %s46
    %s49 = sphi 0, %s48
    %s63 = sphi 0, %s49
    %s67 = sphi 0, %s67
    %s69 = sphi 0, %s67
    %s70 = sphi 0, %s69
    %s84 = sphi 0, %s70
    %s88 = sphi 0, %s88
    %s90 = sphi 0, %s88
    %s91 = sphi 0, %s90
    %s105 = sphi 0, %s91
    %s111 = sphi 0, %s113
    %s114 = sphi 0, %s111
    %s115 = sphi 0, %s114
    %s131 = sphi 0, %s115
  $region4: #{superfusion_forward.12} parent=0 // loop_header_branch
    %15 = sbr.rel (%p13) target = $region8
  $region5: #{superfusion_forward.12} parent=0 // loop_body
    %s17 = ssub.s32 %s12, 1
    %s18 = ssub.s32 %s12, 2
    %s19 = sadd.s32 %s12, 1
    %s20 = ssub.s32 %s12, %s19
    %p21 = scmp.eq.s32.totalorder %s20, 0
    %s23 = sadd.s32 %s22, 1
    %s24 = scalar_select %p21, %s22, %s23
    %p27 = pneg %p21
    %p28 = scmp.eq.s32.totalorder %s12, 1
    %p29 = por %p27, %p28
    %p30 = scmp.ne.s32.totalorder %s22, %s25
    %p31 = scmp.eq.s32.totalorder %s12, 0
    %p32 = por %p30, %p31
    %p33 = scmp.ne.s32.totalorder %s22, %s25
    %p34 = scmp.eq.s32.totalorder %s17, 1
    %p35 = por %p33, %p34
    %p36 = scmp.ne.s32.totalorder %s25, %s26
    %p37 = scmp.eq.s32.totalorder %s17, 0
    %p38 = por %p36, %p37
    %p39 = scmp.ne.s32.totalorder %s25, %s26
    %p40 = scmp.eq.s32.totalorder %s18, 1
    %p41 = por %p39, %p40
    %p43 = scmp.ne.s32.totalorder %s26, %s42
    %p44 = scmp.eq.s32.totalorder %s18, 0
    %p45 = por %p43, %p44
    %s47 = sadd.s32 %s46, 1
    %p50 = scmp.eq.s32.totalorder %s12, 1
    %p51 = scmp.ne.s32.totalorder %s46, %s48
    %p52 = scmp.eq.s32.totalorder %s12, 0
    %p53 = por %p51, %p52
    %p54 = scmp.ne.s32.totalorder %s46, %s48
    %p55 = scmp.eq.s32.totalorder %s17, 1
    %p56 = por %p54, %p55
    %p57 = scmp.ne.s32.totalorder %s48, %s49
    %p58 = scmp.eq.s32.totalorder %s17, 0
    %p59 = por %p57, %p58
    %p60 = scmp.ne.s32.totalorder %s48, %s49
    %p61 = scmp.eq.s32.totalorder %s18, 1
    %p62 = por %p60, %p61
    %p64 = scmp.ne.s32.totalorder %s49, %s63
    %p65 = scmp.eq.s32.totalorder %s18, 0
    %p66 = por %p64, %p65
    %s68 = sadd.s32 %s67, 1
    %p71 = scmp.eq.s32.totalorder %s12, 1
    %p72 = scmp.ne.s32.totalorder %s67, %s69
    %p73 = scmp.eq.s32.totalorder %s12, 0
    %p74 = por %p72, %p73
    %p75 = scmp.ne.s32.totalorder %s67, %s69
    %p76 = scmp.eq.s32.totalorder %s17, 1
    %p77 = por %p75, %p76
    %p78 = scmp.ne.s32.totalorder %s69, %s70
    %p79 = scmp.eq.s32.totalorder %s17, 0
    %p80 = por %p78, %p79
    %p81 = scmp.ne.s32.totalorder %s69, %s70
    %p82 = scmp.eq.s32.totalorder %s18, 1
    %p83 = por %p81, %p82
    %p85 = scmp.ne.s32.totalorder %s70, %s84
    %p86 = scmp.eq.s32.totalorder %s18, 0
    %p87 = por %p85, %p86
    %s89 = sadd.s32 %s88, 1
    %p92 = scmp.eq.s32.totalorder %s12, 1
    %p93 = scmp.ne.s32.totalorder %s88, %s90
    %p94 = scmp.eq.s32.totalorder %s12, 0
    %p95 = por %p93, %p94
    %p96 = scmp.ne.s32.totalorder %s88, %s90
    %p97 = scmp.eq.s32.totalorder %s17, 1
    %p98 = por %p96, %p97
    %p99 = scmp.ne.s32.totalorder %s90, %s91
    %p100 = scmp.eq.s32.totalorder %s17, 0
    %p101 = por %p99, %p100
    %p102 = scmp.ne.s32.totalorder %s90, %s91
    %p103 = scmp.eq.s32.totalorder %s18, 1
    %p104 = por %p102, %p103
    %p106 = scmp.ne.s32.totalorder %s91, %s105
    %p107 = scmp.eq.s32.totalorder %s18, 0
    %p108 = por %p106, %p107
    %s109 = ssub.s32 %s12, %s19
    %p110 = scmp.eq.s32.totalorder %s109, 0
    %s112 = sadd.s32 %s111, 1
    %s113 = scalar_select %p110, %s111, %s112
    %p116 = pneg %p110
    %p117 = scmp.eq.s32.totalorder %s12, 1
    %p118 = por %p116, %p117
    %p119 = scmp.ne.s32.totalorder %s111, %s114
    %p120 = scmp.eq.s32.totalorder %s12, 0
    %p121 = por %p119, %p120
    %p122 = scmp.ne.s32.totalorder %s111, %s114
    %p123 = scmp.eq.s32.totalorder %s17, 1
    %p124 = por %p122, %p123
    %p125 = scmp.ne.s32.totalorder %s114, %s115
    %p126 = scmp.eq.s32.totalorder %s17, 0
    %p127 = por %p125, %p126
    %p128 = scmp.ne.s32.totalorder %s114, %s115
    %p129 = scmp.eq.s32.totalorder %s18, 1
    %p130 = por %p128, %p129
    %p132 = scmp.ne.s32.totalorder %s115, %s131
    %p133 = scmp.eq.s32.totalorder %s18, 0
    %p134 = por %p132, %p133
    %p135 = scmp.le.s32.totalorder 1, %s12
    %p136 = scmp.lt.s32.totalorder %s12, 3
    %p137 = pnand %p135, %p136
    %p138 = pneg %p137
    // Predicated region
    $region9: #{superfusion_forward.12} parent=5 // pred_check
      _
    $region10: #{superfusion_forward.12} parent=5 // pred_check_branch
      %140 = sbr.rel (%p137) target = $region12
    $region11: #{superfusion_forward.12} parent=5 // pred_region
      %s141 = ssub.s32 %s12, 1
      // Predicated region
      $region13: #{superfusion_forward.12} parent=11 // pred_check
        %p142 = pneg %p59
      $region14: #{superfusion_forward.12} parent=11 // pred_check_branch
        %144 = sbr.rel (%p142) target = $region16
      $region15: #{superfusion_forward.12} parent=11 // pred_region
        _
      $region16: #{superfusion_forward.12} parent=11 // pred_fallthru
        _
      // Predicated region
      $region17: #{superfusion_forward.12} parent=11 // pred_check
        %p145 = pneg %p80
      $region18: #{superfusion_forward.12} parent=11 // pred_check_branch
        %147 = sbr.rel (%p145) target = $region20
      $region19: #{superfusion_forward.12} parent=11 // pred_region
        _
      $region20: #{superfusion_forward.12} parent=11 // pred_fallthru
        _
      // Predicated region
      $region21: #{superfusion_forward.12} parent=11 // pred_check
        %p148 = pneg %p101
      $region22: #{superfusion_forward.12} parent=11 // pred_check_branch
        %150 = sbr.rel (%p148) target = $region24
      $region23: #{superfusion_forward.12} parent=11 // pred_region
        _
      $region24: #{superfusion_forward.12} parent=11 // pred_fallthru
        _
    $region12: #{superfusion_forward.12} parent=5 // pred_fallthru
      _
    %p151 = scmp.lt.s32.totalorder %s12, 2
    // Predicated region
    $region25: #{superfusion_forward.12} parent=5 // pred_check
      %p152 = pneg %p151
    $region26: #{superfusion_forward.12} parent=5 // pred_check_branch
      %154 = sbr.rel (%p152) target = $region28
    $region27: #{superfusion_forward.12} parent=5 // pred_region
      // Predicated region
      $region29: #{superfusion_forward.12} parent=27 // pred_check
        %p155 = pneg %p32
      $region30: #{superfusion_forward.12} parent=27 // pred_check_branch
        %157 = sbr.rel (%p155) target = $region32
      $region31: #{superfusion_forward.12} parent=27 // pred_region
        %p158 = scmp.lt.s32.totalorder %s12, 1
        %s159 = scalar_select %p158, %s12, 1
        %s160 = smul.addr %s159, 10
        %s161 = smul.addr %s160, 4
        %s162 = scalar_lea.vmem %s0, %s161
      $region32: #{superfusion_forward.12} parent=27 // pred_fallthru
        _
    $region28: #{superfusion_forward.12} parent=5 // pred_fallthru
      _
    %p163 = scmp.le.s32.totalorder 1, %s12
    %p164 = scmp.lt.s32.totalorder %s12, 3
    %p165 = pnand %p163, %p164
    %p166 = pneg %p165
    // Predicated region
    $region33: #{superfusion_forward.12} parent=5 // pred_check
      _
    $region34: #{superfusion_forward.12} parent=5 // pred_check_branch
      %168 = sbr.rel (%p165) target = $region36
    $region35: #{superfusion_forward.12} parent=5 // pred_region
      %s169 = ssub.s32 %s12, 1
      %p170 = scmp.lt.s32.totalorder %s17, 1
      %s171 = scalar_select %p170, %s17, 1
      %s172 = smul.addr %s171, 10
      %s173 = smul.addr %s172, 4
      %s174 = scalar_lea.vmem %s0, %s173
      %p175 = pneg %p38
      %p176 = pneg %p35
      %p177 = pneg %p59
      %p178 = pneg %p56
      %p179 = pneg %p80
      %p180 = pneg %p77
      %p181 = pneg %p101
      %p182 = pneg %p98
      %p183 = pneg %p127
      %p184 = pneg %p124
      %p185 = scmp.lt.s32.totalorder %s17, 1
      %s186 = scalar_select %p185, %s17, 1
      %s187 = smul.addr %s186, 5
      %s188 = scalar_lea.vmem %s4, %s187
      %p189 = scmp.lt.s32.totalorder %s17, 1
      %s190 = scalar_select %p189, %s17, 1
      %s191 = smul.addr %s190, 10
      %s192 = smul.addr %s191, 4
      %s193 = scalar_lea.vmem %s0, %s192
      %p194 = scmp.lt.s32.totalorder %s17, 1
      %s195 = scalar_select %p194, %s17, 1
      %s196 = smul.addr %s195, 5
      %s197 = scalar_lea.vmem %s4, %s196
      %v199 = vld [vmem:[%s1] sm:$0x3]
      %v200 = vld [vmem:[#allocation3] sm:$0x1]
      %v201 = vlaneseq
      %vm202 = vcmp.ge.s32.totalorder %v201, 0
      %vm203 = vcmp.lt.s32.totalorder %v201, 128
      %vm204 = vmand %vm202, %vm203
      %205 = vst.msk [vmem:[%s197] sm:$0x1] %vm204, 0.0
      %206 = vst.msk [vmem:[%s197 + $0x4] sm:$0x1] %vm204, 0.0
      %v207 = vld [vmem:[%s193] sm:$0xff]
      %v208 = vld [vmem:[%s193 + $0x8] sm:$0xff]
      %v209 = vld [vmem:[%s193 + $0x14] sm:$0xff]
      %v210 = vld [vmem:[%s193 + $0x1c] sm:$0xff]
      %v215 = vunpack.c.l.b16 %v207
      %v216 = vunpack.c.h.b16 %v207
      %v217 = vunpack.c.l.b16 %v208
      %v218 = vunpack.c.h.b16 %v208
      %v219 = vunpack.c.l.b16 %v209
      %v220 = vunpack.c.h.b16 %v209
      %v221 = vunpack.c.l.b16 %v210
      %v222 = vunpack.c.h.b16 %v210
      %v223 = vpack.c.b16 %v219, %v215
      %v224 = vpack.c.b16 %v220, %v216
      %v225 = vpack.c.b16 %v221, %v217
      %v226 = vpack.c.b16 %v222, %v218
      %227 = vrot.lane.b32.xlu0 %v223, 19
      %v228 = vpop.permute.xlu0 %227
      %229 = vrot.lane.b32.xlu0 %v224, 19
      %v230 = vpop.permute.xlu0 %229
      %231 = vrot.lane.b32.xlu0 %v225, 19
      %v232 = vpop.permute.xlu0 %231
      %233 = vrot.lane.b32.xlu0 %v226, 19
      %v234 = vpop.permute.xlu0 %233
      %vm235 = vcmask 154624
      %v236 = vsel %vm235, %v228, %v230
      %v237 = vsel %vm235, %v230, %v232
      %v238 = vsel %vm235, %v232, %v234
      %242 = vst [vmem:[#allocation2] sm:$0xff] %v236
      %243 = vst [vmem:[#allocation2 + $0x8] sm:$0xff] %v237
      %244 = vst [vmem:[#allocation2 + $0x10] sm:$0xff] %v238
      %v245 = vld [vmem:[%s193] sm:$0xff]
      %v246 = vld [vmem:[%s193 + $0x8] sm:$0xff]
      %v247 = vld [vmem:[%s193 + $0x14] sm:$0xff]
      %v248 = vld [vmem:[%s193 + $0x1c] sm:$0xff]
      %v253 = vunpack.c.l.b16 %v245
      %v254 = vunpack.c.h.b16 %v245
      %v255 = vunpack.c.l.b16 %v246
      %v256 = vunpack.c.h.b16 %v246
      %v257 = vunpack.c.l.b16 %v247
      %v258 = vunpack.c.h.b16 %v247
      %v259 = vunpack.c.l.b16 %v248
      %v260 = vunpack.c.h.b16 %v248
      %v261 = vpack.c.b16 %v257, %v253
      %v262 = vpack.c.b16 %v258, %v254
      %v263 = vpack.c.b16 %v259, %v255
      %v264 = vpack.c.b16 %v260, %v256
      %265 = vrot.lane.b32.xlu0 %v261, 18
      %v266 = vpop.permute.xlu0 %265
      %267 = vrot.lane.b32.xlu0 %v262, 18
      %v268 = vpop.permute.xlu0 %267
      %269 = vrot.lane.b32.xlu0 %v263, 18
      %v270 = vpop.permute.xlu0 %269
      %271 = vrot.lane.b32.xlu0 %v264, 18
      %v272 = vpop.permute.xlu0 %271
      %vm273 = vcmask 146432
      %v274 = vsel %vm273, %v266, %v268
      %v275 = vsel %vm273, %v268, %v270
      %v276 = vsel %vm273, %v270, %v272
      %280 = vst [vmem:[#allocation2 + $0x18] sm:$0xff] %v274
      %281 = vst [vmem:[#allocation2 + $0x20] sm:$0xff] %v275
      %282 = vst [vmem:[#allocation2 + $0x28] sm:$0xff] %v276
      %v283 = vld [vmem:[%s193] sm:$0xff]
      %v284 = vld [vmem:[%s193 + $0x8] sm:$0xff]
      %v285 = vld [vmem:[%s193 + $0x14] sm:$0xff]
      %v286 = vld [vmem:[%s193 + $0x1c] sm:$0xff]
      %v291 = vunpack.c.l.b16 %v283
      %v292 = vunpack.c.h.b16 %v283
      %v293 = vunpack.c.l.b16 %v284
      %v294 = vunpack.c.h.b16 %v284
      %v295 = vunpack.c.l.b16 %v285
      %v296 = vunpack.c.h.b16 %v285
      %v297 = vunpack.c.l.b16 %v286
      %v298 = vunpack.c.h.b16 %v286
      %v299 = vpack.c.b16 %v295, %v291
      %v300 = vpack.c.b16 %v296, %v292
      %v301 = vpack.c.b16 %v297, %v293
      %v302 = vpack.c.b16 %v298, %v294
      %303 = vrot.lane.b32.xlu0 %v299, 17
      %v304 = vpop.permute.xlu0 %303
      %305 = vrot.lane.b32.xlu0 %v300, 17
      %v306 = vpop.permute.xlu0 %305
      %307 = vrot.lane.b32.xlu0 %v301, 17
      %v308 = vpop.permute.xlu0 %307
      %309 = vrot.lane.b32.xlu0 %v302, 17
      %v310 = vpop.permute.xlu0 %309
      %vm311 = vcmask 138240
      %v312 = vsel %vm311, %v304, %v306
      %v313 = vsel %vm311, %v306, %v308
      %v314 = vsel %vm311, %v308, %v310
      %318 = vst [vmem:[#allocation2 + $0x30] sm:$0xff] %v312
      %319 = vst [vmem:[#allocation2 + $0x38] sm:$0xff] %v313
      %320 = vst [vmem:[#allocation2 + $0x40] sm:$0xff] %v314
      %v321 = vld [vmem:[%s193] sm:$0xff]
      %v322 = vld [vmem:[%s193 + $0x8] sm:$0xff]
      %v323 = vld [vmem:[%s193 + $0x14] sm:$0xff]
      %v324 = vld [vmem:[%s193 + $0x1c] sm:$0xff]
      %v329 = vunpack.c.l.b16 %v321
      %v330 = vunpack.c.h.b16 %v321
      %v331 = vunpack.c.l.b16 %v322
      %v332 = vunpack.c.h.b16 %v322
      %v333 = vunpack.c.l.b16 %v323
      %v334 = vunpack.c.h.b16 %v323
      %v335 = vunpack.c.l.b16 %v324
      %v336 = vunpack.c.h.b16 %v324
      %v337 = vpack.c.b16 %v333, %v329
      %v338 = vpack.c.b16 %v334, %v330
      %v339 = vpack.c.b16 %v335, %v331
      %v340 = vpack.c.b16 %v336, %v332
      %341 = vrot.lane.b32.xlu0 %v337, 1
      %v342 = vpop.permute.xlu0 %341
      %343 = vrot.lane.b32.xlu0 %v338, 1
      %v344 = vpop.permute.xlu0 %343
      %345 = vrot.lane.b32.xlu0 %v339, 1
      %v346 = vpop.permute.xlu0 %345
      %347 = vrot.lane.b32.xlu0 %v340, 1
      %v348 = vpop.permute.xlu0 %347
      %vm349 = vcmask 7168
      %v350 = vsel %vm349, %v342, %v344
      %v351 = vsel %vm349, %v344, %v346
      %v352 = vsel %vm349, %v346, %v348
      %356 = vst [vmem:[#allocation2 + $0x48] sm:$0xff] %v350
      %357 = vst [vmem:[#allocation2 + $0x50] sm:$0xff] %v351
      %358 = vst [vmem:[#allocation2 + $0x58] sm:$0xff] %v352
      %v359 = vld [vmem:[%s193 + $0x4] sm:$0xff]
      %v360 = vld [vmem:[%s193 + $0xc] sm:$0xf]
      %v361 = vld [vmem:[%s193 + $0x18] sm:$0xff]
      %v362 = vld [vmem:[%s193 + $0x20] sm:$0xf]
      %v367 = vunpack.c.l.b16 %v359
      %v368 = vunpack.c.h.b16 %v359
      %v369 = vunpack.c.l.b16 %v360
      %v370 = vunpack.c.l.b16 %v361
      %v371 = vunpack.c.h.b16 %v361
      %v372 = vunpack.c.l.b16 %v362
      %v373 = vpack.c.b16 %v370, %v367
      %v374 = vpack.c.b16 %v371, %v368
      %v375 = vpack.c.b16 %v372, %v369
      %379 = vst [vmem:[#allocation2 + $0x60] sm:$0xff] %v373
      %380 = vst [vmem:[#allocation2 + $0x68] sm:$0xff] %v374
      %381 = vst [vmem:[#allocation2 + $0x70] sm:$0xff] %v375
      %v382 = vld [vmem:[%s193 + $0x4] sm:$0xff]
      %v383 = vld [vmem:[%s193 + $0xc] sm:$0xff]
      %v384 = vld [vmem:[%s193 + $0x18] sm:$0xff]
      %v385 = vld [vmem:[%s193 + $0x20] sm:$0xff]
      %v390 = vunpack.c.l.b16 %v382
      %v391 = vunpack.c.h.b16 %v382
      %v392 = vunpack.c.l.b16 %v383
      %v393 = vunpack.c.h.b16 %v383
      %v394 = vunpack.c.l.b16 %v384
      %v395 = vunpack.c.h.b16 %v384
      %v396 = vunpack.c.l.b16 %v385
      %v397 = vunpack.c.h.b16 %v385
      %v398 = vpack.c.b16 %v394, %v390
      %v399 = vpack.c.b16 %v395, %v391
      %v400 = vpack.c.b16 %v396, %v392
      %v401 = vpack.c.b16 %v397, %v393
      %402 = vrot.lane.b32.xlu0 %v398, 127
      %v403 = vpop.permute.xlu0 %402
      %404 = vrot.lane.b32.xlu0 %v399, 127
      %v405 = vpop.permute.xlu0 %404
      %406 = vrot.lane.b32.xlu0 %v400, 127
      %v407 = vpop.permute.xlu0 %406
      %408 = vrot.lane.b32.xlu0 %v401, 127
      %v409 = vpop.permute.xlu0 %408
      %vm410 = vcmask 1039360
      %v411 = vsel %vm410, %v403, %v405
      %v412 = vsel %vm410, %v405, %v407
      %v413 = vsel %vm410, %v407, %v409
      %417 = vst [vmem:[#allocation2 + $0x78] sm:$0xff] %v411
      %418 = vst [vmem:[#allocation2 + $0x80] sm:$0xff] %v412
      %419 = vst [vmem:[#allocation2 + $0x88] sm:$0xff] %v413
      %v420 = vld [vmem:[%s193 + $0x4] sm:$0xff]
      %v421 = vld [vmem:[%s193 + $0xc] sm:$0xff]
      %v422 = vld [vmem:[%s193 + $0x18] sm:$0xff]
      %v423 = vld [vmem:[%s193 + $0x20] sm:$0xff]
      %v428 = vunpack.c.l.b16 %v420
      %v429 = vunpack.c.h.b16 %v420
      %v430 = vunpack.c.l.b16 %v421
      %v431 = vunpack.c.h.b16 %v421
      %v432 = vunpack.c.l.b16 %v422
      %v433 = vunpack.c.h.b16 %v422
      %v434 = vunpack.c.l.b16 %v423
      %v435 = vunpack.c.h.b16 %v423
      %v436 = vpack.c.b16 %v432, %v428
      %v437 = vpack.c.b16 %v433, %v429
      %v438 = vpack.c.b16 %v434, %v430
      %v439 = vpack.c.b16 %v435, %v431
      %440 = vrot.lane.b32.xlu0 %v436, 111
      %v441 = vpop.permute.xlu0 %440
      %442 = vrot.lane.b32.xlu0 %v437, 111
      %v443 = vpop.permute.xlu0 %442
      %444 = vrot.lane.b32.xlu0 %v438, 111
      %v445 = vpop.permute.xlu0 %444
      %446 = vrot.lane.b32.xlu0 %v439, 111
      %v447 = vpop.permute.xlu0 %446
      %vm448 = vcmask 908288
      %v449 = vsel %vm448, %v441, %v443
      %v450 = vsel %vm448, %v443, %v445
      %v451 = vsel %vm448, %v445, %v447
      %455 = vst [vmem:[#allocation2 + $0x90] sm:$0xff] %v449
      %456 = vst [vmem:[#allocation2 + $0x98] sm:$0xff] %v450
      %457 = vst [vmem:[#allocation2 + $0xa0] sm:$0xff] %v451
      %v458 = vld [vmem:[%s193 + $0x4] sm:$0xff]
      %v459 = vld [vmem:[%s193 + $0xc] sm:$0xff]
      %v460 = vld [vmem:[%s193 + $0x18] sm:$0xff]
      %v461 = vld [vmem:[%s193 + $0x20] sm:$0xff]
      %v466 = vunpack.c.l.b16 %v458
      %v467 = vunpack.c.h.b16 %v458
      %v468 = vunpack.c.l.b16 %v459
      %v469 = vunpack.c.h.b16 %v459
      %v470 = vunpack.c.l.b16 %v460
      %v471 = vunpack.c.h.b16 %v460
      %v472 = vunpack.c.l.b16 %v461
      %v473 = vunpack.c.h.b16 %v461
      %v474 = vpack.c.b16 %v470, %v466
      %v475 = vpack.c.b16 %v471, %v467
      %v476 = vpack.c.b16 %v472, %v468
      %v477 = vpack.c.b16 %v473, %v469
      %478 = vrot.lane.b32.xlu0 %v474, 110
      %v479 = vpop.permute.xlu0 %478
      %480 = vrot.lane.b32.xlu0 %v475, 110
      %v481 = vpop.permute.xlu0 %480
      %482 = vrot.lane.b32.xlu0 %v476, 110
      %v483 = vpop.permute.xlu0 %482
      %484 = vrot.lane.b32.xlu0 %v477, 110
      %v485 = vpop.permute.xlu0 %484
      %vm486 = vcmask 900096
      %v487 = vsel %vm486, %v479, %v481
      %v488 = vsel %vm486, %v481, %v483
      %v489 = vsel %vm486, %v483, %v485
      %493 = vst [vmem:[#allocation2 + $0xa8] sm:$0xff] %v487
      %494 = vst [vmem:[#allocation2 + $0xb0] sm:$0xff] %v488
      %495 = vst [vmem:[#allocation2 + $0xb8] sm:$0xff] %v489
      %v496 = vld [vmem:[%s193 + $0x4] sm:$0xff]
      %v497 = vld [vmem:[%s193 + $0xc] sm:$0xff]
      %v498 = vld [vmem:[%s193 + $0x18] sm:$0xff]
      %v499 = vld [vmem:[%s193 + $0x20] sm:$0xff]
      %v504 = vunpack.c.l.b16 %v496
      %v505 = vunpack.c.h.b16 %v496
      %v506 = vunpack.c.l.b16 %v497
      %v507 = vunpack.c.h.b16 %v497
      %v508 = vunpack.c.l.b16 %v498
      %v509 = vunpack.c.h.b16 %v498
      %v510 = vunpack.c.l.b16 %v499
      %v511 = vunpack.c.h.b16 %v499
      %v512 = vpack.c.b16 %v508, %v504
      %v513 = vpack.c.b16 %v509, %v505
      %v514 = vpack.c.b16 %v510, %v506
      %v515 = vpack.c.b16 %v511, %v507
      %516 = vrot.lane.b32.xlu0 %v512, 109
      %v517 = vpop.permute.xlu0 %516
      %518 = vrot.lane.b32.xlu0 %v513, 109
      %v519 = vpop.permute.xlu0 %518
      %520 = vrot.lane.b32.xlu0 %v514, 109
      %v521 = vpop.permute.xlu0 %520
      %522 = vrot.lane.b32.xlu0 %v515, 109
      %v523 = vpop.permute.xlu0 %522
      %vm524 = vcmask 891904
      %v525 = vsel %vm524, %v517, %v519
      %v526 = vsel %vm524, %v519, %v521
      %v527 = vsel %vm524, %v521, %v523
      %531 = vst [vmem:[#allocation2 + $0xc0] sm:$0xff] %v525
      %532 = vst [vmem:[#allocation2 + $0xc8] sm:$0xff] %v526
      %533 = vst [vmem:[#allocation2 + $0xd0] sm:$0xff] %v527
      %v534 = vld [vmem:[#allocation2] sm:$0xff]
      %v535 = vld [vmem:[#allocation2 + $0x8] sm:$0xff]
      %v536 = vld [vmem:[#allocation2 + $0x10] sm:$0xff]
      %v537 = vld [vmem:[#allocation2 + $0x18] sm:$0xff]
      %v538 = vld [vmem:[#allocation2 + $0x20] sm:$0xff]
      %v539 = vld [vmem:[#allocation2 + $0x28] sm:$0xff]
      %v540 = vld [vmem:[#allocation2 + $0x30] sm:$0xff]
      %v541 = vld [vmem:[#allocation2 + $0x38] sm:$0xff]
      %v542 = vld [vmem:[#allocation2 + $0x40] sm:$0xff]
      %v543 = vld [vmem:[#allocation2 + $0x48] sm:$0xff]
      %v544 = vld [vmem:[#allocation2 + $0x50] sm:$0xff]
      %v545 = vld [vmem:[#allocation2 + $0x58] sm:$0xff]
      %v546 = vld [vmem:[#allocation2 + $0x60] sm:$0xff]
      %v547 = vld [vmem:[#allocation2 + $0x68] sm:$0xff]
      %v548 = vld [vmem:[#allocation2 + $0x70] sm:$0xff]
      %v549 = vld [vmem:[#allocation2 + $0x78] sm:$0xff]
      %v550 = vld [vmem:[#allocation2 + $0x80] sm:$0xff]
      %v551 = vld [vmem:[#allocation2 + $0x88] sm:$0xff]
      %v552 = vld [vmem:[#allocation2 + $0x90] sm:$0xff]
      %v553 = vld [vmem:[#allocation2 + $0x98] sm:$0xff]
      %v554 = vld [vmem:[#allocation2 + $0xa0] sm:$0xff]
      %v555 = vld [vmem:[#allocation2 + $0xa8] sm:$0xff]
      %v556 = vld [vmem:[#allocation2 + $0xb0] sm:$0xff]
      %v557 = vld [vmem:[#allocation2 + $0xb8] sm:$0xff]
      %v558 = vld [vmem:[#allocation2 + $0xc0] sm:$0xff]
      %v559 = vld [vmem:[#allocation2 + $0xc8] sm:$0xff]
      %v560 = vld [vmem:[#allocation2 + $0xd0] sm:$0xff]
      %562 = vset.pattern.permute.xlu0 0
      %563 = vperm.xlu0 %562, %v200
      %v564 = vpop.permute.xlu0 %563
      %v566 = vlaneseq
      %v567 = vshrl.u32 %v566, 7
      %v568 = vsub.s32 0, %v567
      %v569 = vrot.slane %v564, %v568
      %v572 = vunpack.c.l.s4 1966171168
      %v573 = vunpack.c.0.s8 %v572
      %v574 = vlaneseq
      %v575 = vshrl.u32 %v574, 7
      %v576 = vsub.s32 %v573, %v575
      %v577 = vrot.slane %v199, %v576
      %v578 = vcombine.high %v577, %v577
      %v580 = vunpack.c.l.s4 1966171168
      %v581 = vunpack.c.0.s8 %v580
      %v582 = vlaneseq
      %v583 = vshrl.u32 %v582, 7
      %v584 = vsub.s32 %v581, %v583
      %v585 = vrot.slane %v577, %v584
      %v587 = vunpack.c.l.s4 1966171168
      %v588 = vunpack.c.0.s8 %v587
      %v589 = vlaneseq
      %v590 = vshrl.u32 %v589, 7
      %v591 = vsub.s32 %v588, %v590
      %v592 = vrot.slane %v578, %v591
      %vm594 = vcmask 130048
      %v596 = vsel %vm594, %v592, 0
      %598 = vmatprep.subr.bf16.mxu0 %v535
      %599 = vmatpush1.bf16.msra.mxu0 %v534
      %600 = vmatprep.subr.bf16.mxu0 %v538
      %601 = vmatpush1.bf16.msra.mxu0 %v537
      %602 = vmatprep.subr.bf16.mxu0 %v541
      %603 = vmatpush1.bf16.msra.mxu0 %v540
      %604 = vmatprep.subr.bf16.mxu0 %v544
      %605 = vmatpush1.bf16.msra.mxu0 %v543
      %606 = vmatprep.subr.bf16.mxu0 %v547
      %607 = vmatpush1.bf16.msra.mxu0 %v546
      %608 = vmatprep.subr.bf16.mxu0 %v550
      %609 = vmatpush1.bf16.msra.mxu0 %v549
      %610 = vmatprep.subr.bf16.mxu0 %v553
      %611 = vmatpush1.bf16.msra.mxu0 %v552
      %612 = vmatprep.subr.bf16.mxu0 %v556
      %613 = vmatpush1.bf16.msra.mxu0 %v555
      %614 = vmatprep.subr.bf16.mxu0 %v559
      %615 = vmatpush1.bf16.msra.mxu0 %v558
      %616 = vmatprep.subr.bf16.mxu0 0
      %617 = vmatpush1.bf16.msra.mxu0 0
      %618 = vmatprep.subr.bf16.mxu0 0
      %619 = vmatpush1.bf16.msra.mxu0 0
      %620 = vmatprep.subr.bf16.mxu0 0
      %621 = vmatpush1.bf16.msra.mxu0 0
      %622 = vmatprep.subr.bf16.mxu0 0
      %623 = vmatpush1.bf16.msra.mxu0 0
      %624 = vmatprep.subr.bf16.mxu0 0
      %625 = vmatpush1.bf16.msra.mxu0 0
      %626 = vmatprep.subr.bf16.mxu0 0
      %627 = vmatpush1.bf16.msra.mxu0 0
      %628 = vmatprep.subr.bf16.mxu0 0
      %629 = vmatpush1.bf16.msra.mxu0 0
      %630 = vmatprep.mubr.bf16.mxu0 %v596
      %631 = vmatmul.mubr.bf16.gmra.mrb[0].mxu0 %v585
      %v632 = vpop.f32.mrb[0].mxu0
      %v633 = vadd.f32 %v569, %v632
      %v634 = vpop.f32.mrb[0].mxu0
      %v635 = vadd.f32 %v569, %v634
      %v636 = vpop.f32.mrb[0].mxu0
      %v637 = vpop.f32.mrb[0].mxu0
      %638 = vdwg.mxu0
      %639 = vmatprep.subr.bf16.mxu0 0
      %640 = vmatpush1.bf16.msra.mxu0 %v536
      %641 = vmatprep.subr.bf16.mxu0 0
      %642 = vmatpush1.bf16.msra.mxu0 %v539
      %643 = vmatprep.subr.bf16.mxu0 0
      %644 = vmatpush1.bf16.msra.mxu0 %v542
      %645 = vmatprep.subr.bf16.mxu0 0
      %646 = vmatpush1.bf16.msra.mxu0 %v545
      %647 = vmatprep.subr.bf16.mxu0 0
      %648 = vmatpush1.bf16.msra.mxu0 %v548
      %649 = vmatprep.subr.bf16.mxu0 0
      %650 = vmatpush1.bf16.msra.mxu0 %v551
      %651 = vmatprep.subr.bf16.mxu0 0
      %652 = vmatpush1.bf16.msra.mxu0 %v554
      %653 = vmatprep.subr.bf16.mxu0 0
      %654 = vmatpush1.bf16.msra.mxu0 %v557
      %655 = vmatprep.subr.bf16.mxu0 0
      %656 = vmatpush1.bf16.msra.mxu0 %v560
      %657 = vmatprep.subr.bf16.mxu0 0
      %658 = vmatpush1.bf16.msra.mxu0 0
      %659 = vmatprep.subr.bf16.mxu0 0
      %660 = vmatpush1.bf16.msra.mxu0 0
      %661 = vmatprep.subr.bf16.mxu0 0
      %662 = vmatpush1.bf16.msra.mxu0 0
      %663 = vmatprep.subr.bf16.mxu0 0
      %664 = vmatpush1.bf16.msra.mxu0 0
      %665 = vmatprep.subr.bf16.mxu0 0
      %666 = vmatpush1.bf16.msra.mxu0 0
      %667 = vmatprep.subr.bf16.mxu0 0
      %668 = vmatpush1.bf16.msra.mxu0 0
      %669 = vmatprep.subr.bf16.mxu0 0
      %670 = vmatpush1.bf16.msra.mxu0 0
      %671 = vmatprep.mubr.bf16.mxu0 %v596
      %672 = vmatmul.mubr.bf16.gmra.mrb[0].mxu0 %v585
      %v673 = vpop.f32.mrb[0].mxu0
      %v674 = vadd.f32 %v569, %v673
      %v675 = vpop.f32.mrb[0].mxu0
      %v676 = vpop.f32.mrb[0].mxu0
      %v677 = vpop.f32.mrb[0].mxu0
      %678 = vdwg.mxu0
      %v679 = vtanh.pop %v633
      %v680 = vtanh.pop %v635
      %v681 = vtanh.pop %v674
      %v682 = vmul.f32 %v679, 0.5
      %v683 = vmul.f32 %v680, 0.5
      %v684 = vmul.f32 %v681, 0.5
      %v685 = vadd.f32 %v682, 0.5
      %v686 = vadd.f32 %v683, 0.5
      %v687 = vadd.f32 %v684, 0.5
      %v688 = vld [vmem:[%s3] sm:$0x7]
      %v690 = vlaneseq
      %v691 = vshrl.u32 %v690, 7
      %v692 = vsub.s32 0, %v691
      %v693 = vrot.slane %v688, %v692
      %v694 = vlaneseq
      %v695 = vshrl.u32 %v694, 7
      %v696 = vsub.s32 1, %v695
      %v697 = vrot.slane %v688, %v696
      %v698 = vlaneseq
      %v699 = vshrl.u32 %v698, 7
      %v700 = vsub.s32 2, %v699
      %v701 = vrot.slane %v688, %v700
      %v705 = vmul.f32 %v685, %v693
      %v706 = vmul.f32 %v686, %v697
      %v707 = vmul.f32 %v687, %v701
      %v711 = vcombine.low %v705, %v706
      %v713 = vunpack.c.l.s4 1966171168
      %v714 = vunpack.c.0.s8 %v713
      %v715 = vlaneseq
      %v716 = vshrl.u32 %v715, 7
      %v717 = vsub.s32 %v714, %v716
      %v718 = vrot.slane %v711, %v717
      %v720 = vunpack.c.l.s4 1966171168
      %v721 = vunpack.c.0.s8 %v720
      %v722 = vlaneseq
      %v723 = vshrl.u32 %v722, 7
      %v724 = vsub.s32 %v721, %v723
      %v725 = vrot.slane %v707, %v724
      %v726 = vcombine.low %v718, %v725
      %v728 = vunpack.c.l.s4 1966171168
      %v729 = vunpack.c.0.s8 %v728
      %v730 = vlaneseq
      %v731 = vshrl.u32 %v730, 7
      %v732 = vsub.s32 %v729, %v731
      %v733 = vrot.slane %v726, %v732
      %vm735 = vcmp.lt.s32.totalorder %v201, 384
      %vm736 = vmand %vm202, %vm735
      %737 = vst.msk [vmem:[%s197 + $0x1] sm:$0x7] %vm736, %v733
      %p738 = scmp.lt.s32.totalorder %s17, 1
      %s739 = scalar_select %p738, %s17, 1
      %s740 = smul.addr %s739, 5
      %s741 = scalar_lea.vmem %s4, %s740
      // Predicated region
      $region37: #{superfusion_forward.12} parent=35 // pred_check
        %p742 = pneg %p124
      $region38: #{superfusion_forward.12} parent=35 // pred_check_branch
        %744 = sbr.rel (%p742) target = $region40
      $region39: #{superfusion_forward.12} parent=35 // pred_region
        _
      $region40: #{superfusion_forward.12} parent=35 // pred_fallthru
        _
    $region36: #{superfusion_forward.12} parent=5 // pred_fallthru
      _
    %p745 = scmp.le.s32.totalorder 2, %s12
    // Predicated region
    $region41: #{superfusion_forward.12} parent=5 // pred_check
      %p746 = pneg %p745
    $region42: #{superfusion_forward.12} parent=5 // pred_check_branch
      %748 = sbr.rel (%p746) target = $region44
    $region43: #{superfusion_forward.12} parent=5 // pred_region
      %s749 = ssub.s32 %s12, 2
      // Predicated region
      $region45: #{superfusion_forward.12} parent=43 // pred_check
        %p750 = pneg %p130
      $region46: #{superfusion_forward.12} parent=43 // pred_check_branch
        %752 = sbr.rel (%p750) target = $region48
      $region47: #{superfusion_forward.12} parent=43 // pred_region
        %p753 = scmp.lt.s32.totalorder %s18, 1
        %s754 = scalar_select %p753, %s18, 1
        %s755 = smul.addr %s754, 5
        %s756 = scalar_lea.vmem %s4, %s755
      $region48: #{superfusion_forward.12} parent=43 // pred_fallthru
        _
    $region44: #{superfusion_forward.12} parent=5 // pred_fallthru
      _
  $region6: #{superfusion_forward.12} parent=0 // loop_footer
    %s16 = sadd.s32 1, %s12
  $region7: #{superfusion_forward.12} parent=0 // loop_footer_branch
    %11 = sbr.rel target = $region3
  $region8: #{superfusion_forward.12} parent=0 // loop_exit
    _

// kernel: superfusion_forward.10
$region0: #{superfusion_forward.10}
  #allocation0 [shape = 'u32[]', space=smem, size = 0x4, offset = 0x4, fixed_abs, tag = 'smem constant byte address 0x4 - core index']
  #allocation1 [shape = 'u32[144,128]{1,0:T(1,128)}', space=vmem, size = 0x12000, scoped, tag = 'internal scratch']
  %s0 = inlined_call_operand.vmem [shape: bf16[2,4,640], index: 0, kind: input, shape index: {}]
  %s1 = inlined_call_operand.vmem [shape: bf16[9,16,4], index: 1, kind: input, shape index: {}]
  %s2 = inlined_call_operand.vmem [shape: f32[16,1], index: 2, kind: input, shape index: {}]
  %s3 = inlined_call_operand.vmem [shape: f32[1,384], index: 3, kind: input, shape index: {}]
  %s4 = inlined_call_operand.vmem [shape: bf16[2,16,640], index: 4, kind: output, shape index: {}]
  %s5 = sld [smem:[#allocation0]]
  $region49: #{superfusion_forward.10} parent=0
    _
  %s7 = ssub.s32 1, %s5
  %s8 = scalar_select 0, %s7, %s5
  loop: start=0, step=1, limit=4
  $region2: #{superfusion_forward.10} parent=0 // loop_pre_header
    _
  $region3: #{superfusion_forward.10} parent=0 // loop_header
    %s10 = sphi 0, %s14
    %p11 = scmp.ge.s32.totalorder %s10, 4
    %s20 = sphi 0, %s22
    %s23 = sphi 0, %s20
    %s24 = sphi 0, %s23
    %s40 = sphi 0, %s24
    %s44 = sphi 0, %s44
    %s46 = sphi 0, %s44
    %s47 = sphi 0, %s46
    %s61 = sphi 0, %s47
    %s65 = sphi 0, %s65
    %s67 = sphi 0, %s65
    %s68 = sphi 0, %s67
    %s82 = sphi 0, %s68
    %s86 = sphi 0, %s86
    %s88 = sphi 0, %s86
    %s89 = sphi 0, %s88
    %s103 = sphi 0, %s89
    %s109 = sphi 0, %s111
    %s112 = sphi 0, %s109
    %s113 = sphi 0, %s112
    %s129 = sphi 0, %s113
  $region4: #{superfusion_forward.10} parent=0 // loop_header_branch
    %13 = sbr.rel (%p11) target = $region8
  $region5: #{superfusion_forward.10} parent=0 // loop_body
    %s15 = ssub.s32 %s10, 1
    %s16 = ssub.s32 %s10, 2
    %s17 = sadd.s32 %s10, 1
    %s18 = ssub.s32 %s10, %s17
    %p19 = scmp.eq.s32.totalorder %s18, 0
    %s21 = sadd.s32 %s20, 1
    %s22 = scalar_select %p19, %s20, %s21
    %p25 = pneg %p19
    %p26 = scmp.eq.s32.totalorder %s10, 1
    %p27 = por %p25, %p26
    %p28 = scmp.ne.s32.totalorder %s20, %s23
    %p29 = scmp.eq.s32.totalorder %s10, 0
    %p30 = por %p28, %p29
    %p31 = scmp.ne.s32.totalorder %s20, %s23
    %p32 = scmp.eq.s32.totalorder %s15, 1
    %p33 = por %p31, %p32
    %p34 = scmp.ne.s32.totalorder %s23, %s24
    %p35 = scmp.eq.s32.totalorder %s15, 0
    %p36 = por %p34, %p35
    %p37 = scmp.ne.s32.totalorder %s23, %s24
    %p38 = scmp.eq.s32.totalorder %s16, 1
    %p39 = por %p37, %p38
    %p41 = scmp.ne.s32.totalorder %s24, %s40
    %p42 = scmp.eq.s32.totalorder %s16, 0
    %p43 = por %p41, %p42
    %s45 = sadd.s32 %s44, 1
    %p48 = scmp.eq.s32.totalorder %s10, 1
    %p49 = scmp.ne.s32.totalorder %s44, %s46
    %p50 = scmp.eq.s32.totalorder %s10, 0
    %p51 = por %p49, %p50
    %p52 = scmp.ne.s32.totalorder %s44, %s46
    %p53 = scmp.eq.s32.totalorder %s15, 1
    %p54 = por %p52, %p53
    %p55 = scmp.ne.s32.totalorder %s46, %s47
    %p56 = scmp.eq.s32.totalorder %s15, 0
    %p57 = por %p55, %p56
    %p58 = scmp.ne.s32.totalorder %s46, %s47
    %p59 = scmp.eq.s32.totalorder %s16, 1
    %p60 = por %p58, %p59
    %p62 = scmp.ne.s32.totalorder %s47, %s61
    %p63 = scmp.eq.s32.totalorder %s16, 0
    %p64 = por %p62, %p63
    %s66 = sadd.s32 %s65, 1
    %p69 = scmp.eq.s32.totalorder %s10, 1
    %p70 = scmp.ne.s32.totalorder %s65, %s67
    %p71 = scmp.eq.s32.totalorder %s10, 0
    %p72 = por %p70, %p71
    %p73 = scmp.ne.s32.totalorder %s65, %s67
    %p74 = scmp.eq.s32.totalorder %s15, 1
    %p75 = por %p73, %p74
    %p76 = scmp.ne.s32.totalorder %s67, %s68
    %p77 = scmp.eq.s32.totalorder %s15, 0
    %p78 = por %p76, %p77
    %p79 = scmp.ne.s32.totalorder %s67, %s68
    %p80 = scmp.eq.s32.totalorder %s16, 1
    %p81 = por %p79, %p80
    %p83 = scmp.ne.s32.totalorder %s68, %s82
    %p84 = scmp.eq.s32.totalorder %s16, 0
    %p85 = por %p83, %p84
    %s87 = sadd.s32 %s86, 1
    %p90 = scmp.eq.s32.totalorder %s10, 1
    %p91 = scmp.ne.s32.totalorder %s86, %s88
    %p92 = scmp.eq.s32.totalorder %s10, 0
    %p93 = por %p91, %p92
    %p94 = scmp.ne.s32.totalorder %s86, %s88
    %p95 = scmp.eq.s32.totalorder %s15, 1
    %p96 = por %p94, %p95
    %p97 = scmp.ne.s32.totalorder %s88, %s89
    %p98 = scmp.eq.s32.totalorder %s15, 0
    %p99 = por %p97, %p98
    %p100 = scmp.ne.s32.totalorder %s88, %s89
    %p101 = scmp.eq.s32.totalorder %s16, 1
    %p102 = por %p100, %p101
    %p104 = scmp.ne.s32.totalorder %s89, %s103
    %p105 = scmp.eq.s32.totalorder %s16, 0
    %p106 = por %p104, %p105
    %s107 = ssub.s32 %s10, %s17
    %p108 = scmp.eq.s32.totalorder %s107, 0
    %s110 = sadd.s32 %s109, 1
    %s111 = scalar_select %p108, %s109, %s110
    %p114 = pneg %p108
    %p115 = scmp.eq.s32.totalorder %s10, 1
    %p116 = por %p114, %p115
    %p117 = scmp.ne.s32.totalorder %s109, %s112
    %p118 = scmp.eq.s32.totalorder %s10, 0
    %p119 = por %p117, %p118
    %p120 = scmp.ne.s32.totalorder %s109, %s112
    %p121 = scmp.eq.s32.totalorder %s15, 1
    %p122 = por %p120, %p121
    %p123 = scmp.ne.s32.totalorder %s112, %s113
    %p124 = scmp.eq.s32.totalorder %s15, 0
    %p125 = por %p123, %p124
    %p126 = scmp.ne.s32.totalorder %s112, %s113
    %p127 = scmp.eq.s32.totalorder %s16, 1
    %p128 = por %p126, %p127
    %p130 = scmp.ne.s32.totalorder %s113, %s129
    %p131 = scmp.eq.s32.totalorder %s16, 0
    %p132 = por %p130, %p131
    %p133 = scmp.le.s32.totalorder 1, %s10
    %p134 = scmp.lt.s32.totalorder %s10, 3
    %p135 = pnand %p133, %p134
    %p136 = pneg %p135
    // Predicated region
    $region9: #{superfusion_forward.10} parent=5 // pred_check
      _
    $region10: #{superfusion_forward.10} parent=5 // pred_check_branch
      %138 = sbr.rel (%p135) target = $region12
    $region11: #{superfusion_forward.10} parent=5 // pred_region
      %s139 = ssub.s32 %s10, 1
      // Predicated region
      $region13: #{superfusion_forward.10} parent=11 // pred_check
        %p140 = pneg %p57
      $region14: #{superfusion_forward.10} parent=11 // pred_check_branch
        %142 = sbr.rel (%p140) target = $region16
      $region15: #{superfusion_forward.10} parent=11 // pred_region
        _
      $region16: #{superfusion_forward.10} parent=11 // pred_fallthru
        _
      // Predicated region
      $region17: #{superfusion_forward.10} parent=11 // pred_check
        %p143 = pneg %p78
      $region18: #{superfusion_forward.10} parent=11 // pred_check_branch
        %145 = sbr.rel (%p143) target = $region20
      $region19: #{superfusion_forward.10} parent=11 // pred_region
        _
      $region20: #{superfusion_forward.10} parent=11 // pred_fallthru
        _
      // Predicated region
      $region21: #{superfusion_forward.10} parent=11 // pred_check
        %p146 = pneg %p99
      $region22: #{superfusion_forward.10} parent=11 // pred_check_branch
        %148 = sbr.rel (%p146) target = $region24
      $region23: #{superfusion_forward.10} parent=11 // pred_region
        _
      $region24: #{superfusion_forward.10} parent=11 // pred_fallthru
        _
    $region12: #{superfusion_forward.10} parent=5 // pred_fallthru
      _
    %p149 = scmp.lt.s32.totalorder %s10, 2
    // Predicated region
    $region25: #{superfusion_forward.10} parent=5 // pred_check
      %p150 = pneg %p149
    $region26: #{superfusion_forward.10} parent=5 // pred_check_branch
      %152 = sbr.rel (%p150) target = $region28
    $region27: #{superfusion_forward.10} parent=5 // pred_region
      // Predicated region
      $region29: #{superfusion_forward.10} parent=27 // pred_check
        %p153 = pneg %p30
      $region30: #{superfusion_forward.10} parent=27 // pred_check_branch
        %155 = sbr.rel (%p153) target = $region32
      $region31: #{superfusion_forward.10} parent=27 // pred_region
        %p156 = scmp.lt.s32.totalorder %s10, 1
        %s157 = scalar_select %p156, %s10, 1
        %s158 = smul.addr %s157, 5
        %s159 = smul.addr %s158, 2
        %s160 = scalar_lea.vmem %s0, %s159
      $region32: #{superfusion_forward.10} parent=27 // pred_fallthru
        _
    $region28: #{superfusion_forward.10} parent=5 // pred_fallthru
      _
    %p161 = scmp.le.s32.totalorder 1, %s10
    %p162 = scmp.lt.s32.totalorder %s10, 3
    %p163 = pnand %p161, %p162
    %p164 = pneg %p163
    // Predicated region
    $region33: #{superfusion_forward.10} parent=5 // pred_check
      _
    $region34: #{superfusion_forward.10} parent=5 // pred_check_branch
      %166 = sbr.rel (%p163) target = $region36
    $region35: #{superfusion_forward.10} parent=5 // pred_region
      %s167 = ssub.s32 %s10, 1
      %p168 = scmp.lt.s32.totalorder %s15, 1
      %s169 = scalar_select %p168, %s15, 1
      %s170 = smul.addr %s169, 5
      %s171 = smul.addr %s170, 2
      %s172 = scalar_lea.vmem %s0, %s171
      %p173 = pneg %p36
      %p174 = pneg %p33
      %p175 = pneg %p57
      %p176 = pneg %p54
      %p177 = pneg %p78
      %p178 = pneg %p75
      %p179 = pneg %p99
      %p180 = pneg %p96
      %p181 = pneg %p125
      %p182 = pneg %p122
      %p183 = scmp.lt.s32.totalorder %s15, 1
      %s184 = scalar_select %p183, %s15, 1
      %s185 = smul.addr %s184, 10
      %s186 = smul.addr %s185, 4
      %s187 = scalar_lea.vmem %s4, %s186
      %p188 = scmp.lt.s32.totalorder %s15, 1
      %s189 = scalar_select %p188, %s15, 1
      %s190 = smul.addr %s189, 5
      %s191 = smul.addr %s190, 2
      %s192 = scalar_lea.vmem %s0, %s191
      %p193 = scmp.lt.s32.totalorder %s15, 1
      %s194 = scalar_select %p193, %s15, 1
      %s195 = smul.addr %s194, 10
      %s196 = smul.addr %s195, 4
      %s197 = scalar_lea.vmem %s4, %s196
      %v199 = vld [vmem:[%s1] sm:$0xf]
      %v200 = vld [vmem:[%s1 + $0x4] sm:$0xf]
      %v201 = vld [vmem:[%s1 + $0x8] sm:$0xf]
      %v202 = vld [vmem:[%s1 + $0xc] sm:$0xf]
      %v203 = vld [vmem:[%s1 + $0x10] sm:$0xf]
      %v204 = vld [vmem:[%s1 + $0x14] sm:$0xf]
      %v205 = vld [vmem:[%s1 + $0x18] sm:$0xf]
      %v206 = vld [vmem:[%s1 + $0x1c] sm:$0xf]
      %v207 = vld [vmem:[%s1 + $0x20] sm:$0xf]
      %v208 = vld [vmem:[%s1 + $0x24] sm:$0xf]
      %v209 = vld [vmem:[%s1 + $0x28] sm:$0xf]
      %v210 = vld [vmem:[%s1 + $0x2c] sm:$0xf]
      %v211 = vld [vmem:[%s1 + $0x30] sm:$0xf]
      %v212 = vld [vmem:[%s1 + $0x34] sm:$0xf]
      %v213 = vld [vmem:[%s1 + $0x38] sm:$0xf]
      %v214 = vld [vmem:[%s1 + $0x3c] sm:$0xf]
      %v215 = vld [vmem:[%s1 + $0x40] sm:$0xf]
      %v216 = vld [vmem:[%s1 + $0x44] sm:$0xf]
      %v217 = vld [vmem:[%s2] sm:$0xff]
      %v218 = vld [vmem:[%s2 + $0x8] sm:$0xff]
      %219 = vst [vmem:[%s197] sm:$0xf] 0
      %220 = vst [vmem:[%s197 + $0x14] sm:$0xf] 0
      %221 = vst [vmem:[%s197 + $0x10] sm:$0xf] 0
      %222 = vst [vmem:[%s197 + $0x24] sm:$0xf] 0
      %v223 = vld [vmem:[%s192] sm:$0xff]
      %v226 = vunpack.c.l.b16 %v201
      %v227 = vunpack.c.l.b16 %v202
      %v228 = vpack.c.b16 %v227, %v226
      %v230 = vcombine.high %v223, %v223
      %v232 = vunpack.c.l.s4 1983009808
      %v233 = vunpack.c.0.s8 %v232
      %v234 = vlaneseq
      %v235 = vshrl.u32 %v234, 7
      %v236 = vsub.s32 %v233, %v235
      %v237 = vrot.slane %v223, %v236
      %v239 = vunpack.c.l.s4 1983009808
      %v240 = vunpack.c.0.s8 %v239
      %v241 = vlaneseq
      %v242 = vshrl.u32 %v241, 7
      %v243 = vsub.s32 %v240, %v242
      %v244 = vrot.slane %v230, %v243
      %v245 = vcombine.high %v237, %v237
      %v246 = vcombine.high %v244, %v244
      %247 = vrot.lane.b32.xlu0 %v237, 18
      %v248 = vpop.permute.xlu0 %247
      %249 = vrot.lane.b32.xlu0 %v245, 18
      %v250 = vpop.permute.xlu0 %249
      %251 = vrot.lane.b32.xlu0 %v244, 18
      %v252 = vpop.permute.xlu0 %251
      %253 = vrot.lane.b32.xlu0 %v246, 18
      %v254 = vpop.permute.xlu0 %253
      %vm255 = vcmask 146432
      %v256 = vsel %vm255, %v248, %v250
      %v257 = vsel %vm255, %v250, %v252
      %v258 = vsel %vm255, %v252, %v254
      %vm259 = vcmask 31744
      %v261 = vsel %vm259, %v228, 0
      %vm263 = vcmask 1041408
      %v265 = vsel %vm263, %v256, 0
      %v268 = vsel %vm263, %v257, 0
      %v271 = vsel %vm263, %v258, 0
      %273 = vmatprep.subr.bf16.mxu0 %v268
      %274 = vmatpush1.bf16.msra.mxu0 %v265
      %275 = vmatprep.subr.bf16.mxu0 0
      %276 = vmatpush1.bf16.msra.mxu0 0
      %277 = vmatprep.subr.bf16.mxu0 0
      %278 = vmatpush1.bf16.msra.mxu0 0
      %279 = vmatprep.subr.bf16.mxu0 0
      %280 = vmatpush1.bf16.msra.mxu0 0
      %281 = vmatprep.subr.bf16.mxu0 0
      %282 = vmatpush1.bf16.msra.mxu0 0
      %283 = vmatprep.subr.bf16.mxu0 0
      %284 = vmatpush1.bf16.msra.mxu0 0
      %285 = vmatprep.subr.bf16.mxu0 0
      %286 = vmatpush1.bf16.msra.mxu0 0
      %287 = vmatprep.subr.bf16.mxu0 0
      %288 = vmatpush1.bf16.msra.mxu0 0
      %289 = vmatprep.subr.bf16.mxu0 0
      %290 = vmatpush1.bf16.msra.mxu0 0
      %291 = vmatprep.subr.bf16.mxu0 0
      %292 = vmatpush1.bf16.msra.mxu0 0
      %293 = vmatprep.subr.bf16.mxu0 0
      %294 = vmatpush1.bf16.msra.mxu0 0
      %295 = vmatprep.subr.bf16.mxu0 0
      %296 = vmatpush1.bf16.msra.mxu0 0
      %297 = vmatprep.subr.bf16.mxu0 0
      %298 = vmatpush1.bf16.msra.mxu0 0
      %299 = vmatprep.subr.bf16.mxu0 0
      %300 = vmatpush1.bf16.msra.mxu0 0
      %301 = vmatprep.subr.bf16.mxu0 0
      %302 = vmatpush1.bf16.msra.mxu0 0
      %303 = vmatprep.subr.bf16.mxu0 0
      %304 = vmatpush1.bf16.msra.mxu0 0
      %305 = vmatprep.mubr.bf16.mxu0 0
      %306 = vmatmul.mubr.bf16.gmra.mrb[0].mxu0 %v261
      %v307 = vpop.f32.mrb[0].mxu0
      %v308 = vadd.f32 0.0, %v307
      %v309 = vpop.f32.mrb[0].mxu0
      %v310 = vadd.f32 0.0, %v309
      %v311 = vpop.f32.mrb[0].mxu0
      %v312 = vadd.f32 0.0, %v311
      %v313 = vpop.f32.mrb[0].mxu0
      %v314 = vadd.f32 0.0, %v313
      %315 = vdwg.mxu0
      %316 = vmatprep.subr.bf16.mxu0 0
      %317 = vmatpush1.bf16.msra.mxu0 %v271
      %318 = vmatprep.subr.bf16.mxu0 0
      %319 = vmatpush1.bf16.msra.mxu0 0
      %320 = vmatprep.subr.bf16.mxu0 0
      %321 = vmatpush1.bf16.msra.mxu0 0
      %322 = vmatprep.subr.bf16.mxu0 0
      %323 = vmatpush1.bf16.msra.mxu0 0
      %324 = vmatprep.subr.bf16.mxu0 0
      %325 = vmatpush1.bf16.msra.mxu0 0
      %326 = vmatprep.subr.bf16.mxu0 0
      %327 = vmatpush1.bf16.msra.mxu0 0
      %328 = vmatprep.subr.bf16.mxu0 0
      %329 = vmatpush1.bf16.msra.mxu0 0
      %330 = vmatprep.subr.bf16.mxu0 0
      %331 = vmatpush1.bf16.msra.mxu0 0
      %332 = vmatprep.subr.bf16.mxu0 0
      %333 = vmatpush1.bf16.msra.mxu0 0
      %334 = vmatprep.subr.bf16.mxu0 0
      %335 = vmatpush1.bf16.msra.mxu0 0
      %336 = vmatprep.subr.bf16.mxu0 0
      %337 = vmatpush1.bf16.msra.mxu0 0
      %338 = vmatprep.subr.bf16.mxu0 0
      %339 = vmatpush1.bf16.msra.mxu0 0
      %340 = vmatprep.subr.bf16.mxu0 0
      %341 = vmatpush1.bf16.msra.mxu0 0
      %342 = vmatprep.subr.bf16.mxu0 0
      %343 = vmatpush1.bf16.msra.mxu0 0
      %344 = vmatprep.subr.bf16.mxu0 0
      %345 = vmatpush1.bf16.msra.mxu0 0
      %346 = vmatprep.subr.bf16.mxu0 0
      %347 = vmatpush1.bf16.msra.mxu0 0
      %348 = vmatprep.mubr.bf16.mxu0 0
      %349 = vmatmul.mubr.bf16.gmra.mrb[0].mxu0 %v261
      %v350 = vpop.f32.mrb[0].mxu0
      %v351 = vadd.f32 0.0, %v350
      %v352 = vpop.f32.mrb[0].mxu0
      %v353 = vpop.f32.mrb[0].mxu0
      %v354 = vadd.f32 0.0, %v353
      %v355 = vpop.f32.mrb[0].mxu0
      %356 = vdwg.mxu0
      %v359 = vunpack.c.l.b16 %v199
      %v360 = vunpack.c.l.b16 %v200
      %v361 = vpack.c.b16 %v360, %v359
      %362 = vrot.lane.b32.xlu0 %v237, 19
      %v363 = vpop.permute.xlu0 %362
      %364 = vrot.lane.b32.xlu0 %v245, 19
      %v365 = vpop.permute.xlu0 %364
      %366 = vrot.lane.b32.xlu0 %v244, 19
      %v367 = vpop.permute.xlu0 %366
      %368 = vrot.lane.b32.xlu0 %v246, 19
      %v369 = vpop.permute.xlu0 %368
      %vm370 = vcmask 154624
      %v371 = vsel %vm370, %v363, %v365
      %v372 = vsel %vm370, %v365, %v367
      %v373 = vsel %vm370, %v367, %v369
      %v375 = vsel %vm259, %v361, 0
      %v378 = vsel %vm263, %v371, 0
      %v381 = vsel %vm263, %v372, 0
      %v384 = vsel %vm263, %v373, 0
      %386 = vmatprep.subr.bf16.mxu0 %v381
      %387 = vmatpush1.bf16.msra.mxu0 %v378
      %388 = vmatprep.subr.bf16.mxu0 0
      %389 = vmatpush1.bf16.msra.mxu0 0
      %390 = vmatprep.subr.bf16.mxu0 0
      %391 = vmatpush1.bf16.msra.mxu0 0
      %392 = vmatprep.subr.bf16.mxu0 0
      %393 = vmatpush1.bf16.msra.mxu0 0
      %394 = vmatprep.subr.bf16.mxu0 0
      %395 = vmatpush1.bf16.msra.mxu0 0
      %396 = vmatprep.subr.bf16.mxu0 0
      %397 = vmatpush1.bf16.msra.mxu0 0
      %398 = vmatprep.subr.bf16.mxu0 0
      %399 = vmatpush1.bf16.msra.mxu0 0
      %400 = vmatprep.subr.bf16.mxu0 0
      %401 = vmatpush1.bf16.msra.mxu0 0
      %402 = vmatprep.subr.bf16.mxu0 0
      %403 = vmatpush1.bf16.msra.mxu0 0
      %404 = vmatprep.subr.bf16.mxu0 0
      %405 = vmatpush1.bf16.msra.mxu0 0
      %406 = vmatprep.subr.bf16.mxu0 0
      %407 = vmatpush1.bf16.msra.mxu0 0
      %408 = vmatprep.subr.bf16.mxu0 0
      %409 = vmatpush1.bf16.msra.mxu0 0
      %410 = vmatprep.subr.bf16.mxu0 0
      %411 = vmatpush1.bf16.msra.mxu0 0
      %412 = vmatprep.subr.bf16.mxu0 0
      %413 = vmatpush1.bf16.msra.mxu0 0
      %414 = vmatprep.subr.bf16.mxu0 0
      %415 = vmatpush1.bf16.msra.mxu0 0
      %416 = vmatprep.subr.bf16.mxu0 0
      %417 = vmatpush1.bf16.msra.mxu0 0
      %418 = vmatprep.mubr.bf16.mxu0 0
      %419 = vmatmul.mubr.bf16.gmra.mrb[0].mxu0 %v375
      %v420 = vpop.f32.mrb[0].mxu0
      %v421 = vadd.f32 %v308, %v420
      %v422 = vpop.f32.mrb[0].mxu0
      %v423 = vadd.f32 %v310, %v422
      %v424 = vpop.f32.mrb[0].mxu0
      %v425 = vadd.f32 %v312, %v424
      %v426 = vpop.f32.mrb[0].mxu0
      %v427 = vadd.f32 %v314, %v426
      %428 = vdwg.mxu0
      %429 = vmatprep.subr.bf16.mxu0 0
      %430 = vmatpush1.bf16.msra.mxu0 %v384
      %431 = vmatprep.subr.bf16.mxu0 0
      %432 = vmatpush1.bf16.msra.mxu0 0
      %433 = vmatprep.subr.bf16.mxu0 0
      %434 = vmatpush1.bf16.msra.mxu0 0
      %435 = vmatprep.subr.bf16.mxu0 0
      %436 = vmatpush1.bf16.msra.mxu0 0
      %437 = vmatprep.subr.bf16.mxu0 0
      %438 = vmatpush1.bf16.msra.mxu0 0
      %439 = vmatprep.subr.bf16.mxu0 0
      %440 = vmatpush1.bf16.msra.mxu0 0
      %441 = vmatprep.subr.bf16.mxu0 0
      %442 = vmatpush1.bf16.msra.mxu0 0
      %443 = vmatprep.subr.bf16.mxu0 0
      %444 = vmatpush1.bf16.msra.mxu0 0
      %445 = vmatprep.subr.bf16.mxu0 0
      %446 = vmatpush1.bf16.msra.mxu0 0
      %447 = vmatprep.subr.bf16.mxu0 0
      %448 = vmatpush1.bf16.msra.mxu0 0
      %449 = vmatprep.subr.bf16.mxu0 0
      %450 = vmatpush1.bf16.msra.mxu0 0
      %451 = vmatprep.subr.bf16.mxu0 0
      %452 = vmatpush1.bf16.msra.mxu0 0
      %453 = vmatprep.subr.bf16.mxu0 0
      %454 = vmatpush1.bf16.msra.mxu0 0
      %455 = vmatprep.subr.bf16.mxu0 0
      %456 = vmatpush1.bf16.msra.mxu0 0
      %457 = vmatprep.subr.bf16.mxu0 0
      %458 = vmatpush1.bf16.msra.mxu0 0
      %459 = vmatprep.subr.bf16.mxu0 0
      %460 = vmatpush1.bf16.msra.mxu0 0
      %461 = vmatprep.mubr.bf16.mxu0 0
      %462 = vmatmul.mubr.bf16.gmra.mrb[0].mxu0 %v375
      %v463 = vpop.f32.mrb[0].mxu0
      %v464 = vadd.f32 %v351, %v463
      %v465 = vpop.f32.mrb[0].mxu0
      %v466 = vpop.f32.mrb[0].mxu0
      %v467 = vadd.f32 %v354, %v466
      %v468 = vpop.f32.mrb[0].mxu0
      %469 = vdwg.mxu0
      %v470 = vld [vmem:[%s192] sm:$0xff]
      %v473 = vunpack.c.l.b16 %v203
      %v474 = vunpack.c.l.b16 %v204
      %v475 = vpack.c.b16 %v474, %v473
      %v477 = vcombine.high %v470, %v470
      %v479 = vunpack.c.l.s4 1983009808
      %v480 = vunpack.c.0.s8 %v479
      %v481 = vlaneseq
      %v482 = vshrl.u32 %v481, 7
      %v483 = vsub.s32 %v480, %v482
      %v484 = vrot.slane %v470, %v483
      %v486 = vunpack.c.l.s4 1983009808
      %v487 = vunpack.c.0.s8 %v486
      %v488 = vlaneseq
      %v489 = vshrl.u32 %v488, 7
      %v490 = vsub.s32 %v487, %v489
      %v491 = vrot.slane %v477, %v490
      %v492 = vcombine.high %v484, %v484
      %v493 = vcombine.high %v491, %v491
      %494 = vrot.lane.b32.xlu0 %v484, 17
      %v495 = vpop.permute.xlu0 %494
      %496 = vrot.lane.b32.xlu0 %v492, 17
      %v497 = vpop.permute.xlu0 %496
      %498 = vrot.lane.b32.xlu0 %v491, 17
      %v499 = vpop.permute.xlu0 %498
      %500 = vrot.lane.b32.xlu0 %v493, 17
      %v501 = vpop.permute.xlu0 %500
      %vm502 = vcmask 138240
      %v503 = vsel %vm502, %v495, %v497
      %v504 = vsel %vm502, %v497, %v499
      %v505 = vsel %vm502, %v499, %v501
      %v507 = vsel %vm259, %v475, 0
      %v510 = vsel %vm263, %v503, 0
      %v513 = vsel %vm263, %v504, 0
      %v516 = vsel %vm263, %v505, 0
      %518 = vmatprep.subr.bf16.mxu0 %v513
      %519 = vmatpush1.bf16.msra.mxu0 %v510
      %520 = vmatprep.subr.bf16.mxu0 0
      %521 = vmatpush1.bf16.msra.mxu0 0
      %522 = vmatprep.subr.bf16.mxu0 0
      %523 = vmatpush1.bf16.msra.mxu0 0
      %524 = vmatprep.subr.bf16.mxu0 0
      %525 = vmatpush1.bf16.msra.mxu0 0
      %526 = vmatprep.subr.bf16.mxu0 0
      %527 = vmatpush1.bf16.msra.mxu0 0
      %528 = vmatprep.subr.bf16.mxu0 0
      %529 = vmatpush1.bf16.msra.mxu0 0
      %530 = vmatprep.subr.bf16.mxu0 0
      %531 = vmatpush1.bf16.msra.mxu0 0
      %532 = vmatprep.subr.bf16.mxu0 0
      %533 = vmatpush1.bf16.msra.mxu0 0
      %534 = vmatprep.subr.bf16.mxu0 0
      %535 = vmatpush1.bf16.msra.mxu0 0
      %536 = vmatprep.subr.bf16.mxu0 0
      %537 = vmatpush1.bf16.msra.mxu0 0
      %538 = vmatprep.subr.bf16.mxu0 0
      %539 = vmatpush1.bf16.msra.mxu0 0
      %540 = vmatprep.subr.bf16.mxu0 0
      %541 = vmatpush1.bf16.msra.mxu0 0
      %542 = vmatprep.subr.bf16.mxu0 0
      %543 = vmatpush1.bf16.msra.mxu0 0
      %544 = vmatprep.subr.bf16.mxu0 0
      %545 = vmatpush1.bf16.msra.mxu0 0
      %546 = vmatprep.subr.bf16.mxu0 0
      %547 = vmatpush1.bf16.msra.mxu0 0
      %548 = vmatprep.subr.bf16.mxu0 0
      %549 = vmatpush1.bf16.msra.mxu0 0
      %550 = vmatprep.mubr.bf16.mxu0 0
      %551 = vmatmul.mubr.bf16.gmra.mrb[0].mxu0 %v507
      %v552 = vpop.f32.mrb[0].mxu0
      %v553 = vadd.f32 0.0, %v552
      %v554 = vpop.f32.mrb[0].mxu0
      %v555 = vadd.f32 0.0, %v554
      %v556 = vpop.f32.mrb[0].mxu0
      %v557 = vadd.f32 0.0, %v556
      %v558 = vpop.f32.mrb[0].mxu0
      %v559 = vadd.f32 0.0, %v558
      %560 = vdwg.mxu0
      %561 = vmatprep.subr.bf16.mxu0 0
      %562 = vmatpush1.bf16.msra.mxu0 %v516
      %563 = vmatprep.subr.bf16.mxu0 0
      %564 = vmatpush1.bf16.msra.mxu0 0
      %565 = vmatprep.subr.bf16.mxu0 0
      %566 = vmatpush1.bf16.msra.mxu0 0
      %567 = vmatprep.subr.bf16.mxu0 0
      %568 = vmatpush1.bf16.msra.mxu0 0
      %569 = vmatprep.subr.bf16.mxu0 0
      %570 = vmatpush1.bf16.msra.mxu0 0
      %571 = vmatprep.subr.bf16.mxu0 0
      %572 = vmatpush1.bf16.msra.mxu0 0
      %573 = vmatprep.subr.bf16.mxu0 0
      %574 = vmatpush1.bf16.msra.mxu0 0
      %575 = vmatprep.subr.bf16.mxu0 0
      %576 = vmatpush1.bf16.msra.mxu0 0
      %577 = vmatprep.subr.bf16.mxu0 0
      %578 = vmatpush1.bf16.msra.mxu0 0
      %579 = vmatprep.subr.bf16.mxu0 0
      %580 = vmatpush1.bf16.msra.mxu0 0
      %581 = vmatprep.subr.bf16.mxu0 0
      %582 = vmatpush1.bf16.msra.mxu0 0
      %583 = vmatprep.subr.bf16.mxu0 0
      %584 = vmatpush1.bf16.msra.mxu0 0
      %585 = vmatprep.subr.bf16.mxu0 0
      %586 = vmatpush1.bf16.msra.mxu0 0
      %587 = vmatprep.subr.bf16.mxu0 0
      %588 = vmatpush1.bf16.msra.mxu0 0
      %589 = vmatprep.subr.bf16.mxu0 0
      %590 = vmatpush1.bf16.msra.mxu0 0
      %591 = vmatprep.subr.bf16.mxu0 0
      %592 = vmatpush1.bf16.msra.mxu0 0
      %593 = vmatprep.mubr.bf16.mxu0 0
      %594 = vmatmul.mubr.bf16.gmra.mrb[0].mxu0 %v507
      %v595 = vpop.f32.mrb[0].mxu0
      %v596 = vadd.f32 0.0, %v595
      %v597 = vpop.f32.mrb[0].mxu0
      %v598 = vpop.f32.mrb[0].mxu0
      %v599 = vadd.f32 0.0, %v598
      %v600 = vpop.f32.mrb[0].mxu0
      %601 = vdwg.mxu0
      %v602 = vadd.f32 %v421, %v553
      %v603 = vadd.f32 %v423, %v555
      %v604 = vadd.f32 %v464, %v596
      %v605 = vadd.f32 %v425, %v557
      %v606 = vadd.f32 %v427, %v559
      %v607 = vadd.f32 %v467, %v599
      %v608 = vld [vmem:[%s192] sm:$0xff]
      %v611 = vunpack.c.l.b16 %v205
      %v612 = vunpack.c.l.b16 %v206
      %v613 = vpack.c.b16 %v612, %v611
      %v615 = vcombine.high %v608, %v608
      %v617 = vunpack.c.l.s4 1983009808
      %v618 = vunpack.c.0.s8 %v617
      %v619 = vlaneseq
      %v620 = vshrl.u32 %v619, 7
      %v621 = vsub.s32 %v618, %v620
      %v622 = vrot.slane %v608, %v621
      %v624 = vunpack.c.l.s4 1983009808
      %v625 = vunpack.c.0.s8 %v624
      %v626 = vlaneseq
      %v627 = vshrl.u32 %v626, 7
      %v628 = vsub.s32 %v625, %v627
      %v629 = vrot.slane %v615, %v628
      %v630 = vcombine.high %v622, %v622
      %v631 = vcombine.high %v629, %v629
      %632 = vrot.lane.b32.xlu0 %v622, 1
      %v633 = vpop.permute.xlu0 %632
      %634 = vrot.lane.b32.xlu0 %v630, 1
      %v635 = vpop.permute.xlu0 %634
      %636 = vrot.lane.b32.xlu0 %v629, 1
      %v637 = vpop.permute.xlu0 %636
      %638 = vrot.lane.b32.xlu0 %v631, 1
      %v639 = vpop.permute.xlu0 %638
      %vm640 = vcmask 7168
      %v641 = vsel %vm640, %v633, %v635
      %v642 = vsel %vm640, %v635, %v637
      %v643 = vsel %vm640, %v637, %v639
      %v645 = vsel %vm259, %v613, 0
      %v648 = vsel %vm263, %v641, 0
      %v651 = vsel %vm263, %v642, 0
      %v654 = vsel %vm263, %v643, 0
      %656 = vmatprep.subr.bf16.mxu0 %v651
      %657 = vmatpush1.bf16.msra.mxu0 %v648
      %658 = vmatprep.subr.bf16.mxu0 0
      %659 = vmatpush1.bf16.msra.mxu0 0
      %660 = vmatprep.subr.bf16.mxu0 0
      %661 = vmatpush1.bf16.msra.mxu0 0
      %662 = vmatprep.subr.bf16.mxu0 0
      %663 = vmatpush1.bf16.msra.mxu0 0
      %664 = vmatprep.subr.bf16.mxu0 0
      %665 = vmatpush1.bf16.msra.mxu0 0
      %666 = vmatprep.subr.bf16.mxu0 0
      %667 = vmatpush1.bf16.msra.mxu0 0
      %668 = vmatprep.subr.bf16.mxu0 0
      %669 = vmatpush1.bf16.msra.mxu0 0
      %670 = vmatprep.subr.bf16.mxu0 0
      %671 = vmatpush1.bf16.msra.mxu0 0
      %672 = vmatprep.subr.bf16.mxu0 0
      %673 = vmatpush1.bf16.msra.mxu0 0
      %674 = vmatprep.subr.bf16.mxu0 0
      %675 = vmatpush1.bf16.msra.mxu0 0
      %676 = vmatprep.subr.bf16.mxu0 0
      %677 = vmatpush1.bf16.msra.mxu0 0
      %678 = vmatprep.subr.bf16.mxu0 0
      %679 = vmatpush1.bf16.msra.mxu0 0
      %680 = vmatprep.subr.bf16.mxu0 0
      %681 = vmatpush1.bf16.msra.mxu0 0
      %682 = vmatprep.subr.bf16.mxu0 0
      %683 = vmatpush1.bf16.msra.mxu0 0
      %684 = vmatprep.subr.bf16.mxu0 0
      %685 = vmatpush1.bf16.msra.mxu0 0
      %686 = vmatprep.subr.bf16.mxu0 0
      %687 = vmatpush1.bf16.msra.mxu0 0
      %688 = vmatprep.mubr.bf16.mxu0 0
      %689 = vmatmul.mubr.bf16.gmra.mrb[0].mxu0 %v645
      %v690 = vpop.f32.mrb[0].mxu0
      %v691 = vadd.f32 0.0, %v690
      %v692 = vpop.f32.mrb[0].mxu0
      %v693 = vadd.f32 0.0, %v692
      %v694 = vpop.f32.mrb[0].mxu0
      %v695 = vadd.f32 0.0, %v694
      %v696 = vpop.f32.mrb[0].mxu0
      %v697 = vadd.f32 0.0, %v696
      %698 = vdwg.mxu0
      %699 = vmatprep.subr.bf16.mxu0 0
      %700 = vmatpush1.bf16.msra.mxu0 %v654
      %701 = vmatprep.subr.bf16.mxu0 0
      %702 = vmatpush1.bf16.msra.mxu0 0
      %703 = vmatprep.subr.bf16.mxu0 0
      %704 = vmatpush1.bf16.msra.mxu0 0
      %705 = vmatprep.subr.bf16.mxu0 0
      %706 = vmatpush1.bf16.msra.mxu0 0
      %707 = vmatprep.subr.bf16.mxu0 0
      %708 = vmatpush1.bf16.msra.mxu0 0
      %709 = vmatprep.subr.bf16.mxu0 0
      %710 = vmatpush1.bf16.msra.mxu0 0
      %711 = vmatprep.subr.bf16.mxu0 0
      %712 = vmatpush1.bf16.msra.mxu0 0
      %713 = vmatprep.subr.bf16.mxu0 0
      %714 = vmatpush1.bf16.msra.mxu0 0
      %715 = vmatprep.subr.bf16.mxu0 0
      %716 = vmatpush1.bf16.msra.mxu0 0
      %717 = vmatprep.subr.bf16.mxu0 0
      %718 = vmatpush1.bf16.msra.mxu0 0
      %719 = vmatprep.subr.bf16.mxu0 0
      %720 = vmatpush1.bf16.msra.mxu0 0
      %721 = vmatprep.subr.bf16.mxu0 0
      %722 = vmatpush1.bf16.msra.mxu0 0
      %723 = vmatprep.subr.bf16.mxu0 0
      %724 = vmatpush1.bf16.msra.mxu0 0
      %725 = vmatprep.subr.bf16.mxu0 0
      %726 = vmatpush1.bf16.msra.mxu0 0
      %727 = vmatprep.subr.bf16.mxu0 0
      %728 = vmatpush1.bf16.msra.mxu0 0
      %729 = vmatprep.subr.bf16.mxu0 0
      %730 = vmatpush1.bf16.msra.mxu0 0
      %731 = vmatprep.mubr.bf16.mxu0 0
      %732 = vmatmul.mubr.bf16.gmra.mrb[0].mxu0 %v645
      %v733 = vpop.f32.mrb[0].mxu0
      %v734 = vadd.f32 0.0, %v733
      %v735 = vpop.f32.mrb[0].mxu0
      %v736 = vpop.f32.mrb[0].mxu0
      %v737 = vadd.f32 0.0, %v736
      %v738 = vpop.f32.mrb[0].mxu0
      %739 = vdwg.mxu0
      %v740 = vadd.f32 %v602, %v691
      %v741 = vadd.f32 %v603, %v693
      %v742 = vadd.f32 %v604, %v734
      %v743 = vadd.f32 %v605, %v695
      %v744 = vadd.f32 %v606, %v697
      %v745 = vadd.f32 %v607, %v737
      %v746 = vld [vmem:[%s192 + $0x2] sm:$0x3f]
      %v749 = vunpack.c.l.b16 %v207
      %v750 = vunpack.c.l.b16 %v208
      %v751 = vpack.c.b16 %v750, %v749
      %v753 = vcombine.high %v746, %v746
      %v755 = vunpack.c.l.s4 1983009808
      %v756 = vunpack.c.0.s8 %v755
      %v757 = vlaneseq
      %v758 = vshrl.u32 %v757, 7
      %v759 = vsub.s32 %v756, %v758
      %v760 = vrot.slane %v746, %v759
      %v762 = vunpack.c.l.s4 1983009808
      %v763 = vunpack.c.0.s8 %v762
      %v764 = vlaneseq
      %v765 = vshrl.u32 %v764, 7
      %v766 = vsub.s32 %v763, %v765
      %v767 = vrot.slane %v753, %v766
      %v768 = vcombine.high %v760, %v760
      %v770 = vsel %vm259, %v751, 0
      %v773 = vsel %vm263, %v760, 0
      %v776 = vsel %vm263, %v768, 0
      %v779 = vsel %vm263, %v767, 0
      %781 = vmatprep.subr.bf16.mxu0 %v776
      %782 = vmatpush1.bf16.msra.mxu0 %v773
      %783 = vmatprep.subr.bf16.mxu0 0
      %784 = vmatpush1.bf16.msra.mxu0 0
      %785 = vmatprep.subr.bf16.mxu0 0
      %786 = vmatpush1.bf16.msra.mxu0 0
      %787 = vmatprep.subr.bf16.mxu0 0
      %788 = vmatpush1.bf16.msra.mxu0 0
      %789 = vmatprep.subr.bf16.mxu0 0
      %790 = vmatpush1.bf16.msra.mxu0 0
      %791 = vmatprep.subr.bf16.mxu0 0
      %792 = vmatpush1.bf16.msra.mxu0 0
      %793 = vmatprep.subr.bf16.mxu0 0
      %794 = vmatpush1.bf16.msra.mxu0 0
      %795 = vmatprep.subr.bf16.mxu0 0
      %796 = vmatpush1.bf16.msra.mxu0 0
      %797 = vmatprep.subr.bf16.mxu0 0
      %798 = vmatpush1.bf16.msra.mxu0 0
      %799 = vmatprep.subr.bf16.mxu0 0
      %800 = vmatpush1.bf16.msra.mxu0 0
      %801 = vmatprep.subr.bf16.mxu0 0
      %802 = vmatpush1.bf16.msra.mxu0 0
      %803 = vmatprep.subr.bf16.mxu0 0
      %804 = vmatpush1.bf16.msra.mxu0 0
      %805 = vmatprep.subr.bf16.mxu0 0
      %806 = vmatpush1.bf16.msra.mxu0 0
      %807 = vmatprep.subr.bf16.mxu0 0
      %808 = vmatpush1.bf16.msra.mxu0 0
      %809 = vmatprep.subr.bf16.mxu0 0
      %810 = vmatpush1.bf16.msra.mxu0 0
      %811 = vmatprep.subr.bf16.mxu0 0
      %812 = vmatpush1.bf16.msra.mxu0 0
      %813 = vmatprep.mubr.bf16.mxu0 0
      %814 = vmatmul.mubr.bf16.gmra.mrb[0].mxu0 %v770
      %v815 = vpop.f32.mrb[0].mxu0
      %v816 = vadd.f32 0.0, %v815
      %v817 = vpop.f32.mrb[0].mxu0
      %v818 = vadd.f32 0.0, %v817
      %v819 = vpop.f32.mrb[0].mxu0
      %v820 = vadd.f32 0.0, %v819
      %v821 = vpop.f32.mrb[0].mxu0
      %v822 = vadd.f32 0.0, %v821
      %823 = vdwg.mxu0
      %824 = vmatprep.subr.bf16.mxu0 0
      %825 = vmatpush1.bf16.msra.mxu0 %v779
      %826 = vmatprep.subr.bf16.mxu0 0
      %827 = vmatpush1.bf16.msra.mxu0 0
      %828 = vmatprep.subr.bf16.mxu0 0
      %829 = vmatpush1.bf16.msra.mxu0 0
      %830 = vmatprep.subr.bf16.mxu0 0
      %831 = vmatpush1.bf16.msra.mxu0 0
      %832 = vmatprep.subr.bf16.mxu0 0
      %833 = vmatpush1.bf16.msra.mxu0 0
      %834 = vmatprep.subr.bf16.mxu0 0
      %835 = vmatpush1.bf16.msra.mxu0 0
      %836 = vmatprep.subr.bf16.mxu0 0
      %837 = vmatpush1.bf16.msra.mxu0 0
      %838 = vmatprep.subr.bf16.mxu0 0
      %839 = vmatpush1.bf16.msra.mxu0 0
      %840 = vmatprep.subr.bf16.mxu0 0
      %841 = vmatpush1.bf16.msra.mxu0 0
      %842 = vmatprep.subr.bf16.mxu0 0
      %843 = vmatpush1.bf16.msra.mxu0 0
      %844 = vmatprep.subr.bf16.mxu0 0
      %845 = vmatpush1.bf16.msra.mxu0 0
      %846 = vmatprep.subr.bf16.mxu0 0
      %847 = vmatpush1.bf16.msra.mxu0 0
      %848 = vmatprep.subr.bf16.mxu0 0
      %849 = vmatpush1.bf16.msra.mxu0 0
      %850 = vmatprep.subr.bf16.mxu0 0
      %851 = vmatpush1.bf16.msra.mxu0 0
      %852 = vmatprep.subr.bf16.mxu0 0
      %853 = vmatpush1.bf16.msra.mxu0 0
      %854 = vmatprep.subr.bf16.mxu0 0
      %855 = vmatpush1.bf16.msra.mxu0 0
      %856 = vmatprep.mubr.bf16.mxu0 0
      %857 = vmatmul.mubr.bf16.gmra.mrb[0].mxu0 %v770
      %v858 = vpop.f32.mrb[0].mxu0
      %v859 = vadd.f32 0.0, %v858
      %v860 = vpop.f32.mrb[0].mxu0
      %v861 = vpop.f32.mrb[0].mxu0
      %v862 = vadd.f32 0.0, %v861
      %v863 = vpop.f32.mrb[0].mxu0
      %864 = vdwg.mxu0
      %v865 = vadd.f32 %v740, %v816
      %v866 = vadd.f32 %v741, %v818
      %v867 = vadd.f32 %v742, %v859
      %v868 = vadd.f32 %v743, %v820
      %v869 = vadd.f32 %v744, %v822
      %v870 = vadd.f32 %v745, %v862
      %v871 = vld [vmem:[%s192 + $0x2] sm:$0xff]
      %v874 = vunpack.c.l.b16 %v209
      %v875 = vunpack.c.l.b16 %v210
      %v876 = vpack.c.b16 %v875, %v874
      %v878 = vcombine.high %v871, %v871
      %v880 = vunpack.c.l.s4 1983009808
      %v881 = vunpack.c.0.s8 %v880
      %v882 = vlaneseq
      %v883 = vshrl.u32 %v882, 7
      %v884 = vsub.s32 %v881, %v883
      %v885 = vrot.slane %v871, %v884
      %v887 = vunpack.c.l.s4 1983009808
      %v888 = vunpack.c.0.s8 %v887
      %v889 = vlaneseq
      %v890 = vshrl.u32 %v889, 7
      %v891 = vsub.s32 %v888, %v890
      %v892 = vrot.slane %v878, %v891
      %v893 = vcombine.high %v885, %v885
      %v894 = vcombine.high %v892, %v892
      %895 = vrot.lane.b32.xlu0 %v885, 127
      %v896 = vpop.permute.xlu0 %895
      %897 = vrot.lane.b32.xlu0 %v893, 127
      %v898 = vpop.permute.xlu0 %897
      %899 = vrot.lane.b32.xlu0 %v892, 127
      %v900 = vpop.permute.xlu0 %899
      %901 = vrot.lane.b32.xlu0 %v894, 127
      %v902 = vpop.permute.xlu0 %901
      %vm903 = vcmask 1039360
      %v904 = vsel %vm903, %v896, %v898
      %v905 = vsel %vm903, %v898, %v900
      %v906 = vsel %vm903, %v900, %v902
      %v908 = vsel %vm259, %v876, 0
      %v911 = vsel %vm263, %v904, 0
      %v914 = vsel %vm263, %v905, 0
      %v917 = vsel %vm263, %v906, 0
      %919 = vmatprep.subr.bf16.mxu0 %v914
      %920 = vmatpush1.bf16.msra.mxu0 %v911
      %921 = vmatprep.subr.bf16.mxu0 0
      %922 = vmatpush1.bf16.msra.mxu0 0
      %923 = vmatprep.subr.bf16.mxu0 0
      %924 = vmatpush1.bf16.msra.mxu0 0
      %925 = vmatprep.subr.bf16.mxu0 0
      %926 = vmatpush1.bf16.msra.mxu0 0
      %927 = vmatprep.subr.bf16.mxu0 0
      %928 = vmatpush1.bf16.msra.mxu0 0
      %929 = vmatprep.subr.bf16.mxu0 0
      %930 = vmatpush1.bf16.msra.mxu0 0
      %931 = vmatprep.subr.bf16.mxu0 0
      %932 = vmatpush1.bf16.msra.mxu0 0
      %933 = vmatprep.subr.bf16.mxu0 0
      %934 = vmatpush1.bf16.msra.mxu0 0
      %935 = vmatprep.subr.bf16.mxu0 0
      %936 = vmatpush1.bf16.msra.mxu0 0
      %937 = vmatprep.subr.bf16.mxu0 0
      %938 = vmatpush1.bf16.msra.mxu0 0
      %939 = vmatprep.subr.bf16.mxu0 0
      %940 = vmatpush1.bf16.msra.mxu0 0
      %941 = vmatprep.subr.bf16.mxu0 0
      %942 = vmatpush1.bf16.msra.mxu0 0
      %943 = vmatprep.subr.bf16.mxu0 0
      %944 = vmatpush1.bf16.msra.mxu0 0
      %945 = vmatprep.subr.bf16.mxu0 0
      %946 = vmatpush1.bf16.msra.mxu0 0
      %947 = vmatprep.subr.bf16.mxu0 0
      %948 = vmatpush1.bf16.msra.mxu0 0
      %949 = vmatprep.subr.bf16.mxu0 0
      %950 = vmatpush1.bf16.msra.mxu0 0
      %951 = vmatprep.mubr.bf16.mxu0 0
      %952 = vmatmul.mubr.bf16.gmra.mrb[0].mxu0 %v908
      %v953 = vpop.f32.mrb[0].mxu0
      %v954 = vadd.f32 0.0, %v953
      %v955 = vpop.f32.mrb[0].mxu0
      %v956 = vadd.f32 0.0, %v955
      %v957 = vpop.f32.mrb[0].mxu0
      %v958 = vadd.f32 0.0, %v957
      %v959 = vpop.f32.mrb[0].mxu0
      %v960 = vadd.f32 0.0, %v959
      %961 = vdwg.mxu0
      %962 = vmatprep.subr.bf16.mxu0 0
      %963 = vmatpush1.bf16.msra.mxu0 %v917
      %964 = vmatprep.subr.bf16.mxu0 0
      %965 = vmatpush1.bf16.msra.mxu0 0
      %966 = vmatprep.subr.bf16.mxu0 0
      %967 = vmatpush1.bf16.msra.mxu0 0
      %968 = vmatprep.subr.bf16.mxu0 0
      %969 = vmatpush1.bf16.msra.mxu0 0
      %970 = vmatprep.subr.bf16.mxu0 0
      %971 = vmatpush1.bf16.msra.mxu0 0
      %972 = vmatprep.subr.bf16.mxu0 0
      %973 = vmatpush1.bf16.msra.mxu0 0
      %974 = vmatprep.subr.bf16.mxu0 0
      %975 = vmatpush1.bf16.msra.mxu0 0
      %976 = vmatprep.subr.bf16.mxu0 0
      %977 = vmatpush1.bf16.msra.mxu0 0
      %978 = vmatprep.subr.bf16.mxu0 0
      %979 = vmatpush1.bf16.msra.mxu0 0
      %980 = vmatprep.subr.bf16.mxu0 0
      %981 = vmatpush1.bf16.msra.mxu0 0
      %982 = vmatprep.subr.bf16.mxu0 0
      %983 = vmatpush1.bf16.msra.mxu0 0
      %984 = vmatprep.subr.bf16.mxu0 0
      %985 = vmatpush1.bf16.msra.mxu0 0
      %986 = vmatprep.subr.bf16.mxu0 0
      %987 = vmatpush1.bf16.msra.mxu0 0
      %988 = vmatprep.subr.bf16.mxu0 0
      %989 = vmatpush1.bf16.msra.mxu0 0
      %990 = vmatprep.subr.bf16.mxu0 0
      %991 = vmatpush1.bf16.msra.mxu0 0
      %992 = vmatprep.subr.bf16.mxu0 0
      %993 = vmatpush1.bf16.msra.mxu0 0
      %994 = vmatprep.mubr.bf16.mxu0 0
      %995 = vmatmul.mubr.bf16.gmra.mrb[0].mxu0 %v908
      %v996 = vpop.f32.mrb[0].mxu0
      %v997 = vadd.f32 0.0, %v996
      %v998 = vpop.f32.mrb[0].mxu0
      %v999 = vpop.f32.mrb[0].mxu0
      %v1000 = vadd.f32 0.0, %v999
      %v1001 = vpop.f32.mrb[0].mxu0
      %1002 = vdwg.mxu0
      %v1003 = vadd.f32 %v865, %v954
      %v1004 = vadd.f32 %v866, %v956
      %v1005 = vadd.f32 %v867, %v997
      %v1006 = vadd.f32 %v868, %v958
      %v1007 = vadd.f32 %v869, %v960
      %v1008 = vadd.f32 %v870, %v1000
      %v1009 = vld [vmem:[%s192 + $0x2] sm:$0xff]
      %v1012 = vunpack.c.l.b16 %v211
      %v1013 = vunpack.c.l.b16 %v212
      %v1014 = vpack.c.b16 %v1013, %v1012
      %v1016 = vcombine.high %v1009, %v1009
      %v1018 = vunpack.c.l.s4 1983009808
      %v1019 = vunpack.c.0.s8 %v1018
      %v1020 = vlaneseq
      %v1021 = vshrl.u32 %v1020, 7
      %v1022 = vsub.s32 %v1019, %v1021
      %v1023 = vrot.slane %v1009, %v1022
      %v1025 = vunpack.c.l.s4 1983009808
      %v1026 = vunpack.c.0.s8 %v1025
      %v1027 = vlaneseq
      %v1028 = vshrl.u32 %v1027, 7
      %v1029 = vsub.s32 %v1026, %v1028
      %v1030 = vrot.slane %v1016, %v1029
      %v1031 = vcombine.high %v1023, %v1023
      %v1032 = vcombine.high %v1030, %v1030
      %1033 = vrot.lane.b32.xlu0 %v1023, 111
      %v1034 = vpop.permute.xlu0 %1033
      %1035 = vrot.lane.b32.xlu0 %v1031, 111
      %v1036 = vpop.permute.xlu0 %1035
      %1037 = vrot.lane.b32.xlu0 %v1030, 111
      %v1038 = vpop.permute.xlu0 %1037
      %1039 = vrot.lane.b32.xlu0 %v1032, 111
      %v1040 = vpop.permute.xlu0 %1039
      %vm1041 = vcmask 908288
      %v1042 = vsel %vm1041, %v1034, %v1036
      %v1043 = vsel %vm1041, %v1036, %v1038
      %v1044 = vsel %vm1041, %v1038, %v1040
      %v1046 = vsel %vm259, %v1014, 0
      %v1049 = vsel %vm263, %v1042, 0
      %v1052 = vsel %vm263, %v1043, 0
      %v1055 = vsel %vm263, %v1044, 0
      %1057 = vmatprep.subr.bf16.mxu0 %v1052
      %1058 = vmatpush1.bf16.msra.mxu0 %v1049
      %1059 = vmatprep.subr.bf16.mxu0 0
      %1060 = vmatpush1.bf16.msra.mxu0 0
      %1061 = vmatprep.subr.bf16.mxu0 0
      %1062 = vmatpush1.bf16.msra.mxu0 0
      %1063 = vmatprep.subr.bf16.mxu0 0
      %1064 = vmatpush1.bf16.msra.mxu0 0
      %1065 = vmatprep.subr.bf16.mxu0 0
      %1066 = vmatpush1.bf16.msra.mxu0 0
      %1067 = vmatprep.subr.bf16.mxu0 0
      %1068 = vmatpush1.bf16.msra.mxu0 0
      %1069 = vmatprep.subr.bf16.mxu0 0
      %1070 = vmatpush1.bf16.msra.mxu0 0
      %1071 = vmatprep.subr.bf16.mxu0 0
      %1072 = vmatpush1.bf16.msra.mxu0 0
      %1073 = vmatprep.subr.bf16.mxu0 0
      %1074 = vmatpush1.bf16.msra.mxu0 0
      %1075 = vmatprep.subr.bf16.mxu0 0
      %1076 = vmatpush1.bf16.msra.mxu0 0
      %1077 = vmatprep.subr.bf16.mxu0 0
      %1078 = vmatpush1.bf16.msra.mxu0 0
      %1079 = vmatprep.subr.bf16.mxu0 0
      %1080 = vmatpush1.bf16.msra.mxu0 0
      %1081 = vmatprep.subr.bf16.mxu0 0
      %1082 = vmatpush1.bf16.msra.mxu0 0
      %1083 = vmatprep.subr.bf16.mxu0 0
      %1084 = vmatpush1.bf16.msra.mxu0 0
      %1085 = vmatprep.subr.bf16.mxu0 0
      %1086 = vmatpush1.bf16.msra.mxu0 0
      %1087 = vmatprep.subr.bf16.mxu0 0
      %1088 = vmatpush1.bf16.msra.mxu0 0
      %1089 = vmatprep.mubr.bf16.mxu0 0
      %1090 = vmatmul.mubr.bf16.gmra.mrb[0].mxu0 %v1046
      %v1091 = vpop.f32.mrb[0].mxu0
      %v1092 = vadd.f32 0.0, %v1091
      %v1093 = vpop.f32.mrb[0].mxu0
      %v1094 = vadd.f32 0.0, %v1093
      %v1095 = vpop.f32.mrb[0].mxu0
      %v1096 = vadd.f32 0.0, %v1095
      %v1097 = vpop.f32.mrb[0].mxu0
      %v1098 = vadd.f32 0.0, %v1097
      %1099 = vdwg.mxu0
      %1100 = vmatprep.subr.bf16.mxu0 0
      %1101 = vmatpush1.bf16.msra.mxu0 %v1055
      %1102 = vmatprep.subr.bf16.mxu0 0
      %1103 = vmatpush1.bf16.msra.mxu0 0
      %1104 = vmatprep.subr.bf16.mxu0 0
      %1105 = vmatpush1.bf16.msra.mxu0 0
      %1106 = vmatprep.subr.bf16.mxu0 0
      %1107 = vmatpush1.bf16.msra.mxu0 0
      %1108 = vmatprep.subr.bf16.mxu0 0
      %1109 = vmatpush1.bf16.msra.mxu0 0
      %1110 = vmatprep.subr.bf16.mxu0 0
      %1111 = vmatpush1.bf16.msra.mxu0 0
      %1112 = vmatprep.subr.bf16.mxu0 0
      %1113 = vmatpush1.bf16.msra.mxu0 0
      %1114 = vmatprep.subr.bf16.mxu0 0
      %1115 = vmatpush1.bf16.msra.mxu0 0
      %1116 = vmatprep.subr.bf16.mxu0 0
      %1117 = vmatpush1.bf16.msra.mxu0 0
      %1118 = vmatprep.subr.bf16.mxu0 0
      %1119 = vmatpush1.bf16.msra.mxu0 0
      %1120 = vmatprep.subr.bf16.mxu0 0
      %1121 = vmatpush1.bf16.msra.mxu0 0
      %1122 = vmatprep.subr.bf16.mxu0 0
      %1123 = vmatpush1.bf16.msra.mxu0 0
      %1124 = vmatprep.subr.bf16.mxu0 0
      %1125 = vmatpush1.bf16.msra.mxu0 0
      %1126 = vmatprep.subr.bf16.mxu0 0
      %1127 = vmatpush1.bf16.msra.mxu0 0
      %1128 = vmatprep.subr.bf16.mxu0 0
      %1129 = vmatpush1.bf16.msra.mxu0 0
      %1130 = vmatprep.subr.bf16.mxu0 0
      %1131 = vmatpush1.bf16.msra.mxu0 0
      %1132 = vmatprep.mubr.bf16.mxu0 0
      %1133 = vmatmul.mubr.bf16.gmra.mrb[0].mxu0 %v1046
      %v1134 = vpop.f32.mrb[0].mxu0
      %v1135 = vadd.f32 0.0, %v1134
      %v1136 = vpop.f32.mrb[0].mxu0
      %v1137 = vpop.f32.mrb[0].mxu0
      %v1138 = vadd.f32 0.0, %v1137
      %v1139 = vpop.f32.mrb[0].mxu0
      %1140 = vdwg.mxu0
      %v1141 = vadd.f32 %v1003, %v1092
      %v1142 = vadd.f32 %v1004, %v1094
      %v1143 = vadd.f32 %v1005, %v1135
      %v1144 = vadd.f32 %v1006, %v1096
      %v1145 = vadd.f32 %v1007, %v1098
      %v1146 = vadd.f32 %v1008, %v1138
      %v1147 = vld [vmem:[%s192 + $0x2] sm:$0xff]
      %v1150 = vunpack.c.l.b16 %v213
      %v1151 = vunpack.c.l.b16 %v214
      %v1152 = vpack.c.b16 %v1151, %v1150
      %v1154 = vcombine.high %v1147, %v1147
      %v1156 = vunpack.c.l.s4 1983009808
      %v1157 = vunpack.c.0.s8 %v1156
      %v1158 = vlaneseq
      %v1159 = vshrl.u32 %v1158, 7
      %v1160 = vsub.s32 %v1157, %v1159
      %v1161 = vrot.slane %v1147, %v1160
      %v1163 = vunpack.c.l.s4 1983009808
      %v1164 = vunpack.c.0.s8 %v1163
      %v1165 = vlaneseq
      %v1166 = vshrl.u32 %v1165, 7
      %v1167 = vsub.s32 %v1164, %v1166
      %v1168 = vrot.slane %v1154, %v1167
      %v1169 = vcombine.high %v1161, %v1161
      %v1170 = vcombine.high %v1168, %v1168
      %1171 = vrot.lane.b32.xlu0 %v1161, 110
      %v1172 = vpop.permute.xlu0 %1171
      %1173 = vrot.lane.b32.xlu0 %v1169, 110
      %v1174 = vpop.permute.xlu0 %1173
      %1175 = vrot.lane.b32.xlu0 %v1168, 110
      %v1176 = vpop.permute.xlu0 %1175
      %1177 = vrot.lane.b32.xlu0 %v1170, 110
      %v1178 = vpop.permute.xlu0 %1177
      %vm1179 = vcmask 900096
      %v1180 = vsel %vm1179, %v1172, %v1174
      %v1181 = vsel %vm1179, %v1174, %v1176
      %v1182 = vsel %vm1179, %v1176, %v1178
      %v1184 = vsel %vm259, %v1152, 0
      %v1187 = vsel %vm263, %v1180, 0
      %v1190 = vsel %vm263, %v1181, 0
      %v1193 = vsel %vm263, %v1182, 0
      %1195 = vmatprep.subr.bf16.mxu0 %v1190
      %1196 = vmatpush1.bf16.msra.mxu0 %v1187
      %1197 = vmatprep.subr.bf16.mxu0 0
      %1198 = vmatpush1.bf16.msra.mxu0 0
      %1199 = vmatprep.subr.bf16.mxu0 0
      %1200 = vmatpush1.bf16.msra.mxu0 0
      %1201 = vmatprep.subr.bf16.mxu0 0
      %1202 = vmatpush1.bf16.msra.mxu0 0
      %1203 = vmatprep.subr.bf16.mxu0 0
      %1204 = vmatpush1.bf16.msra.mxu0 0
      %1205 = vmatprep.subr.bf16.mxu0 0
      %1206 = vmatpush1.bf16.msra.mxu0 0
      %1207 = vmatprep.subr.bf16.mxu0 0
      %1208 = vmatpush1.bf16.msra.mxu0 0
      %1209 = vmatprep.subr.bf16.mxu0 0
      %1210 = vmatpush1.bf16.msra.mxu0 0
      %1211 = vmatprep.subr.bf16.mxu0 0
      %1212 = vmatpush1.bf16.msra.mxu0 0
      %1213 = vmatprep.subr.bf16.mxu0 0
      %1214 = vmatpush1.bf16.msra.mxu0 0
      %1215 = vmatprep.subr.bf16.mxu0 0
      %1216 = vmatpush1.bf16.msra.mxu0 0
      %1217 = vmatprep.subr.bf16.mxu0 0
      %1218 = vmatpush1.bf16.msra.mxu0 0
      %1219 = vmatprep.subr.bf16.mxu0 0
      %1220 = vmatpush1.bf16.msra.mxu0 0
      %1221 = vmatprep.subr.bf16.mxu0 0
      %1222 = vmatpush1.bf16.msra.mxu0 0
      %1223 = vmatprep.subr.bf16.mxu0 0
      %1224 = vmatpush1.bf16.msra.mxu0 0
      %1225 = vmatprep.subr.bf16.mxu0 0
      %1226 = vmatpush1.bf16.msra.mxu0 0
      %1227 = vmatprep.mubr.bf16.mxu0 0
      %1228 = vmatmul.mubr.bf16.gmra.mrb[0].mxu0 %v1184
      %v1229 = vpop.f32.mrb[0].mxu0
      %v1230 = vadd.f32 0.0, %v1229
      %v1231 = vpop.f32.mrb[0].mxu0
      %v1232 = vadd.f32 0.0, %v1231
      %v1233 = vpop.f32.mrb[0].mxu0
      %v1234 = vadd.f32 0.0, %v1233
      %v1235 = vpop.f32.mrb[0].mxu0
      %v1236 = vadd.f32 0.0, %v1235
      %1237 = vdwg.mxu0
      %1238 = vmatprep.subr.bf16.mxu0 0
      %1239 = vmatpush1.bf16.msra.mxu0 %v1193
      %1240 = vmatprep.subr.bf16.mxu0 0
      %1241 = vmatpush1.bf16.msra.mxu0 0
      %1242 = vmatprep.subr.bf16.mxu0 0
      %1243 = vmatpush1.bf16.msra.mxu0 0
      %1244 = vmatprep.subr.bf16.mxu0 0
      %1245 = vmatpush1.bf16.msra.mxu0 0
      %1246 = vmatprep.subr.bf16.mxu0 0
      %1247 = vmatpush1.bf16.msra.mxu0 0
      %1248 = vmatprep.subr.bf16.mxu0 0
      %1249 = vmatpush1.bf16.msra.mxu0 0
      %1250 = vmatprep.subr.bf16.mxu0 0
      %1251 = vmatpush1.bf16.msra.mxu0 0
      %1252 = vmatprep.subr.bf16.mxu0 0
      %1253 = vmatpush1.bf16.msra.mxu0 0
      %1254 = vmatprep.subr.bf16.mxu0 0
      %1255 = vmatpush1.bf16.msra.mxu0 0
      %1256 = vmatprep.subr.bf16.mxu0 0
      %1257 = vmatpush1.bf16.msra.mxu0 0
      %1258 = vmatprep.subr.bf16.mxu0 0
      %1259 = vmatpush1.bf16.msra.mxu0 0
      %1260 = vmatprep.subr.bf16.mxu0 0
      %1261 = vmatpush1.bf16.msra.mxu0 0
      %1262 = vmatprep.subr.bf16.mxu0 0
      %1263 = vmatpush1.bf16.msra.mxu0 0
      %1264 = vmatprep.subr.bf16.mxu0 0
      %1265 = vmatpush1.bf16.msra.mxu0 0
      %1266 = vmatprep.subr.bf16.mxu0 0
      %1267 = vmatpush1.bf16.msra.mxu0 0
      %1268 = vmatprep.subr.bf16.mxu0 0
      %1269 = vmatpush1.bf16.msra.mxu0 0
      %1270 = vmatprep.mubr.bf16.mxu0 0
      %1271 = vmatmul.mubr.bf16.gmra.mrb[0].mxu0 %v1184
      %v1272 = vpop.f32.mrb[0].mxu0
      %v1273 = vadd.f32 0.0, %v1272
      %v1274 = vpop.f32.mrb[0].mxu0
      %v1275 = vpop.f32.mrb[0].mxu0
      %v1276 = vadd.f32 0.0, %v1275
      %v1277 = vpop.f32.mrb[0].mxu0
      %1278 = vdwg.mxu0
      %v1279 = vadd.f32 %v1141, %v1230
      %v1280 = vadd.f32 %v1142, %v1232
      %v1281 = vadd.f32 %v1143, %v1273
      %v1282 = vadd.f32 %v1144, %v1234
      %v1283 = vadd.f32 %v1145, %v1236
      %v1284 = vadd.f32 %v1146, %v1276
      %v1285 = vld [vmem:[%s192 + $0x2] sm:$0xff]
      %v1288 = vunpack.c.l.b16 %v215
      %v1289 = vunpack.c.l.b16 %v216
      %v1290 = vpack.c.b16 %v1289, %v1288
      %v1292 = vcombine.high %v1285, %v1285
      %v1294 = vunpack.c.l.s4 1983009808
      %v1295 = vunpack.c.0.s8 %v1294
      %v1296 = vlaneseq
      %v1297 = vshrl.u32 %v1296, 7
      %v1298 = vsub.s32 %v1295, %v1297
      %v1299 = vrot.slane %v1285, %v1298
      %v1301 = vunpack.c.l.s4 1983009808
      %v1302 = vunpack.c.0.s8 %v1301
      %v1303 = vlaneseq
      %v1304 = vshrl.u32 %v1303, 7
      %v1305 = vsub.s32 %v1302, %v1304
      %v1306 = vrot.slane %v1292, %v1305
      %v1307 = vcombine.high %v1299, %v1299
      %v1308 = vcombine.high %v1306, %v1306
      %1309 = vrot.lane.b32.xlu0 %v1299, 109
      %v1310 = vpop.permute.xlu0 %1309
      %1311 = vrot.lane.b32.xlu0 %v1307, 109
      %v1312 = vpop.permute.xlu0 %1311
      %1313 = vrot.lane.b32.xlu0 %v1306, 109
      %v1314 = vpop.permute.xlu0 %1313
      %1315 = vrot.lane.b32.xlu0 %v1308, 109
      %v1316 = vpop.permute.xlu0 %1315
      %vm1317 = vcmask 891904
      %v1318 = vsel %vm1317, %v1310, %v1312
      %v1319 = vsel %vm1317, %v1312, %v1314
      %v1320 = vsel %vm1317, %v1314, %v1316
      %v1322 = vsel %vm259, %v1290, 0
      %v1325 = vsel %vm263, %v1318, 0
      %v1328 = vsel %vm263, %v1319, 0
      %v1331 = vsel %vm263, %v1320, 0
      %1333 = vmatprep.subr.bf16.mxu0 %v1328
      %1334 = vmatpush1.bf16.msra.mxu0 %v1325
      %1335 = vmatprep.subr.bf16.mxu0 0
      %1336 = vmatpush1.bf16.msra.mxu0 0
      %1337 = vmatprep.subr.bf16.mxu0 0
      %1338 = vmatpush1.bf16.msra.mxu0 0
      %1339 = vmatprep.subr.bf16.mxu0 0
      %1340 = vmatpush1.bf16.msra.mxu0 0
      %1341 = vmatprep.subr.bf16.mxu0 0
      %1342 = vmatpush1.bf16.msra.mxu0 0
      %1343 = vmatprep.subr.bf16.mxu0 0
      %1344 = vmatpush1.bf16.msra.mxu0 0
      %1345 = vmatprep.subr.bf16.mxu0 0
      %1346 = vmatpush1.bf16.msra.mxu0 0
      %1347 = vmatprep.subr.bf16.mxu0 0
      %1348 = vmatpush1.bf16.msra.mxu0 0
      %1349 = vmatprep.subr.bf16.mxu0 0
      %1350 = vmatpush1.bf16.msra.mxu0 0
      %1351 = vmatprep.subr.bf16.mxu0 0
      %1352 = vmatpush1.bf16.msra.mxu0 0
      %1353 = vmatprep.subr.bf16.mxu0 0
      %1354 = vmatpush1.bf16.msra.mxu0 0
      %1355 = vmatprep.subr.bf16.mxu0 0
      %1356 = vmatpush1.bf16.msra.mxu0 0
      %1357 = vmatprep.subr.bf16.mxu0 0
      %1358 = vmatpush1.bf16.msra.mxu0 0
      %1359 = vmatprep.subr.bf16.mxu0 0
      %1360 = vmatpush1.bf16.msra.mxu0 0
      %1361 = vmatprep.subr.bf16.mxu0 0
      %1362 = vmatpush1.bf16.msra.mxu0 0
      %1363 = vmatprep.subr.bf16.mxu0 0
      %1364 = vmatpush1.bf16.msra.mxu0 0
      %1365 = vmatprep.mubr.bf16.mxu0 0
      %1366 = vmatmul.mubr.bf16.gmra.mrb[0].mxu0 %v1322
      %v1367 = vpop.f32.mrb[0].mxu0
      %v1368 = vadd.f32 0.0, %v1367
      %v1369 = vpop.f32.mrb[0].mxu0
      %v1370 = vadd.f32 0.0, %v1369
      %v1371 = vpop.f32.mrb[0].mxu0
      %v1372 = vadd.f32 0.0, %v1371
      %v1373 = vpop.f32.mrb[0].mxu0
      %v1374 = vadd.f32 0.0, %v1373
      %1375 = vdwg.mxu0
      %1376 = vmatprep.subr.bf16.mxu0 0
      %1377 = vmatpush1.bf16.msra.mxu0 %v1331
      %1378 = vmatprep.subr.bf16.mxu0 0
      %1379 = vmatpush1.bf16.msra.mxu0 0
      %1380 = vmatprep.subr.bf16.mxu0 0
      %1381 = vmatpush1.bf16.msra.mxu0 0
      %1382 = vmatprep.subr.bf16.mxu0 0
      %1383 = vmatpush1.bf16.msra.mxu0 0
      %1384 = vmatprep.subr.bf16.mxu0 0
      %1385 = vmatpush1.bf16.msra.mxu0 0
      %1386 = vmatprep.subr.bf16.mxu0 0
      %1387 = vmatpush1.bf16.msra.mxu0 0
      %1388 = vmatprep.subr.bf16.mxu0 0
      %1389 = vmatpush1.bf16.msra.mxu0 0
      %1390 = vmatprep.subr.bf16.mxu0 0
      %1391 = vmatpush1.bf16.msra.mxu0 0
      %1392 = vmatprep.subr.bf16.mxu0 0
      %1393 = vmatpush1.bf16.msra.mxu0 0
      %1394 = vmatprep.subr.bf16.mxu0 0
      %1395 = vmatpush1.bf16.msra.mxu0 0
      %1396 = vmatprep.subr.bf16.mxu0 0
      %1397 = vmatpush1.bf16.msra.mxu0 0
      %1398 = vmatprep.subr.bf16.mxu0 0
      %1399 = vmatpush1.bf16.msra.mxu0 0
      %1400 = vmatprep.subr.bf16.mxu0 0
      %1401 = vmatpush1.bf16.msra.mxu0 0
      %1402 = vmatprep.subr.bf16.mxu0 0
      %1403 = vmatpush1.bf16.msra.mxu0 0
      %1404 = vmatprep.subr.bf16.mxu0 0
      %1405 = vmatpush1.bf16.msra.mxu0 0
      %1406 = vmatprep.subr.bf16.mxu0 0
      %1407 = vmatpush1.bf16.msra.mxu0 0
      %1408 = vmatprep.mubr.bf16.mxu0 0
      %1409 = vmatmul.mubr.bf16.gmra.mrb[0].mxu0 %v1322
      %v1410 = vpop.f32.mrb[0].mxu0
      %v1411 = vadd.f32 0.0, %v1410
      %v1412 = vpop.f32.mrb[0].mxu0
      %v1413 = vpop.f32.mrb[0].mxu0
      %v1414 = vadd.f32 0.0, %v1413
      %v1415 = vpop.f32.mrb[0].mxu0
      %1416 = vdwg.mxu0
      %v1417 = vadd.f32 %v1279, %v1368
      %v1418 = vadd.f32 %v1280, %v1370
      %v1419 = vadd.f32 %v1281, %v1411
      %v1420 = vadd.f32 %v1282, %v1372
      %v1421 = vadd.f32 %v1283, %v1374
      %v1422 = vadd.f32 %v1284, %v1414
      %1424 = vset.pattern.permute.xlu0 0
      %1425 = vperm.xlu0 %1424, %v217
      %v1426 = vpop.permute.xlu0 %1425
      %1429 = vset.pattern.permute.xlu0 0
      %1430 = vperm.xlu0 %1429, %v218
      %v1431 = vpop.permute.xlu0 %1430
      %v1433 = vadd.f32 %v1417, %v1426
      %v1434 = vadd.f32 %v1418, %v1426
      %v1435 = vadd.f32 %v1419, %v1426
      %v1436 = vadd.f32 %v1420, %v1431
      %v1437 = vadd.f32 %v1421, %v1431
      %v1438 = vadd.f32 %v1422, %v1431
      %vm1439 = vcmp.ge.f32.partialorder %v1433, 0.0
      %vm1440 = vcmp.ge.f32.partialorder %v1434, 0.0
      %vm1441 = vcmp.ge.f32.partialorder %v1435, 0.0
      %vm1442 = vcmp.ge.f32.partialorder %v1436, 0.0
      %vm1443 = vcmp.ge.f32.partialorder %v1437, 0.0
      %vm1444 = vcmp.ge.f32.partialorder %v1438, 0.0
      %v1445 = vmul.f32 %v1433, 0.2
      %v1446 = vmul.f32 %v1434, 0.2
      %v1447 = vmul.f32 %v1435, 0.2
      %v1448 = vmul.f32 %v1436, 0.2
      %v1449 = vmul.f32 %v1437, 0.2
      %v1450 = vmul.f32 %v1438, 0.2
      %v1451 = vsel %vm1439, %v1433, %v1445
      %v1452 = vsel %vm1440, %v1434, %v1446
      %v1453 = vsel %vm1441, %v1435, %v1447
      %v1454 = vsel %vm1442, %v1436, %v1448
      %v1455 = vsel %vm1443, %v1437, %v1449
      %v1456 = vsel %vm1444, %v1438, %v1450
      %v1457 = vld [vmem:[%s3] sm:$0x7]
      %v1459 = vlaneseq
      %v1460 = vshrl.u32 %v1459, 7
      %v1461 = vsub.s32 0, %v1460
      %v1462 = vrot.slane %v1457, %v1461
      %v1463 = vlaneseq
      %v1464 = vshrl.u32 %v1463, 7
      %v1465 = vsub.s32 1, %v1464
      %v1466 = vrot.slane %v1457, %v1465
      %v1467 = vlaneseq
      %v1468 = vshrl.u32 %v1467, 7
      %v1469 = vsub.s32 2, %v1468
      %v1470 = vrot.slane %v1457, %v1469
      %v1474 = vmul.f32 %v1451, %v1462
      %v1475 = vmul.f32 %v1452, %v1466
      %v1476 = vmul.f32 %v1453, %v1470
      %v1477 = vmul.f32 %v1454, %v1462
      %v1478 = vmul.f32 %v1455, %v1466
      %v1479 = vmul.f32 %v1456, %v1470
      %v1480 = vpack.c.bf16 %v1477, %v1474
      %v1481 = vpack.c.bf16 %v1478, %v1475
      %v1482 = vpack.c.bf16 %v1479, %v1476
      %v1486 = vunpack.c.l.b16 %v1480
      %v1487 = vunpack.c.l.b16 %v1481
      %v1488 = vunpack.c.l.b16 %v1482
      %v1489 = vunpack.c.h.b16 %v1480
      %v1490 = vunpack.c.h.b16 %v1481
      %v1491 = vunpack.c.h.b16 %v1482
      %v1492 = vpack.c.b16 %v1487, %v1486
      %v1493 = vpack.c.b16 %v1488, %v1488
      %v1494 = vpack.c.b16 %v1490, %v1489
      %v1495 = vpack.c.b16 %v1491, %v1491
      %1500 = vst [vmem:[%s197 + $0x4] sm:$0xff] %v1492
      %1501 = vst [vmem:[%s197 + $0xc] sm:$0xf] %v1493
      %1502 = vst [vmem:[%s197 + $0x18] sm:$0xff] %v1494
      %1503 = vst [vmem:[%s197 + $0x20] sm:$0xf] %v1495
      %p1504 = scmp.lt.s32.totalorder %s15, 1
      %s1505 = scalar_select %p1504, %s15, 1
      %s1506 = smul.addr %s1505, 10
      %s1507 = smul.addr %s1506, 4
      %s1508 = scalar_lea.vmem %s4, %s1507
      // Predicated region
      $region37: #{superfusion_forward.10} parent=35 // pred_check
        %p1509 = pneg %p122
      $region38: #{superfusion_forward.10} parent=35 // pred_check_branch
        %1511 = sbr.rel (%p1509) target = $region40
      $region39: #{superfusion_forward.10} parent=35 // pred_region
        _
      $region40: #{superfusion_forward.10} parent=35 // pred_fallthru
        _
    $region36: #{superfusion_forward.10} parent=5 // pred_fallthru
      _
    %p1512 = scmp.le.s32.totalorder 2, %s10
    // Predicated region
    $region41: #{superfusion_forward.10} parent=5 // pred_check
      %p1513 = pneg %p1512
    $region42: #{superfusion_forward.10} parent=5 // pred_check_branch
      %1515 = sbr.rel (%p1513) target = $region44
    $region43: #{superfusion_forward.10} parent=5 // pred_region
      %s1516 = ssub.s32 %s10, 2
      // Predicated region
      $region45: #{superfusion_forward.10} parent=43 // pred_check
        %p1517 = pneg %p128
      $region46: #{superfusion_forward.10} parent=43 // pred_check_branch
        %1519 = sbr.rel (%p1517) target = $region48
      $region47: #{superfusion_forward.10} parent=43 // pred_region
        %p1520 = scmp.lt.s32.totalorder %s16, 1
        %s1521 = scalar_select %p1520, %s16, 1
        %s1522 = smul.addr %s1521, 10
        %s1523 = smul.addr %s1522, 4
        %s1524 = scalar_lea.vmem %s4, %s1523
      $region48: #{superfusion_forward.10} parent=43 // pred_fallthru
        _
    $region44: #{superfusion_forward.10} parent=5 // pred_fallthru
      _
  $region6: #{superfusion_forward.10} parent=0 // loop_footer
    %s14 = sadd.s32 1, %s10
  $region7: #{superfusion_forward.10} parent=0 // loop_footer_branch
    %9 = sbr.rel target = $region3
  $region8: #{superfusion_forward.10} parent=0 // loop_exit
    _

// kernel: superfusion_forward.13
$region0: #{superfusion_forward.13}
  #allocation0 [shape = 'u32[]', space=smem, size = 0x4, offset = 0x4, fixed_abs, tag = 'smem constant byte address 0x4 - core index']
  #allocation1 [shape = 'u32[144,128]{1,0:T(1,128)}', space=vmem, size = 0x12000, scoped, tag = 'internal scratch']
  %s0 = inlined_call_operand.vmem [shape: f32[2,1,8,128], index: 0, kind: input, shape index: {}]
  %s1 = inlined_call_operand.vmem [shape: f32[2,3,8,128], index: 1, kind: input, shape index: {}]
  %s2 = inlined_call_operand.vmem [shape: f32[2,3,8,128], index: 2, kind: output, shape index: {}]
  %s3 = sld [smem:[#allocation0]]
  $region41: #{superfusion_forward.13} parent=0
    _
  %s5 = ssub.s32 1, %s3
  %s6 = scalar_select 0, %s5, %s3
  loop: start=0, step=1, limit=4
  $region2: #{superfusion_forward.13} parent=0 // loop_pre_header
    _
  $region3: #{superfusion_forward.13} parent=0 // loop_header
    %s8 = sphi 0, %s12
    %p9 = scmp.ge.s32.totalorder %s8, 4
    %s18 = sphi 0, %s20
    %s21 = sphi 0, %s18
    %s22 = sphi 0, %s21
    %s38 = sphi 0, %s22
    %s44 = sphi 0, %s46
    %s47 = sphi 0, %s44
    %s48 = sphi 0, %s47
    %s64 = sphi 0, %s48
    %s70 = sphi 0, %s72
    %s73 = sphi 0, %s70
    %s74 = sphi 0, %s73
    %s90 = sphi 0, %s74
  $region4: #{superfusion_forward.13} parent=0 // loop_header_branch
    %11 = sbr.rel (%p9) target = $region8
  $region5: #{superfusion_forward.13} parent=0 // loop_body
    %s13 = ssub.s32 %s8, 1
    %s14 = ssub.s32 %s8, 2
    %s15 = sadd.s32 %s8, 1
    %s16 = ssub.s32 %s8, %s15
    %p17 = scmp.eq.s32.totalorder %s16, 0
    %s19 = sadd.s32 %s18, 1
    %s20 = scalar_select %p17, %s18, %s19
    %p23 = pneg %p17
    %p24 = scmp.eq.s32.totalorder %s8, 1
    %p25 = por %p23, %p24
    %p26 = scmp.ne.s32.totalorder %s18, %s21
    %p27 = scmp.eq.s32.totalorder %s8, 0
    %p28 = por %p26, %p27
    %p29 = scmp.ne.s32.totalorder %s18, %s21
    %p30 = scmp.eq.s32.totalorder %s13, 1
    %p31 = por %p29, %p30
    %p32 = scmp.ne.s32.totalorder %s21, %s22
    %p33 = scmp.eq.s32.totalorder %s13, 0
    %p34 = por %p32, %p33
    %p35 = scmp.ne.s32.totalorder %s21, %s22
    %p36 = scmp.eq.s32.totalorder %s14, 1
    %p37 = por %p35, %p36
    %p39 = scmp.ne.s32.totalorder %s22, %s38
    %p40 = scmp.eq.s32.totalorder %s14, 0
    %p41 = por %p39, %p40
    %s42 = ssub.s32 %s8, %s15
    %p43 = scmp.eq.s32.totalorder %s42, 0
    %s45 = sadd.s32 %s44, 1
    %s46 = scalar_select %p43, %s44, %s45
    %p49 = pneg %p43
    %p50 = scmp.eq.s32.totalorder %s8, 1
    %p51 = por %p49, %p50
    %p52 = scmp.ne.s32.totalorder %s44, %s47
    %p53 = scmp.eq.s32.totalorder %s8, 0
    %p54 = por %p52, %p53
    %p55 = scmp.ne.s32.totalorder %s44, %s47
    %p56 = scmp.eq.s32.totalorder %s13, 1
    %p57 = por %p55, %p56
    %p58 = scmp.ne.s32.totalorder %s47, %s48
    %p59 = scmp.eq.s32.totalorder %s13, 0
    %p60 = por %p58, %p59
    %p61 = scmp.ne.s32.totalorder %s47, %s48
    %p62 = scmp.eq.s32.totalorder %s14, 1
    %p63 = por %p61, %p62
    %p65 = scmp.ne.s32.totalorder %s48, %s64
    %p66 = scmp.eq.s32.totalorder %s14, 0
    %p67 = por %p65, %p66
    %s68 = ssub.s32 %s8, %s15
    %p69 = scmp.eq.s32.totalorder %s68, 0
    %s71 = sadd.s32 %s70, 1
    %s72 = scalar_select %p69, %s70, %s71
    %p75 = pneg %p69
    %p76 = scmp.eq.s32.totalorder %s8, 1
    %p77 = por %p75, %p76
    %p78 = scmp.ne.s32.totalorder %s70, %s73
    %p79 = scmp.eq.s32.totalorder %s8, 0
    %p80 = por %p78, %p79
    %p81 = scmp.ne.s32.totalorder %s70, %s73
    %p82 = scmp.eq.s32.totalorder %s13, 1
    %p83 = por %p81, %p82
    %p84 = scmp.ne.s32.totalorder %s73, %s74
    %p85 = scmp.eq.s32.totalorder %s13, 0
    %p86 = por %p84, %p85
    %p87 = scmp.ne.s32.totalorder %s73, %s74
    %p88 = scmp.eq.s32.totalorder %s14, 1
    %p89 = por %p87, %p88
    %p91 = scmp.ne.s32.totalorder %s74, %s90
    %p92 = scmp.eq.s32.totalorder %s14, 0
    %p93 = por %p91, %p92
    %p94 = scmp.le.s32.totalorder 1, %s8
    %p95 = scmp.lt.s32.totalorder %s8, 3
    %p96 = pnand %p94, %p95
    %p97 = pneg %p96
    // Predicated region
    $region9: #{superfusion_forward.13} parent=5 // pred_check
      _
    $region10: #{superfusion_forward.13} parent=5 // pred_check_branch
      %99 = sbr.rel (%p96) target = $region12
    $region11: #{superfusion_forward.13} parent=5 // pred_region
      %s100 = ssub.s32 %s8, 1
    $region12: #{superfusion_forward.13} parent=5 // pred_fallthru
      _
    %p101 = scmp.lt.s32.totalorder %s8, 2
    // Predicated region
    $region13: #{superfusion_forward.13} parent=5 // pred_check
      %p102 = pneg %p101
    $region14: #{superfusion_forward.13} parent=5 // pred_check_branch
      %104 = sbr.rel (%p102) target = $region16
    $region15: #{superfusion_forward.13} parent=5 // pred_region
      // Predicated region
      $region17: #{superfusion_forward.13} parent=15 // pred_check
        %p105 = pneg %p28
      $region18: #{superfusion_forward.13} parent=15 // pred_check_branch
        %107 = sbr.rel (%p105) target = $region20
      $region19: #{superfusion_forward.13} parent=15 // pred_region
        %p108 = scmp.lt.s32.totalorder %s8, 1
        %s109 = scalar_select %p108, %s8, 1
        %s110 = smul.addr %s109, 8
        %s111 = scalar_lea.vmem %s0, %s110
      $region20: #{superfusion_forward.13} parent=15 // pred_fallthru
        _
      // Predicated region
      $region21: #{superfusion_forward.13} parent=15 // pred_check
        %p112 = pneg %p54
      $region22: #{superfusion_forward.13} parent=15 // pred_check_branch
        %114 = sbr.rel (%p112) target = $region24
      $region23: #{superfusion_forward.13} parent=15 // pred_region
        %p115 = scmp.lt.s32.totalorder %s8, 1
        %s116 = scalar_select %p115, %s8, 1
        %s117 = smul.addr %s116, 3
        %s118 = smul.addr %s117, 8
        %s119 = scalar_lea.vmem %s1, %s118
      $region24: #{superfusion_forward.13} parent=15 // pred_fallthru
        _
    $region16: #{superfusion_forward.13} parent=5 // pred_fallthru
      _
    %p120 = scmp.le.s32.totalorder 1, %s8
    %p121 = scmp.lt.s32.totalorder %s8, 3
    %p122 = pnand %p120, %p121
    %p123 = pneg %p122
    // Predicated region
    $region25: #{superfusion_forward.13} parent=5 // pred_check
      _
    $region26: #{superfusion_forward.13} parent=5 // pred_check_branch
      %125 = sbr.rel (%p122) target = $region28
    $region27: #{superfusion_forward.13} parent=5 // pred_region
      %s126 = ssub.s32 %s8, 1
      %p127 = scmp.lt.s32.totalorder %s13, 1
      %s128 = scalar_select %p127, %s13, 1
      %s129 = smul.addr %s128, 8
      %s130 = scalar_lea.vmem %s0, %s129
      %p131 = pneg %p34
      %p132 = pneg %p31
      %p133 = scmp.lt.s32.totalorder %s13, 1
      %s134 = scalar_select %p133, %s13, 1
      %s135 = smul.addr %s134, 3
      %s136 = smul.addr %s135, 8
      %s137 = scalar_lea.vmem %s1, %s136
      %p138 = pneg %p60
      %p139 = pneg %p57
      %p140 = pneg %p86
      %p141 = pneg %p83
      %p142 = scmp.lt.s32.totalorder %s13, 1
      %s143 = scalar_select %p142, %s13, 1
      %s144 = smul.addr %s143, 3
      %s145 = smul.addr %s144, 8
      %s146 = scalar_lea.vmem %s2, %s145
      %p147 = scmp.lt.s32.totalorder %s13, 1
      %s148 = scalar_select %p147, %s13, 1
      %s149 = smul.addr %s148, 8
      %s150 = scalar_lea.vmem %s0, %s149
      %p151 = scmp.lt.s32.totalorder %s13, 1
      %s152 = scalar_select %p151, %s13, 1
      %s153 = smul.addr %s152, 3
      %s154 = smul.addr %s153, 8
      %s155 = scalar_lea.vmem %s1, %s154
      %p156 = scmp.lt.s32.totalorder %s13, 1
      %s157 = scalar_select %p156, %s13, 1
      %s158 = smul.addr %s157, 3
      %s159 = smul.addr %s158, 8
      %s160 = scalar_lea.vmem %s2, %s159
      %v161 = vld [vmem:[%s150] sm:$0xff]
      %v162 = vld [vmem:[%s155] sm:$0xff]
      %s163 = scalar_lea.vmem %s155, 8
      %v164 = vld [vmem:[%s163] sm:$0xff]
      %s165 = scalar_lea.vmem %s155, 16
      %v166 = vld [vmem:[%s165] sm:$0xff]
      %v167 = vmul.f32 %v162, 0.299
      %v168 = vmul.f32 %v164, 0.587
      %v169 = vadd.f32 %v167, %v168
      %v170 = vmul.f32 %v166, 0.114
      %v171 = vadd.f32 %v169, %v170
      %v172 = vsub.f32 %v162, %v171
      %v173 = vmul.f32 %v172, 0.713
      %v174 = vsub.f32 %v166, %v171
      %v175 = vmul.f32 %v174, 0.564
      %v176 = vmul.f32 %v173, 1.403
      %v177 = vadd.f32 %v161, %v176
      %v178 = vmax.f32 %v177, 0.0
      %v179 = vmin.f32 %v178, 1.0
      %180 = vst [vmem:[%s160] sm:$0xff] %v179
      %v181 = vmul.f32 %v173, 0.714
      %v182 = vsub.f32 %v161, %v181
      %v183 = vmul.f32 %v175, 0.344
      %v184 = vsub.f32 %v182, %v183
      %v185 = vmax.f32 %v184, 0.0
      %v186 = vmin.f32 %v185, 1.0
      %s187 = scalar_lea.vmem %s160, 8
      %188 = vst [vmem:[%s187] sm:$0xff] %v186
      %v189 = vmul.f32 %v175, 1.773
      %v190 = vadd.f32 %v161, %v189
      %v191 = vmax.f32 %v190, 0.0
      %v192 = vmin.f32 %v191, 1.0
      %s193 = scalar_lea.vmem %s160, 16
      %194 = vst [vmem:[%s193] sm:$0xff] %v192
      %p195 = scmp.lt.s32.totalorder %s13, 1
      %s196 = scalar_select %p195, %s13, 1
      %s197 = smul.addr %s196, 3
      %s198 = smul.addr %s197, 8
      %s199 = scalar_lea.vmem %s2, %s198
      // Predicated region
      $region29: #{superfusion_forward.13} parent=27 // pred_check
        %p200 = pneg %p83
      $region30: #{superfusion_forward.13} parent=27 // pred_check_branch
        %202 = sbr.rel (%p200) target = $region32
      $region31: #{superfusion_forward.13} parent=27 // pred_region
        _
      $region32: #{superfusion_forward.13} parent=27 // pred_fallthru
        _
    $region28: #{superfusion_forward.13} parent=5 // pred_fallthru
      _
    %p203 = scmp.le.s32.totalorder 2, %s8
    // Predicated region
    $region33: #{superfusion_forward.13} parent=5 // pred_check
      %p204 = pneg %p203
    $region34: #{superfusion_forward.13} parent=5 // pred_check_branch
      %206 = sbr.rel (%p204) target = $region36
    $region35: #{superfusion_forward.13} parent=5 // pred_region
      %s207 = ssub.s32 %s8, 2
      // Predicated region
      $region37: #{superfusion_forward.13} parent=35 // pred_check
        %p208 = pneg %p89
      $region38: #{superfusion_forward.13} parent=35 // pred_check_branch
        %210 = sbr.rel (%p208) target = $region40
      $region39: #{superfusion_forward.13} parent=35 // pred_region
        %p211 = scmp.lt.s32.totalorder %s14, 1
        %s212 = scalar_select %p211, %s14, 1
        %s213 = smul.addr %s212, 3
        %s214 = smul.addr %s213, 8
        %s215 = scalar_lea.vmem %s2, %s214
      $region40: #{superfusion_forward.13} parent=35 // pred_fallthru
        _
    $region36: #{superfusion_forward.13} parent=5 // pred_fallthru
      _
  $region6: #{superfusion_forward.13} parent=0 // loop_footer
    %s12 = sadd.s32 1, %s8
  $region7: #{superfusion_forward.13} parent=0 // loop_footer_branch
    %7 = sbr.rel target = $region3
  $region8: #{superfusion_forward.13} parent=0 // loop_exit
    _

</llo_original>
